<compile_context>
chip_gen: v7x
topology: tpu7x:2x2x1
jax: 0.10.0
libtpu: 0.0.40
codegen_flags: <defaults>
</compile_context>

<pallas_src>
import jax
import jax.numpy as jnp
from jax.experimental import pallas as pl
from jax.experimental.pallas import tpu as pltpu

FILTER_SIZES = (1, 2, 3, 4, 5, 6, 7, 8, 9, 10, 15, 20)
NUM_FILTERS = (100, 200, 200, 200, 200, 100, 100, 100, 100, 100, 160, 160)
EMB_SIZE = 64
SUM_FILTERS = sum(NUM_FILTERS)                       # 1720
MAX_FS = max(FILTER_SIZES)                           # 20
K_MAX = MAX_FS * EMB_SIZE                            # 1280
H_PAD = ((SUM_FILTERS + 127) // 128) * 128           # 1792 (lane-dense channel count)
CONV_TILE_N = 896                                    # 1792 = 2 * 896
HEAD_TILE_N = 896
K_CHUNK = 640                                        # K reduction chunk (multiple of 128)

assert H_PAD % CONV_TILE_N == 0 and H_PAD % HEAD_TILE_N == 0
assert K_MAX % K_CHUNK == 0


# -----------------------------------------------------------------------------
# Conv schedule: per column tile, how many K_CHUNK-deep weight chunks are nonzero.
# -----------------------------------------------------------------------------
def conv_tile_chunks():
    chunks = []
    for t in range(H_PAD // CONV_TILE_N):
        lo, hi = t * CONV_TILE_N, (t + 1) * CONV_TILE_N
        fs_max, off = 1, 0
        for fs, nf in zip(FILTER_SIZES, NUM_FILTERS):
            if off < hi and off + nf > lo:           # filter group intersects this tile
                fs_max = max(fs_max, fs)
            off += nf
        chunks.append(-(-(fs_max * EMB_SIZE) // K_CHUNK))   # ceil div
    return chunks                                     # -> [1, 2] for this config


def build_conv_schedule():
    """Flat (col_tile, k_chunk, is_last) schedule over only the nonzero weight chunks."""
    col_ids, k_ids, last_ids = [], [], []
    for t, n_chunks in enumerate(conv_tile_chunks()):
        for kc in range(n_chunks):
            col_ids.append(t)
            k_ids.append(kc)
            last_ids.append(1 if kc == n_chunks - 1 else 0)
    return (jnp.asarray(col_ids, jnp.int32),
            jnp.asarray(k_ids, jnp.int32),
            jnp.asarray(last_ids, jnp.int32))


# -----------------------------------------------------------------------------
# Kernel 1: fused conv + bias + ReLU + max-pool-over-time (all filter sizes)
#   grid step s: accumulate x[:, kc*K_CHUNK:...] @ W[kc*K_CHUNK:..., tile ct];
#   on the last chunk of a tile: bias + ReLU + time-validity mask + max over time.
# -----------------------------------------------------------------------------
def conv_stage(x2d, w_packed, b_packed, nvalid, B, T):
    """x2d:      (B*T, K_MAX) bf16, row = b*T + t, col = d*E + e (window unfold)
       w_packed: (K_MAX, H_PAD) bf16 packed conv weights (zero rows above fs*E)
       b_packed: (1, H_PAD) f32 biases, nvalid: (1, H_PAD) int32 valid time counts
       returns pooled features (B, H_PAD) f32 (lane-dense, zero in pad columns)."""
    BT = x2d.shape[0]
    Hp = w_packed.shape[1]
    col_ids, k_ids, last_ids = build_conv_schedule()
    n_steps = int(col_ids.shape[0])

    def kernel(ct_ref, kc_ref, lf_ref, x_ref, w_ref, b_ref, nv_ref, o_ref, acc_ref):
        s = pl.program_id(0)

        @pl.when(kc_ref[s] == 0)                     # first K-chunk of this column tile
        def _init():
            acc_ref[...] = jnp.zeros_like(acc_ref)

        acc_ref[...] += jnp.dot(x_ref[...], w_ref[...],
                                preferred_element_type=jnp.float32)   # (B*T, TILE_N)

        @pl.when(lf_ref[s] == 1)                     # last K-chunk of this column tile
        def _finalize():
            h = jnp.maximum(acc_ref[...] + b_ref[...], 0.0)           # bias + ReLU
            t_idx = jax.lax.broadcasted_iota(jnp.int32, (T, CONV_TILE_N), 0)
            valid = (t_idx < nv_ref[...]).astype(jnp.float32)         # (T, TILE_N)
            for b in range(B):
                # invalid positions masked to 0 (exact: post-ReLU values are >= 0)
                o_ref[b:b + 1, :] = jnp.max(h[b * T:(b + 1) * T, :] * valid,
                                            axis=0, keepdims=True)

    return pl.pallas_call(
        kernel,
        out_shape=jax.ShapeDtypeStruct((B, Hp), jnp.float32),
        grid_spec=pltpu.PrefetchScalarGridSpec(
            num_scalar_prefetch=3,
            grid=(n_steps,),
            in_specs=[
                pl.BlockSpec((BT, K_CHUNK), lambda s, ct, kc, lf: (0, kc[s])),
                pl.BlockSpec((K_CHUNK, CONV_TILE_N), lambda s, ct, kc, lf: (kc[s], ct[s])),
                pl.BlockSpec((1, CONV_TILE_N), lambda s, ct, kc, lf: (0, ct[s])),
                pl.BlockSpec((1, CONV_TILE_N), lambda s, ct, kc, lf: (0, ct[s])),
            ],
            out_specs=pl.BlockSpec((B, CONV_TILE_N), lambda s, ct, kc, lf: (0, ct[s])),
            scratch_shapes=[pltpu.VMEM((BT, CONV_TILE_N), jnp.float32)],
        ),
        compiler_params=pltpu.CompilerParams(
            dimension_semantics=("arbitrary",)),       # reduction over K chunks
    )(col_ids, k_ids, last_ids, x2d, w_packed, b_packed, nvalid)


# -----------------------------------------------------------------------------
# Kernel 2: highway + final linear + sigmoid (2 column tiles, weight streaming)
# -----------------------------------------------------------------------------
def head_stage(pooled_f32, pooled_bf16, wh, bh, wl, bl):
    B, Hp = pooled_f32.shape

    def kernel(lhs_ref, pg_ref, wh_ref, bh_ref, wl_ref, bl_ref, o_ref, acc_ref):
        j = pl.program_id(0)

        @pl.when(j == 0)
        def _init():
            acc_ref[...] = jnp.zeros_like(acc_ref)

        h = jnp.dot(lhs_ref[...], wh_ref[...],
                    preferred_element_type=jnp.float32) + bh_ref[...]   # (B, TILE_N)
        s = jax.nn.sigmoid(h)
        g = s * jnp.maximum(h, 0.0) + (1.0 - s) * pg_ref[...]           # f32 gate path
        # dropout(p=0.5) == identity at inference time
        # lane-dense final linear: elementwise multiply + lane reduce (VPU/XLU slack)
        acc_ref[...] += jnp.sum(g * wl_ref[...], axis=1, keepdims=True)  # (B, 1)

        @pl.when(j == pl.num_programs(0) - 1)
        def _finalize():
            o_ref[...] = jax.nn.sigmoid(acc_ref[...] + bl_ref[...])

    return pl.pallas_call(
        kernel,
        out_shape=jax.ShapeDtypeStruct((B, 1), jnp.float32),
        grid_spec=pltpu.PrefetchScalarGridSpec(
            num_scalar_prefetch=0,
            grid=(Hp // HEAD_TILE_N,),
            in_specs=[
                pl.BlockSpec((B, Hp), lambda j: (0, 0)),              # bf16 matmul LHS (resident)
                pl.BlockSpec((B, HEAD_TILE_N), lambda j: (0, j)),     # f32 pred tile (gate path)
                pl.BlockSpec((Hp, HEAD_TILE_N), lambda j: (0, j)),    # highway W columns (bf16)
                pl.BlockSpec((1, HEAD_TILE_N), lambda j: (0, j)),     # highway bias
                pl.BlockSpec((1, HEAD_TILE_N), lambda j: (0, j)),     # final linear row (lane-dense)
                pl.BlockSpec((1, 1), lambda j: (0, 0)),               # final linear bias
            ],
            out_specs=pl.BlockSpec((B, 1), lambda j: (0, 0)),
            scratch_shapes=[pltpu.VMEM((B, 1), jnp.float32)],
        ),
        compiler_params=pltpu.CompilerParams(
            dimension_semantics=("arbitrary",)),       # reduction over column tiles
    )(pooled_bf16, pooled_f32, wh, bh, wl, bl)


# -----------------------------------------------------------------------------
# Parameter init (matches init_parameters(): every param ~ Uniform(-0.05, 0.05)),
# packed into the lane-dense layouts the kernels consume.
# -----------------------------------------------------------------------------
def init_params(key, voc_size, emb_size=EMB_SIZE):
    def u(k, shape):
        return jax.random.uniform(k, shape, jnp.float32, -0.05, 0.05)

    keys = iter(jax.random.split(key, 2 * len(FILTER_SIZES) + 5))
    params = {"embedding": u(next(keys), (voc_size, emb_size))}

    # Pack all conv weights into (K_MAX, H_PAD): filter group g occupies columns
    # [off, off+F); rows >= fs*E (and pad columns >= 1720) are zero.
    w_packed = jnp.zeros((K_MAX, H_PAD), jnp.float32)
    b_packed = jnp.zeros((1, H_PAD), jnp.float32)
    off = 0
    for fs, nf in zip(FILTER_SIZES, NUM_FILTERS):
        w = u(next(keys), (nf, 1, fs, emb_size))          # PyTorch Conv2d layout
        b = u(next(keys), (nf,))
        w_flat = w.reshape(nf, fs * emb_size).T           # (fs*E, F), row = d*E + e
        w_packed = w_packed.at[: fs * emb_size, off:off + nf].set(w_flat)
        b_packed = b_packed.at[0, off:off + nf].set(b)
        off += nf
    params["conv_w"] = w_packed.astype(jnp.bfloat16)
    params["conv_b"] = b_packed

    # Highway Linear(H, H): PyTorch weight (out, in); h = pred @ W.T + b, zero-padded.
    wh = u(next(keys), (SUM_FILTERS, SUM_FILTERS))
    bh = u(next(keys), (SUM_FILTERS,))
    wh_p = jnp.zeros((H_PAD, H_PAD), jnp.float32)
    wh_p = wh_p.at[:SUM_FILTERS, :SUM_FILTERS].set(wh.T)
    bh_p = jnp.zeros((1, H_PAD), jnp.float32).at[0, :SUM_FILTERS].set(bh)
    params["highway_w"] = wh_p.astype(jnp.bfloat16)
    params["highway_b"] = bh_p

    # Final Linear(H, 1): stored lane-dense as (1, H_PAD) with zero pad columns.
    wl = u(next(keys), (1, SUM_FILTERS))
    bl = u(next(keys), (1,))
    params["linear_w"] = jnp.zeros((1, H_PAD), jnp.float32).at[0, :SUM_FILTERS].set(wl[0])
    params["linear_b"] = bl.reshape(1, 1)
    return params


def time_valid_counts(T):
    """(1, H_PAD) int32: number of valid conv positions (T - fs + 1) per packed column."""
    counts = []
    for fs, nf in zip(FILTER_SIZES, NUM_FILTERS):
        counts.append(jnp.full((nf,), T - fs + 1, jnp.int32))
    c = jnp.concatenate(counts)
    return jnp.pad(c, (0, H_PAD - SUM_FILTERS))[None, :]   # pad columns -> 0 valid


# -----------------------------------------------------------------------------
# Forward pass
# -----------------------------------------------------------------------------
def cnn_discriminator_forward(tokens, params):
    B, T = tokens.shape
    assert T >= MAX_FS, "sequence must be at least as long as the largest filter"
    # embedding lookup + one-shot window unfold (plain JAX glue, ~120 KB bf16)
    embed = params["embedding"][tokens]                                    # (B, T, E) f32
    embed_pad = jnp.pad(embed, ((0, 0), (0, MAX_FS - 1), (0, 0)))          # (B, T+19, E)
    x = jnp.stack([embed_pad[:, d:d + T, :] for d in range(MAX_FS)], axis=2)  # (B, T, 20, E)
    x2d = x.reshape(B * T, K_MAX).astype(jnp.bfloat16)                     # row=b*T+t, col=d*E+e

    nvalid = time_valid_counts(T)
    pooled = conv_stage(x2d, params["conv_w"], params["conv_b"], nvalid, B, T)  # (B, 1792) f32
    return head_stage(pooled, pooled.astype(jnp.bfloat16),
                      params["highway_w"], params["highway_b"],
                      params["linear_w"], params["linear_b"])              # (B, 1)


# -----------------------------------------------------------------------------
# Pure-JAX reference (same bf16-rounded weights, f32 math) for a correctness check
# -----------------------------------------------------------------------------
def reference_forward(tokens, params):
    embed = params["embedding"][tokens]
    B, T, E = embed.shape
    wc = params["conv_w"].astype(jnp.float32)
    pools, off = [], 0
    for fs, nf in zip(FILTER_SIZES, NUM_FILTERS):
        w = wc[: fs * E, off:off + nf]
        b = params["conv_b"][0, off:off + nf]
        L = T - fs + 1
        win = jnp.stack([embed[:, i:i + L, :] for i in range(fs)], axis=2).reshape(B, L, fs * E)
        h = jnp.maximum(jnp.einsum("blk,kf->blf", win, w) + b, 0.0)
        pools.append(jnp.max(h, axis=1))
        off += nf
    pred = jnp.concatenate(pools, axis=1)                                 # (B, 1720)
    wh = params["highway_w"].astype(jnp.float32)[:SUM_FILTERS, :SUM_FILTERS]
    bh = params["highway_b"][0, :SUM_FILTERS]
    h = pred @ wh + bh
    s = jax.nn.sigmoid(h)
    g = s * jnp.maximum(h, 0.0) + (1.0 - s) * pred
    z = g @ params["linear_w"][0, :SUM_FILTERS] + params["linear_b"][0, 0]
    return jax.nn.sigmoid(z)[:, None]


# -----------------------------------------------------------------------------
# Main
# -----------------------------------------------------------------------------
if __name__ == "__main__":
    B, T, VOC = 2, 24, 32  # seq length >= max filter size (20)
    key = jax.random.PRNGKey(0)
    k_tok, k_par = jax.random.split(key)
    tokens = jax.random.randint(k_tok, (B, T), 0, VOC, dtype=jnp.int32)
    params = init_params(k_par, VOC)

    fwd = jax.jit(cnn_discriminator_forward)
    out = jax.block_until_ready(fwd(tokens, params))
    assert out.shape == (B, 1)
    assert bool(jnp.all(jnp.isfinite(out)))
    assert bool(jnp.all((out >= 0.0) & (out <= 1.0)))

    # Compare against the pure-JAX reference (only diff: bf16 MXU casts/accum order).
    ref = jax.block_until_ready(reference_forward(tokens, params))
    max_err = float(jnp.max(jnp.abs(out - ref)))
    assert max_err < 2e-2, f"kernel vs reference mismatch: {max_err}"

    print("KERNEL_OK")
</pallas_src>

<mosaic_0001>
module attributes {stable_mosaic.version = 11 : i64} {
  func.func @kernel(%arg0: i32, %arg1: memref<3xi32, #tpu.memory_space<smem>>, %arg2: memref<3xi32, #tpu.memory_space<smem>>, %arg3: memref<3xi32, #tpu.memory_space<smem>>, %arg4: memref<48x640xbf16, #tpu.memory_space<vmem>>, %arg5: memref<640x896xbf16, #tpu.memory_space<vmem>>, %arg6: memref<1x896xf32, #tpu.memory_space<vmem>>, %arg7: memref<1x896xi32, #tpu.memory_space<vmem>>, %arg8: memref<2x896xf32, #tpu.memory_space<vmem>>, %arg9: memref<48x896xf32, #tpu.memory_space<vmem>>) attributes {dimension_semantics = [#tpu.dimension_semantics<arbitrary>], iteration_bounds = array<i64: 3>, scalar_prefetch = 3 : i64, scratch_operands = 1 : i64, tpu.core_type = #tpu.core_type<tc>, window_params = [{transform_indices = @transform_0, window_bounds = array<i64: 48, 640>}, {transform_indices = @transform_1, window_bounds = array<i64: 640, 896>}, {transform_indices = @transform_2, window_bounds = array<i64: 1, 896>}, {transform_indices = @transform_3, window_bounds = array<i64: 1, 896>}, {transform_indices = @transform_4, window_bounds = array<i64: 2, 896>}]} {
    %0 = arith.index_cast %arg0 : i32 to index
    %1 = memref.load %arg2[%0] : memref<3xi32, #tpu.memory_space<smem>>
    %c0_i32 = arith.constant 0 : i32
    %2 = arith.cmpi eq, %1, %c0_i32 : i32
    %3 = arith.extui %2 : i1 to i32
    %c0_i32_0 = arith.constant 0 : i32
    %4 = arith.cmpi ne, %3, %c0_i32_0 : i32
    scf.if %4 {
      %cst_9 = arith.constant 0.000000e+00 : f32
      %16 = vector.broadcast %cst_9 : f32 to vector<48x896xf32>
      %c0_10 = arith.constant 0 : index
      %c0_11 = arith.constant 0 : index
      %17 = vector.load %arg9[%c0_10, %c0_11] : memref<48x896xf32, #tpu.memory_space<vmem>>, vector<48x896xf32>
      tpu.vector_store %arg9[%c0_10, %c0_11], %16 {strides = array<i32>} : memref<48x896xf32, #tpu.memory_space<vmem>>, vector<48x896xf32>,
    } else {
    }
    %c0 = arith.constant 0 : index
    %c0_1 = arith.constant 0 : index
    %5 = vector.load %arg9[%c0, %c0_1] : memref<48x896xf32, #tpu.memory_space<vmem>>, vector<48x896xf32>
    %c0_2 = arith.constant 0 : index
    %c0_3 = arith.constant 0 : index
    %6 = vector.load %arg4[%c0_2, %c0_3] : memref<48x640xbf16, #tpu.memory_space<vmem>>, vector<48x640xbf16>
    %c0_4 = arith.constant 0 : index
    %c0_5 = arith.constant 0 : index
    %7 = vector.load %arg5[%c0_4, %c0_5] : memref<640x896xbf16, #tpu.memory_space<vmem>>, vector<640x896xbf16>
    %cst = arith.constant dense<0.000000e+00> : vector<48x896xf32>
    %8 = tpu.matmul %6, %7, %cst {dimension_numbers = #tpu.dot_dimension_numbers<[1], [0], [0], [1], [0, 0, 1, 1], [], []>} : vector<48x640xbf16>, vector<640x896xbf16>, vector<48x896xf32> -> vector<48x896xf32>
    %9 = arith.addf %5, %8 : vector<48x896xf32>
    %c0_6 = arith.constant 0 : index
    %c0_7 = arith.constant 0 : index
    %10 = vector.load %arg9[%c0_6, %c0_7] : memref<48x896xf32, #tpu.memory_space<vmem>>, vector<48x896xf32>
    tpu.vector_store %arg9[%c0_6, %c0_7], %9 {strides = array<i32>} : memref<48x896xf32, #tpu.memory_space<vmem>>, vector<48x896xf32>,
    %11 = arith.index_cast %arg0 : i32 to index
    %12 = memref.load %arg3[%11] : memref<3xi32, #tpu.memory_space<smem>>
    %c1_i32 = arith.constant 1 : i32
    %13 = arith.cmpi eq, %12, %c1_i32 : i32
    %14 = arith.extui %13 : i1 to i32
    %c0_i32_8 = arith.constant 0 : i32
    %15 = arith.cmpi ne, %14, %c0_i32_8 : i32
    scf.if %15 {
      %c0_9 = arith.constant 0 : index
      %c0_10 = arith.constant 0 : index
      %16 = vector.load %arg9[%c0_9, %c0_10] : memref<48x896xf32, #tpu.memory_space<vmem>>, vector<48x896xf32>
      %c0_11 = arith.constant 0 : index
      %c0_12 = arith.constant 0 : index
      %17 = vector.load %arg6[%c0_11, %c0_12] : memref<1x896xf32, #tpu.memory_space<vmem>>, vector<1x896xf32>
      %18 = vector.broadcast %17 : vector<1x896xf32> to vector<48x896xf32>
      %19 = arith.addf %16, %18 : vector<48x896xf32>
      %cst_13 = arith.constant 0.000000e+00 : f32
      %20 = vector.broadcast %cst_13 : f32 to vector<48x896xf32>
      %21 = arith.maximumf %19, %20 : vector<48x896xf32>
      %22 = tpu.iota {dimensions = array<i32: 0>} : vector<24x896xi32>
      %c0_14 = arith.constant 0 : index
      %c0_15 = arith.constant 0 : index
      %23 = vector.load %arg7[%c0_14, %c0_15] : memref<1x896xi32, #tpu.memory_space<vmem>>, vector<1x896xi32>
      %24 = vector.broadcast %23 : vector<1x896xi32> to vector<24x896xi32>
      %25 = arith.cmpi slt, %22, %24 : vector<24x896xi32>
      %26 = arith.extui %25 : vector<24x896xi1> to vector<24x896xi32>
      %27 = arith.sitofp %26 : vector<24x896xi32> to vector<24x896xf32>
      %28 = vector.extract_strided_slice %21 {offsets = [0, 0], sizes = [24, 896], strides = [1, 1]} : vector<48x896xf32> to vector<24x896xf32>
      %29 = arith.mulf %28, %27 : vector<24x896xf32>
      %cst_16 = arith.constant dense<0xFF800000> : vector<896xf32>
      %30 = vector.multi_reduction <maximumf>, %29, %cst_16 [0] : vector<24x896xf32> to vector<896xf32>
      %31 = vector.shape_cast %30 : vector<896xf32> to vector<1x896xf32>
      %c0_17 = arith.constant 0 : index
      %c0_18 = arith.constant 0 : index
      %32 = vector.load %arg8[%c0_17, %c0_18] : memref<2x896xf32, #tpu.memory_space<vmem>>, vector<1x896xf32>
      tpu.vector_store %arg8[%c0_17, %c0_18], %31 {strides = array<i32>} : memref<2x896xf32, #tpu.memory_space<vmem>>, vector<1x896xf32>,
      %33 = vector.extract_strided_slice %21 {offsets = [24, 0], sizes = [24, 896], strides = [1, 1]} : vector<48x896xf32> to vector<24x896xf32>
      %34 = arith.mulf %33, %27 : vector<24x896xf32>
      %cst_19 = arith.constant dense<0xFF800000> : vector<896xf32>
      %35 = vector.multi_reduction <maximumf>, %34, %cst_19 [0] : vector<24x896xf32> to vector<896xf32>
      %36 = vector.shape_cast %35 : vector<896xf32> to vector<1x896xf32>
      %c1 = arith.constant 1 : index
      %c0_20 = arith.constant 0 : index
      %37 = vector.load %arg8[%c1, %c0_20] : memref<2x896xf32, #tpu.memory_space<vmem>>, vector<1x896xf32>
      tpu.vector_store %arg8[%c1, %c0_20], %36 {strides = array<i32>} : memref<2x896xf32, #tpu.memory_space<vmem>>, vector<1x896xf32>,
    } else {
    }
    return
  }
  func.func @transform_0(%arg0: i32, %arg1: memref<3xi32, #tpu.memory_space<smem>>, %arg2: memref<3xi32, #tpu.memory_space<smem>>, %arg3: memref<3xi32, #tpu.memory_space<smem>>) -> (i32, i32) {
    %0 = arith.index_cast %arg0 : i32 to index
    %1 = memref.load %arg2[%0] : memref<3xi32, #tpu.memory_space<smem>>
    %c0_i32 = arith.constant 0 : i32
    %c0_i32_0 = arith.constant 0 : i32
    return %c0_i32, %1 : i32, i32
  }
  func.func @transform_1(%arg0: i32, %arg1: memref<3xi32, #tpu.memory_space<smem>>, %arg2: memref<3xi32, #tpu.memory_space<smem>>, %arg3: memref<3xi32, #tpu.memory_space<smem>>) -> (i32, i32) {
    %0 = arith.index_cast %arg0 : i32 to index
    %1 = memref.load %arg2[%0] : memref<3xi32, #tpu.memory_space<smem>>
    %2 = arith.index_cast %arg0 : i32 to index
    %3 = memref.load %arg1[%2] : memref<3xi32, #tpu.memory_space<smem>>
    %c0_i32 = arith.constant 0 : i32
    return %1, %3 : i32, i32
  }
  func.func @transform_2(%arg0: i32, %arg1: memref<3xi32, #tpu.memory_space<smem>>, %arg2: memref<3xi32, #tpu.memory_space<smem>>, %arg3: memref<3xi32, #tpu.memory_space<smem>>) -> (i32, i32) {
    %0 = arith.index_cast %arg0 : i32 to index
    %1 = memref.load %arg1[%0] : memref<3xi32, #tpu.memory_space<smem>>
    %c0_i32 = arith.constant 0 : i32
    %c0_i32_0 = arith.constant 0 : i32
    return %c0_i32, %1 : i32, i32
  }
  func.func @transform_3(%arg0: i32, %arg1: memref<3xi32, #tpu.memory_space<smem>>, %arg2: memref<3xi32, #tpu.memory_space<smem>>, %arg3: memref<3xi32, #tpu.memory_space<smem>>) -> (i32, i32) {
    %0 = arith.index_cast %arg0 : i32 to index
    %1 = memref.load %arg1[%0] : memref<3xi32, #tpu.memory_space<smem>>
    %c0_i32 = arith.constant 0 : i32
    %c0_i32_0 = arith.constant 0 : i32
    return %c0_i32, %1 : i32, i32
  }
  func.func @transform_4(%arg0: i32, %arg1: memref<3xi32, #tpu.memory_space<smem>>, %arg2: memref<3xi32, #tpu.memory_space<smem>>, %arg3: memref<3xi32, #tpu.memory_space<smem>>) -> (i32, i32) {
    %0 = arith.index_cast %arg0 : i32 to index
    %1 = memref.load %arg1[%0] : memref<3xi32, #tpu.memory_space<smem>>
    %c0_i32 = arith.constant 0 : i32
    %c0_i32_0 = arith.constant 0 : i32
    return %c0_i32, %1 : i32, i32
  }
}

module attributes {stable_mosaic.version = 11 : i64} {
  func.func @kernel(%arg0: i32, %arg1: memref<2x1792xbf16, #tpu.memory_space<vmem>>, %arg2: memref<2x896xf32, #tpu.memory_space<vmem>>, %arg3: memref<1792x896xbf16, #tpu.memory_space<vmem>>, %arg4: memref<1x896xf32, #tpu.memory_space<vmem>>, %arg5: memref<1x896xf32, #tpu.memory_space<vmem>>, %arg6: memref<1x1xf32, #tpu.memory_space<vmem>>, %arg7: memref<2x1xf32, #tpu.memory_space<vmem>>, %arg8: memref<2x1xf32, #tpu.memory_space<vmem>>) attributes {dimension_semantics = [#tpu.dimension_semantics<arbitrary>], iteration_bounds = array<i64: 2>, scalar_prefetch = 0 : i64, scratch_operands = 1 : i64, tpu.core_type = #tpu.core_type<tc>, window_params = [{pipeline_mode = #tpu.pipeline_mode<synchronous>, transform_indices = @transform_0, window_bounds = array<i64: 2, 1792>}, {transform_indices = @transform_1, window_bounds = array<i64: 2, 896>}, {transform_indices = @transform_2, window_bounds = array<i64: 1792, 896>}, {transform_indices = @transform_3, window_bounds = array<i64: 1, 896>}, {transform_indices = @transform_4, window_bounds = array<i64: 1, 896>}, {pipeline_mode = #tpu.pipeline_mode<synchronous>, transform_indices = @transform_5, window_bounds = array<i64: 1, 1>}, {pipeline_mode = #tpu.pipeline_mode<synchronous>, transform_indices = @transform_6, window_bounds = array<i64: 2, 1>}]} {
    %c0_i32 = arith.constant 0 : i32
    %0 = arith.cmpi eq, %arg0, %c0_i32 : i32
    %1 = arith.extui %0 : i1 to i32
    %c0_i32_0 = arith.constant 0 : i32
    %2 = arith.cmpi ne, %1, %c0_i32_0 : i32
    scf.if %2 {
      %cst_19 = arith.constant 0.000000e+00 : f32
      %33 = vector.broadcast %cst_19 : f32 to vector<2x1xf32>
      %c0_20 = arith.constant 0 : index
      %c0_21 = arith.constant 0 : index
      %34 = vector.load %arg8[%c0_20, %c0_21] : memref<2x1xf32, #tpu.memory_space<vmem>>, vector<2x1xf32>
      tpu.vector_store %arg8[%c0_20, %c0_21], %33 {strides = array<i32>} : memref<2x1xf32, #tpu.memory_space<vmem>>, vector<2x1xf32>,
    } else {
    }
    %c0 = arith.constant 0 : index
    %c0_1 = arith.constant 0 : index
    %3 = vector.load %arg1[%c0, %c0_1] : memref<2x1792xbf16, #tpu.memory_space<vmem>>, vector<2x1792xbf16>
    %c0_2 = arith.constant 0 : index
    %c0_3 = arith.constant 0 : index
    %4 = vector.load %arg3[%c0_2, %c0_3] : memref<1792x896xbf16, #tpu.memory_space<vmem>>, vector<1792x896xbf16>
    %cst = arith.constant dense<0.000000e+00> : vector<2x896xf32>
    %5 = tpu.matmul %3, %4, %cst {dimension_numbers = #tpu.dot_dimension_numbers<[1], [0], [0], [1], [0, 0, 1, 1], [], []>} : vector<2x1792xbf16>, vector<1792x896xbf16>, vector<2x896xf32> -> vector<2x896xf32>
    %c0_4 = arith.constant 0 : index
    %c0_5 = arith.constant 0 : index
    %6 = vector.load %arg4[%c0_4, %c0_5] : memref<1x896xf32, #tpu.memory_space<vmem>>, vector<1x896xf32>
    %7 = vector.broadcast %6 : vector<1x896xf32> to vector<2x896xf32>
    %8 = arith.addf %5, %7 : vector<2x896xf32>
    %9 = arith.negf %8 : vector<2x896xf32>
    %10 = math.exp %9 : vector<2x896xf32>
    %cst_6 = arith.constant 1.000000e+00 : f32
    %11 = vector.broadcast %cst_6 : f32 to vector<2x896xf32>
    %12 = arith.addf %11, %10 : vector<2x896xf32>
    %13 = arith.divf %11, %12 : vector<2x896xf32>
    %cst_7 = arith.constant 0.000000e+00 : f32
    %14 = vector.broadcast %cst_7 : f32 to vector<2x896xf32>
    %15 = arith.maximumf %8, %14 : vector<2x896xf32>
    %16 = arith.mulf %13, %15 : vector<2x896xf32>
    %cst_8 = arith.constant 1.000000e+00 : f32
    %17 = vector.broadcast %cst_8 : f32 to vector<2x896xf32>
    %18 = arith.subf %17, %13 : vector<2x896xf32>
    %c0_9 = arith.constant 0 : index
    %c0_10 = arith.constant 0 : index
    %19 = vector.load %arg2[%c0_9, %c0_10] : memref<2x896xf32, #tpu.memory_space<vmem>>, vector<2x896xf32>
    %20 = arith.mulf %18, %19 : vector<2x896xf32>
    %21 = arith.addf %16, %20 : vector<2x896xf32>
    %c0_11 = arith.constant 0 : index
    %c0_12 = arith.constant 0 : index
    %22 = vector.load %arg8[%c0_11, %c0_12] : memref<2x1xf32, #tpu.memory_space<vmem>>, vector<2x1xf32>
    %c0_13 = arith.constant 0 : index
    %c0_14 = arith.constant 0 : index
    %23 = vector.load %arg5[%c0_13, %c0_14] : memref<1x896xf32, #tpu.memory_space<vmem>>, vector<1x896xf32>
    %24 = vector.broadcast %23 : vector<1x896xf32> to vector<2x896xf32>
    %25 = arith.mulf %21, %24 : vector<2x896xf32>
    %cst_15 = arith.constant dense<0.000000e+00> : vector<2xf32>
    %26 = vector.multi_reduction <add>, %25, %cst_15 [1] : vector<2x896xf32> to vector<2xf32>
    %27 = vector.shape_cast %26 : vector<2xf32> to vector<2x1xf32>
    %28 = arith.addf %22, %27 : vector<2x1xf32>
    %c0_16 = arith.constant 0 : index
    %c0_17 = arith.constant 0 : index
    %29 = vector.load %arg8[%c0_16, %c0_17] : memref<2x1xf32, #tpu.memory_space<vmem>>, vector<2x1xf32>
    tpu.vector_store %arg8[%c0_16, %c0_17], %28 {strides = array<i32>} : memref<2x1xf32, #tpu.memory_space<vmem>>, vector<2x1xf32>,
    %c1_i32 = arith.constant 1 : i32
    %30 = arith.cmpi eq, %arg0, %c1_i32 : i32
    %31 = arith.extui %30 : i1 to i32
    %c0_i32_18 = arith.constant 0 : i32
    %32 = arith.cmpi ne, %31, %c0_i32_18 : i32
    scf.if %32 {
      %c0_19 = arith.constant 0 : index
      %c0_20 = arith.constant 0 : index
      %33 = vector.load %arg8[%c0_19, %c0_20] : memref<2x1xf32, #tpu.memory_space<vmem>>, vector<2x1xf32>
      %c0_21 = arith.constant 0 : index
      %c0_22 = arith.constant 0 : index
      %34 = vector.load %arg6[%c0_21, %c0_22] : memref<1x1xf32, #tpu.memory_space<vmem>>, vector<1x1xf32>
      %35 = vector.broadcast %34 : vector<1x1xf32> to vector<2x1xf32>
      %36 = arith.addf %33, %35 : vector<2x1xf32>
      %37 = arith.negf %36 : vector<2x1xf32>
      %38 = math.exp %37 : vector<2x1xf32>
      %cst_23 = arith.constant 1.000000e+00 : f32
      %39 = vector.broadcast %cst_23 : f32 to vector<2x1xf32>
      %40 = arith.addf %39, %38 : vector<2x1xf32>
      %41 = arith.divf %39, %40 : vector<2x1xf32>
      %c0_24 = arith.constant 0 : index
      %c0_25 = arith.constant 0 : index
      %42 = vector.load %arg7[%c0_24, %c0_25] : memref<2x1xf32, #tpu.memory_space<vmem>>, vector<2x1xf32>
      tpu.vector_store %arg7[%c0_24, %c0_25], %41 {strides = array<i32>} : memref<2x1xf32, #tpu.memory_space<vmem>>, vector<2x1xf32>,
    } else {
    }
    return
  }
  func.func @transform_0(%arg0: i32) -> (i32, i32) {
    %c0_i32 = arith.constant 0 : i32
    %c0_i32_0 = arith.constant 0 : i32
    %c0_i32_1 = arith.constant 0 : i32
    return %c0_i32, %c0_i32_0 : i32, i32
  }
  func.func @transform_1(%arg0: i32) -> (i32, i32) {
    %c0_i32 = arith.constant 0 : i32
    %c0_i32_0 = arith.constant 0 : i32
    return %c0_i32, %arg0 : i32, i32
  }
  func.func @transform_2(%arg0: i32) -> (i32, i32) {
    %c0_i32 = arith.constant 0 : i32
    %c0_i32_0 = arith.constant 0 : i32
    return %c0_i32, %arg0 : i32, i32
  }
  func.func @transform_3(%arg0: i32) -> (i32, i32) {
    %c0_i32 = arith.constant 0 : i32
    %c0_i32_0 = arith.constant 0 : i32
    return %c0_i32, %arg0 : i32, i32
  }
  func.func @transform_4(%arg0: i32) -> (i32, i32) {
    %c0_i32 = arith.constant 0 : i32
    %c0_i32_0 = arith.constant 0 : i32
    return %c0_i32, %arg0 : i32, i32
  }
  func.func @transform_5(%arg0: i32) -> (i32, i32) {
    %c0_i32 = arith.constant 0 : i32
    %c0_i32_0 = arith.constant 0 : i32
    %c0_i32_1 = arith.constant 0 : i32
    return %c0_i32, %c0_i32_0 : i32, i32
  }
  func.func @transform_6(%arg0: i32) -> (i32, i32) {
    %c0_i32 = arith.constant 0 : i32
    %c0_i32_0 = arith.constant 0 : i32
    %c0_i32_1 = arith.constant 0 : i32
    return %c0_i32, %c0_i32_0 : i32, i32
  }
}

</mosaic_0001>

<llo_original>
// kernel: cnn_discriminator_forward.2
$region0: #{cnn_discriminator_forward.2}
  #allocation0 [shape = 'u32[]', space=smem, size = 0x4, offset = 0x4, fixed_abs, tag = 'smem constant byte address 0x4 - core index']
  #allocation1 [shape = 'u32[144,128]{1,0:T(1,128)}', space=vmem, size = 0x12000, scoped, tag = 'internal scratch']
  #allocation2 [shape = 'f32[48,896]{1,0:T(8,128)}', space=vmem, size = 0x2a000, scoped, tag = 'scratch operand']
  #allocation3 [shape = 's32[1]{0}', space=sflag, size = 0x4, scoped, tag = 'scoped memory for cnn_discriminator_forward.2']
  #allocation4 [shape = 'u8[512]{0}', space=smem, size = 0x200, scoped, tag = 'prefetched SMEM operand 0']
  #allocation5 [shape = 'u8[512]{0}', space=smem, size = 0x200, scoped, tag = 'prefetched SMEM operand 1']
  #allocation6 [shape = 'u8[512]{0}', space=smem, size = 0x200, scoped, tag = 'prefetched SMEM operand 2']
  %s0 = inlined_call_operand.hbm [shape: s32[3], index: 0, kind: input, shape index: {}]
  %s1 = inlined_call_operand.hbm [shape: s32[3], index: 1, kind: input, shape index: {}]
  %s2 = inlined_call_operand.hbm [shape: s32[3], index: 2, kind: input, shape index: {}]
  %s3 = inlined_call_operand.vmem [shape: bf16[48,1280], index: 3, kind: input, shape index: {}]
  %s4 = inlined_call_operand.hbm [shape: bf16[1280,1792], index: 4, kind: input, shape index: {}]
  %s5 = inlined_call_operand.hbm [shape: f32[1,1792], index: 5, kind: input, shape index: {}]
  %s6 = inlined_call_operand.hbm [shape: s32[1,1792], index: 6, kind: input, shape index: {}]
  %s7 = inlined_call_operand.vmem [shape: f32[2,1792], index: 7, kind: output, shape index: {}]
  %s8 = sld [smem:[#allocation0]]
  $region95: #{cnn_discriminator_forward.2} parent=0
    _
  %s10 = ssub.s32 1, %s8
  %s11 = scalar_select 0, %s10, %s8
  %13 = dma.hbm_to_smem %s0, 16, [#allocation4], [#allocation3]
  %15 = dma.hbm_to_smem %s1, 16, [#allocation5], [#allocation3]
  %17 = dma.hbm_to_smem %s2, 16, [#allocation6], [#allocation3]
  %18 = dma.done [#allocation3], 48
  %19 = sfence
  $region1: #{cnn_discriminator_forward.2} parent=0
    #allocation7 [shape = 'u8[122880]{0}', space=vmem, size = 0x1e000, scoped, tag = 'input window, operand 3']
    #allocation8 [shape = 'u8[2293760]{0}', space=vmem, size = 0x230000, scoped, tag = 'input window, operand 4']
    #allocation9 [shape = 's32[2]{0}', space=sflag, size = 0x8, scoped, tag = 'scoped memory for cnn_discriminator_forward.2']
    #allocation10 [shape = 'u8[7168]{0}', space=vmem, size = 0x1c00, scoped, tag = 'input window, operand 5']
    #allocation11 [shape = 's32[2]{0}', space=sflag, size = 0x8, scoped, tag = 'scoped memory for cnn_discriminator_forward.2']
    #allocation12 [shape = 'u8[7168]{0}', space=vmem, size = 0x1c00, scoped, tag = 'input window, operand 6']
    %20 = vsyncpa [#allocation9], 0
    %s21 = scalar_lea.sflag [#allocation9], 1
    %22 = vsyncpa %s21, 0
    %23 = vsyncpa [#allocation11], 0
    %s24 = scalar_lea.sflag [#allocation11], 1
    %25 = vsyncpa %s24, 0
    loop: start=0, step=1, limit=5
    $region2: #{cnn_discriminator_forward.2} parent=1 // loop_pre_header
      _
    $region3: #{cnn_discriminator_forward.2} parent=1 // loop_header
      %s27 = sphi 0, %s31
      %p28 = scmp.ge.s32.totalorder %s27, 5
      %s39 = sphi 0, %s41
      %s42 = sphi 0, %s39
      %s43 = sphi 0, %s42
      %s59 = sphi 0, %s43
      %s71 = sphi 0, %s73
      %s74 = sphi 0, %s71
      %s75 = sphi 0, %s74
      %s91 = sphi 0, %s75
      %s99 = sphi 0, %s101
      %s102 = sphi 0, %s99
      %s103 = sphi 0, %s102
      %s119 = sphi 0, %s103
      %s127 = sphi 0, %s129
      %s130 = sphi 0, %s127
      %s131 = sphi 0, %s130
      %s147 = sphi 0, %s131
      %s155 = sphi 0, %s157
      %s158 = sphi 0, %s155
      %s159 = sphi 0, %s158
      %s175 = sphi 0, %s159
    $region4: #{cnn_discriminator_forward.2} parent=1 // loop_header_branch
      %30 = sbr.rel (%p28) target = $region8
    $region5: #{cnn_discriminator_forward.2} parent=1 // loop_body
      %s32 = ssub.s32 %s27, 1
      %s33 = ssub.s32 %s27, 2
      %s34 = sadd.s32 %s27, 1
      %s35 = sld [smem:[#allocation5 + %s27]]
      %s36 = sld [smem:[#allocation5 + %s34]]
      %s37 = ssub.s32 %s35, %s36
      %p38 = scmp.eq.s32.totalorder %s37, 0
      %s40 = sadd.s32 %s39, 1
      %s41 = scalar_select %p38, %s39, %s40
      %p44 = pneg %p38
      %p45 = scmp.eq.s32.totalorder %s27, 2
      %p46 = por %p44, %p45
      %p47 = scmp.ne.s32.totalorder %s39, %s42
      %p48 = scmp.eq.s32.totalorder %s27, 0
      %p49 = por %p47, %p48
      %p50 = scmp.ne.s32.totalorder %s39, %s42
      %p51 = scmp.eq.s32.totalorder %s32, 2
      %p52 = por %p50, %p51
      %p53 = scmp.ne.s32.totalorder %s42, %s43
      %p54 = scmp.eq.s32.totalorder %s32, 0
      %p55 = por %p53, %p54
      %p56 = scmp.ne.s32.totalorder %s42, %s43
      %p57 = scmp.eq.s32.totalorder %s33, 2
      %p58 = por %p56, %p57
      %p60 = scmp.ne.s32.totalorder %s43, %s59
      %p61 = scmp.eq.s32.totalorder %s33, 0
      %p62 = por %p60, %p61
      %s63 = sld [smem:[#allocation5 + %s27]]
      %s64 = sld [smem:[#allocation4 + %s27]]
      %s65 = sld [smem:[#allocation5 + %s34]]
      %s66 = sld [smem:[#allocation4 + %s34]]
      %s67 = ssub.s32 %s63, %s65
      %s68 = ssub.s32 %s64, %s66
      %s69 = sor.u32 %s67, %s68
      %p70 = scmp.eq.s32.totalorder %s69, 0
      %s72 = sadd.s32 %s71, 1
      %s73 = scalar_select %p70, %s71, %s72
      %p76 = pneg %p70
      %p77 = scmp.eq.s32.totalorder %s27, 2
      %p78 = por %p76, %p77
      %p79 = scmp.ne.s32.totalorder %s71, %s74
      %p80 = scmp.eq.s32.totalorder %s27, 0
      %p81 = por %p79, %p80
      %p82 = scmp.ne.s32.totalorder %s71, %s74
      %p83 = scmp.eq.s32.totalorder %s32, 2
      %p84 = por %p82, %p83
      %p85 = scmp.ne.s32.totalorder %s74, %s75
      %p86 = scmp.eq.s32.totalorder %s32, 0
      %p87 = por %p85, %p86
      %p88 = scmp.ne.s32.totalorder %s74, %s75
      %p89 = scmp.eq.s32.totalorder %s33, 2
      %p90 = por %p88, %p89
      %p92 = scmp.ne.s32.totalorder %s75, %s91
      %p93 = scmp.eq.s32.totalorder %s33, 0
      %p94 = por %p92, %p93
      %s95 = sld [smem:[#allocation4 + %s27]]
      %s96 = sld [smem:[#allocation4 + %s34]]
      %s97 = ssub.s32 %s95, %s96
      %p98 = scmp.eq.s32.totalorder %s97, 0
      %s100 = sadd.s32 %s99, 1
      %s101 = scalar_select %p98, %s99, %s100
      %p104 = pneg %p98
      %p105 = scmp.eq.s32.totalorder %s27, 2
      %p106 = por %p104, %p105
      %p107 = scmp.ne.s32.totalorder %s99, %s102
      %p108 = scmp.eq.s32.totalorder %s27, 0
      %p109 = por %p107, %p108
      %p110 = scmp.ne.s32.totalorder %s99, %s102
      %p111 = scmp.eq.s32.totalorder %s32, 2
      %p112 = por %p110, %p111
      %p113 = scmp.ne.s32.totalorder %s102, %s103
      %p114 = scmp.eq.s32.totalorder %s32, 0
      %p115 = por %p113, %p114
      %p116 = scmp.ne.s32.totalorder %s102, %s103
      %p117 = scmp.eq.s32.totalorder %s33, 2
      %p118 = por %p116, %p117
      %p120 = scmp.ne.s32.totalorder %s103, %s119
      %p121 = scmp.eq.s32.totalorder %s33, 0
      %p122 = por %p120, %p121
      %s123 = sld [smem:[#allocation4 + %s27]]
      %s124 = sld [smem:[#allocation4 + %s34]]
      %s125 = ssub.s32 %s123, %s124
      %p126 = scmp.eq.s32.totalorder %s125, 0
      %s128 = sadd.s32 %s127, 1
      %s129 = scalar_select %p126, %s127, %s128
      %p132 = pneg %p126
      %p133 = scmp.eq.s32.totalorder %s27, 2
      %p134 = por %p132, %p133
      %p135 = scmp.ne.s32.totalorder %s127, %s130
      %p136 = scmp.eq.s32.totalorder %s27, 0
      %p137 = por %p135, %p136
      %p138 = scmp.ne.s32.totalorder %s127, %s130
      %p139 = scmp.eq.s32.totalorder %s32, 2
      %p140 = por %p138, %p139
      %p141 = scmp.ne.s32.totalorder %s130, %s131
      %p142 = scmp.eq.s32.totalorder %s32, 0
      %p143 = por %p141, %p142
      %p144 = scmp.ne.s32.totalorder %s130, %s131
      %p145 = scmp.eq.s32.totalorder %s33, 2
      %p146 = por %p144, %p145
      %p148 = scmp.ne.s32.totalorder %s131, %s147
      %p149 = scmp.eq.s32.totalorder %s33, 0
      %p150 = por %p148, %p149
      %s151 = sld [smem:[#allocation4 + %s27]]
      %s152 = sld [smem:[#allocation4 + %s34]]
      %s153 = ssub.s32 %s151, %s152
      %p154 = scmp.eq.s32.totalorder %s153, 0
      %s156 = sadd.s32 %s155, 1
      %s157 = scalar_select %p154, %s155, %s156
      %p160 = pneg %p154
      %p161 = scmp.eq.s32.totalorder %s27, 2
      %p162 = por %p160, %p161
      %p163 = scmp.ne.s32.totalorder %s155, %s158
      %p164 = scmp.eq.s32.totalorder %s27, 0
      %p165 = por %p163, %p164
      %p166 = scmp.ne.s32.totalorder %s155, %s158
      %p167 = scmp.eq.s32.totalorder %s32, 2
      %p168 = por %p166, %p167
      %p169 = scmp.ne.s32.totalorder %s158, %s159
      %p170 = scmp.eq.s32.totalorder %s32, 0
      %p171 = por %p169, %p170
      %p172 = scmp.ne.s32.totalorder %s158, %s159
      %p173 = scmp.eq.s32.totalorder %s33, 2
      %p174 = por %p172, %p173
      %p176 = scmp.ne.s32.totalorder %s159, %s175
      %p177 = scmp.eq.s32.totalorder %s33, 0
      %p178 = por %p176, %p177
      %p179 = scmp.le.s32.totalorder 1, %s27
      %p180 = scmp.lt.s32.totalorder %s27, 4
      %p181 = pnand %p179, %p180
      %p182 = pneg %p181
      // Predicated region
      $region9: #{cnn_discriminator_forward.2} parent=5 // pred_check
        _
      $region10: #{cnn_discriminator_forward.2} parent=5 // pred_check_branch
        %184 = sbr.rel (%p181) target = $region12
      $region11: #{cnn_discriminator_forward.2} parent=5 // pred_region
        %s185 = ssub.s32 %s27, 1
      $region12: #{cnn_discriminator_forward.2} parent=5 // pred_fallthru
        _
      %p186 = scmp.lt.s32.totalorder %s27, 3
      // Predicated region
      $region13: #{cnn_discriminator_forward.2} parent=5 // pred_check
        %p187 = pneg %p186
      $region14: #{cnn_discriminator_forward.2} parent=5 // pred_check_branch
        %189 = sbr.rel (%p187) target = $region16
      $region15: #{cnn_discriminator_forward.2} parent=5 // pred_region
        // Predicated region
        $region17: #{cnn_discriminator_forward.2} parent=15 // pred_check
          %p190 = pneg %p49
        $region18: #{cnn_discriminator_forward.2} parent=15 // pred_check_branch
          %192 = sbr.rel (%p190) target = $region20
        $region19: #{cnn_discriminator_forward.2} parent=15 // pred_region
          %s193 = sand.u32 %s39, 1
          %s194 = sand.u32 %s39, 1
          %s195 = smul.addr %s194, 120
          %s196 = scalar_lea.vmem [#allocation7], %s195
          %s197 = sld [smem:[#allocation5 + %s27]]
          %s198 = smul.u32 5, %s197
          %s199 = smul.addr %s198, 4
          %s200 = scalar_lea.vmem %s3, %s199
          // Predicated region
          $region21: #{cnn_discriminator_forward.2} parent=19 // pred_check
            _
          $region22: #{cnn_discriminator_forward.2} parent=19 // pred_check_branch
            %202 = sbr.rel (0) target = $region24
          $region23: #{cnn_discriminator_forward.2} parent=19 // pred_region
            // Predicated region
            $region25: #{cnn_discriminator_forward.2} parent=23 // pred_check
              _
            $region26: #{cnn_discriminator_forward.2} parent=23 // pred_check_branch
              %204 = sbr.rel (0) target = $region28
            $region27: #{cnn_discriminator_forward.2} parent=23 // pred_region
              %s205 = scalar_lea.vmem %s200, 16
              %s206 = scalar_lea.vmem %s196, 16 [#allocation7]
              loop: start=0, step=1, limit=1
              $region29: #{cnn_discriminator_forward.2} parent=27 // loop_pre_header
                _
              $region30: #{cnn_discriminator_forward.2} parent=27 // loop_header
                %s208 = sphi 0, %s212
                %p209 = scmp.ge.s32.totalorder %s208, 1
                %s213 = sphi %s200, %s200
                %s214 = sphi %s196, %s196
              $region31: #{cnn_discriminator_forward.2} parent=27 // loop_header_branch
                %211 = sbr.rel (%p209) target = $region35
              $region32: #{cnn_discriminator_forward.2} parent=27 // loop_body
                %v215 = vld [vmem:[%s213] sm:$0xff]
                %216 = vst [vmem:[%s214] sm:$0xff] %v215
                %v217 = vld [vmem:[%s213 + $0x8] sm:$0xff]
                %218 = vst [vmem:[%s214 + $0x8] sm:$0xff] %v217
                %v219 = vld [vmem:[%s213 + $0x28] sm:$0xff]
                %220 = vst [vmem:[%s214 + $0x14] sm:$0xff] %v219
                %v221 = vld [vmem:[%s213 + $0x30] sm:$0xff]
                %222 = vst [vmem:[%s214 + $0x1c] sm:$0xff] %v221
                %v223 = vld [vmem:[%s213 + $0x50] sm:$0xff]
                %224 = vst [vmem:[%s214 + $0x28] sm:$0xff] %v223
                %v225 = vld [vmem:[%s213 + $0x58] sm:$0xff]
                %226 = vst [vmem:[%s214 + $0x30] sm:$0xff] %v225
                %v227 = vld [vmem:[%s213 + $0x78] sm:$0xff]
                %228 = vst [vmem:[%s214 + $0x3c] sm:$0xff] %v227
                %v229 = vld [vmem:[%s213 + $0x80] sm:$0xff]
                %230 = vst [vmem:[%s214 + $0x44] sm:$0xff] %v229
                %v231 = vld [vmem:[%s213 + $0xa0] sm:$0xff]
                %232 = vst [vmem:[%s214 + $0x50] sm:$0xff] %v231
                %v233 = vld [vmem:[%s213 + $0xa8] sm:$0xff]
                %234 = vst [vmem:[%s214 + $0x58] sm:$0xff] %v233
                %v235 = vld [vmem:[%s213 + $0xc8] sm:$0xff]
                %236 = vst [vmem:[%s214 + $0x64] sm:$0xff] %v235
                %v237 = vld [vmem:[%s213 + $0xd0] sm:$0xff]
                %238 = vst [vmem:[%s214 + $0x6c] sm:$0xff] %v237
              $region33: #{cnn_discriminator_forward.2} parent=27 // loop_footer
                %s212 = sadd.s32 1, %s208
              $region34: #{cnn_discriminator_forward.2} parent=27 // loop_footer_branch
                %207 = sbr.rel target = $region30
              $region35: #{cnn_discriminator_forward.2} parent=27 // loop_exit
                _
              loop: start=0, step=1, limit=1
              $region36: #{cnn_discriminator_forward.2} parent=27 // loop_pre_header
                _
              $region37: #{cnn_discriminator_forward.2} parent=27 // loop_header
                %s241 = sphi 0, %s245
                %p242 = scmp.ge.s32.totalorder %s241, 1
                %s246 = sphi %s205, %s205
                %s247 = sphi %s206, %s206
              $region38: #{cnn_discriminator_forward.2} parent=27 // loop_header_branch
                %244 = sbr.rel (%p242) target = $region42
              $region39: #{cnn_discriminator_forward.2} parent=27 // loop_body
                %v248 = vld [vmem:[%s246] sm:$0xf]
                %249 = vst [vmem:[%s247] sm:$0xf] %v248
                %v250 = vld [vmem:[%s246 + $0x28] sm:$0xf]
                %251 = vst [vmem:[%s247 + $0x14] sm:$0xf] %v250
                %v252 = vld [vmem:[%s246 + $0x50] sm:$0xf]
                %253 = vst [vmem:[%s247 + $0x28] sm:$0xf] %v252
                %v254 = vld [vmem:[%s246 + $0x78] sm:$0xf]
                %255 = vst [vmem:[%s247 + $0x3c] sm:$0xf] %v254
                %v256 = vld [vmem:[%s246 + $0xa0] sm:$0xf]
                %257 = vst [vmem:[%s247 + $0x50] sm:$0xf] %v256
                %v258 = vld [vmem:[%s246 + $0xc8] sm:$0xf]
                %259 = vst [vmem:[%s247 + $0x64] sm:$0xf] %v258
              $region40: #{cnn_discriminator_forward.2} parent=27 // loop_footer
                %s245 = sadd.s32 1, %s241
              $region41: #{cnn_discriminator_forward.2} parent=27 // loop_footer_branch
                %240 = sbr.rel target = $region37
              $region42: #{cnn_discriminator_forward.2} parent=27 // loop_exit
                _
            $region28: #{cnn_discriminator_forward.2} parent=23 // pred_fallthru
              _
          $region24: #{cnn_discriminator_forward.2} parent=19 // pred_fallthru
            _
          %260 = vnop
        $region20: #{cnn_discriminator_forward.2} parent=15 // pred_fallthru
          _
        // Predicated region
        $region43: #{cnn_discriminator_forward.2} parent=15 // pred_check
          %p261 = pneg %p81
        $region44: #{cnn_discriminator_forward.2} parent=15 // pred_check_branch
          %263 = sbr.rel (%p261) target = $region46
        $region45: #{cnn_discriminator_forward.2} parent=15 // pred_region
          %s264 = sand.u32 %s71, 1
          %s265 = scalar_lea.sflag [#allocation9], %s264
          %s266 = sand.u32 %s71, 1
          %s267 = smul.addr %s266, 2240
          %s268 = scalar_lea.vmem [#allocation8], %s267
          %s269 = sld [smem:[#allocation5 + %s27]]
          %s270 = sld [smem:[#allocation4 + %s27]]
          %s271 = smul.u32 80, %s269
          %s272 = smul.u32 7, %s270
          %s274 = ssub.s32 35840, 35840
          %275 = vsyncadd %s265, %s274
          %s276 = smul.addr %s271, 14
          %s277 = sadd.s32 %s272, %s276
          %s278 = smul.addr %s277, 64
          %s279 = scalar_lea.hbm %s4, %s278
          %s280 = sshll.u32 %s268, 4
          %s281 = int_to_ptr.vmem [resolvable:$true] %s280
          %286 = dma.hbm_to_vmem [thread:$0]  %s279, 35840, %s281, %s265, 896, 448, 28
        $region46: #{cnn_discriminator_forward.2} parent=15 // pred_fallthru
          _
        // Predicated region
        $region47: #{cnn_discriminator_forward.2} parent=15 // pred_check
          %p287 = pneg %p109
        $region48: #{cnn_discriminator_forward.2} parent=15 // pred_check_branch
          %289 = sbr.rel (%p287) target = $region50
        $region49: #{cnn_discriminator_forward.2} parent=15 // pred_region
          %s290 = sand.u32 %s27, 1
          %s291 = scalar_lea.sflag [#allocation11], %s290
          %s292 = sand.u32 %s99, 1
          %s293 = smul.addr %s292, 7
          %s294 = scalar_lea.vmem [#allocation10], %s293
          %s295 = sld [smem:[#allocation4 + %s27]]
          %s296 = smul.u32 7, %s295
          %s298 = ssub.s32 112, 112
          %299 = vsyncadd %s291, %s298
          %s300 = smul.addr %s296, 16
          %s301 = scalar_lea.hbm %s5, %s300
          %s303 = sshll.u32 %s294, 4
          %s304 = int_to_ptr.vmem [resolvable:$true] %s303
          %306 = dma.hbm_to_vmem [thread:$0]  %s301, 112, %s304, %s291
        $region50: #{cnn_discriminator_forward.2} parent=15 // pred_fallthru
          _
        // Predicated region
        $region51: #{cnn_discriminator_forward.2} parent=15 // pred_check
          %p307 = pneg %p137
        $region52: #{cnn_discriminator_forward.2} parent=15 // pred_check_branch
          %309 = sbr.rel (%p307) target = $region54
        $region53: #{cnn_discriminator_forward.2} parent=15 // pred_region
          %s310 = sand.u32 %s27, 1
          %s311 = scalar_lea.sflag [#allocation11], %s310
          %s312 = sand.u32 %s127, 1
          %s313 = smul.addr %s312, 7
          %s314 = scalar_lea.vmem [#allocation12], %s313
          %s315 = sld [smem:[#allocation4 + %s27]]
          %s316 = smul.u32 7, %s315
          %s318 = ssub.s32 112, 112
          %319 = vsyncadd %s311, %s318
          %s320 = smul.addr %s316, 16
          %s321 = scalar_lea.hbm %s6, %s320
          %s323 = sshll.u32 %s314, 4
          %s324 = int_to_ptr.vmem [resolvable:$true] %s323
          %326 = dma.hbm_to_vmem [thread:$0]  %s321, 112, %s324, %s311
        $region54: #{cnn_discriminator_forward.2} parent=15 // pred_fallthru
          _
      $region16: #{cnn_discriminator_forward.2} parent=5 // pred_fallthru
        _
      %p327 = scmp.le.s32.totalorder 1, %s27
      %p328 = scmp.lt.s32.totalorder %s27, 4
      %p329 = pnand %p327, %p328
      %p330 = pneg %p329
      // Predicated region
      $region55: #{cnn_discriminator_forward.2} parent=5 // pred_check
        _
      $region56: #{cnn_discriminator_forward.2} parent=5 // pred_check_branch
        %332 = sbr.rel (%p329) target = $region58
      $region57: #{cnn_discriminator_forward.2} parent=5 // pred_region
        %s333 = ssub.s32 %s27, 1
        %s334 = sand.u32 %s42, 1
        %s335 = sand.u32 %s42, 1
        %s336 = smul.addr %s335, 120
        %s337 = scalar_lea.vmem [#allocation7], %s336
        // Predicated region
        $region59: #{cnn_discriminator_forward.2} parent=57 // pred_check
          %p338 = pneg %p55
        $region60: #{cnn_discriminator_forward.2} parent=57 // pred_check_branch
          %340 = sbr.rel (%p338) target = $region62
        $region61: #{cnn_discriminator_forward.2} parent=57 // pred_region
          _
        $region62: #{cnn_discriminator_forward.2} parent=57 // pred_fallthru
          _
        %s341 = sand.u32 %s74, 1
        %s342 = scalar_lea.sflag [#allocation9], %s341
        %s343 = sand.u32 %s74, 1
        %s344 = smul.addr %s343, 2240
        %s345 = scalar_lea.vmem [#allocation8], %s344
        // Predicated region
        $region63: #{cnn_discriminator_forward.2} parent=57 // pred_check
          %p346 = pneg %p87
        $region64: #{cnn_discriminator_forward.2} parent=57 // pred_check_branch
          %348 = sbr.rel (%p346) target = $region66
        $region65: #{cnn_discriminator_forward.2} parent=57 // pred_region
          %349 = dma.done %s342, 35840
        $region66: #{cnn_discriminator_forward.2} parent=57 // pred_fallthru
          _
        %s350 = sand.u32 %s32, 1
        %s351 = scalar_lea.sflag [#allocation11], %s350
        %s352 = sand.u32 %s102, 1
        %s353 = smul.addr %s352, 7
        %s354 = scalar_lea.vmem [#allocation10], %s353
        // Predicated region
        $region67: #{cnn_discriminator_forward.2} parent=57 // pred_check
          %p355 = pneg %p115
        $region68: #{cnn_discriminator_forward.2} parent=57 // pred_check_branch
          %357 = sbr.rel (%p355) target = $region70
        $region69: #{cnn_discriminator_forward.2} parent=57 // pred_region
          %358 = dma.done %s351, 112
        $region70: #{cnn_discriminator_forward.2} parent=57 // pred_fallthru
          _
        %s359 = sand.u32 %s32, 1
        %s360 = scalar_lea.sflag [#allocation11], %s359
        %s361 = sand.u32 %s130, 1
        %s362 = smul.addr %s361, 7
        %s363 = scalar_lea.vmem [#allocation12], %s362
        // Predicated region
        $region71: #{cnn_discriminator_forward.2} parent=57 // pred_check
          %p364 = pneg %p143
        $region72: #{cnn_discriminator_forward.2} parent=57 // pred_check_branch
          %366 = sbr.rel (%p364) target = $region74
        $region73: #{cnn_discriminator_forward.2} parent=57 // pred_region
          %367 = dma.done %s360, 112
        $region74: #{cnn_discriminator_forward.2} parent=57 // pred_fallthru
          _
        %s368 = sand.u32 %s42, 1
        %s369 = sand.u32 %s42, 1
        %s370 = smul.addr %s369, 120
        %s371 = scalar_lea.vmem [#allocation7], %s370
        %p372 = pneg %p55
        %p373 = pneg %p52
        %s374 = sand.u32 %s74, 1
        %s375 = scalar_lea.sflag [#allocation9], %s374
        %s376 = sand.u32 %s74, 1
        %s377 = smul.addr %s376, 2240
        %s378 = scalar_lea.vmem [#allocation8], %s377
        %p379 = pneg %p87
        %p380 = pneg %p84
        %s381 = sand.u32 %s32, 1
        %s382 = scalar_lea.sflag [#allocation11], %s381
        %s383 = sand.u32 %s102, 1
        %s384 = smul.addr %s383, 7
        %s385 = scalar_lea.vmem [#allocation10], %s384
        %p386 = pneg %p115
        %p387 = pneg %p112
        %s388 = sand.u32 %s32, 1
        %s389 = scalar_lea.sflag [#allocation11], %s388
        %s390 = sand.u32 %s130, 1
        %s391 = smul.addr %s390, 7
        %s392 = scalar_lea.vmem [#allocation12], %s391
        %p393 = pneg %p143
        %p394 = pneg %p140
        %p395 = pneg %p171
        %p396 = pneg %p168
        %s397 = sld [smem:[#allocation4 + %s32]]
        %s398 = smul.u32 7, %s397
        %p399 = scmp.lt.s32.totalorder %s398, 13
        %s400 = scalar_select %p399, %s398, 13
        %s401 = smul.addr %s400, 2
        %s402 = scalar_lea.vmem %s7, %s401
        %s403 = sld [smem:[#allocation5 + %s32]]
        %s404 = smul.u32 5, %s403
        %s405 = sld [smem:[#allocation5 + %s32]]
        %s406 = sld [smem:[#allocation4 + %s32]]
        %s407 = smul.u32 80, %s405
        %s408 = smul.u32 7, %s406
        %s409 = sld [smem:[#allocation4 + %s32]]
        %s410 = smul.u32 7, %s409
        %s411 = sld [smem:[#allocation4 + %s32]]
        %s412 = smul.u32 7, %s411
        %s413 = sld [smem:[#allocation4 + %s32]]
        %s414 = smul.u32 7, %s413
        %p415 = scmp.lt.s32.totalorder %s414, 13
        %s416 = scalar_select %p415, %s414, 13
        %s417 = smul.addr %s416, 2
        %s418 = scalar_lea.vmem %s7, %s417
        %s419 = sld [smem:[#allocation4 + %s32]]
        %s420 = smul.u32 7, %s419
        %s422 = sld [smem:[#allocation5 + %s32]]
        %p423 = scmp.eq.s32.totalorder %s422, 0
        // Predicated region
        $region75: #{cnn_discriminator_forward.2} parent=57 // pred_check
          %p424 = pneg %p423
        $region76: #{cnn_discriminator_forward.2} parent=57 // pred_check_branch
          %426 = sbr.rel (%p424) target = $region78
        $region77: #{cnn_discriminator_forward.2} parent=57 // pred_region
          %427 = vst [vmem:[#allocation2] sm:$0xff] 0.0
          %428 = vst [vmem:[#allocation2 + $0x8] sm:$0xff] 0.0
          %429 = vst [vmem:[#allocation2 + $0x10] sm:$0xff] 0.0
          %430 = vst [vmem:[#allocation2 + $0x18] sm:$0xff] 0.0
          %431 = vst [vmem:[#allocation2 + $0x20] sm:$0xff] 0.0
          %432 = vst [vmem:[#allocation2 + $0x28] sm:$0xff] 0.0
          %433 = vst [vmem:[#allocation2 + $0x30] sm:$0xff] 0.0
          %434 = vst [vmem:[#allocation2 + $0x38] sm:$0xff] 0.0
          %435 = vst [vmem:[#allocation2 + $0x40] sm:$0xff] 0.0
          %436 = vst [vmem:[#allocation2 + $0x48] sm:$0xff] 0.0
          %437 = vst [vmem:[#allocation2 + $0x50] sm:$0xff] 0.0
          %438 = vst [vmem:[#allocation2 + $0x58] sm:$0xff] 0.0
          %439 = vst [vmem:[#allocation2 + $0x60] sm:$0xff] 0.0
          %440 = vst [vmem:[#allocation2 + $0x68] sm:$0xff] 0.0
          %441 = vst [vmem:[#allocation2 + $0x70] sm:$0xff] 0.0
          %442 = vst [vmem:[#allocation2 + $0x78] sm:$0xff] 0.0
          %443 = vst [vmem:[#allocation2 + $0x80] sm:$0xff] 0.0
          %444 = vst [vmem:[#allocation2 + $0x88] sm:$0xff] 0.0
          %445 = vst [vmem:[#allocation2 + $0x90] sm:$0xff] 0.0
          %446 = vst [vmem:[#allocation2 + $0x98] sm:$0xff] 0.0
          %447 = vst [vmem:[#allocation2 + $0xa0] sm:$0xff] 0.0
          %448 = vst [vmem:[#allocation2 + $0xa8] sm:$0xff] 0.0
          %449 = vst [vmem:[#allocation2 + $0xb0] sm:$0xff] 0.0
          %450 = vst [vmem:[#allocation2 + $0xb8] sm:$0xff] 0.0
          %451 = vst [vmem:[#allocation2 + $0xc0] sm:$0xff] 0.0
          %452 = vst [vmem:[#allocation2 + $0xc8] sm:$0xff] 0.0
          %453 = vst [vmem:[#allocation2 + $0xd0] sm:$0xff] 0.0
          %454 = vst [vmem:[#allocation2 + $0xd8] sm:$0xff] 0.0
          %455 = vst [vmem:[#allocation2 + $0xe0] sm:$0xff] 0.0
          %456 = vst [vmem:[#allocation2 + $0xe8] sm:$0xff] 0.0
          %457 = vst [vmem:[#allocation2 + $0xf0] sm:$0xff] 0.0
          %458 = vst [vmem:[#allocation2 + $0xf8] sm:$0xff] 0.0
          %459 = vst [vmem:[#allocation2 + $0x100] sm:$0xff] 0.0
          %460 = vst [vmem:[#allocation2 + $0x108] sm:$0xff] 0.0
          %461 = vst [vmem:[#allocation2 + $0x110] sm:$0xff] 0.0
          %462 = vst [vmem:[#allocation2 + $0x118] sm:$0xff] 0.0
          %463 = vst [vmem:[#allocation2 + $0x120] sm:$0xff] 0.0
          %464 = vst [vmem:[#allocation2 + $0x128] sm:$0xff] 0.0
          %465 = vst [vmem:[#allocation2 + $0x130] sm:$0xff] 0.0
          %466 = vst [vmem:[#allocation2 + $0x138] sm:$0xff] 0.0
          %467 = vst [vmem:[#allocation2 + $0x140] sm:$0xff] 0.0
          %468 = vst [vmem:[#allocation2 + $0x148] sm:$0xff] 0.0
        $region78: #{cnn_discriminator_forward.2} parent=57 // pred_fallthru
          _
        %v469 = vld [vmem:[#allocation2] sm:$0xff]
        %v470 = vld [vmem:[#allocation2 + $0x8] sm:$0xff]
        %v471 = vld [vmem:[#allocation2 + $0x10] sm:$0xff]
        %v472 = vld [vmem:[#allocation2 + $0x18] sm:$0xff]
        %v473 = vld [vmem:[#allocation2 + $0x20] sm:$0xff]
        %v474 = vld [vmem:[#allocation2 + $0x28] sm:$0xff]
        %v475 = vld [vmem:[#allocation2 + $0x30] sm:$0xff]
        %v476 = vld [vmem:[#allocation2 + $0x38] sm:$0xff]
        %v477 = vld [vmem:[#allocation2 + $0x40] sm:$0xff]
        %v478 = vld [vmem:[#allocation2 + $0x48] sm:$0xff]
        %v479 = vld [vmem:[#allocation2 + $0x50] sm:$0xff]
        %v480 = vld [vmem:[#allocation2 + $0x58] sm:$0xff]
        %v481 = vld [vmem:[#allocation2 + $0x60] sm:$0xff]
        %v482 = vld [vmem:[#allocation2 + $0x68] sm:$0xff]
        %v483 = vld [vmem:[#allocation2 + $0x70] sm:$0xff]
        %v484 = vld [vmem:[#allocation2 + $0x78] sm:$0xff]
        %v485 = vld [vmem:[#allocation2 + $0x80] sm:$0xff]
        %v486 = vld [vmem:[#allocation2 + $0x88] sm:$0xff]
        %v487 = vld [vmem:[#allocation2 + $0x90] sm:$0xff]
        %v488 = vld [vmem:[#allocation2 + $0x98] sm:$0xff]
        %v489 = vld [vmem:[#allocation2 + $0xa0] sm:$0xff]
        %v490 = vld [vmem:[#allocation2 + $0xa8] sm:$0xff]
        %v491 = vld [vmem:[#allocation2 + $0xb0] sm:$0xff]
        %v492 = vld [vmem:[#allocation2 + $0xb8] sm:$0xff]
        %v493 = vld [vmem:[#allocation2 + $0xc0] sm:$0xff]
        %v494 = vld [vmem:[#allocation2 + $0xc8] sm:$0xff]
        %v495 = vld [vmem:[#allocation2 + $0xd0] sm:$0xff]
        %v496 = vld [vmem:[#allocation2 + $0xd8] sm:$0xff]
        %v497 = vld [vmem:[#allocation2 + $0xe0] sm:$0xff]
        %v498 = vld [vmem:[#allocation2 + $0xe8] sm:$0xff]
        %v499 = vld [vmem:[#allocation2 + $0xf0] sm:$0xff]
        %v500 = vld [vmem:[#allocation2 + $0xf8] sm:$0xff]
        %v501 = vld [vmem:[#allocation2 + $0x100] sm:$0xff]
        %v502 = vld [vmem:[#allocation2 + $0x108] sm:$0xff]
        %v503 = vld [vmem:[#allocation2 + $0x110] sm:$0xff]
        %v504 = vld [vmem:[#allocation2 + $0x118] sm:$0xff]
        %v505 = vld [vmem:[#allocation2 + $0x120] sm:$0xff]
        %v506 = vld [vmem:[#allocation2 + $0x128] sm:$0xff]
        %v507 = vld [vmem:[#allocation2 + $0x130] sm:$0xff]
        %v508 = vld [vmem:[#allocation2 + $0x138] sm:$0xff]
        %v509 = vld [vmem:[#allocation2 + $0x140] sm:$0xff]
        %v510 = vld [vmem:[#allocation2 + $0x148] sm:$0xff]
        %v511 = vld [vmem:[%s337] sm:$0xff]
        %v512 = vld [vmem:[%s337 + $0x8] sm:$0xff]
        %v513 = vld [vmem:[%s337 + $0x10] sm:$0xf]
        %v514 = vld [vmem:[%s337 + $0x14] sm:$0xff]
        %v515 = vld [vmem:[%s337 + $0x1c] sm:$0xff]
        %v516 = vld [vmem:[%s337 + $0x24] sm:$0xf]
        %v517 = vld [vmem:[%s337 + $0x28] sm:$0xff]
        %v518 = vld [vmem:[%s337 + $0x30] sm:$0xff]
        %v519 = vld [vmem:[%s337 + $0x38] sm:$0xf]
        %v520 = vld [vmem:[%s337 + $0x3c] sm:$0xff]
        %v521 = vld [vmem:[%s337 + $0x44] sm:$0xff]
        %v522 = vld [vmem:[%s337 + $0x4c] sm:$0xf]
        %v523 = vld [vmem:[%s337 + $0x50] sm:$0xff]
        %v524 = vld [vmem:[%s337 + $0x58] sm:$0xff]
        %v525 = vld [vmem:[%s337 + $0x60] sm:$0xf]
        %v526 = vld [vmem:[%s337 + $0x64] sm:$0xff]
        %v527 = vld [vmem:[%s337 + $0x6c] sm:$0xff]
        %v528 = vld [vmem:[%s337 + $0x74] sm:$0xf]
        %v529 = vld [vmem:[%s345] sm:$0xff]
        %v530 = vld [vmem:[%s345 + $0x8] sm:$0xff]
        %v531 = vld [vmem:[%s345 + $0x10] sm:$0xff]
        %v532 = vld [vmem:[%s345 + $0x18] sm:$0xf]
        %v533 = vld [vmem:[%s345 + $0x1c] sm:$0xff]
        %v534 = vld [vmem:[%s345 + $0x24] sm:$0xff]
        %v535 = vld [vmem:[%s345 + $0x2c] sm:$0xff]
        %v536 = vld [vmem:[%s345 + $0x34] sm:$0xf]
        %v537 = vld [vmem:[%s345 + $0x38] sm:$0xff]
        %v538 = vld [vmem:[%s345 + $0x40] sm:$0xff]
        %v539 = vld [vmem:[%s345 + $0x48] sm:$0xff]
        %v540 = vld [vmem:[%s345 + $0x50] sm:$0xf]
        %v541 = vld [vmem:[%s345 + $0x54] sm:$0xff]
        %v542 = vld [vmem:[%s345 + $0x5c] sm:$0xff]
        %v543 = vld [vmem:[%s345 + $0x64] sm:$0xff]
        %v544 = vld [vmem:[%s345 + $0x6c] sm:$0xf]
        %v545 = vld [vmem:[%s345 + $0x70] sm:$0xff]
        %v546 = vld [vmem:[%s345 + $0x78] sm:$0xff]
        %v547 = vld [vmem:[%s345 + $0x80] sm:$0xff]
        %v548 = vld [vmem:[%s345 + $0x88] sm:$0xf]
        %v549 = vld [vmem:[%s345 + $0x8c] sm:$0xff]
        %v550 = vld [vmem:[%s345 + $0x94] sm:$0xff]
        %v551 = vld [vmem:[%s345 + $0x9c] sm:$0xff]
        %v552 = vld [vmem:[%s345 + $0xa4] sm:$0xf]
        %v553 = vld [vmem:[%s345 + $0xa8] sm:$0xff]
        %v554 = vld [vmem:[%s345 + $0xb0] sm:$0xff]
        %v555 = vld [vmem:[%s345 + $0xb8] sm:$0xff]
        %v556 = vld [vmem:[%s345 + $0xc0] sm:$0xf]
        %v557 = vld [vmem:[%s345 + $0xc4] sm:$0xff]
        %v558 = vld [vmem:[%s345 + $0xcc] sm:$0xff]
        %v559 = vld [vmem:[%s345 + $0xd4] sm:$0xff]
        %v560 = vld [vmem:[%s345 + $0xdc] sm:$0xf]
        %v561 = vld [vmem:[%s345 + $0xe0] sm:$0xff]
        %v562 = vld [vmem:[%s345 + $0xe8] sm:$0xff]
        %v563 = vld [vmem:[%s345 + $0xf0] sm:$0xff]
        %v564 = vld [vmem:[%s345 + $0xf8] sm:$0xf]
        %v565 = vld [vmem:[%s345 + $0xfc] sm:$0xff]
        %v566 = vld [vmem:[%s345 + $0x104] sm:$0xff]
        %v567 = vld [vmem:[%s345 + $0x10c] sm:$0xff]
        %v568 = vld [vmem:[%s345 + $0x114] sm:$0xf]
        %v569 = vld [vmem:[%s345 + $0x118] sm:$0xff]
        %v570 = vld [vmem:[%s345 + $0x120] sm:$0xff]
        %v571 = vld [vmem:[%s345 + $0x128] sm:$0xff]
        %v572 = vld [vmem:[%s345 + $0x130] sm:$0xf]
        %v573 = vld [vmem:[%s345 + $0x134] sm:$0xff]
        %v574 = vld [vmem:[%s345 + $0x13c] sm:$0xff]
        %v575 = vld [vmem:[%s345 + $0x144] sm:$0xff]
        %v576 = vld [vmem:[%s345 + $0x14c] sm:$0xf]
        %v577 = vld [vmem:[%s345 + $0x150] sm:$0xff]
        %v578 = vld [vmem:[%s345 + $0x158] sm:$0xff]
        %v579 = vld [vmem:[%s345 + $0x160] sm:$0xff]
        %v580 = vld [vmem:[%s345 + $0x168] sm:$0xf]
        %v581 = vld [vmem:[%s345 + $0x16c] sm:$0xff]
        %v582 = vld [vmem:[%s345 + $0x174] sm:$0xff]
        %v583 = vld [vmem:[%s345 + $0x17c] sm:$0xff]
        %v584 = vld [vmem:[%s345 + $0x184] sm:$0xf]
        %v585 = vld [vmem:[%s345 + $0x188] sm:$0xff]
        %v586 = vld [vmem:[%s345 + $0x190] sm:$0xff]
        %v587 = vld [vmem:[%s345 + $0x198] sm:$0xff]
        %v588 = vld [vmem:[%s345 + $0x1a0] sm:$0xf]
        %v589 = vld [vmem:[%s345 + $0x1a4] sm:$0xff]
        %v590 = vld [vmem:[%s345 + $0x1ac] sm:$0xff]
        %v591 = vld [vmem:[%s345 + $0x1b4] sm:$0xff]
        %v592 = vld [vmem:[%s345 + $0x1bc] sm:$0xf]
        %v593 = vld [vmem:[%s345 + $0x1c0] sm:$0xff]
        %v594 = vld [vmem:[%s345 + $0x1c8] sm:$0xff]
        %v595 = vld [vmem:[%s345 + $0x1d0] sm:$0xff]
        %v596 = vld [vmem:[%s345 + $0x1d8] sm:$0xf]
        %v597 = vld [vmem:[%s345 + $0x1dc] sm:$0xff]
        %v598 = vld [vmem:[%s345 + $0x1e4] sm:$0xff]
        %v599 = vld [vmem:[%s345 + $0x1ec] sm:$0xff]
        %v600 = vld [vmem:[%s345 + $0x1f4] sm:$0xf]
        %v601 = vld [vmem:[%s345 + $0x1f8] sm:$0xff]
        %v602 = vld [vmem:[%s345 + $0x200] sm:$0xff]
        %v603 = vld [vmem:[%s345 + $0x208] sm:$0xff]
        %v604 = vld [vmem:[%s345 + $0x210] sm:$0xf]
        %v605 = vld [vmem:[%s345 + $0x214] sm:$0xff]
        %v606 = vld [vmem:[%s345 + $0x21c] sm:$0xff]
        %v607 = vld [vmem:[%s345 + $0x224] sm:$0xff]
        %v608 = vld [vmem:[%s345 + $0x22c] sm:$0xf]
        %v609 = vld [vmem:[%s345 + $0x230] sm:$0xff]
        %v610 = vld [vmem:[%s345 + $0x238] sm:$0xff]
        %v611 = vld [vmem:[%s345 + $0x240] sm:$0xff]
        %v612 = vld [vmem:[%s345 + $0x248] sm:$0xf]
        %v613 = vld [vmem:[%s345 + $0x24c] sm:$0xff]
        %v614 = vld [vmem:[%s345 + $0x254] sm:$0xff]
        %v615 = vld [vmem:[%s345 + $0x25c] sm:$0xff]
        %v616 = vld [vmem:[%s345 + $0x264] sm:$0xf]
        %v617 = vld [vmem:[%s345 + $0x268] sm:$0xff]
        %v618 = vld [vmem:[%s345 + $0x270] sm:$0xff]
        %v619 = vld [vmem:[%s345 + $0x278] sm:$0xff]
        %v620 = vld [vmem:[%s345 + $0x280] sm:$0xf]
        %v621 = vld [vmem:[%s345 + $0x284] sm:$0xff]
        %v622 = vld [vmem:[%s345 + $0x28c] sm:$0xff]
        %v623 = vld [vmem:[%s345 + $0x294] sm:$0xff]
        %v624 = vld [vmem:[%s345 + $0x29c] sm:$0xf]
        %v625 = vld [vmem:[%s345 + $0x2a0] sm:$0xff]
        %v626 = vld [vmem:[%s345 + $0x2a8] sm:$0xff]
        %v627 = vld [vmem:[%s345 + $0x2b0] sm:$0xff]
        %v628 = vld [vmem:[%s345 + $0x2b8] sm:$0xf]
        %v629 = vld [vmem:[%s345 + $0x2bc] sm:$0xff]
        %v630 = vld [vmem:[%s345 + $0x2c4] sm:$0xff]
        %v631 = vld [vmem:[%s345 + $0x2cc] sm:$0xff]
        %v632 = vld [vmem:[%s345 + $0x2d4] sm:$0xf]
        %v633 = vld [vmem:[%s345 + $0x2d8] sm:$0xff]
        %v634 = vld [vmem:[%s345 + $0x2e0] sm:$0xff]
        %v635 = vld [vmem:[%s345 + $0x2e8] sm:$0xff]
        %v636 = vld [vmem:[%s345 + $0x2f0] sm:$0xf]
        %v637 = vld [vmem:[%s345 + $0x2f4] sm:$0xff]
        %v638 = vld [vmem:[%s345 + $0x2fc] sm:$0xff]
        %v639 = vld [vmem:[%s345 + $0x304] sm:$0xff]
        %v640 = vld [vmem:[%s345 + $0x30c] sm:$0xf]
        %v641 = vld [vmem:[%s345 + $0x310] sm:$0xff]
        %v642 = vld [vmem:[%s345 + $0x318] sm:$0xff]
        %v643 = vld [vmem:[%s345 + $0x320] sm:$0xff]
        %v644 = vld [vmem:[%s345 + $0x328] sm:$0xf]
        %v645 = vld [vmem:[%s345 + $0x32c] sm:$0xff]
        %v646 = vld [vmem:[%s345 + $0x334] sm:$0xff]
        %v647 = vld [vmem:[%s345 + $0x33c] sm:$0xff]
        %v648 = vld [vmem:[%s345 + $0x344] sm:$0xf]
        %v649 = vld [vmem:[%s345 + $0x348] sm:$0xff]
        %v650 = vld [vmem:[%s345 + $0x350] sm:$0xff]
        %v651 = vld [vmem:[%s345 + $0x358] sm:$0xff]
        %v652 = vld [vmem:[%s345 + $0x360] sm:$0xf]
        %v653 = vld [vmem:[%s345 + $0x364] sm:$0xff]
        %v654 = vld [vmem:[%s345 + $0x36c] sm:$0xff]
        %v655 = vld [vmem:[%s345 + $0x374] sm:$0xff]
        %v656 = vld [vmem:[%s345 + $0x37c] sm:$0xf]
        %v657 = vld [vmem:[%s345 + $0x380] sm:$0xff]
        %v658 = vld [vmem:[%s345 + $0x388] sm:$0xff]
        %v659 = vld [vmem:[%s345 + $0x390] sm:$0xff]
        %v660 = vld [vmem:[%s345 + $0x398] sm:$0xf]
        %v661 = vld [vmem:[%s345 + $0x39c] sm:$0xff]
        %v662 = vld [vmem:[%s345 + $0x3a4] sm:$0xff]
        %v663 = vld [vmem:[%s345 + $0x3ac] sm:$0xff]
        %v664 = vld [vmem:[%s345 + $0x3b4] sm:$0xf]
        %v665 = vld [vmem:[%s345 + $0x3b8] sm:$0xff]
        %v666 = vld [vmem:[%s345 + $0x3c0] sm:$0xff]
        %v667 = vld [vmem:[%s345 + $0x3c8] sm:$0xff]
        %v668 = vld [vmem:[%s345 + $0x3d0] sm:$0xf]
        %v669 = vld [vmem:[%s345 + $0x3d4] sm:$0xff]
        %v670 = vld [vmem:[%s345 + $0x3dc] sm:$0xff]
        %v671 = vld [vmem:[%s345 + $0x3e4] sm:$0xff]
        %v672 = vld [vmem:[%s345 + $0x3ec] sm:$0xf]
        %v673 = vld [vmem:[%s345 + $0x3f0] sm:$0xff]
        %v674 = vld [vmem:[%s345 + $0x3f8] sm:$0xff]
        %v675 = vld [vmem:[%s345 + $0x400] sm:$0xff]
        %v676 = vld [vmem:[%s345 + $0x408] sm:$0xf]
        %v677 = vld [vmem:[%s345 + $0x40c] sm:$0xff]
        %v678 = vld [vmem:[%s345 + $0x414] sm:$0xff]
        %v679 = vld [vmem:[%s345 + $0x41c] sm:$0xff]
        %v680 = vld [vmem:[%s345 + $0x424] sm:$0xf]
        %v681 = vld [vmem:[%s345 + $0x428] sm:$0xff]
        %v682 = vld [vmem:[%s345 + $0x430] sm:$0xff]
        %v683 = vld [vmem:[%s345 + $0x438] sm:$0xff]
        %v684 = vld [vmem:[%s345 + $0x440] sm:$0xf]
        %v685 = vld [vmem:[%s345 + $0x444] sm:$0xff]
        %v686 = vld [vmem:[%s345 + $0x44c] sm:$0xff]
        %v687 = vld [vmem:[%s345 + $0x454] sm:$0xff]
        %v688 = vld [vmem:[%s345 + $0x45c] sm:$0xf]
        %v689 = vld [vmem:[%s345 + $0x460] sm:$0xff]
        %v690 = vld [vmem:[%s345 + $0x468] sm:$0xff]
        %v691 = vld [vmem:[%s345 + $0x470] sm:$0xff]
        %v692 = vld [vmem:[%s345 + $0x478] sm:$0xf]
        %v693 = vld [vmem:[%s345 + $0x47c] sm:$0xff]
        %v694 = vld [vmem:[%s345 + $0x484] sm:$0xff]
        %v695 = vld [vmem:[%s345 + $0x48c] sm:$0xff]
        %v696 = vld [vmem:[%s345 + $0x494] sm:$0xf]
        %v697 = vld [vmem:[%s345 + $0x498] sm:$0xff]
        %v698 = vld [vmem:[%s345 + $0x4a0] sm:$0xff]
        %v699 = vld [vmem:[%s345 + $0x4a8] sm:$0xff]
        %v700 = vld [vmem:[%s345 + $0x4b0] sm:$0xf]
        %v701 = vld [vmem:[%s345 + $0x4b4] sm:$0xff]
        %v702 = vld [vmem:[%s345 + $0x4bc] sm:$0xff]
        %v703 = vld [vmem:[%s345 + $0x4c4] sm:$0xff]
        %v704 = vld [vmem:[%s345 + $0x4cc] sm:$0xf]
        %v705 = vld [vmem:[%s345 + $0x4d0] sm:$0xff]
        %v706 = vld [vmem:[%s345 + $0x4d8] sm:$0xff]
        %v707 = vld [vmem:[%s345 + $0x4e0] sm:$0xff]
        %v708 = vld [vmem:[%s345 + $0x4e8] sm:$0xf]
        %v709 = vld [vmem:[%s345 + $0x4ec] sm:$0xff]
        %v710 = vld [vmem:[%s345 + $0x4f4] sm:$0xff]
        %v711 = vld [vmem:[%s345 + $0x4fc] sm:$0xff]
        %v712 = vld [vmem:[%s345 + $0x504] sm:$0xf]
        %v713 = vld [vmem:[%s345 + $0x508] sm:$0xff]
        %v714 = vld [vmem:[%s345 + $0x510] sm:$0xff]
        %v715 = vld [vmem:[%s345 + $0x518] sm:$0xff]
        %v716 = vld [vmem:[%s345 + $0x520] sm:$0xf]
        %v717 = vld [vmem:[%s345 + $0x524] sm:$0xff]
        %v718 = vld [vmem:[%s345 + $0x52c] sm:$0xff]
        %v719 = vld [vmem:[%s345 + $0x534] sm:$0xff]
        %v720 = vld [vmem:[%s345 + $0x53c] sm:$0xf]
        %v721 = vld [vmem:[%s345 + $0x540] sm:$0xff]
        %v722 = vld [vmem:[%s345 + $0x548] sm:$0xff]
        %v723 = vld [vmem:[%s345 + $0x550] sm:$0xff]
        %v724 = vld [vmem:[%s345 + $0x558] sm:$0xf]
        %v725 = vld [vmem:[%s345 + $0x55c] sm:$0xff]
        %v726 = vld [vmem:[%s345 + $0x564] sm:$0xff]
        %v727 = vld [vmem:[%s345 + $0x56c] sm:$0xff]
        %v728 = vld [vmem:[%s345 + $0x574] sm:$0xf]
        %v729 = vld [vmem:[%s345 + $0x578] sm:$0xff]
        %v730 = vld [vmem:[%s345 + $0x580] sm:$0xff]
        %v731 = vld [vmem:[%s345 + $0x588] sm:$0xff]
        %v732 = vld [vmem:[%s345 + $0x590] sm:$0xf]
        %v733 = vld [vmem:[%s345 + $0x594] sm:$0xff]
        %v734 = vld [vmem:[%s345 + $0x59c] sm:$0xff]
        %v735 = vld [vmem:[%s345 + $0x5a4] sm:$0xff]
        %v736 = vld [vmem:[%s345 + $0x5ac] sm:$0xf]
        %v737 = vld [vmem:[%s345 + $0x5b0] sm:$0xff]
        %v738 = vld [vmem:[%s345 + $0x5b8] sm:$0xff]
        %v739 = vld [vmem:[%s345 + $0x5c0] sm:$0xff]
        %v740 = vld [vmem:[%s345 + $0x5c8] sm:$0xf]
        %v741 = vld [vmem:[%s345 + $0x5cc] sm:$0xff]
        %v742 = vld [vmem:[%s345 + $0x5d4] sm:$0xff]
        %v743 = vld [vmem:[%s345 + $0x5dc] sm:$0xff]
        %v744 = vld [vmem:[%s345 + $0x5e4] sm:$0xf]
        %v745 = vld [vmem:[%s345 + $0x5e8] sm:$0xff]
        %v746 = vld [vmem:[%s345 + $0x5f0] sm:$0xff]
        %v747 = vld [vmem:[%s345 + $0x5f8] sm:$0xff]
        %v748 = vld [vmem:[%s345 + $0x600] sm:$0xf]
        %v749 = vld [vmem:[%s345 + $0x604] sm:$0xff]
        %v750 = vld [vmem:[%s345 + $0x60c] sm:$0xff]
        %v751 = vld [vmem:[%s345 + $0x614] sm:$0xff]
        %v752 = vld [vmem:[%s345 + $0x61c] sm:$0xf]
        %v753 = vld [vmem:[%s345 + $0x620] sm:$0xff]
        %v754 = vld [vmem:[%s345 + $0x628] sm:$0xff]
        %v755 = vld [vmem:[%s345 + $0x630] sm:$0xff]
        %v756 = vld [vmem:[%s345 + $0x638] sm:$0xf]
        %v757 = vld [vmem:[%s345 + $0x63c] sm:$0xff]
        %v758 = vld [vmem:[%s345 + $0x644] sm:$0xff]
        %v759 = vld [vmem:[%s345 + $0x64c] sm:$0xff]
        %v760 = vld [vmem:[%s345 + $0x654] sm:$0xf]
        %v761 = vld [vmem:[%s345 + $0x658] sm:$0xff]
        %v762 = vld [vmem:[%s345 + $0x660] sm:$0xff]
        %v763 = vld [vmem:[%s345 + $0x668] sm:$0xff]
        %v764 = vld [vmem:[%s345 + $0x670] sm:$0xf]
        %v765 = vld [vmem:[%s345 + $0x674] sm:$0xff]
        %v766 = vld [vmem:[%s345 + $0x67c] sm:$0xff]
        %v767 = vld [vmem:[%s345 + $0x684] sm:$0xff]
        %v768 = vld [vmem:[%s345 + $0x68c] sm:$0xf]
        %v769 = vld [vmem:[%s345 + $0x690] sm:$0xff]
        %v770 = vld [vmem:[%s345 + $0x698] sm:$0xff]
        %v771 = vld [vmem:[%s345 + $0x6a0] sm:$0xff]
        %v772 = vld [vmem:[%s345 + $0x6a8] sm:$0xf]
        %v773 = vld [vmem:[%s345 + $0x6ac] sm:$0xff]
        %v774 = vld [vmem:[%s345 + $0x6b4] sm:$0xff]
        %v775 = vld [vmem:[%s345 + $0x6bc] sm:$0xff]
        %v776 = vld [vmem:[%s345 + $0x6c4] sm:$0xf]
        %v777 = vld [vmem:[%s345 + $0x6c8] sm:$0xff]
        %v778 = vld [vmem:[%s345 + $0x6d0] sm:$0xff]
        %v779 = vld [vmem:[%s345 + $0x6d8] sm:$0xff]
        %v780 = vld [vmem:[%s345 + $0x6e0] sm:$0xf]
        %v781 = vld [vmem:[%s345 + $0x6e4] sm:$0xff]
        %v782 = vld [vmem:[%s345 + $0x6ec] sm:$0xff]
        %v783 = vld [vmem:[%s345 + $0x6f4] sm:$0xff]
        %v784 = vld [vmem:[%s345 + $0x6fc] sm:$0xf]
        %v785 = vld [vmem:[%s345 + $0x700] sm:$0xff]
        %v786 = vld [vmem:[%s345 + $0x708] sm:$0xff]
        %v787 = vld [vmem:[%s345 + $0x710] sm:$0xff]
        %v788 = vld [vmem:[%s345 + $0x718] sm:$0xf]
        %v789 = vld [vmem:[%s345 + $0x71c] sm:$0xff]
        %v790 = vld [vmem:[%s345 + $0x724] sm:$0xff]
        %v791 = vld [vmem:[%s345 + $0x72c] sm:$0xff]
        %v792 = vld [vmem:[%s345 + $0x734] sm:$0xf]
        %v793 = vld [vmem:[%s345 + $0x738] sm:$0xff]
        %v794 = vld [vmem:[%s345 + $0x740] sm:$0xff]
        %v795 = vld [vmem:[%s345 + $0x748] sm:$0xff]
        %v796 = vld [vmem:[%s345 + $0x750] sm:$0xf]
        %v797 = vld [vmem:[%s345 + $0x754] sm:$0xff]
        %v798 = vld [vmem:[%s345 + $0x75c] sm:$0xff]
        %v799 = vld [vmem:[%s345 + $0x764] sm:$0xff]
        %v800 = vld [vmem:[%s345 + $0x76c] sm:$0xf]
        %v801 = vld [vmem:[%s345 + $0x770] sm:$0xff]
        %v802 = vld [vmem:[%s345 + $0x778] sm:$0xff]
        %v803 = vld [vmem:[%s345 + $0x780] sm:$0xff]
        %v804 = vld [vmem:[%s345 + $0x788] sm:$0xf]
        %v805 = vld [vmem:[%s345 + $0x78c] sm:$0xff]
        %v806 = vld [vmem:[%s345 + $0x794] sm:$0xff]
        %v807 = vld [vmem:[%s345 + $0x79c] sm:$0xff]
        %v808 = vld [vmem:[%s345 + $0x7a4] sm:$0xf]
        %v809 = vld [vmem:[%s345 + $0x7a8] sm:$0xff]
        %v810 = vld [vmem:[%s345 + $0x7b0] sm:$0xff]
        %v811 = vld [vmem:[%s345 + $0x7b8] sm:$0xff]
        %v812 = vld [vmem:[%s345 + $0x7c0] sm:$0xf]
        %v813 = vld [vmem:[%s345 + $0x7c4] sm:$0xff]
        %v814 = vld [vmem:[%s345 + $0x7cc] sm:$0xff]
        %v815 = vld [vmem:[%s345 + $0x7d4] sm:$0xff]
        %v816 = vld [vmem:[%s345 + $0x7dc] sm:$0xf]
        %v817 = vld [vmem:[%s345 + $0x7e0] sm:$0xff]
        %v818 = vld [vmem:[%s345 + $0x7e8] sm:$0xff]
        %v819 = vld [vmem:[%s345 + $0x7f0] sm:$0xff]
        %v820 = vld [vmem:[%s345 + $0x7f8] sm:$0xf]
        %v821 = vld [vmem:[%s345 + $0x7fc] sm:$0xff]
        %v822 = vld [vmem:[%s345 + $0x804] sm:$0xff]
        %v823 = vld [vmem:[%s345 + $0x80c] sm:$0xff]
        %v824 = vld [vmem:[%s345 + $0x814] sm:$0xf]
        %v825 = vld [vmem:[%s345 + $0x818] sm:$0xff]
        %v826 = vld [vmem:[%s345 + $0x820] sm:$0xff]
        %v827 = vld [vmem:[%s345 + $0x828] sm:$0xff]
        %v828 = vld [vmem:[%s345 + $0x830] sm:$0xf]
        %v829 = vld [vmem:[%s345 + $0x834] sm:$0xff]
        %v830 = vld [vmem:[%s345 + $0x83c] sm:$0xff]
        %v831 = vld [vmem:[%s345 + $0x844] sm:$0xff]
        %v832 = vld [vmem:[%s345 + $0x84c] sm:$0xf]
        %v833 = vld [vmem:[%s345 + $0x850] sm:$0xff]
        %v834 = vld [vmem:[%s345 + $0x858] sm:$0xff]
        %v835 = vld [vmem:[%s345 + $0x860] sm:$0xff]
        %v836 = vld [vmem:[%s345 + $0x868] sm:$0xf]
        %v837 = vld [vmem:[%s345 + $0x86c] sm:$0xff]
        %v838 = vld [vmem:[%s345 + $0x874] sm:$0xff]
        %v839 = vld [vmem:[%s345 + $0x87c] sm:$0xff]
        %v840 = vld [vmem:[%s345 + $0x884] sm:$0xf]
        %v841 = vld [vmem:[%s345 + $0x888] sm:$0xff]
        %v842 = vld [vmem:[%s345 + $0x890] sm:$0xff]
        %v843 = vld [vmem:[%s345 + $0x898] sm:$0xff]
        %v844 = vld [vmem:[%s345 + $0x8a0] sm:$0xf]
        %v845 = vld [vmem:[%s345 + $0x8a4] sm:$0xff]
        %v846 = vld [vmem:[%s345 + $0x8ac] sm:$0xff]
        %v847 = vld [vmem:[%s345 + $0x8b4] sm:$0xff]
        %v848 = vld [vmem:[%s345 + $0x8bc] sm:$0xf]
        %v867 = vunpack.c.l.b16 %v511
        %v868 = vunpack.c.h.b16 %v511
        %v869 = vunpack.c.l.b16 %v512
        %v870 = vunpack.c.h.b16 %v512
        %v871 = vunpack.c.l.b16 %v513
        %v872 = vunpack.c.l.b16 %v514
        %v873 = vunpack.c.h.b16 %v514
        %v874 = vunpack.c.l.b16 %v515
        %v875 = vunpack.c.h.b16 %v515
        %v876 = vunpack.c.l.b16 %v516
        %v877 = vunpack.c.l.b16 %v517
        %v878 = vunpack.c.h.b16 %v517
        %v879 = vunpack.c.l.b16 %v518
        %v880 = vunpack.c.h.b16 %v518
        %v881 = vunpack.c.l.b16 %v519
        %v882 = vunpack.c.l.b16 %v520
        %v883 = vunpack.c.h.b16 %v520
        %v884 = vunpack.c.l.b16 %v521
        %v885 = vunpack.c.h.b16 %v521
        %v886 = vunpack.c.l.b16 %v522
        %v887 = vunpack.c.l.b16 %v523
        %v888 = vunpack.c.h.b16 %v523
        %v889 = vunpack.c.l.b16 %v524
        %v890 = vunpack.c.h.b16 %v524
        %v891 = vunpack.c.l.b16 %v525
        %v892 = vunpack.c.l.b16 %v526
        %v893 = vunpack.c.h.b16 %v526
        %v894 = vunpack.c.l.b16 %v527
        %v895 = vunpack.c.h.b16 %v527
        %v896 = vunpack.c.l.b16 %v528
        %v897 = vpack.c.b16 %v872, %v867
        %v898 = vpack.c.b16 %v873, %v868
        %v899 = vpack.c.b16 %v874, %v869
        %v900 = vpack.c.b16 %v875, %v870
        %v901 = vpack.c.b16 %v876, %v871
        %v902 = vpack.c.b16 %v882, %v877
        %v903 = vpack.c.b16 %v883, %v878
        %v904 = vpack.c.b16 %v884, %v879
        %v905 = vpack.c.b16 %v885, %v880
        %v906 = vpack.c.b16 %v886, %v881
        %v907 = vpack.c.b16 %v892, %v887
        %v908 = vpack.c.b16 %v893, %v888
        %v909 = vpack.c.b16 %v894, %v889
        %v910 = vpack.c.b16 %v895, %v890
        %v911 = vpack.c.b16 %v896, %v891
        %v1247 = vunpack.c.l.b16 %v529
        %v1248 = vunpack.c.h.b16 %v529
        %v1249 = vunpack.c.l.b16 %v530
        %v1250 = vunpack.c.h.b16 %v530
        %v1251 = vunpack.c.l.b16 %v531
        %v1252 = vunpack.c.h.b16 %v531
        %v1253 = vunpack.c.l.b16 %v532
        %v1254 = vunpack.c.l.b16 %v533
        %v1255 = vunpack.c.h.b16 %v533
        %v1256 = vunpack.c.l.b16 %v534
        %v1257 = vunpack.c.h.b16 %v534
        %v1258 = vunpack.c.l.b16 %v535
        %v1259 = vunpack.c.h.b16 %v535
        %v1260 = vunpack.c.l.b16 %v536
        %v1261 = vunpack.c.l.b16 %v537
        %v1262 = vunpack.c.h.b16 %v537
        %v1263 = vunpack.c.l.b16 %v538
        %v1264 = vunpack.c.h.b16 %v538
        %v1265 = vunpack.c.l.b16 %v539
        %v1266 = vunpack.c.h.b16 %v539
        %v1267 = vunpack.c.l.b16 %v540
        %v1268 = vunpack.c.l.b16 %v541
        %v1269 = vunpack.c.h.b16 %v541
        %v1270 = vunpack.c.l.b16 %v542
        %v1271 = vunpack.c.h.b16 %v542
        %v1272 = vunpack.c.l.b16 %v543
        %v1273 = vunpack.c.h.b16 %v543
        %v1274 = vunpack.c.l.b16 %v544
        %v1275 = vunpack.c.l.b16 %v545
        %v1276 = vunpack.c.h.b16 %v545
        %v1277 = vunpack.c.l.b16 %v546
        %v1278 = vunpack.c.h.b16 %v546
        %v1279 = vunpack.c.l.b16 %v547
        %v1280 = vunpack.c.h.b16 %v547
        %v1281 = vunpack.c.l.b16 %v548
        %v1282 = vunpack.c.l.b16 %v549
        %v1283 = vunpack.c.h.b16 %v549
        %v1284 = vunpack.c.l.b16 %v550
        %v1285 = vunpack.c.h.b16 %v550
        %v1286 = vunpack.c.l.b16 %v551
        %v1287 = vunpack.c.h.b16 %v551
        %v1288 = vunpack.c.l.b16 %v552
        %v1289 = vunpack.c.l.b16 %v553
        %v1290 = vunpack.c.h.b16 %v553
        %v1291 = vunpack.c.l.b16 %v554
        %v1292 = vunpack.c.h.b16 %v554
        %v1293 = vunpack.c.l.b16 %v555
        %v1294 = vunpack.c.h.b16 %v555
        %v1295 = vunpack.c.l.b16 %v556
        %v1296 = vunpack.c.l.b16 %v557
        %v1297 = vunpack.c.h.b16 %v557
        %v1298 = vunpack.c.l.b16 %v558
        %v1299 = vunpack.c.h.b16 %v558
        %v1300 = vunpack.c.l.b16 %v559
        %v1301 = vunpack.c.h.b16 %v559
        %v1302 = vunpack.c.l.b16 %v560
        %v1303 = vunpack.c.l.b16 %v561
        %v1304 = vunpack.c.h.b16 %v561
        %v1305 = vunpack.c.l.b16 %v562
        %v1306 = vunpack.c.h.b16 %v562
        %v1307 = vunpack.c.l.b16 %v563
        %v1308 = vunpack.c.h.b16 %v563
        %v1309 = vunpack.c.l.b16 %v564
        %v1310 = vunpack.c.l.b16 %v565
        %v1311 = vunpack.c.h.b16 %v565
        %v1312 = vunpack.c.l.b16 %v566
        %v1313 = vunpack.c.h.b16 %v566
        %v1314 = vunpack.c.l.b16 %v567
        %v1315 = vunpack.c.h.b16 %v567
        %v1316 = vunpack.c.l.b16 %v568
        %v1317 = vunpack.c.l.b16 %v569
        %v1318 = vunpack.c.h.b16 %v569
        %v1319 = vunpack.c.l.b16 %v570
        %v1320 = vunpack.c.h.b16 %v570
        %v1321 = vunpack.c.l.b16 %v571
        %v1322 = vunpack.c.h.b16 %v571
        %v1323 = vunpack.c.l.b16 %v572
        %v1324 = vunpack.c.l.b16 %v573
        %v1325 = vunpack.c.h.b16 %v573
        %v1326 = vunpack.c.l.b16 %v574
        %v1327 = vunpack.c.h.b16 %v574
        %v1328 = vunpack.c.l.b16 %v575
        %v1329 = vunpack.c.h.b16 %v575
        %v1330 = vunpack.c.l.b16 %v576
        %v1331 = vunpack.c.l.b16 %v577
        %v1332 = vunpack.c.h.b16 %v577
        %v1333 = vunpack.c.l.b16 %v578
        %v1334 = vunpack.c.h.b16 %v578
        %v1335 = vunpack.c.l.b16 %v579
        %v1336 = vunpack.c.h.b16 %v579
        %v1337 = vunpack.c.l.b16 %v580
        %v1338 = vunpack.c.l.b16 %v581
        %v1339 = vunpack.c.h.b16 %v581
        %v1340 = vunpack.c.l.b16 %v582
        %v1341 = vunpack.c.h.b16 %v582
        %v1342 = vunpack.c.l.b16 %v583
        %v1343 = vunpack.c.h.b16 %v583
        %v1344 = vunpack.c.l.b16 %v584
        %v1345 = vunpack.c.l.b16 %v585
        %v1346 = vunpack.c.h.b16 %v585
        %v1347 = vunpack.c.l.b16 %v586
        %v1348 = vunpack.c.h.b16 %v586
        %v1349 = vunpack.c.l.b16 %v587
        %v1350 = vunpack.c.h.b16 %v587
        %v1351 = vunpack.c.l.b16 %v588
        %v1352 = vunpack.c.l.b16 %v589
        %v1353 = vunpack.c.h.b16 %v589
        %v1354 = vunpack.c.l.b16 %v590
        %v1355 = vunpack.c.h.b16 %v590
        %v1356 = vunpack.c.l.b16 %v591
        %v1357 = vunpack.c.h.b16 %v591
        %v1358 = vunpack.c.l.b16 %v592
        %v1359 = vunpack.c.l.b16 %v593
        %v1360 = vunpack.c.h.b16 %v593
        %v1361 = vunpack.c.l.b16 %v594
        %v1362 = vunpack.c.h.b16 %v594
        %v1363 = vunpack.c.l.b16 %v595
        %v1364 = vunpack.c.h.b16 %v595
        %v1365 = vunpack.c.l.b16 %v596
        %v1366 = vunpack.c.l.b16 %v597
        %v1367 = vunpack.c.h.b16 %v597
        %v1368 = vunpack.c.l.b16 %v598
        %v1369 = vunpack.c.h.b16 %v598
        %v1370 = vunpack.c.l.b16 %v599
        %v1371 = vunpack.c.h.b16 %v599
        %v1372 = vunpack.c.l.b16 %v600
        %v1373 = vunpack.c.l.b16 %v601
        %v1374 = vunpack.c.h.b16 %v601
        %v1375 = vunpack.c.l.b16 %v602
        %v1376 = vunpack.c.h.b16 %v602
        %v1377 = vunpack.c.l.b16 %v603
        %v1378 = vunpack.c.h.b16 %v603
        %v1379 = vunpack.c.l.b16 %v604
        %v1380 = vunpack.c.l.b16 %v605
        %v1381 = vunpack.c.h.b16 %v605
        %v1382 = vunpack.c.l.b16 %v606
        %v1383 = vunpack.c.h.b16 %v606
        %v1384 = vunpack.c.l.b16 %v607
        %v1385 = vunpack.c.h.b16 %v607
        %v1386 = vunpack.c.l.b16 %v608
        %v1387 = vunpack.c.l.b16 %v609
        %v1388 = vunpack.c.h.b16 %v609
        %v1389 = vunpack.c.l.b16 %v610
        %v1390 = vunpack.c.h.b16 %v610
        %v1391 = vunpack.c.l.b16 %v611
        %v1392 = vunpack.c.h.b16 %v611
        %v1393 = vunpack.c.l.b16 %v612
        %v1394 = vunpack.c.l.b16 %v613
        %v1395 = vunpack.c.h.b16 %v613
        %v1396 = vunpack.c.l.b16 %v614
        %v1397 = vunpack.c.h.b16 %v614
        %v1398 = vunpack.c.l.b16 %v615
        %v1399 = vunpack.c.h.b16 %v615
        %v1400 = vunpack.c.l.b16 %v616
        %v1401 = vunpack.c.l.b16 %v617
        %v1402 = vunpack.c.h.b16 %v617
        %v1403 = vunpack.c.l.b16 %v618
        %v1404 = vunpack.c.h.b16 %v618
        %v1405 = vunpack.c.l.b16 %v619
        %v1406 = vunpack.c.h.b16 %v619
        %v1407 = vunpack.c.l.b16 %v620
        %v1408 = vunpack.c.l.b16 %v621
        %v1409 = vunpack.c.h.b16 %v621
        %v1410 = vunpack.c.l.b16 %v622
        %v1411 = vunpack.c.h.b16 %v622
        %v1412 = vunpack.c.l.b16 %v623
        %v1413 = vunpack.c.h.b16 %v623
        %v1414 = vunpack.c.l.b16 %v624
        %v1415 = vunpack.c.l.b16 %v625
        %v1416 = vunpack.c.h.b16 %v625
        %v1417 = vunpack.c.l.b16 %v626
        %v1418 = vunpack.c.h.b16 %v626
        %v1419 = vunpack.c.l.b16 %v627
        %v1420 = vunpack.c.h.b16 %v627
        %v1421 = vunpack.c.l.b16 %v628
        %v1422 = vunpack.c.l.b16 %v629
        %v1423 = vunpack.c.h.b16 %v629
        %v1424 = vunpack.c.l.b16 %v630
        %v1425 = vunpack.c.h.b16 %v630
        %v1426 = vunpack.c.l.b16 %v631
        %v1427 = vunpack.c.h.b16 %v631
        %v1428 = vunpack.c.l.b16 %v632
        %v1429 = vunpack.c.l.b16 %v633
        %v1430 = vunpack.c.h.b16 %v633
        %v1431 = vunpack.c.l.b16 %v634
        %v1432 = vunpack.c.h.b16 %v634
        %v1433 = vunpack.c.l.b16 %v635
        %v1434 = vunpack.c.h.b16 %v635
        %v1435 = vunpack.c.l.b16 %v636
        %v1436 = vunpack.c.l.b16 %v637
        %v1437 = vunpack.c.h.b16 %v637
        %v1438 = vunpack.c.l.b16 %v638
        %v1439 = vunpack.c.h.b16 %v638
        %v1440 = vunpack.c.l.b16 %v639
        %v1441 = vunpack.c.h.b16 %v639
        %v1442 = vunpack.c.l.b16 %v640
        %v1443 = vunpack.c.l.b16 %v641
        %v1444 = vunpack.c.h.b16 %v641
        %v1445 = vunpack.c.l.b16 %v642
        %v1446 = vunpack.c.h.b16 %v642
        %v1447 = vunpack.c.l.b16 %v643
        %v1448 = vunpack.c.h.b16 %v643
        %v1449 = vunpack.c.l.b16 %v644
        %v1450 = vunpack.c.l.b16 %v645
        %v1451 = vunpack.c.h.b16 %v645
        %v1452 = vunpack.c.l.b16 %v646
        %v1453 = vunpack.c.h.b16 %v646
        %v1454 = vunpack.c.l.b16 %v647
        %v1455 = vunpack.c.h.b16 %v647
        %v1456 = vunpack.c.l.b16 %v648
        %v1457 = vunpack.c.l.b16 %v649
        %v1458 = vunpack.c.h.b16 %v649
        %v1459 = vunpack.c.l.b16 %v650
        %v1460 = vunpack.c.h.b16 %v650
        %v1461 = vunpack.c.l.b16 %v651
        %v1462 = vunpack.c.h.b16 %v651
        %v1463 = vunpack.c.l.b16 %v652
        %v1464 = vunpack.c.l.b16 %v653
        %v1465 = vunpack.c.h.b16 %v653
        %v1466 = vunpack.c.l.b16 %v654
        %v1467 = vunpack.c.h.b16 %v654
        %v1468 = vunpack.c.l.b16 %v655
        %v1469 = vunpack.c.h.b16 %v655
        %v1470 = vunpack.c.l.b16 %v656
        %v1471 = vunpack.c.l.b16 %v657
        %v1472 = vunpack.c.h.b16 %v657
        %v1473 = vunpack.c.l.b16 %v658
        %v1474 = vunpack.c.h.b16 %v658
        %v1475 = vunpack.c.l.b16 %v659
        %v1476 = vunpack.c.h.b16 %v659
        %v1477 = vunpack.c.l.b16 %v660
        %v1478 = vunpack.c.l.b16 %v661
        %v1479 = vunpack.c.h.b16 %v661
        %v1480 = vunpack.c.l.b16 %v662
        %v1481 = vunpack.c.h.b16 %v662
        %v1482 = vunpack.c.l.b16 %v663
        %v1483 = vunpack.c.h.b16 %v663
        %v1484 = vunpack.c.l.b16 %v664
        %v1485 = vunpack.c.l.b16 %v665
        %v1486 = vunpack.c.h.b16 %v665
        %v1487 = vunpack.c.l.b16 %v666
        %v1488 = vunpack.c.h.b16 %v666
        %v1489 = vunpack.c.l.b16 %v667
        %v1490 = vunpack.c.h.b16 %v667
        %v1491 = vunpack.c.l.b16 %v668
        %v1492 = vunpack.c.l.b16 %v669
        %v1493 = vunpack.c.h.b16 %v669
        %v1494 = vunpack.c.l.b16 %v670
        %v1495 = vunpack.c.h.b16 %v670
        %v1496 = vunpack.c.l.b16 %v671
        %v1497 = vunpack.c.h.b16 %v671
        %v1498 = vunpack.c.l.b16 %v672
        %v1499 = vunpack.c.l.b16 %v673
        %v1500 = vunpack.c.h.b16 %v673
        %v1501 = vunpack.c.l.b16 %v674
        %v1502 = vunpack.c.h.b16 %v674
        %v1503 = vunpack.c.l.b16 %v675
        %v1504 = vunpack.c.h.b16 %v675
        %v1505 = vunpack.c.l.b16 %v676
        %v1506 = vunpack.c.l.b16 %v677
        %v1507 = vunpack.c.h.b16 %v677
        %v1508 = vunpack.c.l.b16 %v678
        %v1509 = vunpack.c.h.b16 %v678
        %v1510 = vunpack.c.l.b16 %v679
        %v1511 = vunpack.c.h.b16 %v679
        %v1512 = vunpack.c.l.b16 %v680
        %v1513 = vunpack.c.l.b16 %v681
        %v1514 = vunpack.c.h.b16 %v681
        %v1515 = vunpack.c.l.b16 %v682
        %v1516 = vunpack.c.h.b16 %v682
        %v1517 = vunpack.c.l.b16 %v683
        %v1518 = vunpack.c.h.b16 %v683
        %v1519 = vunpack.c.l.b16 %v684
        %v1520 = vunpack.c.l.b16 %v685
        %v1521 = vunpack.c.h.b16 %v685
        %v1522 = vunpack.c.l.b16 %v686
        %v1523 = vunpack.c.h.b16 %v686
        %v1524 = vunpack.c.l.b16 %v687
        %v1525 = vunpack.c.h.b16 %v687
        %v1526 = vunpack.c.l.b16 %v688
        %v1527 = vunpack.c.l.b16 %v689
        %v1528 = vunpack.c.h.b16 %v689
        %v1529 = vunpack.c.l.b16 %v690
        %v1530 = vunpack.c.h.b16 %v690
        %v1531 = vunpack.c.l.b16 %v691
        %v1532 = vunpack.c.h.b16 %v691
        %v1533 = vunpack.c.l.b16 %v692
        %v1534 = vunpack.c.l.b16 %v693
        %v1535 = vunpack.c.h.b16 %v693
        %v1536 = vunpack.c.l.b16 %v694
        %v1537 = vunpack.c.h.b16 %v694
        %v1538 = vunpack.c.l.b16 %v695
        %v1539 = vunpack.c.h.b16 %v695
        %v1540 = vunpack.c.l.b16 %v696
        %v1541 = vunpack.c.l.b16 %v697
        %v1542 = vunpack.c.h.b16 %v697
        %v1543 = vunpack.c.l.b16 %v698
        %v1544 = vunpack.c.h.b16 %v698
        %v1545 = vunpack.c.l.b16 %v699
        %v1546 = vunpack.c.h.b16 %v699
        %v1547 = vunpack.c.l.b16 %v700
        %v1548 = vunpack.c.l.b16 %v701
        %v1549 = vunpack.c.h.b16 %v701
        %v1550 = vunpack.c.l.b16 %v702
        %v1551 = vunpack.c.h.b16 %v702
        %v1552 = vunpack.c.l.b16 %v703
        %v1553 = vunpack.c.h.b16 %v703
        %v1554 = vunpack.c.l.b16 %v704
        %v1555 = vunpack.c.l.b16 %v705
        %v1556 = vunpack.c.h.b16 %v705
        %v1557 = vunpack.c.l.b16 %v706
        %v1558 = vunpack.c.h.b16 %v706
        %v1559 = vunpack.c.l.b16 %v707
        %v1560 = vunpack.c.h.b16 %v707
        %v1561 = vunpack.c.l.b16 %v708
        %v1562 = vunpack.c.l.b16 %v709
        %v1563 = vunpack.c.h.b16 %v709
        %v1564 = vunpack.c.l.b16 %v710
        %v1565 = vunpack.c.h.b16 %v710
        %v1566 = vunpack.c.l.b16 %v711
        %v1567 = vunpack.c.h.b16 %v711
        %v1568 = vunpack.c.l.b16 %v712
        %v1569 = vunpack.c.l.b16 %v713
        %v1570 = vunpack.c.h.b16 %v713
        %v1571 = vunpack.c.l.b16 %v714
        %v1572 = vunpack.c.h.b16 %v714
        %v1573 = vunpack.c.l.b16 %v715
        %v1574 = vunpack.c.h.b16 %v715
        %v1575 = vunpack.c.l.b16 %v716
        %v1576 = vunpack.c.l.b16 %v717
        %v1577 = vunpack.c.h.b16 %v717
        %v1578 = vunpack.c.l.b16 %v718
        %v1579 = vunpack.c.h.b16 %v718
        %v1580 = vunpack.c.l.b16 %v719
        %v1581 = vunpack.c.h.b16 %v719
        %v1582 = vunpack.c.l.b16 %v720
        %v1583 = vunpack.c.l.b16 %v721
        %v1584 = vunpack.c.h.b16 %v721
        %v1585 = vunpack.c.l.b16 %v722
        %v1586 = vunpack.c.h.b16 %v722
        %v1587 = vunpack.c.l.b16 %v723
        %v1588 = vunpack.c.h.b16 %v723
        %v1589 = vunpack.c.l.b16 %v724
        %v1590 = vunpack.c.l.b16 %v725
        %v1591 = vunpack.c.h.b16 %v725
        %v1592 = vunpack.c.l.b16 %v726
        %v1593 = vunpack.c.h.b16 %v726
        %v1594 = vunpack.c.l.b16 %v727
        %v1595 = vunpack.c.h.b16 %v727
        %v1596 = vunpack.c.l.b16 %v728
        %v1597 = vunpack.c.l.b16 %v729
        %v1598 = vunpack.c.h.b16 %v729
        %v1599 = vunpack.c.l.b16 %v730
        %v1600 = vunpack.c.h.b16 %v730
        %v1601 = vunpack.c.l.b16 %v731
        %v1602 = vunpack.c.h.b16 %v731
        %v1603 = vunpack.c.l.b16 %v732
        %v1604 = vunpack.c.l.b16 %v733
        %v1605 = vunpack.c.h.b16 %v733
        %v1606 = vunpack.c.l.b16 %v734
        %v1607 = vunpack.c.h.b16 %v734
        %v1608 = vunpack.c.l.b16 %v735
        %v1609 = vunpack.c.h.b16 %v735
        %v1610 = vunpack.c.l.b16 %v736
        %v1611 = vunpack.c.l.b16 %v737
        %v1612 = vunpack.c.h.b16 %v737
        %v1613 = vunpack.c.l.b16 %v738
        %v1614 = vunpack.c.h.b16 %v738
        %v1615 = vunpack.c.l.b16 %v739
        %v1616 = vunpack.c.h.b16 %v739
        %v1617 = vunpack.c.l.b16 %v740
        %v1618 = vunpack.c.l.b16 %v741
        %v1619 = vunpack.c.h.b16 %v741
        %v1620 = vunpack.c.l.b16 %v742
        %v1621 = vunpack.c.h.b16 %v742
        %v1622 = vunpack.c.l.b16 %v743
        %v1623 = vunpack.c.h.b16 %v743
        %v1624 = vunpack.c.l.b16 %v744
        %v1625 = vunpack.c.l.b16 %v745
        %v1626 = vunpack.c.h.b16 %v745
        %v1627 = vunpack.c.l.b16 %v746
        %v1628 = vunpack.c.h.b16 %v746
        %v1629 = vunpack.c.l.b16 %v747
        %v1630 = vunpack.c.h.b16 %v747
        %v1631 = vunpack.c.l.b16 %v748
        %v1632 = vunpack.c.l.b16 %v749
        %v1633 = vunpack.c.h.b16 %v749
        %v1634 = vunpack.c.l.b16 %v750
        %v1635 = vunpack.c.h.b16 %v750
        %v1636 = vunpack.c.l.b16 %v751
        %v1637 = vunpack.c.h.b16 %v751
        %v1638 = vunpack.c.l.b16 %v752
        %v1639 = vunpack.c.l.b16 %v753
        %v1640 = vunpack.c.h.b16 %v753
        %v1641 = vunpack.c.l.b16 %v754
        %v1642 = vunpack.c.h.b16 %v754
        %v1643 = vunpack.c.l.b16 %v755
        %v1644 = vunpack.c.h.b16 %v755
        %v1645 = vunpack.c.l.b16 %v756
        %v1646 = vunpack.c.l.b16 %v757
        %v1647 = vunpack.c.h.b16 %v757
        %v1648 = vunpack.c.l.b16 %v758
        %v1649 = vunpack.c.h.b16 %v758
        %v1650 = vunpack.c.l.b16 %v759
        %v1651 = vunpack.c.h.b16 %v759
        %v1652 = vunpack.c.l.b16 %v760
        %v1653 = vunpack.c.l.b16 %v761
        %v1654 = vunpack.c.h.b16 %v761
        %v1655 = vunpack.c.l.b16 %v762
        %v1656 = vunpack.c.h.b16 %v762
        %v1657 = vunpack.c.l.b16 %v763
        %v1658 = vunpack.c.h.b16 %v763
        %v1659 = vunpack.c.l.b16 %v764
        %v1660 = vunpack.c.l.b16 %v765
        %v1661 = vunpack.c.h.b16 %v765
        %v1662 = vunpack.c.l.b16 %v766
        %v1663 = vunpack.c.h.b16 %v766
        %v1664 = vunpack.c.l.b16 %v767
        %v1665 = vunpack.c.h.b16 %v767
        %v1666 = vunpack.c.l.b16 %v768
        %v1667 = vunpack.c.l.b16 %v769
        %v1668 = vunpack.c.h.b16 %v769
        %v1669 = vunpack.c.l.b16 %v770
        %v1670 = vunpack.c.h.b16 %v770
        %v1671 = vunpack.c.l.b16 %v771
        %v1672 = vunpack.c.h.b16 %v771
        %v1673 = vunpack.c.l.b16 %v772
        %v1674 = vunpack.c.l.b16 %v773
        %v1675 = vunpack.c.h.b16 %v773
        %v1676 = vunpack.c.l.b16 %v774
        %v1677 = vunpack.c.h.b16 %v774
        %v1678 = vunpack.c.l.b16 %v775
        %v1679 = vunpack.c.h.b16 %v775
        %v1680 = vunpack.c.l.b16 %v776
        %v1681 = vunpack.c.l.b16 %v777
        %v1682 = vunpack.c.h.b16 %v777
        %v1683 = vunpack.c.l.b16 %v778
        %v1684 = vunpack.c.h.b16 %v778
        %v1685 = vunpack.c.l.b16 %v779
        %v1686 = vunpack.c.h.b16 %v779
        %v1687 = vunpack.c.l.b16 %v780
        %v1688 = vunpack.c.l.b16 %v781
        %v1689 = vunpack.c.h.b16 %v781
        %v1690 = vunpack.c.l.b16 %v782
        %v1691 = vunpack.c.h.b16 %v782
        %v1692 = vunpack.c.l.b16 %v783
        %v1693 = vunpack.c.h.b16 %v783
        %v1694 = vunpack.c.l.b16 %v784
        %v1695 = vunpack.c.l.b16 %v785
        %v1696 = vunpack.c.h.b16 %v785
        %v1697 = vunpack.c.l.b16 %v786
        %v1698 = vunpack.c.h.b16 %v786
        %v1699 = vunpack.c.l.b16 %v787
        %v1700 = vunpack.c.h.b16 %v787
        %v1701 = vunpack.c.l.b16 %v788
        %v1702 = vunpack.c.l.b16 %v789
        %v1703 = vunpack.c.h.b16 %v789
        %v1704 = vunpack.c.l.b16 %v790
        %v1705 = vunpack.c.h.b16 %v790
        %v1706 = vunpack.c.l.b16 %v791
        %v1707 = vunpack.c.h.b16 %v791
        %v1708 = vunpack.c.l.b16 %v792
        %v1709 = vunpack.c.l.b16 %v793
        %v1710 = vunpack.c.h.b16 %v793
        %v1711 = vunpack.c.l.b16 %v794
        %v1712 = vunpack.c.h.b16 %v794
        %v1713 = vunpack.c.l.b16 %v795
        %v1714 = vunpack.c.h.b16 %v795
        %v1715 = vunpack.c.l.b16 %v796
        %v1716 = vunpack.c.l.b16 %v797
        %v1717 = vunpack.c.h.b16 %v797
        %v1718 = vunpack.c.l.b16 %v798
        %v1719 = vunpack.c.h.b16 %v798
        %v1720 = vunpack.c.l.b16 %v799
        %v1721 = vunpack.c.h.b16 %v799
        %v1722 = vunpack.c.l.b16 %v800
        %v1723 = vunpack.c.l.b16 %v801
        %v1724 = vunpack.c.h.b16 %v801
        %v1725 = vunpack.c.l.b16 %v802
        %v1726 = vunpack.c.h.b16 %v802
        %v1727 = vunpack.c.l.b16 %v803
        %v1728 = vunpack.c.h.b16 %v803
        %v1729 = vunpack.c.l.b16 %v804
        %v1730 = vunpack.c.l.b16 %v805
        %v1731 = vunpack.c.h.b16 %v805
        %v1732 = vunpack.c.l.b16 %v806
        %v1733 = vunpack.c.h.b16 %v806
        %v1734 = vunpack.c.l.b16 %v807
        %v1735 = vunpack.c.h.b16 %v807
        %v1736 = vunpack.c.l.b16 %v808
        %v1737 = vunpack.c.l.b16 %v809
        %v1738 = vunpack.c.h.b16 %v809
        %v1739 = vunpack.c.l.b16 %v810
        %v1740 = vunpack.c.h.b16 %v810
        %v1741 = vunpack.c.l.b16 %v811
        %v1742 = vunpack.c.h.b16 %v811
        %v1743 = vunpack.c.l.b16 %v812
        %v1744 = vunpack.c.l.b16 %v813
        %v1745 = vunpack.c.h.b16 %v813
        %v1746 = vunpack.c.l.b16 %v814
        %v1747 = vunpack.c.h.b16 %v814
        %v1748 = vunpack.c.l.b16 %v815
        %v1749 = vunpack.c.h.b16 %v815
        %v1750 = vunpack.c.l.b16 %v816
        %v1751 = vunpack.c.l.b16 %v817
        %v1752 = vunpack.c.h.b16 %v817
        %v1753 = vunpack.c.l.b16 %v818
        %v1754 = vunpack.c.h.b16 %v818
        %v1755 = vunpack.c.l.b16 %v819
        %v1756 = vunpack.c.h.b16 %v819
        %v1757 = vunpack.c.l.b16 %v820
        %v1758 = vunpack.c.l.b16 %v821
        %v1759 = vunpack.c.h.b16 %v821
        %v1760 = vunpack.c.l.b16 %v822
        %v1761 = vunpack.c.h.b16 %v822
        %v1762 = vunpack.c.l.b16 %v823
        %v1763 = vunpack.c.h.b16 %v823
        %v1764 = vunpack.c.l.b16 %v824
        %v1765 = vunpack.c.l.b16 %v825
        %v1766 = vunpack.c.h.b16 %v825
        %v1767 = vunpack.c.l.b16 %v826
        %v1768 = vunpack.c.h.b16 %v826
        %v1769 = vunpack.c.l.b16 %v827
        %v1770 = vunpack.c.h.b16 %v827
        %v1771 = vunpack.c.l.b16 %v828
        %v1772 = vunpack.c.l.b16 %v829
        %v1773 = vunpack.c.h.b16 %v829
        %v1774 = vunpack.c.l.b16 %v830
        %v1775 = vunpack.c.h.b16 %v830
        %v1776 = vunpack.c.l.b16 %v831
        %v1777 = vunpack.c.h.b16 %v831
        %v1778 = vunpack.c.l.b16 %v832
        %v1779 = vunpack.c.l.b16 %v833
        %v1780 = vunpack.c.h.b16 %v833
        %v1781 = vunpack.c.l.b16 %v834
        %v1782 = vunpack.c.h.b16 %v834
        %v1783 = vunpack.c.l.b16 %v835
        %v1784 = vunpack.c.h.b16 %v835
        %v1785 = vunpack.c.l.b16 %v836
        %v1786 = vunpack.c.l.b16 %v837
        %v1787 = vunpack.c.h.b16 %v837
        %v1788 = vunpack.c.l.b16 %v838
        %v1789 = vunpack.c.h.b16 %v838
        %v1790 = vunpack.c.l.b16 %v839
        %v1791 = vunpack.c.h.b16 %v839
        %v1792 = vunpack.c.l.b16 %v840
        %v1793 = vunpack.c.l.b16 %v841
        %v1794 = vunpack.c.h.b16 %v841
        %v1795 = vunpack.c.l.b16 %v842
        %v1796 = vunpack.c.h.b16 %v842
        %v1797 = vunpack.c.l.b16 %v843
        %v1798 = vunpack.c.h.b16 %v843
        %v1799 = vunpack.c.l.b16 %v844
        %v1800 = vunpack.c.l.b16 %v845
        %v1801 = vunpack.c.h.b16 %v845
        %v1802 = vunpack.c.l.b16 %v846
        %v1803 = vunpack.c.h.b16 %v846
        %v1804 = vunpack.c.l.b16 %v847
        %v1805 = vunpack.c.h.b16 %v847
        %v1806 = vunpack.c.l.b16 %v848
        %v1807 = vpack.c.b16 %v1254, %v1247
        %v1808 = vpack.c.b16 %v1255, %v1248
        %v1809 = vpack.c.b16 %v1256, %v1249
        %v1810 = vpack.c.b16 %v1257, %v1250
        %v1811 = vpack.c.b16 %v1258, %v1251
        %v1812 = vpack.c.b16 %v1259, %v1252
        %v1813 = vpack.c.b16 %v1260, %v1253
        %v1814 = vpack.c.b16 %v1268, %v1261
        %v1815 = vpack.c.b16 %v1269, %v1262
        %v1816 = vpack.c.b16 %v1270, %v1263
        %v1817 = vpack.c.b16 %v1271, %v1264
        %v1818 = vpack.c.b16 %v1272, %v1265
        %v1819 = vpack.c.b16 %v1273, %v1266
        %v1820 = vpack.c.b16 %v1274, %v1267
        %v1821 = vpack.c.b16 %v1282, %v1275
        %v1822 = vpack.c.b16 %v1283, %v1276
        %v1823 = vpack.c.b16 %v1284, %v1277
        %v1824 = vpack.c.b16 %v1285, %v1278
        %v1825 = vpack.c.b16 %v1286, %v1279
        %v1826 = vpack.c.b16 %v1287, %v1280
        %v1827 = vpack.c.b16 %v1288, %v1281
        %v1828 = vpack.c.b16 %v1296, %v1289
        %v1829 = vpack.c.b16 %v1297, %v1290
        %v1830 = vpack.c.b16 %v1298, %v1291
        %v1831 = vpack.c.b16 %v1299, %v1292
        %v1832 = vpack.c.b16 %v1300, %v1293
        %v1833 = vpack.c.b16 %v1301, %v1294
        %v1834 = vpack.c.b16 %v1302, %v1295
        %v1835 = vpack.c.b16 %v1310, %v1303
        %v1836 = vpack.c.b16 %v1311, %v1304
        %v1837 = vpack.c.b16 %v1312, %v1305
        %v1838 = vpack.c.b16 %v1313, %v1306
        %v1839 = vpack.c.b16 %v1314, %v1307
        %v1840 = vpack.c.b16 %v1315, %v1308
        %v1841 = vpack.c.b16 %v1316, %v1309
        %v1842 = vpack.c.b16 %v1324, %v1317
        %v1843 = vpack.c.b16 %v1325, %v1318
        %v1844 = vpack.c.b16 %v1326, %v1319
        %v1845 = vpack.c.b16 %v1327, %v1320
        %v1846 = vpack.c.b16 %v1328, %v1321
        %v1847 = vpack.c.b16 %v1329, %v1322
        %v1848 = vpack.c.b16 %v1330, %v1323
        %v1849 = vpack.c.b16 %v1338, %v1331
        %v1850 = vpack.c.b16 %v1339, %v1332
        %v1851 = vpack.c.b16 %v1340, %v1333
        %v1852 = vpack.c.b16 %v1341, %v1334
        %v1853 = vpack.c.b16 %v1342, %v1335
        %v1854 = vpack.c.b16 %v1343, %v1336
        %v1855 = vpack.c.b16 %v1344, %v1337
        %v1856 = vpack.c.b16 %v1352, %v1345
        %v1857 = vpack.c.b16 %v1353, %v1346
        %v1858 = vpack.c.b16 %v1354, %v1347
        %v1859 = vpack.c.b16 %v1355, %v1348
        %v1860 = vpack.c.b16 %v1356, %v1349
        %v1861 = vpack.c.b16 %v1357, %v1350
        %v1862 = vpack.c.b16 %v1358, %v1351
        %v1863 = vpack.c.b16 %v1366, %v1359
        %v1864 = vpack.c.b16 %v1367, %v1360
        %v1865 = vpack.c.b16 %v1368, %v1361
        %v1866 = vpack.c.b16 %v1369, %v1362
        %v1867 = vpack.c.b16 %v1370, %v1363
        %v1868 = vpack.c.b16 %v1371, %v1364
        %v1869 = vpack.c.b16 %v1372, %v1365
        %v1870 = vpack.c.b16 %v1380, %v1373
        %v1871 = vpack.c.b16 %v1381, %v1374
        %v1872 = vpack.c.b16 %v1382, %v1375
        %v1873 = vpack.c.b16 %v1383, %v1376
        %v1874 = vpack.c.b16 %v1384, %v1377
        %v1875 = vpack.c.b16 %v1385, %v1378
        %v1876 = vpack.c.b16 %v1386, %v1379
        %v1877 = vpack.c.b16 %v1394, %v1387
        %v1878 = vpack.c.b16 %v1395, %v1388
        %v1879 = vpack.c.b16 %v1396, %v1389
        %v1880 = vpack.c.b16 %v1397, %v1390
        %v1881 = vpack.c.b16 %v1398, %v1391
        %v1882 = vpack.c.b16 %v1399, %v1392
        %v1883 = vpack.c.b16 %v1400, %v1393
        %v1884 = vpack.c.b16 %v1408, %v1401
        %v1885 = vpack.c.b16 %v1409, %v1402
        %v1886 = vpack.c.b16 %v1410, %v1403
        %v1887 = vpack.c.b16 %v1411, %v1404
        %v1888 = vpack.c.b16 %v1412, %v1405
        %v1889 = vpack.c.b16 %v1413, %v1406
        %v1890 = vpack.c.b16 %v1414, %v1407
        %v1891 = vpack.c.b16 %v1422, %v1415
        %v1892 = vpack.c.b16 %v1423, %v1416
        %v1893 = vpack.c.b16 %v1424, %v1417
        %v1894 = vpack.c.b16 %v1425, %v1418
        %v1895 = vpack.c.b16 %v1426, %v1419
        %v1896 = vpack.c.b16 %v1427, %v1420
        %v1897 = vpack.c.b16 %v1428, %v1421
        %v1898 = vpack.c.b16 %v1436, %v1429
        %v1899 = vpack.c.b16 %v1437, %v1430
        %v1900 = vpack.c.b16 %v1438, %v1431
        %v1901 = vpack.c.b16 %v1439, %v1432
        %v1902 = vpack.c.b16 %v1440, %v1433
        %v1903 = vpack.c.b16 %v1441, %v1434
        %v1904 = vpack.c.b16 %v1442, %v1435
        %v1905 = vpack.c.b16 %v1450, %v1443
        %v1906 = vpack.c.b16 %v1451, %v1444
        %v1907 = vpack.c.b16 %v1452, %v1445
        %v1908 = vpack.c.b16 %v1453, %v1446
        %v1909 = vpack.c.b16 %v1454, %v1447
        %v1910 = vpack.c.b16 %v1455, %v1448
        %v1911 = vpack.c.b16 %v1456, %v1449
        %v1912 = vpack.c.b16 %v1464, %v1457
        %v1913 = vpack.c.b16 %v1465, %v1458
        %v1914 = vpack.c.b16 %v1466, %v1459
        %v1915 = vpack.c.b16 %v1467, %v1460
        %v1916 = vpack.c.b16 %v1468, %v1461
        %v1917 = vpack.c.b16 %v1469, %v1462
        %v1918 = vpack.c.b16 %v1470, %v1463
        %v1919 = vpack.c.b16 %v1478, %v1471
        %v1920 = vpack.c.b16 %v1479, %v1472
        %v1921 = vpack.c.b16 %v1480, %v1473
        %v1922 = vpack.c.b16 %v1481, %v1474
        %v1923 = vpack.c.b16 %v1482, %v1475
        %v1924 = vpack.c.b16 %v1483, %v1476
        %v1925 = vpack.c.b16 %v1484, %v1477
        %v1926 = vpack.c.b16 %v1492, %v1485
        %v1927 = vpack.c.b16 %v1493, %v1486
        %v1928 = vpack.c.b16 %v1494, %v1487
        %v1929 = vpack.c.b16 %v1495, %v1488
        %v1930 = vpack.c.b16 %v1496, %v1489
        %v1931 = vpack.c.b16 %v1497, %v1490
        %v1932 = vpack.c.b16 %v1498, %v1491
        %v1933 = vpack.c.b16 %v1506, %v1499
        %v1934 = vpack.c.b16 %v1507, %v1500
        %v1935 = vpack.c.b16 %v1508, %v1501
        %v1936 = vpack.c.b16 %v1509, %v1502
        %v1937 = vpack.c.b16 %v1510, %v1503
        %v1938 = vpack.c.b16 %v1511, %v1504
        %v1939 = vpack.c.b16 %v1512, %v1505
        %v1940 = vpack.c.b16 %v1520, %v1513
        %v1941 = vpack.c.b16 %v1521, %v1514
        %v1942 = vpack.c.b16 %v1522, %v1515
        %v1943 = vpack.c.b16 %v1523, %v1516
        %v1944 = vpack.c.b16 %v1524, %v1517
        %v1945 = vpack.c.b16 %v1525, %v1518
        %v1946 = vpack.c.b16 %v1526, %v1519
        %v1947 = vpack.c.b16 %v1534, %v1527
        %v1948 = vpack.c.b16 %v1535, %v1528
        %v1949 = vpack.c.b16 %v1536, %v1529
        %v1950 = vpack.c.b16 %v1537, %v1530
        %v1951 = vpack.c.b16 %v1538, %v1531
        %v1952 = vpack.c.b16 %v1539, %v1532
        %v1953 = vpack.c.b16 %v1540, %v1533
        %v1954 = vpack.c.b16 %v1548, %v1541
        %v1955 = vpack.c.b16 %v1549, %v1542
        %v1956 = vpack.c.b16 %v1550, %v1543
        %v1957 = vpack.c.b16 %v1551, %v1544
        %v1958 = vpack.c.b16 %v1552, %v1545
        %v1959 = vpack.c.b16 %v1553, %v1546
        %v1960 = vpack.c.b16 %v1554, %v1547
        %v1961 = vpack.c.b16 %v1562, %v1555
        %v1962 = vpack.c.b16 %v1563, %v1556
        %v1963 = vpack.c.b16 %v1564, %v1557
        %v1964 = vpack.c.b16 %v1565, %v1558
        %v1965 = vpack.c.b16 %v1566, %v1559
        %v1966 = vpack.c.b16 %v1567, %v1560
        %v1967 = vpack.c.b16 %v1568, %v1561
        %v1968 = vpack.c.b16 %v1576, %v1569
        %v1969 = vpack.c.b16 %v1577, %v1570
        %v1970 = vpack.c.b16 %v1578, %v1571
        %v1971 = vpack.c.b16 %v1579, %v1572
        %v1972 = vpack.c.b16 %v1580, %v1573
        %v1973 = vpack.c.b16 %v1581, %v1574
        %v1974 = vpack.c.b16 %v1582, %v1575
        %v1975 = vpack.c.b16 %v1590, %v1583
        %v1976 = vpack.c.b16 %v1591, %v1584
        %v1977 = vpack.c.b16 %v1592, %v1585
        %v1978 = vpack.c.b16 %v1593, %v1586
        %v1979 = vpack.c.b16 %v1594, %v1587
        %v1980 = vpack.c.b16 %v1595, %v1588
        %v1981 = vpack.c.b16 %v1596, %v1589
        %v1982 = vpack.c.b16 %v1604, %v1597
        %v1983 = vpack.c.b16 %v1605, %v1598
        %v1984 = vpack.c.b16 %v1606, %v1599
        %v1985 = vpack.c.b16 %v1607, %v1600
        %v1986 = vpack.c.b16 %v1608, %v1601
        %v1987 = vpack.c.b16 %v1609, %v1602
        %v1988 = vpack.c.b16 %v1610, %v1603
        %v1989 = vpack.c.b16 %v1618, %v1611
        %v1990 = vpack.c.b16 %v1619, %v1612
        %v1991 = vpack.c.b16 %v1620, %v1613
        %v1992 = vpack.c.b16 %v1621, %v1614
        %v1993 = vpack.c.b16 %v1622, %v1615
        %v1994 = vpack.c.b16 %v1623, %v1616
        %v1995 = vpack.c.b16 %v1624, %v1617
        %v1996 = vpack.c.b16 %v1632, %v1625
        %v1997 = vpack.c.b16 %v1633, %v1626
        %v1998 = vpack.c.b16 %v1634, %v1627
        %v1999 = vpack.c.b16 %v1635, %v1628
        %v2000 = vpack.c.b16 %v1636, %v1629
        %v2001 = vpack.c.b16 %v1637, %v1630
        %v2002 = vpack.c.b16 %v1638, %v1631
        %v2003 = vpack.c.b16 %v1646, %v1639
        %v2004 = vpack.c.b16 %v1647, %v1640
        %v2005 = vpack.c.b16 %v1648, %v1641
        %v2006 = vpack.c.b16 %v1649, %v1642
        %v2007 = vpack.c.b16 %v1650, %v1643
        %v2008 = vpack.c.b16 %v1651, %v1644
        %v2009 = vpack.c.b16 %v1652, %v1645
        %v2010 = vpack.c.b16 %v1660, %v1653
        %v2011 = vpack.c.b16 %v1661, %v1654
        %v2012 = vpack.c.b16 %v1662, %v1655
        %v2013 = vpack.c.b16 %v1663, %v1656
        %v2014 = vpack.c.b16 %v1664, %v1657
        %v2015 = vpack.c.b16 %v1665, %v1658
        %v2016 = vpack.c.b16 %v1666, %v1659
        %v2017 = vpack.c.b16 %v1674, %v1667
        %v2018 = vpack.c.b16 %v1675, %v1668
        %v2019 = vpack.c.b16 %v1676, %v1669
        %v2020 = vpack.c.b16 %v1677, %v1670
        %v2021 = vpack.c.b16 %v1678, %v1671
        %v2022 = vpack.c.b16 %v1679, %v1672
        %v2023 = vpack.c.b16 %v1680, %v1673
        %v2024 = vpack.c.b16 %v1688, %v1681
        %v2025 = vpack.c.b16 %v1689, %v1682
        %v2026 = vpack.c.b16 %v1690, %v1683
        %v2027 = vpack.c.b16 %v1691, %v1684
        %v2028 = vpack.c.b16 %v1692, %v1685
        %v2029 = vpack.c.b16 %v1693, %v1686
        %v2030 = vpack.c.b16 %v1694, %v1687
        %v2031 = vpack.c.b16 %v1702, %v1695
        %v2032 = vpack.c.b16 %v1703, %v1696
        %v2033 = vpack.c.b16 %v1704, %v1697
        %v2034 = vpack.c.b16 %v1705, %v1698
        %v2035 = vpack.c.b16 %v1706, %v1699
        %v2036 = vpack.c.b16 %v1707, %v1700
        %v2037 = vpack.c.b16 %v1708, %v1701
        %v2038 = vpack.c.b16 %v1716, %v1709
        %v2039 = vpack.c.b16 %v1717, %v1710
        %v2040 = vpack.c.b16 %v1718, %v1711
        %v2041 = vpack.c.b16 %v1719, %v1712
        %v2042 = vpack.c.b16 %v1720, %v1713
        %v2043 = vpack.c.b16 %v1721, %v1714
        %v2044 = vpack.c.b16 %v1722, %v1715
        %v2045 = vpack.c.b16 %v1730, %v1723
        %v2046 = vpack.c.b16 %v1731, %v1724
        %v2047 = vpack.c.b16 %v1732, %v1725
        %v2048 = vpack.c.b16 %v1733, %v1726
        %v2049 = vpack.c.b16 %v1734, %v1727
        %v2050 = vpack.c.b16 %v1735, %v1728
        %v2051 = vpack.c.b16 %v1736, %v1729
        %v2052 = vpack.c.b16 %v1744, %v1737
        %v2053 = vpack.c.b16 %v1745, %v1738
        %v2054 = vpack.c.b16 %v1746, %v1739
        %v2055 = vpack.c.b16 %v1747, %v1740
        %v2056 = vpack.c.b16 %v1748, %v1741
        %v2057 = vpack.c.b16 %v1749, %v1742
        %v2058 = vpack.c.b16 %v1750, %v1743
        %v2059 = vpack.c.b16 %v1758, %v1751
        %v2060 = vpack.c.b16 %v1759, %v1752
        %v2061 = vpack.c.b16 %v1760, %v1753
        %v2062 = vpack.c.b16 %v1761, %v1754
        %v2063 = vpack.c.b16 %v1762, %v1755
        %v2064 = vpack.c.b16 %v1763, %v1756
        %v2065 = vpack.c.b16 %v1764, %v1757
        %v2066 = vpack.c.b16 %v1772, %v1765
        %v2067 = vpack.c.b16 %v1773, %v1766
        %v2068 = vpack.c.b16 %v1774, %v1767
        %v2069 = vpack.c.b16 %v1775, %v1768
        %v2070 = vpack.c.b16 %v1776, %v1769
        %v2071 = vpack.c.b16 %v1777, %v1770
        %v2072 = vpack.c.b16 %v1778, %v1771
        %v2073 = vpack.c.b16 %v1786, %v1779
        %v2074 = vpack.c.b16 %v1787, %v1780
        %v2075 = vpack.c.b16 %v1788, %v1781
        %v2076 = vpack.c.b16 %v1789, %v1782
        %v2077 = vpack.c.b16 %v1790, %v1783
        %v2078 = vpack.c.b16 %v1791, %v1784
        %v2079 = vpack.c.b16 %v1792, %v1785
        %v2080 = vpack.c.b16 %v1800, %v1793
        %v2081 = vpack.c.b16 %v1801, %v1794
        %v2082 = vpack.c.b16 %v1802, %v1795
        %v2083 = vpack.c.b16 %v1803, %v1796
        %v2084 = vpack.c.b16 %v1804, %v1797
        %v2085 = vpack.c.b16 %v1805, %v1798
        %v2086 = vpack.c.b16 %v1806, %v1799
        %2367 = vmatprep.subr.bf16.mxu0 %v1808
        %2368 = vmatpush1.bf16.msra.mxu0 %v1807
        %2369 = vmatprep.subr.bf16.mxu0 %v1815
        %2370 = vmatpush1.bf16.msra.mxu0 %v1814
        %2371 = vmatprep.subr.bf16.mxu0 %v1822
        %2372 = vmatpush1.bf16.msra.mxu0 %v1821
        %2373 = vmatprep.subr.bf16.mxu0 %v1829
        %2374 = vmatpush1.bf16.msra.mxu0 %v1828
        %2375 = vmatprep.subr.bf16.mxu0 %v1836
        %2376 = vmatpush1.bf16.msra.mxu0 %v1835
        %2377 = vmatprep.subr.bf16.mxu0 %v1843
        %2378 = vmatpush1.bf16.msra.mxu0 %v1842
        %2379 = vmatprep.subr.bf16.mxu0 %v1850
        %2380 = vmatpush1.bf16.msra.mxu0 %v1849
        %2381 = vmatprep.subr.bf16.mxu0 %v1857
        %2382 = vmatpush1.bf16.msra.mxu0 %v1856
        %2383 = vmatprep.subr.bf16.mxu0 %v1864
        %2384 = vmatpush1.bf16.msra.mxu0 %v1863
        %2385 = vmatprep.subr.bf16.mxu0 %v1871
        %2386 = vmatpush1.bf16.msra.mxu0 %v1870
        %2387 = vmatprep.subr.bf16.mxu0 %v1878
        %2388 = vmatpush1.bf16.msra.mxu0 %v1877
        %2389 = vmatprep.subr.bf16.mxu0 %v1885
        %2390 = vmatpush1.bf16.msra.mxu0 %v1884
        %2391 = vmatprep.subr.bf16.mxu0 %v1892
        %2392 = vmatpush1.bf16.msra.mxu0 %v1891
        %2393 = vmatprep.subr.bf16.mxu0 %v1899
        %2394 = vmatpush1.bf16.msra.mxu0 %v1898
        %2395 = vmatprep.subr.bf16.mxu0 %v1906
        %2396 = vmatpush1.bf16.msra.mxu0 %v1905
        %2397 = vmatprep.subr.bf16.mxu0 %v1913
        %2398 = vmatpush1.bf16.msra.mxu0 %v1912
        %2399 = vmatprep.mubr.bf16.mxu0 %v898
        %2400 = vmatmul.mubr.bf16.gmra.mrb[0].mxu0 %v897
        %v2401 = vpop.f32.mrb[0].mxu0
        %v2402 = vadd.f32 0.0, %v2401
        %v2403 = vpop.f32.mrb[0].mxu0
        %v2404 = vadd.f32 0.0, %v2403
        %v2405 = vpop.f32.mrb[0].mxu0
        %v2406 = vadd.f32 0.0, %v2405
        %v2407 = vpop.f32.mrb[0].mxu0
        %v2408 = vadd.f32 0.0, %v2407
        %2409 = vmatprep.mubr.bf16.mxu0 %v903
        %2410 = vmatmul.mubr.bf16.gmra.mrb[0].mxu0 %v902
        %v2411 = vpop.f32.mrb[0].mxu0
        %v2412 = vadd.f32 0.0, %v2411
        %v2413 = vpop.f32.mrb[0].mxu0
        %v2414 = vadd.f32 0.0, %v2413
        %v2415 = vpop.f32.mrb[0].mxu0
        %v2416 = vadd.f32 0.0, %v2415
        %v2417 = vpop.f32.mrb[0].mxu0
        %v2418 = vadd.f32 0.0, %v2417
        %2419 = vmatprep.mubr.bf16.mxu0 %v908
        %2420 = vmatmul.mubr.bf16.gmra.mrb[0].mxu0 %v907
        %v2421 = vpop.f32.mrb[0].mxu0
        %v2422 = vadd.f32 0.0, %v2421
        %v2423 = vpop.f32.mrb[0].mxu0
        %v2424 = vadd.f32 0.0, %v2423
        %v2425 = vpop.f32.mrb[0].mxu0
        %v2426 = vadd.f32 0.0, %v2425
        %v2427 = vpop.f32.mrb[0].mxu0
        %v2428 = vadd.f32 0.0, %v2427
        %2429 = vdwg.mxu0
        %2430 = vmatprep.subr.bf16.mxu0 %v1920
        %2431 = vmatpush1.bf16.msra.mxu0 %v1919
        %2432 = vmatprep.subr.bf16.mxu0 %v1927
        %2433 = vmatpush1.bf16.msra.mxu0 %v1926
        %2434 = vmatprep.subr.bf16.mxu0 %v1934
        %2435 = vmatpush1.bf16.msra.mxu0 %v1933
        %2436 = vmatprep.subr.bf16.mxu0 %v1941
        %2437 = vmatpush1.bf16.msra.mxu0 %v1940
        %2438 = vmatprep.subr.bf16.mxu0 %v1948
        %2439 = vmatpush1.bf16.msra.mxu0 %v1947
        %2440 = vmatprep.subr.bf16.mxu0 %v1955
        %2441 = vmatpush1.bf16.msra.mxu0 %v1954
        %2442 = vmatprep.subr.bf16.mxu0 %v1962
        %2443 = vmatpush1.bf16.msra.mxu0 %v1961
        %2444 = vmatprep.subr.bf16.mxu0 %v1969
        %2445 = vmatpush1.bf16.msra.mxu0 %v1968
        %2446 = vmatprep.subr.bf16.mxu0 %v1976
        %2447 = vmatpush1.bf16.msra.mxu0 %v1975
        %2448 = vmatprep.subr.bf16.mxu0 %v1983
        %2449 = vmatpush1.bf16.msra.mxu0 %v1982
        %2450 = vmatprep.subr.bf16.mxu0 %v1990
        %2451 = vmatpush1.bf16.msra.mxu0 %v1989
        %2452 = vmatprep.subr.bf16.mxu0 %v1997
        %2453 = vmatpush1.bf16.msra.mxu0 %v1996
        %2454 = vmatprep.subr.bf16.mxu0 %v2004
        %2455 = vmatpush1.bf16.msra.mxu0 %v2003
        %2456 = vmatprep.subr.bf16.mxu0 %v2011
        %2457 = vmatpush1.bf16.msra.mxu0 %v2010
        %2458 = vmatprep.subr.bf16.mxu0 %v2018
        %2459 = vmatpush1.bf16.msra.mxu0 %v2017
        %2460 = vmatprep.subr.bf16.mxu0 %v2025
        %2461 = vmatpush1.bf16.msra.mxu0 %v2024
        %2462 = vmatprep.mubr.bf16.mxu0 %v900
        %2463 = vmatmul.mubr.bf16.gmra.mrb[0].mxu0 %v899
        %v2464 = vpop.f32.mrb[0].mxu0
        %v2465 = vadd.f32 %v2402, %v2464
        %v2466 = vpop.f32.mrb[0].mxu0
        %v2467 = vadd.f32 %v2404, %v2466
        %v2468 = vpop.f32.mrb[0].mxu0
        %v2469 = vadd.f32 %v2406, %v2468
        %v2470 = vpop.f32.mrb[0].mxu0
        %v2471 = vadd.f32 %v2408, %v2470
        %2472 = vmatprep.mubr.bf16.mxu0 %v905
        %2473 = vmatmul.mubr.bf16.gmra.mrb[0].mxu0 %v904
        %v2474 = vpop.f32.mrb[0].mxu0
        %v2475 = vadd.f32 %v2412, %v2474
        %v2476 = vpop.f32.mrb[0].mxu0
        %v2477 = vadd.f32 %v2414, %v2476
        %v2478 = vpop.f32.mrb[0].mxu0
        %v2479 = vadd.f32 %v2416, %v2478
        %v2480 = vpop.f32.mrb[0].mxu0
        %v2481 = vadd.f32 %v2418, %v2480
        %2482 = vmatprep.mubr.bf16.mxu0 %v910
        %2483 = vmatmul.mubr.bf16.gmra.mrb[0].mxu0 %v909
        %v2484 = vpop.f32.mrb[0].mxu0
        %v2485 = vadd.f32 %v2422, %v2484
        %v2486 = vpop.f32.mrb[0].mxu0
        %v2487 = vadd.f32 %v2424, %v2486
        %v2488 = vpop.f32.mrb[0].mxu0
        %v2489 = vadd.f32 %v2426, %v2488
        %v2490 = vpop.f32.mrb[0].mxu0
        %v2491 = vadd.f32 %v2428, %v2490
        %2492 = vdwg.mxu0
        %2493 = vmatprep.subr.bf16.mxu0 %v2032
        %2494 = vmatpush1.bf16.msra.mxu0 %v2031
        %2495 = vmatprep.subr.bf16.mxu0 %v2039
        %2496 = vmatpush1.bf16.msra.mxu0 %v2038
        %2497 = vmatprep.subr.bf16.mxu0 %v2046
        %2498 = vmatpush1.bf16.msra.mxu0 %v2045
        %2499 = vmatprep.subr.bf16.mxu0 %v2053
        %2500 = vmatpush1.bf16.msra.mxu0 %v2052
        %2501 = vmatprep.subr.bf16.mxu0 %v2060
        %2502 = vmatpush1.bf16.msra.mxu0 %v2059
        %2503 = vmatprep.subr.bf16.mxu0 %v2067
        %2504 = vmatpush1.bf16.msra.mxu0 %v2066
        %2505 = vmatprep.subr.bf16.mxu0 %v2074
        %2506 = vmatpush1.bf16.msra.mxu0 %v2073
        %2507 = vmatprep.subr.bf16.mxu0 %v2081
        %2508 = vmatpush1.bf16.msra.mxu0 %v2080
        %2509 = vmatprep.subr.bf16.mxu0 0
        %2510 = vmatpush1.bf16.msra.mxu0 0
        %2511 = vmatprep.subr.bf16.mxu0 0
        %2512 = vmatpush1.bf16.msra.mxu0 0
        %2513 = vmatprep.subr.bf16.mxu0 0
        %2514 = vmatpush1.bf16.msra.mxu0 0
        %2515 = vmatprep.subr.bf16.mxu0 0
        %2516 = vmatpush1.bf16.msra.mxu0 0
        %2517 = vmatprep.subr.bf16.mxu0 0
        %2518 = vmatpush1.bf16.msra.mxu0 0
        %2519 = vmatprep.subr.bf16.mxu0 0
        %2520 = vmatpush1.bf16.msra.mxu0 0
        %2521 = vmatprep.subr.bf16.mxu0 0
        %2522 = vmatpush1.bf16.msra.mxu0 0
        %2523 = vmatprep.subr.bf16.mxu0 0
        %2524 = vmatpush1.bf16.msra.mxu0 0
        %2525 = vmatprep.mubr.bf16.mxu0 0
        %2526 = vmatmul.mubr.bf16.gmra.mrb[0].mxu0 %v901
        %v2527 = vpop.f32.mrb[0].mxu0
        %v2528 = vadd.f32 %v2465, %v2527
        %v2529 = vpop.f32.mrb[0].mxu0
        %v2530 = vadd.f32 %v2467, %v2529
        %v2531 = vpop.f32.mrb[0].mxu0
        %v2532 = vadd.f32 %v2469, %v2531
        %v2533 = vpop.f32.mrb[0].mxu0
        %v2534 = vadd.f32 %v2471, %v2533
        %2535 = vmatprep.mubr.bf16.mxu0 0
        %2536 = vmatmul.mubr.bf16.gmra.mrb[0].mxu0 %v906
        %v2537 = vpop.f32.mrb[0].mxu0
        %v2538 = vadd.f32 %v2475, %v2537
        %v2539 = vpop.f32.mrb[0].mxu0
        %v2540 = vadd.f32 %v2477, %v2539
        %v2541 = vpop.f32.mrb[0].mxu0
        %v2542 = vadd.f32 %v2479, %v2541
        %v2543 = vpop.f32.mrb[0].mxu0
        %v2544 = vadd.f32 %v2481, %v2543
        %2545 = vmatprep.mubr.bf16.mxu0 0
        %2546 = vmatmul.mubr.bf16.gmra.mrb[0].mxu0 %v911
        %v2547 = vpop.f32.mrb[0].mxu0
        %v2548 = vadd.f32 %v2485, %v2547
        %v2549 = vpop.f32.mrb[0].mxu0
        %v2550 = vadd.f32 %v2487, %v2549
        %v2551 = vpop.f32.mrb[0].mxu0
        %v2552 = vadd.f32 %v2489, %v2551
        %v2553 = vpop.f32.mrb[0].mxu0
        %v2554 = vadd.f32 %v2491, %v2553
        %2555 = vdwg.mxu0
        %2556 = vmatprep.subr.bf16.mxu0 %v1810
        %2557 = vmatpush1.bf16.msra.mxu0 %v1809
        %2558 = vmatprep.subr.bf16.mxu0 %v1817
        %2559 = vmatpush1.bf16.msra.mxu0 %v1816
        %2560 = vmatprep.subr.bf16.mxu0 %v1824
        %2561 = vmatpush1.bf16.msra.mxu0 %v1823
        %2562 = vmatprep.subr.bf16.mxu0 %v1831
        %2563 = vmatpush1.bf16.msra.mxu0 %v1830
        %2564 = vmatprep.subr.bf16.mxu0 %v1838
        %2565 = vmatpush1.bf16.msra.mxu0 %v1837
        %2566 = vmatprep.subr.bf16.mxu0 %v1845
        %2567 = vmatpush1.bf16.msra.mxu0 %v1844
        %2568 = vmatprep.subr.bf16.mxu0 %v1852
        %2569 = vmatpush1.bf16.msra.mxu0 %v1851
        %2570 = vmatprep.subr.bf16.mxu0 %v1859
        %2571 = vmatpush1.bf16.msra.mxu0 %v1858
        %2572 = vmatprep.subr.bf16.mxu0 %v1866
        %2573 = vmatpush1.bf16.msra.mxu0 %v1865
        %2574 = vmatprep.subr.bf16.mxu0 %v1873
        %2575 = vmatpush1.bf16.msra.mxu0 %v1872
        %2576 = vmatprep.subr.bf16.mxu0 %v1880
        %2577 = vmatpush1.bf16.msra.mxu0 %v1879
        %2578 = vmatprep.subr.bf16.mxu0 %v1887
        %2579 = vmatpush1.bf16.msra.mxu0 %v1886
        %2580 = vmatprep.subr.bf16.mxu0 %v1894
        %2581 = vmatpush1.bf16.msra.mxu0 %v1893
        %2582 = vmatprep.subr.bf16.mxu0 %v1901
        %2583 = vmatpush1.bf16.msra.mxu0 %v1900
        %2584 = vmatprep.subr.bf16.mxu0 %v1908
        %2585 = vmatpush1.bf16.msra.mxu0 %v1907
        %2586 = vmatprep.subr.bf16.mxu0 %v1915
        %2587 = vmatpush1.bf16.msra.mxu0 %v1914
        %2588 = vmatprep.mubr.bf16.mxu0 %v898
        %2589 = vmatmul.mubr.bf16.gmra.mrb[0].mxu0 %v897
        %v2590 = vpop.f32.mrb[0].mxu0
        %v2591 = vadd.f32 0.0, %v2590
        %v2592 = vpop.f32.mrb[0].mxu0
        %v2593 = vadd.f32 0.0, %v2592
        %v2594 = vpop.f32.mrb[0].mxu0
        %v2595 = vadd.f32 0.0, %v2594
        %v2596 = vpop.f32.mrb[0].mxu0
        %v2597 = vadd.f32 0.0, %v2596
        %2598 = vmatprep.mubr.bf16.mxu0 %v903
        %2599 = vmatmul.mubr.bf16.gmra.mrb[0].mxu0 %v902
        %v2600 = vpop.f32.mrb[0].mxu0
        %v2601 = vadd.f32 0.0, %v2600
        %v2602 = vpop.f32.mrb[0].mxu0
        %v2603 = vadd.f32 0.0, %v2602
        %v2604 = vpop.f32.mrb[0].mxu0
        %v2605 = vadd.f32 0.0, %v2604
        %v2606 = vpop.f32.mrb[0].mxu0
        %v2607 = vadd.f32 0.0, %v2606
        %2608 = vmatprep.mubr.bf16.mxu0 %v908
        %2609 = vmatmul.mubr.bf16.gmra.mrb[0].mxu0 %v907
        %v2610 = vpop.f32.mrb[0].mxu0
        %v2611 = vadd.f32 0.0, %v2610
        %v2612 = vpop.f32.mrb[0].mxu0
        %v2613 = vadd.f32 0.0, %v2612
        %v2614 = vpop.f32.mrb[0].mxu0
        %v2615 = vadd.f32 0.0, %v2614
        %v2616 = vpop.f32.mrb[0].mxu0
        %v2617 = vadd.f32 0.0, %v2616
        %2618 = vdwg.mxu0
        %2619 = vmatprep.subr.bf16.mxu0 %v1922
        %2620 = vmatpush1.bf16.msra.mxu0 %v1921
        %2621 = vmatprep.subr.bf16.mxu0 %v1929
        %2622 = vmatpush1.bf16.msra.mxu0 %v1928
        %2623 = vmatprep.subr.bf16.mxu0 %v1936
        %2624 = vmatpush1.bf16.msra.mxu0 %v1935
        %2625 = vmatprep.subr.bf16.mxu0 %v1943
        %2626 = vmatpush1.bf16.msra.mxu0 %v1942
        %2627 = vmatprep.subr.bf16.mxu0 %v1950
        %2628 = vmatpush1.bf16.msra.mxu0 %v1949
        %2629 = vmatprep.subr.bf16.mxu0 %v1957
        %2630 = vmatpush1.bf16.msra.mxu0 %v1956
        %2631 = vmatprep.subr.bf16.mxu0 %v1964
        %2632 = vmatpush1.bf16.msra.mxu0 %v1963
        %2633 = vmatprep.subr.bf16.mxu0 %v1971
        %2634 = vmatpush1.bf16.msra.mxu0 %v1970
        %2635 = vmatprep.subr.bf16.mxu0 %v1978
        %2636 = vmatpush1.bf16.msra.mxu0 %v1977
        %2637 = vmatprep.subr.bf16.mxu0 %v1985
        %2638 = vmatpush1.bf16.msra.mxu0 %v1984
        %2639 = vmatprep.subr.bf16.mxu0 %v1992
        %2640 = vmatpush1.bf16.msra.mxu0 %v1991
        %2641 = vmatprep.subr.bf16.mxu0 %v1999
        %2642 = vmatpush1.bf16.msra.mxu0 %v1998
        %2643 = vmatprep.subr.bf16.mxu0 %v2006
        %2644 = vmatpush1.bf16.msra.mxu0 %v2005
        %2645 = vmatprep.subr.bf16.mxu0 %v2013
        %2646 = vmatpush1.bf16.msra.mxu0 %v2012
        %2647 = vmatprep.subr.bf16.mxu0 %v2020
        %2648 = vmatpush1.bf16.msra.mxu0 %v2019
        %2649 = vmatprep.subr.bf16.mxu0 %v2027
        %2650 = vmatpush1.bf16.msra.mxu0 %v2026
        %2651 = vmatprep.mubr.bf16.mxu0 %v900
        %2652 = vmatmul.mubr.bf16.gmra.mrb[0].mxu0 %v899
        %v2653 = vpop.f32.mrb[0].mxu0
        %v2654 = vadd.f32 %v2591, %v2653
        %v2655 = vpop.f32.mrb[0].mxu0
        %v2656 = vadd.f32 %v2593, %v2655
        %v2657 = vpop.f32.mrb[0].mxu0
        %v2658 = vadd.f32 %v2595, %v2657
        %v2659 = vpop.f32.mrb[0].mxu0
        %v2660 = vadd.f32 %v2597, %v2659
        %2661 = vmatprep.mubr.bf16.mxu0 %v905
        %2662 = vmatmul.mubr.bf16.gmra.mrb[0].mxu0 %v904
        %v2663 = vpop.f32.mrb[0].mxu0
        %v2664 = vadd.f32 %v2601, %v2663
        %v2665 = vpop.f32.mrb[0].mxu0
        %v2666 = vadd.f32 %v2603, %v2665
        %v2667 = vpop.f32.mrb[0].mxu0
        %v2668 = vadd.f32 %v2605, %v2667
        %v2669 = vpop.f32.mrb[0].mxu0
        %v2670 = vadd.f32 %v2607, %v2669
        %2671 = vmatprep.mubr.bf16.mxu0 %v910
        %2672 = vmatmul.mubr.bf16.gmra.mrb[0].mxu0 %v909
        %v2673 = vpop.f32.mrb[0].mxu0
        %v2674 = vadd.f32 %v2611, %v2673
        %v2675 = vpop.f32.mrb[0].mxu0
        %v2676 = vadd.f32 %v2613, %v2675
        %v2677 = vpop.f32.mrb[0].mxu0
        %v2678 = vadd.f32 %v2615, %v2677
        %v2679 = vpop.f32.mrb[0].mxu0
        %v2680 = vadd.f32 %v2617, %v2679
        %2681 = vdwg.mxu0
        %2682 = vmatprep.subr.bf16.mxu0 %v2034
        %2683 = vmatpush1.bf16.msra.mxu0 %v2033
        %2684 = vmatprep.subr.bf16.mxu0 %v2041
        %2685 = vmatpush1.bf16.msra.mxu0 %v2040
        %2686 = vmatprep.subr.bf16.mxu0 %v2048
        %2687 = vmatpush1.bf16.msra.mxu0 %v2047
        %2688 = vmatprep.subr.bf16.mxu0 %v2055
        %2689 = vmatpush1.bf16.msra.mxu0 %v2054
        %2690 = vmatprep.subr.bf16.mxu0 %v2062
        %2691 = vmatpush1.bf16.msra.mxu0 %v2061
        %2692 = vmatprep.subr.bf16.mxu0 %v2069
        %2693 = vmatpush1.bf16.msra.mxu0 %v2068
        %2694 = vmatprep.subr.bf16.mxu0 %v2076
        %2695 = vmatpush1.bf16.msra.mxu0 %v2075
        %2696 = vmatprep.subr.bf16.mxu0 %v2083
        %2697 = vmatpush1.bf16.msra.mxu0 %v2082
        %2698 = vmatprep.subr.bf16.mxu0 0
        %2699 = vmatpush1.bf16.msra.mxu0 0
        %2700 = vmatprep.subr.bf16.mxu0 0
        %2701 = vmatpush1.bf16.msra.mxu0 0
        %2702 = vmatprep.subr.bf16.mxu0 0
        %2703 = vmatpush1.bf16.msra.mxu0 0
        %2704 = vmatprep.subr.bf16.mxu0 0
        %2705 = vmatpush1.bf16.msra.mxu0 0
        %2706 = vmatprep.subr.bf16.mxu0 0
        %2707 = vmatpush1.bf16.msra.mxu0 0
        %2708 = vmatprep.subr.bf16.mxu0 0
        %2709 = vmatpush1.bf16.msra.mxu0 0
        %2710 = vmatprep.subr.bf16.mxu0 0
        %2711 = vmatpush1.bf16.msra.mxu0 0
        %2712 = vmatprep.subr.bf16.mxu0 0
        %2713 = vmatpush1.bf16.msra.mxu0 0
        %2714 = vmatprep.mubr.bf16.mxu0 0
        %2715 = vmatmul.mubr.bf16.gmra.mrb[0].mxu0 %v901
        %v2716 = vpop.f32.mrb[0].mxu0
        %v2717 = vadd.f32 %v2654, %v2716
        %v2718 = vpop.f32.mrb[0].mxu0
        %v2719 = vadd.f32 %v2656, %v2718
        %v2720 = vpop.f32.mrb[0].mxu0
        %v2721 = vadd.f32 %v2658, %v2720
        %v2722 = vpop.f32.mrb[0].mxu0
        %v2723 = vadd.f32 %v2660, %v2722
        %2724 = vmatprep.mubr.bf16.mxu0 0
        %2725 = vmatmul.mubr.bf16.gmra.mrb[0].mxu0 %v906
        %v2726 = vpop.f32.mrb[0].mxu0
        %v2727 = vadd.f32 %v2664, %v2726
        %v2728 = vpop.f32.mrb[0].mxu0
        %v2729 = vadd.f32 %v2666, %v2728
        %v2730 = vpop.f32.mrb[0].mxu0
        %v2731 = vadd.f32 %v2668, %v2730
        %v2732 = vpop.f32.mrb[0].mxu0
        %v2733 = vadd.f32 %v2670, %v2732
        %2734 = vmatprep.mubr.bf16.mxu0 0
        %2735 = vmatmul.mubr.bf16.gmra.mrb[0].mxu0 %v911
        %v2736 = vpop.f32.mrb[0].mxu0
        %v2737 = vadd.f32 %v2674, %v2736
        %v2738 = vpop.f32.mrb[0].mxu0
        %v2739 = vadd.f32 %v2676, %v2738
        %v2740 = vpop.f32.mrb[0].mxu0
        %v2741 = vadd.f32 %v2678, %v2740
        %v2742 = vpop.f32.mrb[0].mxu0
        %v2743 = vadd.f32 %v2680, %v2742
        %2744 = vdwg.mxu0
        %2745 = vmatprep.subr.bf16.mxu0 %v1812
        %2746 = vmatpush1.bf16.msra.mxu0 %v1811
        %2747 = vmatprep.subr.bf16.mxu0 %v1819
        %2748 = vmatpush1.bf16.msra.mxu0 %v1818
        %2749 = vmatprep.subr.bf16.mxu0 %v1826
        %2750 = vmatpush1.bf16.msra.mxu0 %v1825
        %2751 = vmatprep.subr.bf16.mxu0 %v1833
        %2752 = vmatpush1.bf16.msra.mxu0 %v1832
        %2753 = vmatprep.subr.bf16.mxu0 %v1840
        %2754 = vmatpush1.bf16.msra.mxu0 %v1839
        %2755 = vmatprep.subr.bf16.mxu0 %v1847
        %2756 = vmatpush1.bf16.msra.mxu0 %v1846
        %2757 = vmatprep.subr.bf16.mxu0 %v1854
        %2758 = vmatpush1.bf16.msra.mxu0 %v1853
        %2759 = vmatprep.subr.bf16.mxu0 %v1861
        %2760 = vmatpush1.bf16.msra.mxu0 %v1860
        %2761 = vmatprep.subr.bf16.mxu0 %v1868
        %2762 = vmatpush1.bf16.msra.mxu0 %v1867
        %2763 = vmatprep.subr.bf16.mxu0 %v1875
        %2764 = vmatpush1.bf16.msra.mxu0 %v1874
        %2765 = vmatprep.subr.bf16.mxu0 %v1882
        %2766 = vmatpush1.bf16.msra.mxu0 %v1881
        %2767 = vmatprep.subr.bf16.mxu0 %v1889
        %2768 = vmatpush1.bf16.msra.mxu0 %v1888
        %2769 = vmatprep.subr.bf16.mxu0 %v1896
        %2770 = vmatpush1.bf16.msra.mxu0 %v1895
        %2771 = vmatprep.subr.bf16.mxu0 %v1903
        %2772 = vmatpush1.bf16.msra.mxu0 %v1902
        %2773 = vmatprep.subr.bf16.mxu0 %v1910
        %2774 = vmatpush1.bf16.msra.mxu0 %v1909
        %2775 = vmatprep.subr.bf16.mxu0 %v1917
        %2776 = vmatpush1.bf16.msra.mxu0 %v1916
        %2777 = vmatprep.mubr.bf16.mxu0 %v898
        %2778 = vmatmul.mubr.bf16.gmra.mrb[0].mxu0 %v897
        %v2779 = vpop.f32.mrb[0].mxu0
        %v2780 = vadd.f32 0.0, %v2779
        %v2781 = vpop.f32.mrb[0].mxu0
        %v2782 = vadd.f32 0.0, %v2781
        %v2783 = vpop.f32.mrb[0].mxu0
        %v2784 = vadd.f32 0.0, %v2783
        %v2785 = vpop.f32.mrb[0].mxu0
        %v2786 = vadd.f32 0.0, %v2785
        %2787 = vmatprep.mubr.bf16.mxu0 %v903
        %2788 = vmatmul.mubr.bf16.gmra.mrb[0].mxu0 %v902
        %v2789 = vpop.f32.mrb[0].mxu0
        %v2790 = vadd.f32 0.0, %v2789
        %v2791 = vpop.f32.mrb[0].mxu0
        %v2792 = vadd.f32 0.0, %v2791
        %v2793 = vpop.f32.mrb[0].mxu0
        %v2794 = vadd.f32 0.0, %v2793
        %v2795 = vpop.f32.mrb[0].mxu0
        %v2796 = vadd.f32 0.0, %v2795
        %2797 = vmatprep.mubr.bf16.mxu0 %v908
        %2798 = vmatmul.mubr.bf16.gmra.mrb[0].mxu0 %v907
        %v2799 = vpop.f32.mrb[0].mxu0
        %v2800 = vadd.f32 0.0, %v2799
        %v2801 = vpop.f32.mrb[0].mxu0
        %v2802 = vadd.f32 0.0, %v2801
        %v2803 = vpop.f32.mrb[0].mxu0
        %v2804 = vadd.f32 0.0, %v2803
        %v2805 = vpop.f32.mrb[0].mxu0
        %v2806 = vadd.f32 0.0, %v2805
        %2807 = vdwg.mxu0
        %2808 = vmatprep.subr.bf16.mxu0 %v1924
        %2809 = vmatpush1.bf16.msra.mxu0 %v1923
        %2810 = vmatprep.subr.bf16.mxu0 %v1931
        %2811 = vmatpush1.bf16.msra.mxu0 %v1930
        %2812 = vmatprep.subr.bf16.mxu0 %v1938
        %2813 = vmatpush1.bf16.msra.mxu0 %v1937
        %2814 = vmatprep.subr.bf16.mxu0 %v1945
        %2815 = vmatpush1.bf16.msra.mxu0 %v1944
        %2816 = vmatprep.subr.bf16.mxu0 %v1952
        %2817 = vmatpush1.bf16.msra.mxu0 %v1951
        %2818 = vmatprep.subr.bf16.mxu0 %v1959
        %2819 = vmatpush1.bf16.msra.mxu0 %v1958
        %2820 = vmatprep.subr.bf16.mxu0 %v1966
        %2821 = vmatpush1.bf16.msra.mxu0 %v1965
        %2822 = vmatprep.subr.bf16.mxu0 %v1973
        %2823 = vmatpush1.bf16.msra.mxu0 %v1972
        %2824 = vmatprep.subr.bf16.mxu0 %v1980
        %2825 = vmatpush1.bf16.msra.mxu0 %v1979
        %2826 = vmatprep.subr.bf16.mxu0 %v1987
        %2827 = vmatpush1.bf16.msra.mxu0 %v1986
        %2828 = vmatprep.subr.bf16.mxu0 %v1994
        %2829 = vmatpush1.bf16.msra.mxu0 %v1993
        %2830 = vmatprep.subr.bf16.mxu0 %v2001
        %2831 = vmatpush1.bf16.msra.mxu0 %v2000
        %2832 = vmatprep.subr.bf16.mxu0 %v2008
        %2833 = vmatpush1.bf16.msra.mxu0 %v2007
        %2834 = vmatprep.subr.bf16.mxu0 %v2015
        %2835 = vmatpush1.bf16.msra.mxu0 %v2014
        %2836 = vmatprep.subr.bf16.mxu0 %v2022
        %2837 = vmatpush1.bf16.msra.mxu0 %v2021
        %2838 = vmatprep.subr.bf16.mxu0 %v2029
        %2839 = vmatpush1.bf16.msra.mxu0 %v2028
        %2840 = vmatprep.mubr.bf16.mxu0 %v900
        %2841 = vmatmul.mubr.bf16.gmra.mrb[0].mxu0 %v899
        %v2842 = vpop.f32.mrb[0].mxu0
        %v2843 = vadd.f32 %v2780, %v2842
        %v2844 = vpop.f32.mrb[0].mxu0
        %v2845 = vadd.f32 %v2782, %v2844
        %v2846 = vpop.f32.mrb[0].mxu0
        %v2847 = vadd.f32 %v2784, %v2846
        %v2848 = vpop.f32.mrb[0].mxu0
        %v2849 = vadd.f32 %v2786, %v2848
        %2850 = vmatprep.mubr.bf16.mxu0 %v905
        %2851 = vmatmul.mubr.bf16.gmra.mrb[0].mxu0 %v904
        %v2852 = vpop.f32.mrb[0].mxu0
        %v2853 = vadd.f32 %v2790, %v2852
        %v2854 = vpop.f32.mrb[0].mxu0
        %v2855 = vadd.f32 %v2792, %v2854
        %v2856 = vpop.f32.mrb[0].mxu0
        %v2857 = vadd.f32 %v2794, %v2856
        %v2858 = vpop.f32.mrb[0].mxu0
        %v2859 = vadd.f32 %v2796, %v2858
        %2860 = vmatprep.mubr.bf16.mxu0 %v910
        %2861 = vmatmul.mubr.bf16.gmra.mrb[0].mxu0 %v909
        %v2862 = vpop.f32.mrb[0].mxu0
        %v2863 = vadd.f32 %v2800, %v2862
        %v2864 = vpop.f32.mrb[0].mxu0
        %v2865 = vadd.f32 %v2802, %v2864
        %v2866 = vpop.f32.mrb[0].mxu0
        %v2867 = vadd.f32 %v2804, %v2866
        %v2868 = vpop.f32.mrb[0].mxu0
        %v2869 = vadd.f32 %v2806, %v2868
        %2870 = vdwg.mxu0
        %2871 = vmatprep.subr.bf16.mxu0 %v2036
        %2872 = vmatpush1.bf16.msra.mxu0 %v2035
        %2873 = vmatprep.subr.bf16.mxu0 %v2043
        %2874 = vmatpush1.bf16.msra.mxu0 %v2042
        %2875 = vmatprep.subr.bf16.mxu0 %v2050
        %2876 = vmatpush1.bf16.msra.mxu0 %v2049
        %2877 = vmatprep.subr.bf16.mxu0 %v2057
        %2878 = vmatpush1.bf16.msra.mxu0 %v2056
        %2879 = vmatprep.subr.bf16.mxu0 %v2064
        %2880 = vmatpush1.bf16.msra.mxu0 %v2063
        %2881 = vmatprep.subr.bf16.mxu0 %v2071
        %2882 = vmatpush1.bf16.msra.mxu0 %v2070
        %2883 = vmatprep.subr.bf16.mxu0 %v2078
        %2884 = vmatpush1.bf16.msra.mxu0 %v2077
        %2885 = vmatprep.subr.bf16.mxu0 %v2085
        %2886 = vmatpush1.bf16.msra.mxu0 %v2084
        %2887 = vmatprep.subr.bf16.mxu0 0
        %2888 = vmatpush1.bf16.msra.mxu0 0
        %2889 = vmatprep.subr.bf16.mxu0 0
        %2890 = vmatpush1.bf16.msra.mxu0 0
        %2891 = vmatprep.subr.bf16.mxu0 0
        %2892 = vmatpush1.bf16.msra.mxu0 0
        %2893 = vmatprep.subr.bf16.mxu0 0
        %2894 = vmatpush1.bf16.msra.mxu0 0
        %2895 = vmatprep.subr.bf16.mxu0 0
        %2896 = vmatpush1.bf16.msra.mxu0 0
        %2897 = vmatprep.subr.bf16.mxu0 0
        %2898 = vmatpush1.bf16.msra.mxu0 0
        %2899 = vmatprep.subr.bf16.mxu0 0
        %2900 = vmatpush1.bf16.msra.mxu0 0
        %2901 = vmatprep.subr.bf16.mxu0 0
        %2902 = vmatpush1.bf16.msra.mxu0 0
        %2903 = vmatprep.mubr.bf16.mxu0 0
        %2904 = vmatmul.mubr.bf16.gmra.mrb[0].mxu0 %v901
        %v2905 = vpop.f32.mrb[0].mxu0
        %v2906 = vadd.f32 %v2843, %v2905
        %v2907 = vpop.f32.mrb[0].mxu0
        %v2908 = vadd.f32 %v2845, %v2907
        %v2909 = vpop.f32.mrb[0].mxu0
        %v2910 = vadd.f32 %v2847, %v2909
        %v2911 = vpop.f32.mrb[0].mxu0
        %v2912 = vadd.f32 %v2849, %v2911
        %2913 = vmatprep.mubr.bf16.mxu0 0
        %2914 = vmatmul.mubr.bf16.gmra.mrb[0].mxu0 %v906
        %v2915 = vpop.f32.mrb[0].mxu0
        %v2916 = vadd.f32 %v2853, %v2915
        %v2917 = vpop.f32.mrb[0].mxu0
        %v2918 = vadd.f32 %v2855, %v2917
        %v2919 = vpop.f32.mrb[0].mxu0
        %v2920 = vadd.f32 %v2857, %v2919
        %v2921 = vpop.f32.mrb[0].mxu0
        %v2922 = vadd.f32 %v2859, %v2921
        %2923 = vmatprep.mubr.bf16.mxu0 0
        %2924 = vmatmul.mubr.bf16.gmra.mrb[0].mxu0 %v911
        %v2925 = vpop.f32.mrb[0].mxu0
        %v2926 = vadd.f32 %v2863, %v2925
        %v2927 = vpop.f32.mrb[0].mxu0
        %v2928 = vadd.f32 %v2865, %v2927
        %v2929 = vpop.f32.mrb[0].mxu0
        %v2930 = vadd.f32 %v2867, %v2929
        %v2931 = vpop.f32.mrb[0].mxu0
        %v2932 = vadd.f32 %v2869, %v2931
        %2933 = vdwg.mxu0
        %2934 = vmatprep.subr.bf16.mxu0 0
        %2935 = vmatpush1.bf16.msra.mxu0 %v1813
        %2936 = vmatprep.subr.bf16.mxu0 0
        %2937 = vmatpush1.bf16.msra.mxu0 %v1820
        %2938 = vmatprep.subr.bf16.mxu0 0
        %2939 = vmatpush1.bf16.msra.mxu0 %v1827
        %2940 = vmatprep.subr.bf16.mxu0 0
        %2941 = vmatpush1.bf16.msra.mxu0 %v1834
        %2942 = vmatprep.subr.bf16.mxu0 0
        %2943 = vmatpush1.bf16.msra.mxu0 %v1841
        %2944 = vmatprep.subr.bf16.mxu0 0
        %2945 = vmatpush1.bf16.msra.mxu0 %v1848
        %2946 = vmatprep.subr.bf16.mxu0 0
        %2947 = vmatpush1.bf16.msra.mxu0 %v1855
        %2948 = vmatprep.subr.bf16.mxu0 0
        %2949 = vmatpush1.bf16.msra.mxu0 %v1862
        %2950 = vmatprep.subr.bf16.mxu0 0
        %2951 = vmatpush1.bf16.msra.mxu0 %v1869
        %2952 = vmatprep.subr.bf16.mxu0 0
        %2953 = vmatpush1.bf16.msra.mxu0 %v1876
        %2954 = vmatprep.subr.bf16.mxu0 0
        %2955 = vmatpush1.bf16.msra.mxu0 %v1883
        %2956 = vmatprep.subr.bf16.mxu0 0
        %2957 = vmatpush1.bf16.msra.mxu0 %v1890
        %2958 = vmatprep.subr.bf16.mxu0 0
        %2959 = vmatpush1.bf16.msra.mxu0 %v1897
        %2960 = vmatprep.subr.bf16.mxu0 0
        %2961 = vmatpush1.bf16.msra.mxu0 %v1904
        %2962 = vmatprep.subr.bf16.mxu0 0
        %2963 = vmatpush1.bf16.msra.mxu0 %v1911
        %2964 = vmatprep.subr.bf16.mxu0 0
        %2965 = vmatpush1.bf16.msra.mxu0 %v1918
        %2966 = vmatprep.mubr.bf16.mxu0 %v898
        %2967 = vmatmul.mubr.bf16.gmra.mrb[0].mxu0 %v897
        %v2968 = vpop.f32.mrb[0].mxu0
        %v2969 = vadd.f32 0.0, %v2968
        %v2970 = vpop.f32.mrb[0].mxu0
        %v2971 = vpop.f32.mrb[0].mxu0
        %v2972 = vadd.f32 0.0, %v2971
        %v2973 = vpop.f32.mrb[0].mxu0
        %2974 = vmatprep.mubr.bf16.mxu0 %v903
        %2975 = vmatmul.mubr.bf16.gmra.mrb[0].mxu0 %v902
        %v2976 = vpop.f32.mrb[0].mxu0
        %v2977 = vadd.f32 0.0, %v2976
        %v2978 = vpop.f32.mrb[0].mxu0
        %v2979 = vpop.f32.mrb[0].mxu0
        %v2980 = vadd.f32 0.0, %v2979
        %v2981 = vpop.f32.mrb[0].mxu0
        %2982 = vmatprep.mubr.bf16.mxu0 %v908
        %2983 = vmatmul.mubr.bf16.gmra.mrb[0].mxu0 %v907
        %v2984 = vpop.f32.mrb[0].mxu0
        %v2985 = vadd.f32 0.0, %v2984
        %v2986 = vpop.f32.mrb[0].mxu0
        %v2987 = vpop.f32.mrb[0].mxu0
        %v2988 = vadd.f32 0.0, %v2987
        %v2989 = vpop.f32.mrb[0].mxu0
        %2990 = vdwg.mxu0
        %2991 = vmatprep.subr.bf16.mxu0 0
        %2992 = vmatpush1.bf16.msra.mxu0 %v1925
        %2993 = vmatprep.subr.bf16.mxu0 0
        %2994 = vmatpush1.bf16.msra.mxu0 %v1932
        %2995 = vmatprep.subr.bf16.mxu0 0
        %2996 = vmatpush1.bf16.msra.mxu0 %v1939
        %2997 = vmatprep.subr.bf16.mxu0 0
        %2998 = vmatpush1.bf16.msra.mxu0 %v1946
        %2999 = vmatprep.subr.bf16.mxu0 0
        %3000 = vmatpush1.bf16.msra.mxu0 %v1953
        %3001 = vmatprep.subr.bf16.mxu0 0
        %3002 = vmatpush1.bf16.msra.mxu0 %v1960
        %3003 = vmatprep.subr.bf16.mxu0 0
        %3004 = vmatpush1.bf16.msra.mxu0 %v1967
        %3005 = vmatprep.subr.bf16.mxu0 0
        %3006 = vmatpush1.bf16.msra.mxu0 %v1974
        %3007 = vmatprep.subr.bf16.mxu0 0
        %3008 = vmatpush1.bf16.msra.mxu0 %v1981
        %3009 = vmatprep.subr.bf16.mxu0 0
        %3010 = vmatpush1.bf16.msra.mxu0 %v1988
        %3011 = vmatprep.subr.bf16.mxu0 0
        %3012 = vmatpush1.bf16.msra.mxu0 %v1995
        %3013 = vmatprep.subr.bf16.mxu0 0
        %3014 = vmatpush1.bf16.msra.mxu0 %v2002
        %3015 = vmatprep.subr.bf16.mxu0 0
        %3016 = vmatpush1.bf16.msra.mxu0 %v2009
        %3017 = vmatprep.subr.bf16.mxu0 0
        %3018 = vmatpush1.bf16.msra.mxu0 %v2016
        %3019 = vmatprep.subr.bf16.mxu0 0
        %3020 = vmatpush1.bf16.msra.mxu0 %v2023
        %3021 = vmatprep.subr.bf16.mxu0 0
        %3022 = vmatpush1.bf16.msra.mxu0 %v2030
        %3023 = vmatprep.mubr.bf16.mxu0 %v900
        %3024 = vmatmul.mubr.bf16.gmra.mrb[0].mxu0 %v899
        %v3025 = vpop.f32.mrb[0].mxu0
        %v3026 = vadd.f32 %v2969, %v3025
        %v3027 = vpop.f32.mrb[0].mxu0
        %v3028 = vpop.f32.mrb[0].mxu0
        %v3029 = vadd.f32 %v2972, %v3028
        %v3030 = vpop.f32.mrb[0].mxu0
        %3031 = vmatprep.mubr.bf16.mxu0 %v905
        %3032 = vmatmul.mubr.bf16.gmra.mrb[0].mxu0 %v904
        %v3033 = vpop.f32.mrb[0].mxu0
        %v3034 = vadd.f32 %v2977, %v3033
        %v3035 = vpop.f32.mrb[0].mxu0
        %v3036 = vpop.f32.mrb[0].mxu0
        %v3037 = vadd.f32 %v2980, %v3036
        %v3038 = vpop.f32.mrb[0].mxu0
        %3039 = vmatprep.mubr.bf16.mxu0 %v910
        %3040 = vmatmul.mubr.bf16.gmra.mrb[0].mxu0 %v909
        %v3041 = vpop.f32.mrb[0].mxu0
        %v3042 = vadd.f32 %v2985, %v3041
        %v3043 = vpop.f32.mrb[0].mxu0
        %v3044 = vpop.f32.mrb[0].mxu0
        %v3045 = vadd.f32 %v2988, %v3044
        %v3046 = vpop.f32.mrb[0].mxu0
        %3047 = vdwg.mxu0
        %3048 = vmatprep.subr.bf16.mxu0 0
        %3049 = vmatpush1.bf16.msra.mxu0 %v2037
        %3050 = vmatprep.subr.bf16.mxu0 0
        %3051 = vmatpush1.bf16.msra.mxu0 %v2044
        %3052 = vmatprep.subr.bf16.mxu0 0
        %3053 = vmatpush1.bf16.msra.mxu0 %v2051
        %3054 = vmatprep.subr.bf16.mxu0 0
        %3055 = vmatpush1.bf16.msra.mxu0 %v2058
        %3056 = vmatprep.subr.bf16.mxu0 0
        %3057 = vmatpush1.bf16.msra.mxu0 %v2065
        %3058 = vmatprep.subr.bf16.mxu0 0
        %3059 = vmatpush1.bf16.msra.mxu0 %v2072
        %3060 = vmatprep.subr.bf16.mxu0 0
        %3061 = vmatpush1.bf16.msra.mxu0 %v2079
        %3062 = vmatprep.subr.bf16.mxu0 0
        %3063 = vmatpush1.bf16.msra.mxu0 %v2086
        %3064 = vmatprep.subr.bf16.mxu0 0
        %3065 = vmatpush1.bf16.msra.mxu0 0
        %3066 = vmatprep.subr.bf16.mxu0 0
        %3067 = vmatpush1.bf16.msra.mxu0 0
        %3068 = vmatprep.subr.bf16.mxu0 0
        %3069 = vmatpush1.bf16.msra.mxu0 0
        %3070 = vmatprep.subr.bf16.mxu0 0
        %3071 = vmatpush1.bf16.msra.mxu0 0
        %3072 = vmatprep.subr.bf16.mxu0 0
        %3073 = vmatpush1.bf16.msra.mxu0 0
        %3074 = vmatprep.subr.bf16.mxu0 0
        %3075 = vmatpush1.bf16.msra.mxu0 0
        %3076 = vmatprep.subr.bf16.mxu0 0
        %3077 = vmatpush1.bf16.msra.mxu0 0
        %3078 = vmatprep.subr.bf16.mxu0 0
        %3079 = vmatpush1.bf16.msra.mxu0 0
        %3080 = vmatprep.mubr.bf16.mxu0 0
        %3081 = vmatmul.mubr.bf16.gmra.mrb[0].mxu0 %v901
        %v3082 = vpop.f32.mrb[0].mxu0
        %v3083 = vadd.f32 %v3026, %v3082
        %v3084 = vpop.f32.mrb[0].mxu0
        %v3085 = vpop.f32.mrb[0].mxu0
        %v3086 = vadd.f32 %v3029, %v3085
        %v3087 = vpop.f32.mrb[0].mxu0
        %3088 = vmatprep.mubr.bf16.mxu0 0
        %3089 = vmatmul.mubr.bf16.gmra.mrb[0].mxu0 %v906
        %v3090 = vpop.f32.mrb[0].mxu0
        %v3091 = vadd.f32 %v3034, %v3090
        %v3092 = vpop.f32.mrb[0].mxu0
        %v3093 = vpop.f32.mrb[0].mxu0
        %v3094 = vadd.f32 %v3037, %v3093
        %v3095 = vpop.f32.mrb[0].mxu0
        %3096 = vmatprep.mubr.bf16.mxu0 0
        %3097 = vmatmul.mubr.bf16.gmra.mrb[0].mxu0 %v911
        %v3098 = vpop.f32.mrb[0].mxu0
        %v3099 = vadd.f32 %v3042, %v3098
        %v3100 = vpop.f32.mrb[0].mxu0
        %v3101 = vpop.f32.mrb[0].mxu0
        %v3102 = vadd.f32 %v3045, %v3101
        %v3103 = vpop.f32.mrb[0].mxu0
        %3104 = vdwg.mxu0
        %v3105 = vadd.f32 %v469, %v2528
        %v3106 = vadd.f32 %v470, %v2530
        %v3107 = vadd.f32 %v471, %v2717
        %v3108 = vadd.f32 %v472, %v2719
        %v3109 = vadd.f32 %v473, %v2906
        %v3110 = vadd.f32 %v474, %v2908
        %v3111 = vadd.f32 %v475, %v3083
        %v3112 = vadd.f32 %v476, %v2532
        %v3113 = vadd.f32 %v477, %v2534
        %v3114 = vadd.f32 %v478, %v2721
        %v3115 = vadd.f32 %v479, %v2723
        %v3116 = vadd.f32 %v480, %v2910
        %v3117 = vadd.f32 %v481, %v2912
        %v3118 = vadd.f32 %v482, %v3086
        %v3119 = vadd.f32 %v483, %v2538
        %v3120 = vadd.f32 %v484, %v2540
        %v3121 = vadd.f32 %v485, %v2727
        %v3122 = vadd.f32 %v486, %v2729
        %v3123 = vadd.f32 %v487, %v2916
        %v3124 = vadd.f32 %v488, %v2918
        %v3125 = vadd.f32 %v489, %v3091
        %v3126 = vadd.f32 %v490, %v2542
        %v3127 = vadd.f32 %v491, %v2544
        %v3128 = vadd.f32 %v492, %v2731
        %v3129 = vadd.f32 %v493, %v2733
        %v3130 = vadd.f32 %v494, %v2920
        %v3131 = vadd.f32 %v495, %v2922
        %v3132 = vadd.f32 %v496, %v3094
        %v3133 = vadd.f32 %v497, %v2548
        %v3134 = vadd.f32 %v498, %v2550
        %v3135 = vadd.f32 %v499, %v2737
        %v3136 = vadd.f32 %v500, %v2739
        %v3137 = vadd.f32 %v501, %v2926
        %v3138 = vadd.f32 %v502, %v2928
        %v3139 = vadd.f32 %v503, %v3099
        %v3140 = vadd.f32 %v504, %v2552
        %v3141 = vadd.f32 %v505, %v2554
        %v3142 = vadd.f32 %v506, %v2741
        %v3143 = vadd.f32 %v507, %v2743
        %v3144 = vadd.f32 %v508, %v2930
        %v3145 = vadd.f32 %v509, %v2932
        %v3146 = vadd.f32 %v510, %v3102
        %3147 = vst [vmem:[#allocation2] sm:$0xff] %v3105
        %3148 = vst [vmem:[#allocation2 + $0x8] sm:$0xff] %v3106
        %3149 = vst [vmem:[#allocation2 + $0x10] sm:$0xff] %v3107
        %3150 = vst [vmem:[#allocation2 + $0x18] sm:$0xff] %v3108
        %3151 = vst [vmem:[#allocation2 + $0x20] sm:$0xff] %v3109
        %3152 = vst [vmem:[#allocation2 + $0x28] sm:$0xff] %v3110
        %3153 = vst [vmem:[#allocation2 + $0x30] sm:$0xff] %v3111
        %3154 = vst [vmem:[#allocation2 + $0x38] sm:$0xff] %v3112
        %3155 = vst [vmem:[#allocation2 + $0x40] sm:$0xff] %v3113
        %3156 = vst [vmem:[#allocation2 + $0x48] sm:$0xff] %v3114
        %3157 = vst [vmem:[#allocation2 + $0x50] sm:$0xff] %v3115
        %3158 = vst [vmem:[#allocation2 + $0x58] sm:$0xff] %v3116
        %3159 = vst [vmem:[#allocation2 + $0x60] sm:$0xff] %v3117
        %3160 = vst [vmem:[#allocation2 + $0x68] sm:$0xff] %v3118
        %3161 = vst [vmem:[#allocation2 + $0x70] sm:$0xff] %v3119
        %3162 = vst [vmem:[#allocation2 + $0x78] sm:$0xff] %v3120
        %3163 = vst [vmem:[#allocation2 + $0x80] sm:$0xff] %v3121
        %3164 = vst [vmem:[#allocation2 + $0x88] sm:$0xff] %v3122
        %3165 = vst [vmem:[#allocation2 + $0x90] sm:$0xff] %v3123
        %3166 = vst [vmem:[#allocation2 + $0x98] sm:$0xff] %v3124
        %3167 = vst [vmem:[#allocation2 + $0xa0] sm:$0xff] %v3125
        %3168 = vst [vmem:[#allocation2 + $0xa8] sm:$0xff] %v3126
        %3169 = vst [vmem:[#allocation2 + $0xb0] sm:$0xff] %v3127
        %3170 = vst [vmem:[#allocation2 + $0xb8] sm:$0xff] %v3128
        %3171 = vst [vmem:[#allocation2 + $0xc0] sm:$0xff] %v3129
        %3172 = vst [vmem:[#allocation2 + $0xc8] sm:$0xff] %v3130
        %3173 = vst [vmem:[#allocation2 + $0xd0] sm:$0xff] %v3131
        %3174 = vst [vmem:[#allocation2 + $0xd8] sm:$0xff] %v3132
        %3175 = vst [vmem:[#allocation2 + $0xe0] sm:$0xff] %v3133
        %3176 = vst [vmem:[#allocation2 + $0xe8] sm:$0xff] %v3134
        %3177 = vst [vmem:[#allocation2 + $0xf0] sm:$0xff] %v3135
        %3178 = vst [vmem:[#allocation2 + $0xf8] sm:$0xff] %v3136
        %3179 = vst [vmem:[#allocation2 + $0x100] sm:$0xff] %v3137
        %3180 = vst [vmem:[#allocation2 + $0x108] sm:$0xff] %v3138
        %3181 = vst [vmem:[#allocation2 + $0x110] sm:$0xff] %v3139
        %3182 = vst [vmem:[#allocation2 + $0x118] sm:$0xff] %v3140
        %3183 = vst [vmem:[#allocation2 + $0x120] sm:$0xff] %v3141
        %3184 = vst [vmem:[#allocation2 + $0x128] sm:$0xff] %v3142
        %3185 = vst [vmem:[#allocation2 + $0x130] sm:$0xff] %v3143
        %3186 = vst [vmem:[#allocation2 + $0x138] sm:$0xff] %v3144
        %3187 = vst [vmem:[#allocation2 + $0x140] sm:$0xff] %v3145
        %3188 = vst [vmem:[#allocation2 + $0x148] sm:$0xff] %v3146
        %s3189 = sld [smem:[#allocation6 + %s32]]
        %p3190 = scmp.eq.s32.totalorder %s3189, 1
        // Predicated region
        $region79: #{cnn_discriminator_forward.2} parent=57 // pred_check
          %p3191 = pneg %p3190
        $region80: #{cnn_discriminator_forward.2} parent=57 // pred_check_branch
          %3193 = sbr.rel (%p3191) target = $region82
        $region81: #{cnn_discriminator_forward.2} parent=57 // pred_region
          %v3194 = vld [vmem:[#allocation2] sm:$0xff]
          %v3195 = vld [vmem:[#allocation2 + $0x8] sm:$0xff]
          %v3196 = vld [vmem:[#allocation2 + $0x10] sm:$0xff]
          %v3197 = vld [vmem:[#allocation2 + $0x18] sm:$0xff]
          %v3198 = vld [vmem:[#allocation2 + $0x20] sm:$0xff]
          %v3199 = vld [vmem:[#allocation2 + $0x28] sm:$0xff]
          %v3200 = vld [vmem:[#allocation2 + $0x30] sm:$0xff]
          %v3201 = vld [vmem:[#allocation2 + $0x38] sm:$0xff]
          %v3202 = vld [vmem:[#allocation2 + $0x40] sm:$0xff]
          %v3203 = vld [vmem:[#allocation2 + $0x48] sm:$0xff]
          %v3204 = vld [vmem:[#allocation2 + $0x50] sm:$0xff]
          %v3205 = vld [vmem:[#allocation2 + $0x58] sm:$0xff]
          %v3206 = vld [vmem:[#allocation2 + $0x60] sm:$0xff]
          %v3207 = vld [vmem:[#allocation2 + $0x68] sm:$0xff]
          %v3208 = vld [vmem:[#allocation2 + $0x70] sm:$0xff]
          %v3209 = vld [vmem:[#allocation2 + $0x78] sm:$0xff]
          %v3210 = vld [vmem:[#allocation2 + $0x80] sm:$0xff]
          %v3211 = vld [vmem:[#allocation2 + $0x88] sm:$0xff]
          %v3212 = vld [vmem:[#allocation2 + $0x90] sm:$0xff]
          %v3213 = vld [vmem:[#allocation2 + $0x98] sm:$0xff]
          %v3214 = vld [vmem:[#allocation2 + $0xa0] sm:$0xff]
          %v3215 = vld [vmem:[#allocation2 + $0xa8] sm:$0xff]
          %v3216 = vld [vmem:[#allocation2 + $0xb0] sm:$0xff]
          %v3217 = vld [vmem:[#allocation2 + $0xb8] sm:$0xff]
          %v3218 = vld [vmem:[#allocation2 + $0xc0] sm:$0xff]
          %v3219 = vld [vmem:[#allocation2 + $0xc8] sm:$0xff]
          %v3220 = vld [vmem:[#allocation2 + $0xd0] sm:$0xff]
          %v3221 = vld [vmem:[#allocation2 + $0xd8] sm:$0xff]
          %v3222 = vld [vmem:[#allocation2 + $0xe0] sm:$0xff]
          %v3223 = vld [vmem:[#allocation2 + $0xe8] sm:$0xff]
          %v3224 = vld [vmem:[#allocation2 + $0xf0] sm:$0xff]
          %v3225 = vld [vmem:[#allocation2 + $0xf8] sm:$0xff]
          %v3226 = vld [vmem:[#allocation2 + $0x100] sm:$0xff]
          %v3227 = vld [vmem:[#allocation2 + $0x108] sm:$0xff]
          %v3228 = vld [vmem:[#allocation2 + $0x110] sm:$0xff]
          %v3229 = vld [vmem:[#allocation2 + $0x118] sm:$0xff]
          %v3230 = vld [vmem:[#allocation2 + $0x120] sm:$0xff]
          %v3231 = vld [vmem:[#allocation2 + $0x128] sm:$0xff]
          %v3232 = vld [vmem:[#allocation2 + $0x130] sm:$0xff]
          %v3233 = vld [vmem:[#allocation2 + $0x138] sm:$0xff]
          %v3234 = vld [vmem:[#allocation2 + $0x140] sm:$0xff]
          %v3235 = vld [vmem:[#allocation2 + $0x148] sm:$0xff]
          %v3236 = vld [vmem:[%s354] sm:$0xff]
          %v3238 = vlaneseq
          %v3239 = vshrl.u32 %v3238, 7
          %v3240 = vsub.s32 0, %v3239
          %v3241 = vrot.slane %v3236, %v3240
          %v3242 = vlaneseq
          %v3243 = vshrl.u32 %v3242, 7
          %v3244 = vsub.s32 1, %v3243
          %v3245 = vrot.slane %v3236, %v3244
          %v3246 = vlaneseq
          %v3247 = vshrl.u32 %v3246, 7
          %v3248 = vsub.s32 2, %v3247
          %v3249 = vrot.slane %v3236, %v3248
          %v3250 = vlaneseq
          %v3251 = vshrl.u32 %v3250, 7
          %v3252 = vsub.s32 3, %v3251
          %v3253 = vrot.slane %v3236, %v3252
          %v3254 = vlaneseq
          %v3255 = vshrl.u32 %v3254, 7
          %v3256 = vsub.s32 4, %v3255
          %v3257 = vrot.slane %v3236, %v3256
          %v3258 = vlaneseq
          %v3259 = vshrl.u32 %v3258, 7
          %v3260 = vsub.s32 5, %v3259
          %v3261 = vrot.slane %v3236, %v3260
          %v3262 = vlaneseq
          %v3263 = vshrl.u32 %v3262, 7
          %v3264 = vsub.s32 6, %v3263
          %v3265 = vrot.slane %v3236, %v3264
          %v3273 = vadd.f32 %v3194, %v3241
          %v3274 = vadd.f32 %v3195, %v3245
          %v3275 = vadd.f32 %v3196, %v3249
          %v3276 = vadd.f32 %v3197, %v3253
          %v3277 = vadd.f32 %v3198, %v3257
          %v3278 = vadd.f32 %v3199, %v3261
          %v3279 = vadd.f32 %v3200, %v3265
          %v3280 = vadd.f32 %v3201, %v3241
          %v3281 = vadd.f32 %v3202, %v3245
          %v3282 = vadd.f32 %v3203, %v3249
          %v3283 = vadd.f32 %v3204, %v3253
          %v3284 = vadd.f32 %v3205, %v3257
          %v3285 = vadd.f32 %v3206, %v3261
          %v3286 = vadd.f32 %v3207, %v3265
          %v3287 = vadd.f32 %v3208, %v3241
          %v3288 = vadd.f32 %v3209, %v3245
          %v3289 = vadd.f32 %v3210, %v3249
          %v3290 = vadd.f32 %v3211, %v3253
          %v3291 = vadd.f32 %v3212, %v3257
          %v3292 = vadd.f32 %v3213, %v3261
          %v3293 = vadd.f32 %v3214, %v3265
          %v3294 = vadd.f32 %v3215, %v3241
          %v3295 = vadd.f32 %v3216, %v3245
          %v3296 = vadd.f32 %v3217, %v3249
          %v3297 = vadd.f32 %v3218, %v3253
          %v3298 = vadd.f32 %v3219, %v3257
          %v3299 = vadd.f32 %v3220, %v3261
          %v3300 = vadd.f32 %v3221, %v3265
          %v3301 = vadd.f32 %v3222, %v3241
          %v3302 = vadd.f32 %v3223, %v3245
          %v3303 = vadd.f32 %v3224, %v3249
          %v3304 = vadd.f32 %v3225, %v3253
          %v3305 = vadd.f32 %v3226, %v3257
          %v3306 = vadd.f32 %v3227, %v3261
          %v3307 = vadd.f32 %v3228, %v3265
          %v3308 = vadd.f32 %v3229, %v3241
          %v3309 = vadd.f32 %v3230, %v3245
          %v3310 = vadd.f32 %v3231, %v3249
          %v3311 = vadd.f32 %v3232, %v3253
          %v3312 = vadd.f32 %v3233, %v3257
          %v3313 = vadd.f32 %v3234, %v3261
          %v3314 = vadd.f32 %v3235, %v3265
          %v3315 = vmax.f32 %v3273, 0.0
          %v3316 = vmax.f32 %v3274, 0.0
          %v3317 = vmax.f32 %v3275, 0.0
          %v3318 = vmax.f32 %v3276, 0.0
          %v3319 = vmax.f32 %v3277, 0.0
          %v3320 = vmax.f32 %v3278, 0.0
          %v3321 = vmax.f32 %v3279, 0.0
          %v3322 = vmax.f32 %v3280, 0.0
          %v3323 = vmax.f32 %v3281, 0.0
          %v3324 = vmax.f32 %v3282, 0.0
          %v3325 = vmax.f32 %v3283, 0.0
          %v3326 = vmax.f32 %v3284, 0.0
          %v3327 = vmax.f32 %v3285, 0.0
          %v3328 = vmax.f32 %v3286, 0.0
          %v3329 = vmax.f32 %v3287, 0.0
          %v3330 = vmax.f32 %v3288, 0.0
          %v3331 = vmax.f32 %v3289, 0.0
          %v3332 = vmax.f32 %v3290, 0.0
          %v3333 = vmax.f32 %v3291, 0.0
          %v3334 = vmax.f32 %v3292, 0.0
          %v3335 = vmax.f32 %v3293, 0.0
          %v3336 = vmax.f32 %v3294, 0.0
          %v3337 = vmax.f32 %v3295, 0.0
          %v3338 = vmax.f32 %v3296, 0.0
          %v3339 = vmax.f32 %v3297, 0.0
          %v3340 = vmax.f32 %v3298, 0.0
          %v3341 = vmax.f32 %v3299, 0.0
          %v3342 = vmax.f32 %v3300, 0.0
          %v3343 = vmax.f32 %v3301, 0.0
          %v3344 = vmax.f32 %v3302, 0.0
          %v3345 = vmax.f32 %v3303, 0.0
          %v3346 = vmax.f32 %v3304, 0.0
          %v3347 = vmax.f32 %v3305, 0.0
          %v3348 = vmax.f32 %v3306, 0.0
          %v3349 = vmax.f32 %v3307, 0.0
          %v3350 = vmax.f32 %v3308, 0.0
          %v3351 = vmax.f32 %v3309, 0.0
          %v3352 = vmax.f32 %v3310, 0.0
          %v3353 = vmax.f32 %v3311, 0.0
          %v3354 = vmax.f32 %v3312, 0.0
          %v3355 = vmax.f32 %v3313, 0.0
          %v3356 = vmax.f32 %v3314, 0.0
          %v3357 = vlaneseq
          %v3358 = vshrl.u32 %v3357, 7
          %v3359 = vadd.s32 %v3358, 8
          %v3360 = vadd.s32 %v3358, 16
          %v3361 = vld [vmem:[%s363] sm:$0xff]
          %v3362 = vlaneseq
          %v3363 = vshrl.u32 %v3362, 7
          %v3364 = vsub.s32 0, %v3363
          %v3365 = vrot.slane %v3361, %v3364
          %v3366 = vlaneseq
          %v3367 = vshrl.u32 %v3366, 7
          %v3368 = vsub.s32 1, %v3367
          %v3369 = vrot.slane %v3361, %v3368
          %v3370 = vlaneseq
          %v3371 = vshrl.u32 %v3370, 7
          %v3372 = vsub.s32 2, %v3371
          %v3373 = vrot.slane %v3361, %v3372
          %v3374 = vlaneseq
          %v3375 = vshrl.u32 %v3374, 7
          %v3376 = vsub.s32 3, %v3375
          %v3377 = vrot.slane %v3361, %v3376
          %v3378 = vlaneseq
          %v3379 = vshrl.u32 %v3378, 7
          %v3380 = vsub.s32 4, %v3379
          %v3381 = vrot.slane %v3361, %v3380
          %v3382 = vlaneseq
          %v3383 = vshrl.u32 %v3382, 7
          %v3384 = vsub.s32 5, %v3383
          %v3385 = vrot.slane %v3361, %v3384
          %v3386 = vlaneseq
          %v3387 = vshrl.u32 %v3386, 7
          %v3388 = vsub.s32 6, %v3387
          %v3389 = vrot.slane %v3361, %v3388
          %vm3390 = vcmp.lt.s32.totalorder %v3358, %v3365
          %vm3391 = vcmp.lt.s32.totalorder %v3358, %v3369
          %vm3392 = vcmp.lt.s32.totalorder %v3358, %v3373
          %vm3393 = vcmp.lt.s32.totalorder %v3358, %v3377
          %vm3394 = vcmp.lt.s32.totalorder %v3358, %v3381
          %vm3395 = vcmp.lt.s32.totalorder %v3358, %v3385
          %vm3396 = vcmp.lt.s32.totalorder %v3358, %v3389
          %vm3397 = vcmp.lt.s32.totalorder %v3359, %v3365
          %vm3398 = vcmp.lt.s32.totalorder %v3359, %v3369
          %vm3399 = vcmp.lt.s32.totalorder %v3359, %v3373
          %vm3400 = vcmp.lt.s32.totalorder %v3359, %v3377
          %vm3401 = vcmp.lt.s32.totalorder %v3359, %v3381
          %vm3402 = vcmp.lt.s32.totalorder %v3359, %v3385
          %vm3403 = vcmp.lt.s32.totalorder %v3359, %v3389
          %vm3404 = vcmp.lt.s32.totalorder %v3360, %v3365
          %vm3405 = vcmp.lt.s32.totalorder %v3360, %v3369
          %vm3406 = vcmp.lt.s32.totalorder %v3360, %v3373
          %vm3407 = vcmp.lt.s32.totalorder %v3360, %v3377
          %vm3408 = vcmp.lt.s32.totalorder %v3360, %v3381
          %vm3409 = vcmp.lt.s32.totalorder %v3360, %v3385
          %vm3410 = vcmp.lt.s32.totalorder %v3360, %v3389
          %v3411 = vsel %vm3390, 1, 0
          %v3412 = vsel %vm3391, 1, 0
          %v3413 = vsel %vm3392, 1, 0
          %v3414 = vsel %vm3393, 1, 0
          %v3415 = vsel %vm3394, 1, 0
          %v3416 = vsel %vm3395, 1, 0
          %v3417 = vsel %vm3396, 1, 0
          %v3418 = vsel %vm3397, 1, 0
          %v3419 = vsel %vm3398, 1, 0
          %v3420 = vsel %vm3399, 1, 0
          %v3421 = vsel %vm3400, 1, 0
          %v3422 = vsel %vm3401, 1, 0
          %v3423 = vsel %vm3402, 1, 0
          %v3424 = vsel %vm3403, 1, 0
          %v3425 = vsel %vm3404, 1, 0
          %v3426 = vsel %vm3405, 1, 0
          %v3427 = vsel %vm3406, 1, 0
          %v3428 = vsel %vm3407, 1, 0
          %v3429 = vsel %vm3408, 1, 0
          %v3430 = vsel %vm3409, 1, 0
          %v3431 = vsel %vm3410, 1, 0
          %v3432 = vcvt.s32.f32 %v3411
          %v3433 = vcvt.s32.f32 %v3412
          %v3434 = vcvt.s32.f32 %v3413
          %v3435 = vcvt.s32.f32 %v3414
          %v3436 = vcvt.s32.f32 %v3415
          %v3437 = vcvt.s32.f32 %v3416
          %v3438 = vcvt.s32.f32 %v3417
          %v3439 = vcvt.s32.f32 %v3418
          %v3440 = vcvt.s32.f32 %v3419
          %v3441 = vcvt.s32.f32 %v3420
          %v3442 = vcvt.s32.f32 %v3421
          %v3443 = vcvt.s32.f32 %v3422
          %v3444 = vcvt.s32.f32 %v3423
          %v3445 = vcvt.s32.f32 %v3424
          %v3446 = vcvt.s32.f32 %v3425
          %v3447 = vcvt.s32.f32 %v3426
          %v3448 = vcvt.s32.f32 %v3427
          %v3449 = vcvt.s32.f32 %v3428
          %v3450 = vcvt.s32.f32 %v3429
          %v3451 = vcvt.s32.f32 %v3430
          %v3452 = vcvt.s32.f32 %v3431
          %v3453 = vmul.f32 %v3315, %v3432
          %v3454 = vmul.f32 %v3316, %v3433
          %v3455 = vmul.f32 %v3317, %v3434
          %v3456 = vmul.f32 %v3318, %v3435
          %v3457 = vmul.f32 %v3319, %v3436
          %v3458 = vmul.f32 %v3320, %v3437
          %v3459 = vmul.f32 %v3321, %v3438
          %v3460 = vmul.f32 %v3322, %v3439
          %v3461 = vmul.f32 %v3323, %v3440
          %v3462 = vmul.f32 %v3324, %v3441
          %v3463 = vmul.f32 %v3325, %v3442
          %v3464 = vmul.f32 %v3326, %v3443
          %v3465 = vmul.f32 %v3327, %v3444
          %v3466 = vmul.f32 %v3328, %v3445
          %v3467 = vmul.f32 %v3329, %v3446
          %v3468 = vmul.f32 %v3330, %v3447
          %v3469 = vmul.f32 %v3331, %v3448
          %v3470 = vmul.f32 %v3332, %v3449
          %v3471 = vmul.f32 %v3333, %v3450
          %v3472 = vmul.f32 %v3334, %v3451
          %v3473 = vmul.f32 %v3335, %v3452
          %v3474 = vmax.f32 %v3453, %v3460
          %v3475 = vmax.f32 %v3474, %v3467
          %v3476 = vrot.slane %v3475, 4
          %v3477 = vmax.f32 %v3475, %v3476
          %v3478 = vrot.slane %v3477, 2
          %v3479 = vmax.f32 %v3477, %v3478
          %v3480 = vrot.slane %v3479, 1
          %v3481 = vmax.f32 %v3479, %v3480
          %v3482 = vmax.f32 %v3454, %v3461
          %v3483 = vmax.f32 %v3482, %v3468
          %v3484 = vrot.slane %v3483, 4
          %v3485 = vmax.f32 %v3483, %v3484
          %v3486 = vrot.slane %v3485, 2
          %v3487 = vmax.f32 %v3485, %v3486
          %v3488 = vrot.slane %v3487, 1
          %v3489 = vmax.f32 %v3487, %v3488
          %v3490 = vmax.f32 %v3455, %v3462
          %v3491 = vmax.f32 %v3490, %v3469
          %v3492 = vrot.slane %v3491, 4
          %v3493 = vmax.f32 %v3491, %v3492
          %v3494 = vrot.slane %v3493, 2
          %v3495 = vmax.f32 %v3493, %v3494
          %v3496 = vrot.slane %v3495, 1
          %v3497 = vmax.f32 %v3495, %v3496
          %v3498 = vmax.f32 %v3456, %v3463
          %v3499 = vmax.f32 %v3498, %v3470
          %v3500 = vrot.slane %v3499, 4
          %v3501 = vmax.f32 %v3499, %v3500
          %v3502 = vrot.slane %v3501, 2
          %v3503 = vmax.f32 %v3501, %v3502
          %v3504 = vrot.slane %v3503, 1
          %v3505 = vmax.f32 %v3503, %v3504
          %v3506 = vmax.f32 %v3457, %v3464
          %v3507 = vmax.f32 %v3506, %v3471
          %v3508 = vrot.slane %v3507, 4
          %v3509 = vmax.f32 %v3507, %v3508
          %v3510 = vrot.slane %v3509, 2
          %v3511 = vmax.f32 %v3509, %v3510
          %v3512 = vrot.slane %v3511, 1
          %v3513 = vmax.f32 %v3511, %v3512
          %v3514 = vmax.f32 %v3458, %v3465
          %v3515 = vmax.f32 %v3514, %v3472
          %v3516 = vrot.slane %v3515, 4
          %v3517 = vmax.f32 %v3515, %v3516
          %v3518 = vrot.slane %v3517, 2
          %v3519 = vmax.f32 %v3517, %v3518
          %v3520 = vrot.slane %v3519, 1
          %v3521 = vmax.f32 %v3519, %v3520
          %v3522 = vmax.f32 %v3459, %v3466
          %v3523 = vmax.f32 %v3522, %v3473
          %v3524 = vrot.slane %v3523, 4
          %v3525 = vmax.f32 %v3523, %v3524
          %v3526 = vrot.slane %v3525, 2
          %v3527 = vmax.f32 %v3525, %v3526
          %v3528 = vrot.slane %v3527, 1
          %v3529 = vmax.f32 %v3527, %v3528
          %v3537 = vcombine.low %v3481, %v3489
          %v3538 = vcombine.low %v3497, %v3505
          %v3539 = vcombine.low %v3513, %v3521
          %v3541 = vunpack.c.l.s4 1966171168
          %v3542 = vunpack.c.0.s8 %v3541
          %v3543 = vlaneseq
          %v3544 = vshrl.u32 %v3543, 7
          %v3545 = vsub.s32 %v3542, %v3544
          %v3546 = vrot.slane %v3537, %v3545
          %v3548 = vunpack.c.l.s4 1966171168
          %v3549 = vunpack.c.0.s8 %v3548
          %v3550 = vlaneseq
          %v3551 = vshrl.u32 %v3550, 7
          %v3552 = vsub.s32 %v3549, %v3551
          %v3553 = vrot.slane %v3538, %v3552
          %v3555 = vunpack.c.l.s4 1966171168
          %v3556 = vunpack.c.0.s8 %v3555
          %v3557 = vlaneseq
          %v3558 = vshrl.u32 %v3557, 7
          %v3559 = vsub.s32 %v3556, %v3558
          %v3560 = vrot.slane %v3539, %v3559
          %v3562 = vunpack.c.l.s4 1966171168
          %v3563 = vunpack.c.0.s8 %v3562
          %v3564 = vlaneseq
          %v3565 = vshrl.u32 %v3564, 7
          %v3566 = vsub.s32 %v3563, %v3565
          %v3567 = vrot.slane %v3529, %v3566
          %v3568 = vcombine.low %v3546, %v3553
          %v3569 = vcombine.low %v3560, %v3567
          %v3571 = vunpack.c.l.s4 1966171168
          %v3572 = vunpack.c.0.s8 %v3571
          %v3573 = vlaneseq
          %v3574 = vshrl.u32 %v3573, 7
          %v3575 = vsub.s32 %v3572, %v3574
          %v3576 = vrot.slane %v3568, %v3575
          %v3578 = vunpack.c.l.s4 1966171168
          %v3579 = vunpack.c.0.s8 %v3578
          %v3580 = vlaneseq
          %v3581 = vshrl.u32 %v3580, 7
          %v3582 = vsub.s32 %v3579, %v3581
          %v3583 = vrot.slane %v3569, %v3582
          %v3584 = vcombine.low %v3576, %v3583
          %v3586 = vlaneseq
          %vm3587 = vcmp.ge.s32.totalorder %v3586, 0
          %vm3588 = vcmp.lt.s32.totalorder %v3586, 896
          %vm3589 = vmand %vm3587, %vm3588
          %3590 = vst.msk [vmem:[%s418] ss:$2 sm:$0x7f] %vm3589, %v3584
          %v3591 = vmul.f32 %v3336, %v3432
          %v3592 = vmul.f32 %v3337, %v3433
          %v3593 = vmul.f32 %v3338, %v3434
          %v3594 = vmul.f32 %v3339, %v3435
          %v3595 = vmul.f32 %v3340, %v3436
          %v3596 = vmul.f32 %v3341, %v3437
          %v3597 = vmul.f32 %v3342, %v3438
          %v3598 = vmul.f32 %v3343, %v3439
          %v3599 = vmul.f32 %v3344, %v3440
          %v3600 = vmul.f32 %v3345, %v3441
          %v3601 = vmul.f32 %v3346, %v3442
          %v3602 = vmul.f32 %v3347, %v3443
          %v3603 = vmul.f32 %v3348, %v3444
          %v3604 = vmul.f32 %v3349, %v3445
          %v3605 = vmul.f32 %v3350, %v3446
          %v3606 = vmul.f32 %v3351, %v3447
          %v3607 = vmul.f32 %v3352, %v3448
          %v3608 = vmul.f32 %v3353, %v3449
          %v3609 = vmul.f32 %v3354, %v3450
          %v3610 = vmul.f32 %v3355, %v3451
          %v3611 = vmul.f32 %v3356, %v3452
          %v3612 = vmax.f32 %v3591, %v3598
          %v3613 = vmax.f32 %v3612, %v3605
          %v3614 = vrot.slane %v3613, 4
          %v3615 = vmax.f32 %v3613, %v3614
          %v3616 = vrot.slane %v3615, 2
          %v3617 = vmax.f32 %v3615, %v3616
          %v3618 = vrot.slane %v3617, 1
          %v3619 = vmax.f32 %v3617, %v3618
          %v3620 = vmax.f32 %v3592, %v3599
          %v3621 = vmax.f32 %v3620, %v3606
          %v3622 = vrot.slane %v3621, 4
          %v3623 = vmax.f32 %v3621, %v3622
          %v3624 = vrot.slane %v3623, 2
          %v3625 = vmax.f32 %v3623, %v3624
          %v3626 = vrot.slane %v3625, 1
          %v3627 = vmax.f32 %v3625, %v3626
          %v3628 = vmax.f32 %v3593, %v3600
          %v3629 = vmax.f32 %v3628, %v3607
          %v3630 = vrot.slane %v3629, 4
          %v3631 = vmax.f32 %v3629, %v3630
          %v3632 = vrot.slane %v3631, 2
          %v3633 = vmax.f32 %v3631, %v3632
          %v3634 = vrot.slane %v3633, 1
          %v3635 = vmax.f32 %v3633, %v3634
          %v3636 = vmax.f32 %v3594, %v3601
          %v3637 = vmax.f32 %v3636, %v3608
          %v3638 = vrot.slane %v3637, 4
          %v3639 = vmax.f32 %v3637, %v3638
          %v3640 = vrot.slane %v3639, 2
          %v3641 = vmax.f32 %v3639, %v3640
          %v3642 = vrot.slane %v3641, 1
          %v3643 = vmax.f32 %v3641, %v3642
          %v3644 = vmax.f32 %v3595, %v3602
          %v3645 = vmax.f32 %v3644, %v3609
          %v3646 = vrot.slane %v3645, 4
          %v3647 = vmax.f32 %v3645, %v3646
          %v3648 = vrot.slane %v3647, 2
          %v3649 = vmax.f32 %v3647, %v3648
          %v3650 = vrot.slane %v3649, 1
          %v3651 = vmax.f32 %v3649, %v3650
          %v3652 = vmax.f32 %v3596, %v3603
          %v3653 = vmax.f32 %v3652, %v3610
          %v3654 = vrot.slane %v3653, 4
          %v3655 = vmax.f32 %v3653, %v3654
          %v3656 = vrot.slane %v3655, 2
          %v3657 = vmax.f32 %v3655, %v3656
          %v3658 = vrot.slane %v3657, 1
          %v3659 = vmax.f32 %v3657, %v3658
          %v3660 = vmax.f32 %v3597, %v3604
          %v3661 = vmax.f32 %v3660, %v3611
          %v3662 = vrot.slane %v3661, 4
          %v3663 = vmax.f32 %v3661, %v3662
          %v3664 = vrot.slane %v3663, 2
          %v3665 = vmax.f32 %v3663, %v3664
          %v3666 = vrot.slane %v3665, 1
          %v3667 = vmax.f32 %v3665, %v3666
          %v3675 = vcombine.low %v3619, %v3627
          %v3676 = vcombine.low %v3635, %v3643
          %v3677 = vcombine.low %v3651, %v3659
          %v3679 = vunpack.c.l.s4 1966171168
          %v3680 = vunpack.c.0.s8 %v3679
          %v3681 = vlaneseq
          %v3682 = vshrl.u32 %v3681, 7
          %v3683 = vsub.s32 %v3680, %v3682
          %v3684 = vrot.slane %v3675, %v3683
          %v3686 = vunpack.c.l.s4 1966171168
          %v3687 = vunpack.c.0.s8 %v3686
          %v3688 = vlaneseq
          %v3689 = vshrl.u32 %v3688, 7
          %v3690 = vsub.s32 %v3687, %v3689
          %v3691 = vrot.slane %v3676, %v3690
          %v3693 = vunpack.c.l.s4 1966171168
          %v3694 = vunpack.c.0.s8 %v3693
          %v3695 = vlaneseq
          %v3696 = vshrl.u32 %v3695, 7
          %v3697 = vsub.s32 %v3694, %v3696
          %v3698 = vrot.slane %v3677, %v3697
          %v3700 = vunpack.c.l.s4 1966171168
          %v3701 = vunpack.c.0.s8 %v3700
          %v3702 = vlaneseq
          %v3703 = vshrl.u32 %v3702, 7
          %v3704 = vsub.s32 %v3701, %v3703
          %v3705 = vrot.slane %v3667, %v3704
          %v3706 = vcombine.low %v3684, %v3691
          %v3707 = vcombine.low %v3698, %v3705
          %v3709 = vunpack.c.l.s4 1966171168
          %v3710 = vunpack.c.0.s8 %v3709
          %v3711 = vlaneseq
          %v3712 = vshrl.u32 %v3711, 7
          %v3713 = vsub.s32 %v3710, %v3712
          %v3714 = vrot.slane %v3706, %v3713
          %v3716 = vunpack.c.l.s4 1966171168
          %v3717 = vunpack.c.0.s8 %v3716
          %v3718 = vlaneseq
          %v3719 = vshrl.u32 %v3718, 7
          %v3720 = vsub.s32 %v3717, %v3719
          %v3721 = vrot.slane %v3707, %v3720
          %v3722 = vcombine.low %v3714, %v3721
          %s3724 = scalar_lea.vmem %s418, 1
          %3725 = vst.msk [vmem:[%s3724] ss:$2 sm:$0x7f] %vm3589, %v3722
        $region82: #{cnn_discriminator_forward.2} parent=57 // pred_fallthru
          _
        %s3726 = sld [smem:[#allocation4 + %s32]]
        %s3727 = smul.u32 7, %s3726
        %p3728 = scmp.lt.s32.totalorder %s3727, 13
        %s3729 = scalar_select %p3728, %s3727, 13
        %s3730 = smul.addr %s3729, 2
        %s3731 = scalar_lea.vmem %s7, %s3730
        // Predicated region
        $region83: #{cnn_discriminator_forward.2} parent=57 // pred_check
          %p3732 = pneg %p168
        $region84: #{cnn_discriminator_forward.2} parent=57 // pred_check_branch
          %3734 = sbr.rel (%p3732) target = $region86
        $region85: #{cnn_discriminator_forward.2} parent=57 // pred_region
          %s3735 = sld [smem:[#allocation4 + %s32]]
          %s3736 = smul.u32 7, %s3735
        $region86: #{cnn_discriminator_forward.2} parent=57 // pred_fallthru
          _
      $region58: #{cnn_discriminator_forward.2} parent=5 // pred_fallthru
        _
      %p3737 = scmp.le.s32.totalorder 2, %s27
      // Predicated region
      $region87: #{cnn_discriminator_forward.2} parent=5 // pred_check
        %p3738 = pneg %p3737
      $region88: #{cnn_discriminator_forward.2} parent=5 // pred_check_branch
        %3740 = sbr.rel (%p3738) target = $region90
      $region89: #{cnn_discriminator_forward.2} parent=5 // pred_region
        %s3741 = ssub.s32 %s27, 2
        // Predicated region
        $region91: #{cnn_discriminator_forward.2} parent=89 // pred_check
          %p3742 = pneg %p174
        $region92: #{cnn_discriminator_forward.2} parent=89 // pred_check_branch
          %3744 = sbr.rel (%p3742) target = $region94
        $region93: #{cnn_discriminator_forward.2} parent=89 // pred_region
          %s3745 = sld [smem:[#allocation4 + %s33]]
          %s3746 = smul.u32 7, %s3745
          %p3747 = scmp.lt.s32.totalorder %s3746, 13
          %s3748 = scalar_select %p3747, %s3746, 13
          %s3749 = smul.addr %s3748, 2
          %s3750 = scalar_lea.vmem %s7, %s3749
        $region94: #{cnn_discriminator_forward.2} parent=89 // pred_fallthru
          _
      $region90: #{cnn_discriminator_forward.2} parent=5 // pred_fallthru
        _
    $region6: #{cnn_discriminator_forward.2} parent=1 // loop_footer
      %s31 = sadd.s32 1, %s27
    $region7: #{cnn_discriminator_forward.2} parent=1 // loop_footer_branch
      %26 = sbr.rel target = $region3
    $region8: #{cnn_discriminator_forward.2} parent=1 // loop_exit
      _
    %3751 = vsyncpa [#allocation9], 1
    %s3752 = scalar_lea.sflag [#allocation9], 1
    %3753 = vsyncpa %s3752, 1
    %3754 = vsyncpa [#allocation11], 1
    %s3755 = scalar_lea.sflag [#allocation11], 1
    %3756 = vsyncpa %s3755, 1

// kernel: cnn_discriminator_forward.3
$region0: #{cnn_discriminator_forward.3}
  #allocation0 [shape = 'u32[]', space=smem, size = 0x4, offset = 0x4, fixed_abs, tag = 'smem constant byte address 0x4 - core index']
  #allocation1 [shape = 'u32[144,128]{1,0:T(1,128)}', space=vmem, size = 0x12000, scoped, tag = 'internal scratch']
  #allocation2 [shape = 'f32[2,1]{1,0:T(2,128)}', space=vmem, size = 0x400, scoped, tag = 'scratch operand']
  #allocation3 [shape = 'f32[1,1]{1,0:T(1,128)S(1)}', space=vmem, size = 0x200, scoped, tag = 'scoped memory for cnn_discriminator_forward.3']
  %s0 = inlined_call_operand.vmem [shape: bf16[2,1792], index: 0, kind: input, shape index: {}]
  %s1 = inlined_call_operand.vmem [shape: f32[2,1792], index: 1, kind: input, shape index: {}]
  %s2 = inlined_call_operand.hbm [shape: bf16[1792,1792], index: 2, kind: input, shape index: {}]
  %s3 = inlined_call_operand.hbm [shape: f32[1,1792], index: 3, kind: input, shape index: {}]
  %s4 = inlined_call_operand.hbm [shape: f32[1,1792], index: 4, kind: input, shape index: {}]
  %s5 = inlined_call_operand.<no memory space> [shape: f32[1,1], index: 5, kind: input, shape index: {}]
  %s6 = inlined_call_operand.vmem [shape: f32[2,1], index: 6, kind: output, shape index: {}]
  %s7 = sld [smem:[#allocation0]]
  $region77: #{cnn_discriminator_forward.3} parent=0
    _
  %s9 = ssub.s32 1, %s7
  %s10 = scalar_select 0, %s9, %s7
  %v11 = vstv %s5
  %12 = vst [vmem:[#allocation3] sm:$0x1] %v11
  $region1: #{cnn_discriminator_forward.3} parent=0
    #allocation4 [shape = 'u8[6422528]{0}', space=vmem, size = 0x620000, scoped, tag = 'input window, operand 2']
    #allocation5 [shape = 's32[2]{0}', space=sflag, size = 0x8, scoped, tag = 'scoped memory for cnn_discriminator_forward.3']
    #allocation6 [shape = 'u8[7168]{0}', space=vmem, size = 0x1c00, scoped, tag = 'input window, operand 3']
    #allocation7 [shape = 's32[2]{0}', space=sflag, size = 0x8, scoped, tag = 'scoped memory for cnn_discriminator_forward.3']
    #allocation8 [shape = 'u8[7168]{0}', space=vmem, size = 0x1c00, scoped, tag = 'input window, operand 4']
    %13 = vsyncpa [#allocation5], 0
    %s14 = scalar_lea.sflag [#allocation5], 1
    %15 = vsyncpa %s14, 0
    %16 = vsyncpa [#allocation7], 0
    %s17 = scalar_lea.sflag [#allocation7], 1
    %18 = vsyncpa %s17, 0
    loop: start=0, step=1, limit=4
    $region2: #{cnn_discriminator_forward.3} parent=1 // loop_pre_header
      _
    $region3: #{cnn_discriminator_forward.3} parent=1 // loop_header
      %s20 = sphi 0, %s24
      %p21 = scmp.ge.s32.totalorder %s20, 4
      %s28 = sphi 0, %s28
      %s30 = sphi 0, %s28
      %s31 = sphi 0, %s30
      %s45 = sphi 0, %s31
      %s51 = sphi 0, %s53
      %s54 = sphi 0, %s51
      %s55 = sphi 0, %s54
      %s71 = sphi 0, %s55
      %s77 = sphi 0, %s79
      %s80 = sphi 0, %s77
      %s81 = sphi 0, %s80
      %s97 = sphi 0, %s81
      %s103 = sphi 0, %s105
      %s106 = sphi 0, %s103
      %s107 = sphi 0, %s106
      %s123 = sphi 0, %s107
      %s129 = sphi 0, %s131
      %s132 = sphi 0, %s129
      %s133 = sphi 0, %s132
      %s149 = sphi 0, %s133
      %s153 = sphi 0, %s153
      %s155 = sphi 0, %s153
      %s156 = sphi 0, %s155
      %s170 = sphi 0, %s156
      %s174 = sphi 0, %s174
      %s176 = sphi 0, %s174
      %s177 = sphi 0, %s176
      %s191 = sphi 0, %s177
    $region4: #{cnn_discriminator_forward.3} parent=1 // loop_header_branch
      %23 = sbr.rel (%p21) target = $region8
    $region5: #{cnn_discriminator_forward.3} parent=1 // loop_body
      %s25 = ssub.s32 %s20, 1
      %s26 = ssub.s32 %s20, 2
      %s27 = sadd.s32 %s20, 1
      %s29 = sadd.s32 %s28, 1
      %p32 = scmp.eq.s32.totalorder %s20, 1
      %p33 = scmp.ne.s32.totalorder %s28, %s30
      %p34 = scmp.eq.s32.totalorder %s20, 0
      %p35 = por %p33, %p34
      %p36 = scmp.ne.s32.totalorder %s28, %s30
      %p37 = scmp.eq.s32.totalorder %s25, 1
      %p38 = por %p36, %p37
      %p39 = scmp.ne.s32.totalorder %s30, %s31
      %p40 = scmp.eq.s32.totalorder %s25, 0
      %p41 = por %p39, %p40
      %p42 = scmp.ne.s32.totalorder %s30, %s31
      %p43 = scmp.eq.s32.totalorder %s26, 1
      %p44 = por %p42, %p43
      %p46 = scmp.ne.s32.totalorder %s31, %s45
      %p47 = scmp.eq.s32.totalorder %s26, 0
      %p48 = por %p46, %p47
      %s49 = ssub.s32 %s20, %s27
      %p50 = scmp.eq.s32.totalorder %s49, 0
      %s52 = sadd.s32 %s51, 1
      %s53 = scalar_select %p50, %s51, %s52
      %p56 = pneg %p50
      %p57 = scmp.eq.s32.totalorder %s20, 1
      %p58 = por %p56, %p57
      %p59 = scmp.ne.s32.totalorder %s51, %s54
      %p60 = scmp.eq.s32.totalorder %s20, 0
      %p61 = por %p59, %p60
      %p62 = scmp.ne.s32.totalorder %s51, %s54
      %p63 = scmp.eq.s32.totalorder %s25, 1
      %p64 = por %p62, %p63
      %p65 = scmp.ne.s32.totalorder %s54, %s55
      %p66 = scmp.eq.s32.totalorder %s25, 0
      %p67 = por %p65, %p66
      %p68 = scmp.ne.s32.totalorder %s54, %s55
      %p69 = scmp.eq.s32.totalorder %s26, 1
      %p70 = por %p68, %p69
      %p72 = scmp.ne.s32.totalorder %s55, %s71
      %p73 = scmp.eq.s32.totalorder %s26, 0
      %p74 = por %p72, %p73
      %s75 = ssub.s32 %s20, %s27
      %p76 = scmp.eq.s32.totalorder %s75, 0
      %s78 = sadd.s32 %s77, 1
      %s79 = scalar_select %p76, %s77, %s78
      %p82 = pneg %p76
      %p83 = scmp.eq.s32.totalorder %s20, 1
      %p84 = por %p82, %p83
      %p85 = scmp.ne.s32.totalorder %s77, %s80
      %p86 = scmp.eq.s32.totalorder %s20, 0
      %p87 = por %p85, %p86
      %p88 = scmp.ne.s32.totalorder %s77, %s80
      %p89 = scmp.eq.s32.totalorder %s25, 1
      %p90 = por %p88, %p89
      %p91 = scmp.ne.s32.totalorder %s80, %s81
      %p92 = scmp.eq.s32.totalorder %s25, 0
      %p93 = por %p91, %p92
      %p94 = scmp.ne.s32.totalorder %s80, %s81
      %p95 = scmp.eq.s32.totalorder %s26, 1
      %p96 = por %p94, %p95
      %p98 = scmp.ne.s32.totalorder %s81, %s97
      %p99 = scmp.eq.s32.totalorder %s26, 0
      %p100 = por %p98, %p99
      %s101 = ssub.s32 %s20, %s27
      %p102 = scmp.eq.s32.totalorder %s101, 0
      %s104 = sadd.s32 %s103, 1
      %s105 = scalar_select %p102, %s103, %s104
      %p108 = pneg %p102
      %p109 = scmp.eq.s32.totalorder %s20, 1
      %p110 = por %p108, %p109
      %p111 = scmp.ne.s32.totalorder %s103, %s106
      %p112 = scmp.eq.s32.totalorder %s20, 0
      %p113 = por %p111, %p112
      %p114 = scmp.ne.s32.totalorder %s103, %s106
      %p115 = scmp.eq.s32.totalorder %s25, 1
      %p116 = por %p114, %p115
      %p117 = scmp.ne.s32.totalorder %s106, %s107
      %p118 = scmp.eq.s32.totalorder %s25, 0
      %p119 = por %p117, %p118
      %p120 = scmp.ne.s32.totalorder %s106, %s107
      %p121 = scmp.eq.s32.totalorder %s26, 1
      %p122 = por %p120, %p121
      %p124 = scmp.ne.s32.totalorder %s107, %s123
      %p125 = scmp.eq.s32.totalorder %s26, 0
      %p126 = por %p124, %p125
      %s127 = ssub.s32 %s20, %s27
      %p128 = scmp.eq.s32.totalorder %s127, 0
      %s130 = sadd.s32 %s129, 1
      %s131 = scalar_select %p128, %s129, %s130
      %p134 = pneg %p128
      %p135 = scmp.eq.s32.totalorder %s20, 1
      %p136 = por %p134, %p135
      %p137 = scmp.ne.s32.totalorder %s129, %s132
      %p138 = scmp.eq.s32.totalorder %s20, 0
      %p139 = por %p137, %p138
      %p140 = scmp.ne.s32.totalorder %s129, %s132
      %p141 = scmp.eq.s32.totalorder %s25, 1
      %p142 = por %p140, %p141
      %p143 = scmp.ne.s32.totalorder %s132, %s133
      %p144 = scmp.eq.s32.totalorder %s25, 0
      %p145 = por %p143, %p144
      %p146 = scmp.ne.s32.totalorder %s132, %s133
      %p147 = scmp.eq.s32.totalorder %s26, 1
      %p148 = por %p146, %p147
      %p150 = scmp.ne.s32.totalorder %s133, %s149
      %p151 = scmp.eq.s32.totalorder %s26, 0
      %p152 = por %p150, %p151
      %s154 = sadd.s32 %s153, 1
      %p157 = scmp.eq.s32.totalorder %s20, 1
      %p158 = scmp.ne.s32.totalorder %s153, %s155
      %p159 = scmp.eq.s32.totalorder %s20, 0
      %p160 = por %p158, %p159
      %p161 = scmp.ne.s32.totalorder %s153, %s155
      %p162 = scmp.eq.s32.totalorder %s25, 1
      %p163 = por %p161, %p162
      %p164 = scmp.ne.s32.totalorder %s155, %s156
      %p165 = scmp.eq.s32.totalorder %s25, 0
      %p166 = por %p164, %p165
      %p167 = scmp.ne.s32.totalorder %s155, %s156
      %p168 = scmp.eq.s32.totalorder %s26, 1
      %p169 = por %p167, %p168
      %p171 = scmp.ne.s32.totalorder %s156, %s170
      %p172 = scmp.eq.s32.totalorder %s26, 0
      %p173 = por %p171, %p172
      %s175 = sadd.s32 %s174, 1
      %p178 = scmp.eq.s32.totalorder %s20, 1
      %p179 = scmp.ne.s32.totalorder %s174, %s176
      %p180 = scmp.eq.s32.totalorder %s20, 0
      %p181 = por %p179, %p180
      %p182 = scmp.ne.s32.totalorder %s174, %s176
      %p183 = scmp.eq.s32.totalorder %s25, 1
      %p184 = por %p182, %p183
      %p185 = scmp.ne.s32.totalorder %s176, %s177
      %p186 = scmp.eq.s32.totalorder %s25, 0
      %p187 = por %p185, %p186
      %p188 = scmp.ne.s32.totalorder %s176, %s177
      %p189 = scmp.eq.s32.totalorder %s26, 1
      %p190 = por %p188, %p189
      %p192 = scmp.ne.s32.totalorder %s177, %s191
      %p193 = scmp.eq.s32.totalorder %s26, 0
      %p194 = por %p192, %p193
      %p195 = scmp.le.s32.totalorder 1, %s20
      %p196 = scmp.lt.s32.totalorder %s20, 3
      %p197 = pnand %p195, %p196
      %p198 = pneg %p197
      // Predicated region
      $region9: #{cnn_discriminator_forward.3} parent=5 // pred_check
        _
      $region10: #{cnn_discriminator_forward.3} parent=5 // pred_check_branch
        %200 = sbr.rel (%p197) target = $region12
      $region11: #{cnn_discriminator_forward.3} parent=5 // pred_region
        %s201 = ssub.s32 %s20, 1
        // Predicated region
        $region13: #{cnn_discriminator_forward.3} parent=11 // pred_check
          %p202 = pneg %p41
        $region14: #{cnn_discriminator_forward.3} parent=11 // pred_check_branch
          %204 = sbr.rel (%p202) target = $region16
        $region15: #{cnn_discriminator_forward.3} parent=11 // pred_region
          _
        $region16: #{cnn_discriminator_forward.3} parent=11 // pred_fallthru
          _
        // Predicated region
        $region17: #{cnn_discriminator_forward.3} parent=11 // pred_check
          %p205 = pneg %p166
        $region18: #{cnn_discriminator_forward.3} parent=11 // pred_check_branch
          %207 = sbr.rel (%p205) target = $region20
        $region19: #{cnn_discriminator_forward.3} parent=11 // pred_region
          _
        $region20: #{cnn_discriminator_forward.3} parent=11 // pred_fallthru
          _
      $region12: #{cnn_discriminator_forward.3} parent=5 // pred_fallthru
        _
      %p208 = scmp.lt.s32.totalorder %s20, 2
      // Predicated region
      $region21: #{cnn_discriminator_forward.3} parent=5 // pred_check
        %p209 = pneg %p208
      $region22: #{cnn_discriminator_forward.3} parent=5 // pred_check_branch
        %211 = sbr.rel (%p209) target = $region24
      $region23: #{cnn_discriminator_forward.3} parent=5 // pred_region
        // Predicated region
        $region25: #{cnn_discriminator_forward.3} parent=23 // pred_check
          %p212 = pneg %p61
        $region26: #{cnn_discriminator_forward.3} parent=23 // pred_check_branch
          %214 = sbr.rel (%p212) target = $region28
        $region27: #{cnn_discriminator_forward.3} parent=23 // pred_region
          %s215 = smul.u32 7, %s20
          %p216 = scmp.lt.s32.totalorder %s215, 13
          %s217 = scalar_select %p216, %s215, 13
          %s218 = smul.addr %s217, 2
          %s219 = scalar_lea.vmem %s1, %s218
          %s220 = smul.u32 7, %s20
        $region28: #{cnn_discriminator_forward.3} parent=23 // pred_fallthru
          _
        // Predicated region
        $region29: #{cnn_discriminator_forward.3} parent=23 // pred_check
          %p221 = pneg %p87
        $region30: #{cnn_discriminator_forward.3} parent=23 // pred_check_branch
          %223 = sbr.rel (%p221) target = $region32
        $region31: #{cnn_discriminator_forward.3} parent=23 // pred_region
          %s224 = sand.u32 %s77, 1
          %s225 = scalar_lea.sflag [#allocation5], %s224
          %s226 = sand.u32 %s77, 1
          %s227 = smul.addr %s226, 6272
          %s228 = scalar_lea.vmem [#allocation4], %s227
          %s229 = smul.u32 7, %s20
          %s231 = ssub.s32 100352, 100352
          %232 = vsyncadd %s225, %s231
          %s233 = smul.addr %s229, 64
          %s234 = scalar_lea.hbm %s2, %s233
          %s235 = sshll.u32 %s228, 4
          %s236 = int_to_ptr.vmem [resolvable:$true] %s235
          %241 = dma.hbm_to_vmem [thread:$0]  %s234, 100352, %s236, %s225, 896, 448, 28
        $region32: #{cnn_discriminator_forward.3} parent=23 // pred_fallthru
          _
        // Predicated region
        $region33: #{cnn_discriminator_forward.3} parent=23 // pred_check
          %p242 = pneg %p113
        $region34: #{cnn_discriminator_forward.3} parent=23 // pred_check_branch
          %244 = sbr.rel (%p242) target = $region36
        $region35: #{cnn_discriminator_forward.3} parent=23 // pred_region
          %s245 = sand.u32 %s20, 1
          %s246 = scalar_lea.sflag [#allocation7], %s245
          %s247 = sand.u32 %s103, 1
          %s248 = smul.addr %s247, 7
          %s249 = scalar_lea.vmem [#allocation6], %s248
          %s250 = smul.u32 7, %s20
          %s252 = ssub.s32 112, 112
          %253 = vsyncadd %s246, %s252
          %s254 = smul.addr %s250, 16
          %s255 = scalar_lea.hbm %s3, %s254
          %s257 = sshll.u32 %s249, 4
          %s258 = int_to_ptr.vmem [resolvable:$true] %s257
          %260 = dma.hbm_to_vmem [thread:$0]  %s255, 112, %s258, %s246
        $region36: #{cnn_discriminator_forward.3} parent=23 // pred_fallthru
          _
        // Predicated region
        $region37: #{cnn_discriminator_forward.3} parent=23 // pred_check
          %p261 = pneg %p139
        $region38: #{cnn_discriminator_forward.3} parent=23 // pred_check_branch
          %263 = sbr.rel (%p261) target = $region40
        $region39: #{cnn_discriminator_forward.3} parent=23 // pred_region
          %s264 = sand.u32 %s20, 1
          %s265 = scalar_lea.sflag [#allocation7], %s264
          %s266 = sand.u32 %s129, 1
          %s267 = smul.addr %s266, 7
          %s268 = scalar_lea.vmem [#allocation8], %s267
          %s269 = smul.u32 7, %s20
          %s271 = ssub.s32 112, 112
          %272 = vsyncadd %s265, %s271
          %s273 = smul.addr %s269, 16
          %s274 = scalar_lea.hbm %s4, %s273
          %s276 = sshll.u32 %s268, 4
          %s277 = int_to_ptr.vmem [resolvable:$true] %s276
          %279 = dma.hbm_to_vmem [thread:$0]  %s274, 112, %s277, %s265
        $region40: #{cnn_discriminator_forward.3} parent=23 // pred_fallthru
          _
      $region24: #{cnn_discriminator_forward.3} parent=5 // pred_fallthru
        _
      %p280 = scmp.le.s32.totalorder 1, %s20
      %p281 = scmp.lt.s32.totalorder %s20, 3
      %p282 = pnand %p280, %p281
      %p283 = pneg %p282
      // Predicated region
      $region41: #{cnn_discriminator_forward.3} parent=5 // pred_check
        _
      $region42: #{cnn_discriminator_forward.3} parent=5 // pred_check_branch
        %285 = sbr.rel (%p282) target = $region44
      $region43: #{cnn_discriminator_forward.3} parent=5 // pred_region
        %s286 = ssub.s32 %s20, 1
        %s287 = sand.u32 %s80, 1
        %s288 = scalar_lea.sflag [#allocation5], %s287
        %s289 = sand.u32 %s80, 1
        %s290 = smul.addr %s289, 6272
        %s291 = scalar_lea.vmem [#allocation4], %s290
        // Predicated region
        $region45: #{cnn_discriminator_forward.3} parent=43 // pred_check
          %p292 = pneg %p93
        $region46: #{cnn_discriminator_forward.3} parent=43 // pred_check_branch
          %294 = sbr.rel (%p292) target = $region48
        $region47: #{cnn_discriminator_forward.3} parent=43 // pred_region
          %295 = dma.done %s288, 100352
        $region48: #{cnn_discriminator_forward.3} parent=43 // pred_fallthru
          _
        %s296 = sand.u32 %s25, 1
        %s297 = scalar_lea.sflag [#allocation7], %s296
        %s298 = sand.u32 %s106, 1
        %s299 = smul.addr %s298, 7
        %s300 = scalar_lea.vmem [#allocation6], %s299
        // Predicated region
        $region49: #{cnn_discriminator_forward.3} parent=43 // pred_check
          %p301 = pneg %p119
        $region50: #{cnn_discriminator_forward.3} parent=43 // pred_check_branch
          %303 = sbr.rel (%p301) target = $region52
        $region51: #{cnn_discriminator_forward.3} parent=43 // pred_region
          %304 = dma.done %s297, 112
        $region52: #{cnn_discriminator_forward.3} parent=43 // pred_fallthru
          _
        %s305 = sand.u32 %s25, 1
        %s306 = scalar_lea.sflag [#allocation7], %s305
        %s307 = sand.u32 %s132, 1
        %s308 = smul.addr %s307, 7
        %s309 = scalar_lea.vmem [#allocation8], %s308
        // Predicated region
        $region53: #{cnn_discriminator_forward.3} parent=43 // pred_check
          %p310 = pneg %p145
        $region54: #{cnn_discriminator_forward.3} parent=43 // pred_check_branch
          %312 = sbr.rel (%p310) target = $region56
        $region55: #{cnn_discriminator_forward.3} parent=43 // pred_region
          %313 = dma.done %s306, 112
        $region56: #{cnn_discriminator_forward.3} parent=43 // pred_fallthru
          _
        %p314 = pneg %p41
        %p315 = pneg %p38
        %s316 = smul.u32 7, %s25
        %p317 = scmp.lt.s32.totalorder %s316, 13
        %s318 = scalar_select %p317, %s316, 13
        %s319 = smul.addr %s318, 2
        %s320 = scalar_lea.vmem %s1, %s319
        %p321 = pneg %p67
        %p322 = pneg %p64
        %s323 = sand.u32 %s80, 1
        %s324 = scalar_lea.sflag [#allocation5], %s323
        %s325 = sand.u32 %s80, 1
        %s326 = smul.addr %s325, 6272
        %s327 = scalar_lea.vmem [#allocation4], %s326
        %p328 = pneg %p93
        %p329 = pneg %p90
        %s330 = sand.u32 %s25, 1
        %s331 = scalar_lea.sflag [#allocation7], %s330
        %s332 = sand.u32 %s106, 1
        %s333 = smul.addr %s332, 7
        %s334 = scalar_lea.vmem [#allocation6], %s333
        %p335 = pneg %p119
        %p336 = pneg %p116
        %s337 = sand.u32 %s25, 1
        %s338 = scalar_lea.sflag [#allocation7], %s337
        %s339 = sand.u32 %s132, 1
        %s340 = smul.addr %s339, 7
        %s341 = scalar_lea.vmem [#allocation8], %s340
        %p342 = pneg %p145
        %p343 = pneg %p142
        %p344 = pneg %p166
        %p345 = pneg %p163
        %p346 = pneg %p187
        %p347 = pneg %p184
        %s348 = smul.u32 7, %s25
        %p349 = scmp.lt.s32.totalorder %s348, 13
        %s350 = scalar_select %p349, %s348, 13
        %s351 = smul.addr %s350, 2
        %s352 = scalar_lea.vmem %s1, %s351
        %s353 = smul.u32 7, %s25
        %s354 = smul.u32 7, %s25
        %s355 = smul.u32 7, %s25
        %s356 = smul.u32 7, %s25
        %p358 = scmp.eq.s32.totalorder %s25, 0
        // Predicated region
        $region57: #{cnn_discriminator_forward.3} parent=43 // pred_check
          %p359 = pneg %p358
        $region58: #{cnn_discriminator_forward.3} parent=43 // pred_check_branch
          %361 = sbr.rel (%p359) target = $region60
        $region59: #{cnn_discriminator_forward.3} parent=43 // pred_region
          %vm362 = vcmask 1024
          %363 = vst.msk [vmem:[#allocation2] sm:$0x3] %vm362, 0.0
        $region60: #{cnn_discriminator_forward.3} parent=43 // pred_fallthru
          _
        %v364 = vld [vmem:[%s0] sm:$0xff]
        %v365 = vld [vmem:[%s0 + $0x8] sm:$0x3f]
        %v366 = vld [vmem:[%s291] sm:$0xff]
        %v367 = vld [vmem:[%s291 + $0x8] sm:$0xff]
        %v368 = vld [vmem:[%s291 + $0x10] sm:$0xff]
        %v369 = vld [vmem:[%s291 + $0x18] sm:$0xf]
        %v370 = vld [vmem:[%s291 + $0x1c] sm:$0xff]
        %v371 = vld [vmem:[%s291 + $0x24] sm:$0xff]
        %v372 = vld [vmem:[%s291 + $0x2c] sm:$0xff]
        %v373 = vld [vmem:[%s291 + $0x34] sm:$0xf]
        %v374 = vld [vmem:[%s291 + $0x38] sm:$0xff]
        %v375 = vld [vmem:[%s291 + $0x40] sm:$0xff]
        %v376 = vld [vmem:[%s291 + $0x48] sm:$0xff]
        %v377 = vld [vmem:[%s291 + $0x50] sm:$0xf]
        %v378 = vld [vmem:[%s291 + $0x54] sm:$0xff]
        %v379 = vld [vmem:[%s291 + $0x5c] sm:$0xff]
        %v380 = vld [vmem:[%s291 + $0x64] sm:$0xff]
        %v381 = vld [vmem:[%s291 + $0x6c] sm:$0xf]
        %v382 = vld [vmem:[%s291 + $0x70] sm:$0xff]
        %v383 = vld [vmem:[%s291 + $0x78] sm:$0xff]
        %v384 = vld [vmem:[%s291 + $0x80] sm:$0xff]
        %v385 = vld [vmem:[%s291 + $0x88] sm:$0xf]
        %v386 = vld [vmem:[%s291 + $0x8c] sm:$0xff]
        %v387 = vld [vmem:[%s291 + $0x94] sm:$0xff]
        %v388 = vld [vmem:[%s291 + $0x9c] sm:$0xff]
        %v389 = vld [vmem:[%s291 + $0xa4] sm:$0xf]
        %v390 = vld [vmem:[%s291 + $0xa8] sm:$0xff]
        %v391 = vld [vmem:[%s291 + $0xb0] sm:$0xff]
        %v392 = vld [vmem:[%s291 + $0xb8] sm:$0xff]
        %v393 = vld [vmem:[%s291 + $0xc0] sm:$0xf]
        %v394 = vld [vmem:[%s291 + $0xc4] sm:$0xff]
        %v395 = vld [vmem:[%s291 + $0xcc] sm:$0xff]
        %v396 = vld [vmem:[%s291 + $0xd4] sm:$0xff]
        %v397 = vld [vmem:[%s291 + $0xdc] sm:$0xf]
        %v398 = vld [vmem:[%s291 + $0xe0] sm:$0xff]
        %v399 = vld [vmem:[%s291 + $0xe8] sm:$0xff]
        %v400 = vld [vmem:[%s291 + $0xf0] sm:$0xff]
        %v401 = vld [vmem:[%s291 + $0xf8] sm:$0xf]
        %v402 = vld [vmem:[%s291 + $0xfc] sm:$0xff]
        %v403 = vld [vmem:[%s291 + $0x104] sm:$0xff]
        %v404 = vld [vmem:[%s291 + $0x10c] sm:$0xff]
        %v405 = vld [vmem:[%s291 + $0x114] sm:$0xf]
        %v406 = vld [vmem:[%s291 + $0x118] sm:$0xff]
        %v407 = vld [vmem:[%s291 + $0x120] sm:$0xff]
        %v408 = vld [vmem:[%s291 + $0x128] sm:$0xff]
        %v409 = vld [vmem:[%s291 + $0x130] sm:$0xf]
        %v410 = vld [vmem:[%s291 + $0x134] sm:$0xff]
        %v411 = vld [vmem:[%s291 + $0x13c] sm:$0xff]
        %v412 = vld [vmem:[%s291 + $0x144] sm:$0xff]
        %v413 = vld [vmem:[%s291 + $0x14c] sm:$0xf]
        %v414 = vld [vmem:[%s291 + $0x150] sm:$0xff]
        %v415 = vld [vmem:[%s291 + $0x158] sm:$0xff]
        %v416 = vld [vmem:[%s291 + $0x160] sm:$0xff]
        %v417 = vld [vmem:[%s291 + $0x168] sm:$0xf]
        %v418 = vld [vmem:[%s291 + $0x16c] sm:$0xff]
        %v419 = vld [vmem:[%s291 + $0x174] sm:$0xff]
        %v420 = vld [vmem:[%s291 + $0x17c] sm:$0xff]
        %v421 = vld [vmem:[%s291 + $0x184] sm:$0xf]
        %v422 = vld [vmem:[%s291 + $0x188] sm:$0xff]
        %v423 = vld [vmem:[%s291 + $0x190] sm:$0xff]
        %v424 = vld [vmem:[%s291 + $0x198] sm:$0xff]
        %v425 = vld [vmem:[%s291 + $0x1a0] sm:$0xf]
        %v426 = vld [vmem:[%s291 + $0x1a4] sm:$0xff]
        %v427 = vld [vmem:[%s291 + $0x1ac] sm:$0xff]
        %v428 = vld [vmem:[%s291 + $0x1b4] sm:$0xff]
        %v429 = vld [vmem:[%s291 + $0x1bc] sm:$0xf]
        %v430 = vld [vmem:[%s291 + $0x1c0] sm:$0xff]
        %v431 = vld [vmem:[%s291 + $0x1c8] sm:$0xff]
        %v432 = vld [vmem:[%s291 + $0x1d0] sm:$0xff]
        %v433 = vld [vmem:[%s291 + $0x1d8] sm:$0xf]
        %v434 = vld [vmem:[%s291 + $0x1dc] sm:$0xff]
        %v435 = vld [vmem:[%s291 + $0x1e4] sm:$0xff]
        %v436 = vld [vmem:[%s291 + $0x1ec] sm:$0xff]
        %v437 = vld [vmem:[%s291 + $0x1f4] sm:$0xf]
        %v438 = vld [vmem:[%s291 + $0x1f8] sm:$0xff]
        %v439 = vld [vmem:[%s291 + $0x200] sm:$0xff]
        %v440 = vld [vmem:[%s291 + $0x208] sm:$0xff]
        %v441 = vld [vmem:[%s291 + $0x210] sm:$0xf]
        %v442 = vld [vmem:[%s291 + $0x214] sm:$0xff]
        %v443 = vld [vmem:[%s291 + $0x21c] sm:$0xff]
        %v444 = vld [vmem:[%s291 + $0x224] sm:$0xff]
        %v445 = vld [vmem:[%s291 + $0x22c] sm:$0xf]
        %v446 = vld [vmem:[%s291 + $0x230] sm:$0xff]
        %v447 = vld [vmem:[%s291 + $0x238] sm:$0xff]
        %v448 = vld [vmem:[%s291 + $0x240] sm:$0xff]
        %v449 = vld [vmem:[%s291 + $0x248] sm:$0xf]
        %v450 = vld [vmem:[%s291 + $0x24c] sm:$0xff]
        %v451 = vld [vmem:[%s291 + $0x254] sm:$0xff]
        %v452 = vld [vmem:[%s291 + $0x25c] sm:$0xff]
        %v453 = vld [vmem:[%s291 + $0x264] sm:$0xf]
        %v454 = vld [vmem:[%s291 + $0x268] sm:$0xff]
        %v455 = vld [vmem:[%s291 + $0x270] sm:$0xff]
        %v456 = vld [vmem:[%s291 + $0x278] sm:$0xff]
        %v457 = vld [vmem:[%s291 + $0x280] sm:$0xf]
        %v458 = vld [vmem:[%s291 + $0x284] sm:$0xff]
        %v459 = vld [vmem:[%s291 + $0x28c] sm:$0xff]
        %v460 = vld [vmem:[%s291 + $0x294] sm:$0xff]
        %v461 = vld [vmem:[%s291 + $0x29c] sm:$0xf]
        %v462 = vld [vmem:[%s291 + $0x2a0] sm:$0xff]
        %v463 = vld [vmem:[%s291 + $0x2a8] sm:$0xff]
        %v464 = vld [vmem:[%s291 + $0x2b0] sm:$0xff]
        %v465 = vld [vmem:[%s291 + $0x2b8] sm:$0xf]
        %v466 = vld [vmem:[%s291 + $0x2bc] sm:$0xff]
        %v467 = vld [vmem:[%s291 + $0x2c4] sm:$0xff]
        %v468 = vld [vmem:[%s291 + $0x2cc] sm:$0xff]
        %v469 = vld [vmem:[%s291 + $0x2d4] sm:$0xf]
        %v470 = vld [vmem:[%s291 + $0x2d8] sm:$0xff]
        %v471 = vld [vmem:[%s291 + $0x2e0] sm:$0xff]
        %v472 = vld [vmem:[%s291 + $0x2e8] sm:$0xff]
        %v473 = vld [vmem:[%s291 + $0x2f0] sm:$0xf]
        %v474 = vld [vmem:[%s291 + $0x2f4] sm:$0xff]
        %v475 = vld [vmem:[%s291 + $0x2fc] sm:$0xff]
        %v476 = vld [vmem:[%s291 + $0x304] sm:$0xff]
        %v477 = vld [vmem:[%s291 + $0x30c] sm:$0xf]
        %v478 = vld [vmem:[%s291 + $0x310] sm:$0xff]
        %v479 = vld [vmem:[%s291 + $0x318] sm:$0xff]
        %v480 = vld [vmem:[%s291 + $0x320] sm:$0xff]
        %v481 = vld [vmem:[%s291 + $0x328] sm:$0xf]
        %v482 = vld [vmem:[%s291 + $0x32c] sm:$0xff]
        %v483 = vld [vmem:[%s291 + $0x334] sm:$0xff]
        %v484 = vld [vmem:[%s291 + $0x33c] sm:$0xff]
        %v485 = vld [vmem:[%s291 + $0x344] sm:$0xf]
        %v486 = vld [vmem:[%s291 + $0x348] sm:$0xff]
        %v487 = vld [vmem:[%s291 + $0x350] sm:$0xff]
        %v488 = vld [vmem:[%s291 + $0x358] sm:$0xff]
        %v489 = vld [vmem:[%s291 + $0x360] sm:$0xf]
        %v490 = vld [vmem:[%s291 + $0x364] sm:$0xff]
        %v491 = vld [vmem:[%s291 + $0x36c] sm:$0xff]
        %v492 = vld [vmem:[%s291 + $0x374] sm:$0xff]
        %v493 = vld [vmem:[%s291 + $0x37c] sm:$0xf]
        %v494 = vld [vmem:[%s291 + $0x380] sm:$0xff]
        %v495 = vld [vmem:[%s291 + $0x388] sm:$0xff]
        %v496 = vld [vmem:[%s291 + $0x390] sm:$0xff]
        %v497 = vld [vmem:[%s291 + $0x398] sm:$0xf]
        %v498 = vld [vmem:[%s291 + $0x39c] sm:$0xff]
        %v499 = vld [vmem:[%s291 + $0x3a4] sm:$0xff]
        %v500 = vld [vmem:[%s291 + $0x3ac] sm:$0xff]
        %v501 = vld [vmem:[%s291 + $0x3b4] sm:$0xf]
        %v502 = vld [vmem:[%s291 + $0x3b8] sm:$0xff]
        %v503 = vld [vmem:[%s291 + $0x3c0] sm:$0xff]
        %v504 = vld [vmem:[%s291 + $0x3c8] sm:$0xff]
        %v505 = vld [vmem:[%s291 + $0x3d0] sm:$0xf]
        %v506 = vld [vmem:[%s291 + $0x3d4] sm:$0xff]
        %v507 = vld [vmem:[%s291 + $0x3dc] sm:$0xff]
        %v508 = vld [vmem:[%s291 + $0x3e4] sm:$0xff]
        %v509 = vld [vmem:[%s291 + $0x3ec] sm:$0xf]
        %v510 = vld [vmem:[%s291 + $0x3f0] sm:$0xff]
        %v511 = vld [vmem:[%s291 + $0x3f8] sm:$0xff]
        %v512 = vld [vmem:[%s291 + $0x400] sm:$0xff]
        %v513 = vld [vmem:[%s291 + $0x408] sm:$0xf]
        %v514 = vld [vmem:[%s291 + $0x40c] sm:$0xff]
        %v515 = vld [vmem:[%s291 + $0x414] sm:$0xff]
        %v516 = vld [vmem:[%s291 + $0x41c] sm:$0xff]
        %v517 = vld [vmem:[%s291 + $0x424] sm:$0xf]
        %v518 = vld [vmem:[%s291 + $0x428] sm:$0xff]
        %v519 = vld [vmem:[%s291 + $0x430] sm:$0xff]
        %v520 = vld [vmem:[%s291 + $0x438] sm:$0xff]
        %v521 = vld [vmem:[%s291 + $0x440] sm:$0xf]
        %v522 = vld [vmem:[%s291 + $0x444] sm:$0xff]
        %v523 = vld [vmem:[%s291 + $0x44c] sm:$0xff]
        %v524 = vld [vmem:[%s291 + $0x454] sm:$0xff]
        %v525 = vld [vmem:[%s291 + $0x45c] sm:$0xf]
        %v526 = vld [vmem:[%s291 + $0x460] sm:$0xff]
        %v527 = vld [vmem:[%s291 + $0x468] sm:$0xff]
        %v528 = vld [vmem:[%s291 + $0x470] sm:$0xff]
        %v529 = vld [vmem:[%s291 + $0x478] sm:$0xf]
        %v530 = vld [vmem:[%s291 + $0x47c] sm:$0xff]
        %v531 = vld [vmem:[%s291 + $0x484] sm:$0xff]
        %v532 = vld [vmem:[%s291 + $0x48c] sm:$0xff]
        %v533 = vld [vmem:[%s291 + $0x494] sm:$0xf]
        %v534 = vld [vmem:[%s291 + $0x498] sm:$0xff]
        %v535 = vld [vmem:[%s291 + $0x4a0] sm:$0xff]
        %v536 = vld [vmem:[%s291 + $0x4a8] sm:$0xff]
        %v537 = vld [vmem:[%s291 + $0x4b0] sm:$0xf]
        %v538 = vld [vmem:[%s291 + $0x4b4] sm:$0xff]
        %v539 = vld [vmem:[%s291 + $0x4bc] sm:$0xff]
        %v540 = vld [vmem:[%s291 + $0x4c4] sm:$0xff]
        %v541 = vld [vmem:[%s291 + $0x4cc] sm:$0xf]
        %v542 = vld [vmem:[%s291 + $0x4d0] sm:$0xff]
        %v543 = vld [vmem:[%s291 + $0x4d8] sm:$0xff]
        %v544 = vld [vmem:[%s291 + $0x4e0] sm:$0xff]
        %v545 = vld [vmem:[%s291 + $0x4e8] sm:$0xf]
        %v546 = vld [vmem:[%s291 + $0x4ec] sm:$0xff]
        %v547 = vld [vmem:[%s291 + $0x4f4] sm:$0xff]
        %v548 = vld [vmem:[%s291 + $0x4fc] sm:$0xff]
        %v549 = vld [vmem:[%s291 + $0x504] sm:$0xf]
        %v550 = vld [vmem:[%s291 + $0x508] sm:$0xff]
        %v551 = vld [vmem:[%s291 + $0x510] sm:$0xff]
        %v552 = vld [vmem:[%s291 + $0x518] sm:$0xff]
        %v553 = vld [vmem:[%s291 + $0x520] sm:$0xf]
        %v554 = vld [vmem:[%s291 + $0x524] sm:$0xff]
        %v555 = vld [vmem:[%s291 + $0x52c] sm:$0xff]
        %v556 = vld [vmem:[%s291 + $0x534] sm:$0xff]
        %v557 = vld [vmem:[%s291 + $0x53c] sm:$0xf]
        %v558 = vld [vmem:[%s291 + $0x540] sm:$0xff]
        %v559 = vld [vmem:[%s291 + $0x548] sm:$0xff]
        %v560 = vld [vmem:[%s291 + $0x550] sm:$0xff]
        %v561 = vld [vmem:[%s291 + $0x558] sm:$0xf]
        %v562 = vld [vmem:[%s291 + $0x55c] sm:$0xff]
        %v563 = vld [vmem:[%s291 + $0x564] sm:$0xff]
        %v564 = vld [vmem:[%s291 + $0x56c] sm:$0xff]
        %v565 = vld [vmem:[%s291 + $0x574] sm:$0xf]
        %v566 = vld [vmem:[%s291 + $0x578] sm:$0xff]
        %v567 = vld [vmem:[%s291 + $0x580] sm:$0xff]
        %v568 = vld [vmem:[%s291 + $0x588] sm:$0xff]
        %v569 = vld [vmem:[%s291 + $0x590] sm:$0xf]
        %v570 = vld [vmem:[%s291 + $0x594] sm:$0xff]
        %v571 = vld [vmem:[%s291 + $0x59c] sm:$0xff]
        %v572 = vld [vmem:[%s291 + $0x5a4] sm:$0xff]
        %v573 = vld [vmem:[%s291 + $0x5ac] sm:$0xf]
        %v574 = vld [vmem:[%s291 + $0x5b0] sm:$0xff]
        %v575 = vld [vmem:[%s291 + $0x5b8] sm:$0xff]
        %v576 = vld [vmem:[%s291 + $0x5c0] sm:$0xff]
        %v577 = vld [vmem:[%s291 + $0x5c8] sm:$0xf]
        %v578 = vld [vmem:[%s291 + $0x5cc] sm:$0xff]
        %v579 = vld [vmem:[%s291 + $0x5d4] sm:$0xff]
        %v580 = vld [vmem:[%s291 + $0x5dc] sm:$0xff]
        %v581 = vld [vmem:[%s291 + $0x5e4] sm:$0xf]
        %v582 = vld [vmem:[%s291 + $0x5e8] sm:$0xff]
        %v583 = vld [vmem:[%s291 + $0x5f0] sm:$0xff]
        %v584 = vld [vmem:[%s291 + $0x5f8] sm:$0xff]
        %v585 = vld [vmem:[%s291 + $0x600] sm:$0xf]
        %v586 = vld [vmem:[%s291 + $0x604] sm:$0xff]
        %v587 = vld [vmem:[%s291 + $0x60c] sm:$0xff]
        %v588 = vld [vmem:[%s291 + $0x614] sm:$0xff]
        %v589 = vld [vmem:[%s291 + $0x61c] sm:$0xf]
        %v590 = vld [vmem:[%s291 + $0x620] sm:$0xff]
        %v591 = vld [vmem:[%s291 + $0x628] sm:$0xff]
        %v592 = vld [vmem:[%s291 + $0x630] sm:$0xff]
        %v593 = vld [vmem:[%s291 + $0x638] sm:$0xf]
        %v594 = vld [vmem:[%s291 + $0x63c] sm:$0xff]
        %v595 = vld [vmem:[%s291 + $0x644] sm:$0xff]
        %v596 = vld [vmem:[%s291 + $0x64c] sm:$0xff]
        %v597 = vld [vmem:[%s291 + $0x654] sm:$0xf]
        %v598 = vld [vmem:[%s291 + $0x658] sm:$0xff]
        %v599 = vld [vmem:[%s291 + $0x660] sm:$0xff]
        %v600 = vld [vmem:[%s291 + $0x668] sm:$0xff]
        %v601 = vld [vmem:[%s291 + $0x670] sm:$0xf]
        %v602 = vld [vmem:[%s291 + $0x674] sm:$0xff]
        %v603 = vld [vmem:[%s291 + $0x67c] sm:$0xff]
        %v604 = vld [vmem:[%s291 + $0x684] sm:$0xff]
        %v605 = vld [vmem:[%s291 + $0x68c] sm:$0xf]
        %v606 = vld [vmem:[%s291 + $0x690] sm:$0xff]
        %v607 = vld [vmem:[%s291 + $0x698] sm:$0xff]
        %v608 = vld [vmem:[%s291 + $0x6a0] sm:$0xff]
        %v609 = vld [vmem:[%s291 + $0x6a8] sm:$0xf]
        %v610 = vld [vmem:[%s291 + $0x6ac] sm:$0xff]
        %v611 = vld [vmem:[%s291 + $0x6b4] sm:$0xff]
        %v612 = vld [vmem:[%s291 + $0x6bc] sm:$0xff]
        %v613 = vld [vmem:[%s291 + $0x6c4] sm:$0xf]
        %v614 = vld [vmem:[%s291 + $0x6c8] sm:$0xff]
        %v615 = vld [vmem:[%s291 + $0x6d0] sm:$0xff]
        %v616 = vld [vmem:[%s291 + $0x6d8] sm:$0xff]
        %v617 = vld [vmem:[%s291 + $0x6e0] sm:$0xf]
        %v618 = vld [vmem:[%s291 + $0x6e4] sm:$0xff]
        %v619 = vld [vmem:[%s291 + $0x6ec] sm:$0xff]
        %v620 = vld [vmem:[%s291 + $0x6f4] sm:$0xff]
        %v621 = vld [vmem:[%s291 + $0x6fc] sm:$0xf]
        %v622 = vld [vmem:[%s291 + $0x700] sm:$0xff]
        %v623 = vld [vmem:[%s291 + $0x708] sm:$0xff]
        %v624 = vld [vmem:[%s291 + $0x710] sm:$0xff]
        %v625 = vld [vmem:[%s291 + $0x718] sm:$0xf]
        %v626 = vld [vmem:[%s291 + $0x71c] sm:$0xff]
        %v627 = vld [vmem:[%s291 + $0x724] sm:$0xff]
        %v628 = vld [vmem:[%s291 + $0x72c] sm:$0xff]
        %v629 = vld [vmem:[%s291 + $0x734] sm:$0xf]
        %v630 = vld [vmem:[%s291 + $0x738] sm:$0xff]
        %v631 = vld [vmem:[%s291 + $0x740] sm:$0xff]
        %v632 = vld [vmem:[%s291 + $0x748] sm:$0xff]
        %v633 = vld [vmem:[%s291 + $0x750] sm:$0xf]
        %v634 = vld [vmem:[%s291 + $0x754] sm:$0xff]
        %v635 = vld [vmem:[%s291 + $0x75c] sm:$0xff]
        %v636 = vld [vmem:[%s291 + $0x764] sm:$0xff]
        %v637 = vld [vmem:[%s291 + $0x76c] sm:$0xf]
        %v638 = vld [vmem:[%s291 + $0x770] sm:$0xff]
        %v639 = vld [vmem:[%s291 + $0x778] sm:$0xff]
        %v640 = vld [vmem:[%s291 + $0x780] sm:$0xff]
        %v641 = vld [vmem:[%s291 + $0x788] sm:$0xf]
        %v642 = vld [vmem:[%s291 + $0x78c] sm:$0xff]
        %v643 = vld [vmem:[%s291 + $0x794] sm:$0xff]
        %v644 = vld [vmem:[%s291 + $0x79c] sm:$0xff]
        %v645 = vld [vmem:[%s291 + $0x7a4] sm:$0xf]
        %v646 = vld [vmem:[%s291 + $0x7a8] sm:$0xff]
        %v647 = vld [vmem:[%s291 + $0x7b0] sm:$0xff]
        %v648 = vld [vmem:[%s291 + $0x7b8] sm:$0xff]
        %v649 = vld [vmem:[%s291 + $0x7c0] sm:$0xf]
        %v650 = vld [vmem:[%s291 + $0x7c4] sm:$0xff]
        %v651 = vld [vmem:[%s291 + $0x7cc] sm:$0xff]
        %v652 = vld [vmem:[%s291 + $0x7d4] sm:$0xff]
        %v653 = vld [vmem:[%s291 + $0x7dc] sm:$0xf]
        %v654 = vld [vmem:[%s291 + $0x7e0] sm:$0xff]
        %v655 = vld [vmem:[%s291 + $0x7e8] sm:$0xff]
        %v656 = vld [vmem:[%s291 + $0x7f0] sm:$0xff]
        %v657 = vld [vmem:[%s291 + $0x7f8] sm:$0xf]
        %v658 = vld [vmem:[%s291 + $0x7fc] sm:$0xff]
        %v659 = vld [vmem:[%s291 + $0x804] sm:$0xff]
        %v660 = vld [vmem:[%s291 + $0x80c] sm:$0xff]
        %v661 = vld [vmem:[%s291 + $0x814] sm:$0xf]
        %v662 = vld [vmem:[%s291 + $0x818] sm:$0xff]
        %v663 = vld [vmem:[%s291 + $0x820] sm:$0xff]
        %v664 = vld [vmem:[%s291 + $0x828] sm:$0xff]
        %v665 = vld [vmem:[%s291 + $0x830] sm:$0xf]
        %v666 = vld [vmem:[%s291 + $0x834] sm:$0xff]
        %v667 = vld [vmem:[%s291 + $0x83c] sm:$0xff]
        %v668 = vld [vmem:[%s291 + $0x844] sm:$0xff]
        %v669 = vld [vmem:[%s291 + $0x84c] sm:$0xf]
        %v670 = vld [vmem:[%s291 + $0x850] sm:$0xff]
        %v671 = vld [vmem:[%s291 + $0x858] sm:$0xff]
        %v672 = vld [vmem:[%s291 + $0x860] sm:$0xff]
        %v673 = vld [vmem:[%s291 + $0x868] sm:$0xf]
        %v674 = vld [vmem:[%s291 + $0x86c] sm:$0xff]
        %v675 = vld [vmem:[%s291 + $0x874] sm:$0xff]
        %v676 = vld [vmem:[%s291 + $0x87c] sm:$0xff]
        %v677 = vld [vmem:[%s291 + $0x884] sm:$0xf]
        %v678 = vld [vmem:[%s291 + $0x888] sm:$0xff]
        %v679 = vld [vmem:[%s291 + $0x890] sm:$0xff]
        %v680 = vld [vmem:[%s291 + $0x898] sm:$0xff]
        %v681 = vld [vmem:[%s291 + $0x8a0] sm:$0xf]
        %v682 = vld [vmem:[%s291 + $0x8a4] sm:$0xff]
        %v683 = vld [vmem:[%s291 + $0x8ac] sm:$0xff]
        %v684 = vld [vmem:[%s291 + $0x8b4] sm:$0xff]
        %v685 = vld [vmem:[%s291 + $0x8bc] sm:$0xf]
        %v686 = vld [vmem:[%s291 + $0x8c0] sm:$0xff]
        %v687 = vld [vmem:[%s291 + $0x8c8] sm:$0xff]
        %v688 = vld [vmem:[%s291 + $0x8d0] sm:$0xff]
        %v689 = vld [vmem:[%s291 + $0x8d8] sm:$0xf]
        %v690 = vld [vmem:[%s291 + $0x8dc] sm:$0xff]
        %v691 = vld [vmem:[%s291 + $0x8e4] sm:$0xff]
        %v692 = vld [vmem:[%s291 + $0x8ec] sm:$0xff]
        %v693 = vld [vmem:[%s291 + $0x8f4] sm:$0xf]
        %v694 = vld [vmem:[%s291 + $0x8f8] sm:$0xff]
        %v695 = vld [vmem:[%s291 + $0x900] sm:$0xff]
        %v696 = vld [vmem:[%s291 + $0x908] sm:$0xff]
        %v697 = vld [vmem:[%s291 + $0x910] sm:$0xf]
        %v698 = vld [vmem:[%s291 + $0x914] sm:$0xff]
        %v699 = vld [vmem:[%s291 + $0x91c] sm:$0xff]
        %v700 = vld [vmem:[%s291 + $0x924] sm:$0xff]
        %v701 = vld [vmem:[%s291 + $0x92c] sm:$0xf]
        %v702 = vld [vmem:[%s291 + $0x930] sm:$0xff]
        %v703 = vld [vmem:[%s291 + $0x938] sm:$0xff]
        %v704 = vld [vmem:[%s291 + $0x940] sm:$0xff]
        %v705 = vld [vmem:[%s291 + $0x948] sm:$0xf]
        %v706 = vld [vmem:[%s291 + $0x94c] sm:$0xff]
        %v707 = vld [vmem:[%s291 + $0x954] sm:$0xff]
        %v708 = vld [vmem:[%s291 + $0x95c] sm:$0xff]
        %v709 = vld [vmem:[%s291 + $0x964] sm:$0xf]
        %v710 = vld [vmem:[%s291 + $0x968] sm:$0xff]
        %v711 = vld [vmem:[%s291 + $0x970] sm:$0xff]
        %v712 = vld [vmem:[%s291 + $0x978] sm:$0xff]
        %v713 = vld [vmem:[%s291 + $0x980] sm:$0xf]
        %v714 = vld [vmem:[%s291 + $0x984] sm:$0xff]
        %v715 = vld [vmem:[%s291 + $0x98c] sm:$0xff]
        %v716 = vld [vmem:[%s291 + $0x994] sm:$0xff]
        %v717 = vld [vmem:[%s291 + $0x99c] sm:$0xf]
        %v718 = vld [vmem:[%s291 + $0x9a0] sm:$0xff]
        %v719 = vld [vmem:[%s291 + $0x9a8] sm:$0xff]
        %v720 = vld [vmem:[%s291 + $0x9b0] sm:$0xff]
        %v721 = vld [vmem:[%s291 + $0x9b8] sm:$0xf]
        %v722 = vld [vmem:[%s291 + $0x9bc] sm:$0xff]
        %v723 = vld [vmem:[%s291 + $0x9c4] sm:$0xff]
        %v724 = vld [vmem:[%s291 + $0x9cc] sm:$0xff]
        %v725 = vld [vmem:[%s291 + $0x9d4] sm:$0xf]
        %v726 = vld [vmem:[%s291 + $0x9d8] sm:$0xff]
        %v727 = vld [vmem:[%s291 + $0x9e0] sm:$0xff]
        %v728 = vld [vmem:[%s291 + $0x9e8] sm:$0xff]
        %v729 = vld [vmem:[%s291 + $0x9f0] sm:$0xf]
        %v730 = vld [vmem:[%s291 + $0x9f4] sm:$0xff]
        %v731 = vld [vmem:[%s291 + $0x9fc] sm:$0xff]
        %v732 = vld [vmem:[%s291 + $0xa04] sm:$0xff]
        %v733 = vld [vmem:[%s291 + $0xa0c] sm:$0xf]
        %v734 = vld [vmem:[%s291 + $0xa10] sm:$0xff]
        %v735 = vld [vmem:[%s291 + $0xa18] sm:$0xff]
        %v736 = vld [vmem:[%s291 + $0xa20] sm:$0xff]
        %v737 = vld [vmem:[%s291 + $0xa28] sm:$0xf]
        %v738 = vld [vmem:[%s291 + $0xa2c] sm:$0xff]
        %v739 = vld [vmem:[%s291 + $0xa34] sm:$0xff]
        %v740 = vld [vmem:[%s291 + $0xa3c] sm:$0xff]
        %v741 = vld [vmem:[%s291 + $0xa44] sm:$0xf]
        %v742 = vld [vmem:[%s291 + $0xa48] sm:$0xff]
        %v743 = vld [vmem:[%s291 + $0xa50] sm:$0xff]
        %v744 = vld [vmem:[%s291 + $0xa58] sm:$0xff]
        %v745 = vld [vmem:[%s291 + $0xa60] sm:$0xf]
        %v746 = vld [vmem:[%s291 + $0xa64] sm:$0xff]
        %v747 = vld [vmem:[%s291 + $0xa6c] sm:$0xff]
        %v748 = vld [vmem:[%s291 + $0xa74] sm:$0xff]
        %v749 = vld [vmem:[%s291 + $0xa7c] sm:$0xf]
        %v750 = vld [vmem:[%s291 + $0xa80] sm:$0xff]
        %v751 = vld [vmem:[%s291 + $0xa88] sm:$0xff]
        %v752 = vld [vmem:[%s291 + $0xa90] sm:$0xff]
        %v753 = vld [vmem:[%s291 + $0xa98] sm:$0xf]
        %v754 = vld [vmem:[%s291 + $0xa9c] sm:$0xff]
        %v755 = vld [vmem:[%s291 + $0xaa4] sm:$0xff]
        %v756 = vld [vmem:[%s291 + $0xaac] sm:$0xff]
        %v757 = vld [vmem:[%s291 + $0xab4] sm:$0xf]
        %v758 = vld [vmem:[%s291 + $0xab8] sm:$0xff]
        %v759 = vld [vmem:[%s291 + $0xac0] sm:$0xff]
        %v760 = vld [vmem:[%s291 + $0xac8] sm:$0xff]
        %v761 = vld [vmem:[%s291 + $0xad0] sm:$0xf]
        %v762 = vld [vmem:[%s291 + $0xad4] sm:$0xff]
        %v763 = vld [vmem:[%s291 + $0xadc] sm:$0xff]
        %v764 = vld [vmem:[%s291 + $0xae4] sm:$0xff]
        %v765 = vld [vmem:[%s291 + $0xaec] sm:$0xf]
        %v766 = vld [vmem:[%s291 + $0xaf0] sm:$0xff]
        %v767 = vld [vmem:[%s291 + $0xaf8] sm:$0xff]
        %v768 = vld [vmem:[%s291 + $0xb00] sm:$0xff]
        %v769 = vld [vmem:[%s291 + $0xb08] sm:$0xf]
        %v770 = vld [vmem:[%s291 + $0xb0c] sm:$0xff]
        %v771 = vld [vmem:[%s291 + $0xb14] sm:$0xff]
        %v772 = vld [vmem:[%s291 + $0xb1c] sm:$0xff]
        %v773 = vld [vmem:[%s291 + $0xb24] sm:$0xf]
        %v774 = vld [vmem:[%s291 + $0xb28] sm:$0xff]
        %v775 = vld [vmem:[%s291 + $0xb30] sm:$0xff]
        %v776 = vld [vmem:[%s291 + $0xb38] sm:$0xff]
        %v777 = vld [vmem:[%s291 + $0xb40] sm:$0xf]
        %v778 = vld [vmem:[%s291 + $0xb44] sm:$0xff]
        %v779 = vld [vmem:[%s291 + $0xb4c] sm:$0xff]
        %v780 = vld [vmem:[%s291 + $0xb54] sm:$0xff]
        %v781 = vld [vmem:[%s291 + $0xb5c] sm:$0xf]
        %v782 = vld [vmem:[%s291 + $0xb60] sm:$0xff]
        %v783 = vld [vmem:[%s291 + $0xb68] sm:$0xff]
        %v784 = vld [vmem:[%s291 + $0xb70] sm:$0xff]
        %v785 = vld [vmem:[%s291 + $0xb78] sm:$0xf]
        %v786 = vld [vmem:[%s291 + $0xb7c] sm:$0xff]
        %v787 = vld [vmem:[%s291 + $0xb84] sm:$0xff]
        %v788 = vld [vmem:[%s291 + $0xb8c] sm:$0xff]
        %v789 = vld [vmem:[%s291 + $0xb94] sm:$0xf]
        %v790 = vld [vmem:[%s291 + $0xb98] sm:$0xff]
        %v791 = vld [vmem:[%s291 + $0xba0] sm:$0xff]
        %v792 = vld [vmem:[%s291 + $0xba8] sm:$0xff]
        %v793 = vld [vmem:[%s291 + $0xbb0] sm:$0xf]
        %v794 = vld [vmem:[%s291 + $0xbb4] sm:$0xff]
        %v795 = vld [vmem:[%s291 + $0xbbc] sm:$0xff]
        %v796 = vld [vmem:[%s291 + $0xbc4] sm:$0xff]
        %v797 = vld [vmem:[%s291 + $0xbcc] sm:$0xf]
        %v798 = vld [vmem:[%s291 + $0xbd0] sm:$0xff]
        %v799 = vld [vmem:[%s291 + $0xbd8] sm:$0xff]
        %v800 = vld [vmem:[%s291 + $0xbe0] sm:$0xff]
        %v801 = vld [vmem:[%s291 + $0xbe8] sm:$0xf]
        %v802 = vld [vmem:[%s291 + $0xbec] sm:$0xff]
        %v803 = vld [vmem:[%s291 + $0xbf4] sm:$0xff]
        %v804 = vld [vmem:[%s291 + $0xbfc] sm:$0xff]
        %v805 = vld [vmem:[%s291 + $0xc04] sm:$0xf]
        %v806 = vld [vmem:[%s291 + $0xc08] sm:$0xff]
        %v807 = vld [vmem:[%s291 + $0xc10] sm:$0xff]
        %v808 = vld [vmem:[%s291 + $0xc18] sm:$0xff]
        %v809 = vld [vmem:[%s291 + $0xc20] sm:$0xf]
        %v810 = vld [vmem:[%s291 + $0xc24] sm:$0xff]
        %v811 = vld [vmem:[%s291 + $0xc2c] sm:$0xff]
        %v812 = vld [vmem:[%s291 + $0xc34] sm:$0xff]
        %v813 = vld [vmem:[%s291 + $0xc3c] sm:$0xf]
        %v814 = vld [vmem:[%s291 + $0xc40] sm:$0xff]
        %v815 = vld [vmem:[%s291 + $0xc48] sm:$0xff]
        %v816 = vld [vmem:[%s291 + $0xc50] sm:$0xff]
        %v817 = vld [vmem:[%s291 + $0xc58] sm:$0xf]
        %v818 = vld [vmem:[%s291 + $0xc5c] sm:$0xff]
        %v819 = vld [vmem:[%s291 + $0xc64] sm:$0xff]
        %v820 = vld [vmem:[%s291 + $0xc6c] sm:$0xff]
        %v821 = vld [vmem:[%s291 + $0xc74] sm:$0xf]
        %v822 = vld [vmem:[%s291 + $0xc78] sm:$0xff]
        %v823 = vld [vmem:[%s291 + $0xc80] sm:$0xff]
        %v824 = vld [vmem:[%s291 + $0xc88] sm:$0xff]
        %v825 = vld [vmem:[%s291 + $0xc90] sm:$0xf]
        %v826 = vld [vmem:[%s291 + $0xc94] sm:$0xff]
        %v827 = vld [vmem:[%s291 + $0xc9c] sm:$0xff]
        %v828 = vld [vmem:[%s291 + $0xca4] sm:$0xff]
        %v829 = vld [vmem:[%s291 + $0xcac] sm:$0xf]
        %v830 = vld [vmem:[%s291 + $0xcb0] sm:$0xff]
        %v831 = vld [vmem:[%s291 + $0xcb8] sm:$0xff]
        %v832 = vld [vmem:[%s291 + $0xcc0] sm:$0xff]
        %v833 = vld [vmem:[%s291 + $0xcc8] sm:$0xf]
        %v834 = vld [vmem:[%s291 + $0xccc] sm:$0xff]
        %v835 = vld [vmem:[%s291 + $0xcd4] sm:$0xff]
        %v836 = vld [vmem:[%s291 + $0xcdc] sm:$0xff]
        %v837 = vld [vmem:[%s291 + $0xce4] sm:$0xf]
        %v838 = vld [vmem:[%s291 + $0xce8] sm:$0xff]
        %v839 = vld [vmem:[%s291 + $0xcf0] sm:$0xff]
        %v840 = vld [vmem:[%s291 + $0xcf8] sm:$0xff]
        %v841 = vld [vmem:[%s291 + $0xd00] sm:$0xf]
        %v842 = vld [vmem:[%s291 + $0xd04] sm:$0xff]
        %v843 = vld [vmem:[%s291 + $0xd0c] sm:$0xff]
        %v844 = vld [vmem:[%s291 + $0xd14] sm:$0xff]
        %v845 = vld [vmem:[%s291 + $0xd1c] sm:$0xf]
        %v846 = vld [vmem:[%s291 + $0xd20] sm:$0xff]
        %v847 = vld [vmem:[%s291 + $0xd28] sm:$0xff]
        %v848 = vld [vmem:[%s291 + $0xd30] sm:$0xff]
        %v849 = vld [vmem:[%s291 + $0xd38] sm:$0xf]
        %v850 = vld [vmem:[%s291 + $0xd3c] sm:$0xff]
        %v851 = vld [vmem:[%s291 + $0xd44] sm:$0xff]
        %v852 = vld [vmem:[%s291 + $0xd4c] sm:$0xff]
        %v853 = vld [vmem:[%s291 + $0xd54] sm:$0xf]
        %v854 = vld [vmem:[%s291 + $0xd58] sm:$0xff]
        %v855 = vld [vmem:[%s291 + $0xd60] sm:$0xff]
        %v856 = vld [vmem:[%s291 + $0xd68] sm:$0xff]
        %v857 = vld [vmem:[%s291 + $0xd70] sm:$0xf]
        %v858 = vld [vmem:[%s291 + $0xd74] sm:$0xff]
        %v859 = vld [vmem:[%s291 + $0xd7c] sm:$0xff]
        %v860 = vld [vmem:[%s291 + $0xd84] sm:$0xff]
        %v861 = vld [vmem:[%s291 + $0xd8c] sm:$0xf]
        %v862 = vld [vmem:[%s291 + $0xd90] sm:$0xff]
        %v863 = vld [vmem:[%s291 + $0xd98] sm:$0xff]
        %v864 = vld [vmem:[%s291 + $0xda0] sm:$0xff]
        %v865 = vld [vmem:[%s291 + $0xda8] sm:$0xf]
        %v866 = vld [vmem:[%s291 + $0xdac] sm:$0xff]
        %v867 = vld [vmem:[%s291 + $0xdb4] sm:$0xff]
        %v868 = vld [vmem:[%s291 + $0xdbc] sm:$0xff]
        %v869 = vld [vmem:[%s291 + $0xdc4] sm:$0xf]
        %v870 = vld [vmem:[%s291 + $0xdc8] sm:$0xff]
        %v871 = vld [vmem:[%s291 + $0xdd0] sm:$0xff]
        %v872 = vld [vmem:[%s291 + $0xdd8] sm:$0xff]
        %v873 = vld [vmem:[%s291 + $0xde0] sm:$0xf]
        %v874 = vld [vmem:[%s291 + $0xde4] sm:$0xff]
        %v875 = vld [vmem:[%s291 + $0xdec] sm:$0xff]
        %v876 = vld [vmem:[%s291 + $0xdf4] sm:$0xff]
        %v877 = vld [vmem:[%s291 + $0xdfc] sm:$0xf]
        %v878 = vld [vmem:[%s291 + $0xe00] sm:$0xff]
        %v879 = vld [vmem:[%s291 + $0xe08] sm:$0xff]
        %v880 = vld [vmem:[%s291 + $0xe10] sm:$0xff]
        %v881 = vld [vmem:[%s291 + $0xe18] sm:$0xf]
        %v882 = vld [vmem:[%s291 + $0xe1c] sm:$0xff]
        %v883 = vld [vmem:[%s291 + $0xe24] sm:$0xff]
        %v884 = vld [vmem:[%s291 + $0xe2c] sm:$0xff]
        %v885 = vld [vmem:[%s291 + $0xe34] sm:$0xf]
        %v886 = vld [vmem:[%s291 + $0xe38] sm:$0xff]
        %v887 = vld [vmem:[%s291 + $0xe40] sm:$0xff]
        %v888 = vld [vmem:[%s291 + $0xe48] sm:$0xff]
        %v889 = vld [vmem:[%s291 + $0xe50] sm:$0xf]
        %v890 = vld [vmem:[%s291 + $0xe54] sm:$0xff]
        %v891 = vld [vmem:[%s291 + $0xe5c] sm:$0xff]
        %v892 = vld [vmem:[%s291 + $0xe64] sm:$0xff]
        %v893 = vld [vmem:[%s291 + $0xe6c] sm:$0xf]
        %v894 = vld [vmem:[%s291 + $0xe70] sm:$0xff]
        %v895 = vld [vmem:[%s291 + $0xe78] sm:$0xff]
        %v896 = vld [vmem:[%s291 + $0xe80] sm:$0xff]
        %v897 = vld [vmem:[%s291 + $0xe88] sm:$0xf]
        %v898 = vld [vmem:[%s291 + $0xe8c] sm:$0xff]
        %v899 = vld [vmem:[%s291 + $0xe94] sm:$0xff]
        %v900 = vld [vmem:[%s291 + $0xe9c] sm:$0xff]
        %v901 = vld [vmem:[%s291 + $0xea4] sm:$0xf]
        %v902 = vld [vmem:[%s291 + $0xea8] sm:$0xff]
        %v903 = vld [vmem:[%s291 + $0xeb0] sm:$0xff]
        %v904 = vld [vmem:[%s291 + $0xeb8] sm:$0xff]
        %v905 = vld [vmem:[%s291 + $0xec0] sm:$0xf]
        %v906 = vld [vmem:[%s291 + $0xec4] sm:$0xff]
        %v907 = vld [vmem:[%s291 + $0xecc] sm:$0xff]
        %v908 = vld [vmem:[%s291 + $0xed4] sm:$0xff]
        %v909 = vld [vmem:[%s291 + $0xedc] sm:$0xf]
        %v910 = vld [vmem:[%s291 + $0xee0] sm:$0xff]
        %v911 = vld [vmem:[%s291 + $0xee8] sm:$0xff]
        %v912 = vld [vmem:[%s291 + $0xef0] sm:$0xff]
        %v913 = vld [vmem:[%s291 + $0xef8] sm:$0xf]
        %v914 = vld [vmem:[%s291 + $0xefc] sm:$0xff]
        %v915 = vld [vmem:[%s291 + $0xf04] sm:$0xff]
        %v916 = vld [vmem:[%s291 + $0xf0c] sm:$0xff]
        %v917 = vld [vmem:[%s291 + $0xf14] sm:$0xf]
        %v918 = vld [vmem:[%s291 + $0xf18] sm:$0xff]
        %v919 = vld [vmem:[%s291 + $0xf20] sm:$0xff]
        %v920 = vld [vmem:[%s291 + $0xf28] sm:$0xff]
        %v921 = vld [vmem:[%s291 + $0xf30] sm:$0xf]
        %v922 = vld [vmem:[%s291 + $0xf34] sm:$0xff]
        %v923 = vld [vmem:[%s291 + $0xf3c] sm:$0xff]
        %v924 = vld [vmem:[%s291 + $0xf44] sm:$0xff]
        %v925 = vld [vmem:[%s291 + $0xf4c] sm:$0xf]
        %v926 = vld [vmem:[%s291 + $0xf50] sm:$0xff]
        %v927 = vld [vmem:[%s291 + $0xf58] sm:$0xff]
        %v928 = vld [vmem:[%s291 + $0xf60] sm:$0xff]
        %v929 = vld [vmem:[%s291 + $0xf68] sm:$0xf]
        %v930 = vld [vmem:[%s291 + $0xf6c] sm:$0xff]
        %v931 = vld [vmem:[%s291 + $0xf74] sm:$0xff]
        %v932 = vld [vmem:[%s291 + $0xf7c] sm:$0xff]
        %v933 = vld [vmem:[%s291 + $0xf84] sm:$0xf]
        %v934 = vld [vmem:[%s291 + $0xf88] sm:$0xff]
        %v935 = vld [vmem:[%s291 + $0xf90] sm:$0xff]
        %v936 = vld [vmem:[%s291 + $0xf98] sm:$0xff]
        %v937 = vld [vmem:[%s291 + $0xfa0] sm:$0xf]
        %v938 = vld [vmem:[%s291 + $0xfa4] sm:$0xff]
        %v939 = vld [vmem:[%s291 + $0xfac] sm:$0xff]
        %v940 = vld [vmem:[%s291 + $0xfb4] sm:$0xff]
        %v941 = vld [vmem:[%s291 + $0xfbc] sm:$0xf]
        %v942 = vld [vmem:[%s291 + $0xfc0] sm:$0xff]
        %v943 = vld [vmem:[%s291 + $0xfc8] sm:$0xff]
        %v944 = vld [vmem:[%s291 + $0xfd0] sm:$0xff]
        %v945 = vld [vmem:[%s291 + $0xfd8] sm:$0xf]
        %v946 = vld [vmem:[%s291 + $0xfdc] sm:$0xff]
        %v947 = vld [vmem:[%s291 + $0xfe4] sm:$0xff]
        %v948 = vld [vmem:[%s291 + $0xfec] sm:$0xff]
        %v949 = vld [vmem:[%s291 + $0xff4] sm:$0xf]
        %v950 = vld [vmem:[%s291 + $0xff8] sm:$0xff]
        %v951 = vld [vmem:[%s291 + $0x1000] sm:$0xff]
        %v952 = vld [vmem:[%s291 + $0x1008] sm:$0xff]
        %v953 = vld [vmem:[%s291 + $0x1010] sm:$0xf]
        %v954 = vld [vmem:[%s291 + $0x1014] sm:$0xff]
        %v955 = vld [vmem:[%s291 + $0x101c] sm:$0xff]
        %v956 = vld [vmem:[%s291 + $0x1024] sm:$0xff]
        %v957 = vld [vmem:[%s291 + $0x102c] sm:$0xf]
        %v958 = vld [vmem:[%s291 + $0x1030] sm:$0xff]
        %v959 = vld [vmem:[%s291 + $0x1038] sm:$0xff]
        %v960 = vld [vmem:[%s291 + $0x1040] sm:$0xff]
        %v961 = vld [vmem:[%s291 + $0x1048] sm:$0xf]
        %v962 = vld [vmem:[%s291 + $0x104c] sm:$0xff]
        %v963 = vld [vmem:[%s291 + $0x1054] sm:$0xff]
        %v964 = vld [vmem:[%s291 + $0x105c] sm:$0xff]
        %v965 = vld [vmem:[%s291 + $0x1064] sm:$0xf]
        %v966 = vld [vmem:[%s291 + $0x1068] sm:$0xff]
        %v967 = vld [vmem:[%s291 + $0x1070] sm:$0xff]
        %v968 = vld [vmem:[%s291 + $0x1078] sm:$0xff]
        %v969 = vld [vmem:[%s291 + $0x1080] sm:$0xf]
        %v970 = vld [vmem:[%s291 + $0x1084] sm:$0xff]
        %v971 = vld [vmem:[%s291 + $0x108c] sm:$0xff]
        %v972 = vld [vmem:[%s291 + $0x1094] sm:$0xff]
        %v973 = vld [vmem:[%s291 + $0x109c] sm:$0xf]
        %v974 = vld [vmem:[%s291 + $0x10a0] sm:$0xff]
        %v975 = vld [vmem:[%s291 + $0x10a8] sm:$0xff]
        %v976 = vld [vmem:[%s291 + $0x10b0] sm:$0xff]
        %v977 = vld [vmem:[%s291 + $0x10b8] sm:$0xf]
        %v978 = vld [vmem:[%s291 + $0x10bc] sm:$0xff]
        %v979 = vld [vmem:[%s291 + $0x10c4] sm:$0xff]
        %v980 = vld [vmem:[%s291 + $0x10cc] sm:$0xff]
        %v981 = vld [vmem:[%s291 + $0x10d4] sm:$0xf]
        %v982 = vld [vmem:[%s291 + $0x10d8] sm:$0xff]
        %v983 = vld [vmem:[%s291 + $0x10e0] sm:$0xff]
        %v984 = vld [vmem:[%s291 + $0x10e8] sm:$0xff]
        %v985 = vld [vmem:[%s291 + $0x10f0] sm:$0xf]
        %v986 = vld [vmem:[%s291 + $0x10f4] sm:$0xff]
        %v987 = vld [vmem:[%s291 + $0x10fc] sm:$0xff]
        %v988 = vld [vmem:[%s291 + $0x1104] sm:$0xff]
        %v989 = vld [vmem:[%s291 + $0x110c] sm:$0xf]
        %v990 = vld [vmem:[%s291 + $0x1110] sm:$0xff]
        %v991 = vld [vmem:[%s291 + $0x1118] sm:$0xff]
        %v992 = vld [vmem:[%s291 + $0x1120] sm:$0xff]
        %v993 = vld [vmem:[%s291 + $0x1128] sm:$0xf]
        %v994 = vld [vmem:[%s291 + $0x112c] sm:$0xff]
        %v995 = vld [vmem:[%s291 + $0x1134] sm:$0xff]
        %v996 = vld [vmem:[%s291 + $0x113c] sm:$0xff]
        %v997 = vld [vmem:[%s291 + $0x1144] sm:$0xf]
        %v998 = vld [vmem:[%s291 + $0x1148] sm:$0xff]
        %v999 = vld [vmem:[%s291 + $0x1150] sm:$0xff]
        %v1000 = vld [vmem:[%s291 + $0x1158] sm:$0xff]
        %v1001 = vld [vmem:[%s291 + $0x1160] sm:$0xf]
        %v1002 = vld [vmem:[%s291 + $0x1164] sm:$0xff]
        %v1003 = vld [vmem:[%s291 + $0x116c] sm:$0xff]
        %v1004 = vld [vmem:[%s291 + $0x1174] sm:$0xff]
        %v1005 = vld [vmem:[%s291 + $0x117c] sm:$0xf]
        %v1006 = vld [vmem:[%s291 + $0x1180] sm:$0xff]
        %v1007 = vld [vmem:[%s291 + $0x1188] sm:$0xff]
        %v1008 = vld [vmem:[%s291 + $0x1190] sm:$0xff]
        %v1009 = vld [vmem:[%s291 + $0x1198] sm:$0xf]
        %v1010 = vld [vmem:[%s291 + $0x119c] sm:$0xff]
        %v1011 = vld [vmem:[%s291 + $0x11a4] sm:$0xff]
        %v1012 = vld [vmem:[%s291 + $0x11ac] sm:$0xff]
        %v1013 = vld [vmem:[%s291 + $0x11b4] sm:$0xf]
        %v1014 = vld [vmem:[%s291 + $0x11b8] sm:$0xff]
        %v1015 = vld [vmem:[%s291 + $0x11c0] sm:$0xff]
        %v1016 = vld [vmem:[%s291 + $0x11c8] sm:$0xff]
        %v1017 = vld [vmem:[%s291 + $0x11d0] sm:$0xf]
        %v1018 = vld [vmem:[%s291 + $0x11d4] sm:$0xff]
        %v1019 = vld [vmem:[%s291 + $0x11dc] sm:$0xff]
        %v1020 = vld [vmem:[%s291 + $0x11e4] sm:$0xff]
        %v1021 = vld [vmem:[%s291 + $0x11ec] sm:$0xf]
        %v1022 = vld [vmem:[%s291 + $0x11f0] sm:$0xff]
        %v1023 = vld [vmem:[%s291 + $0x11f8] sm:$0xff]
        %v1024 = vld [vmem:[%s291 + $0x1200] sm:$0xff]
        %v1025 = vld [vmem:[%s291 + $0x1208] sm:$0xf]
        %v1026 = vld [vmem:[%s291 + $0x120c] sm:$0xff]
        %v1027 = vld [vmem:[%s291 + $0x1214] sm:$0xff]
        %v1028 = vld [vmem:[%s291 + $0x121c] sm:$0xff]
        %v1029 = vld [vmem:[%s291 + $0x1224] sm:$0xf]
        %v1030 = vld [vmem:[%s291 + $0x1228] sm:$0xff]
        %v1031 = vld [vmem:[%s291 + $0x1230] sm:$0xff]
        %v1032 = vld [vmem:[%s291 + $0x1238] sm:$0xff]
        %v1033 = vld [vmem:[%s291 + $0x1240] sm:$0xf]
        %v1034 = vld [vmem:[%s291 + $0x1244] sm:$0xff]
        %v1035 = vld [vmem:[%s291 + $0x124c] sm:$0xff]
        %v1036 = vld [vmem:[%s291 + $0x1254] sm:$0xff]
        %v1037 = vld [vmem:[%s291 + $0x125c] sm:$0xf]
        %v1038 = vld [vmem:[%s291 + $0x1260] sm:$0xff]
        %v1039 = vld [vmem:[%s291 + $0x1268] sm:$0xff]
        %v1040 = vld [vmem:[%s291 + $0x1270] sm:$0xff]
        %v1041 = vld [vmem:[%s291 + $0x1278] sm:$0xf]
        %v1042 = vld [vmem:[%s291 + $0x127c] sm:$0xff]
        %v1043 = vld [vmem:[%s291 + $0x1284] sm:$0xff]
        %v1044 = vld [vmem:[%s291 + $0x128c] sm:$0xff]
        %v1045 = vld [vmem:[%s291 + $0x1294] sm:$0xf]
        %v1046 = vld [vmem:[%s291 + $0x1298] sm:$0xff]
        %v1047 = vld [vmem:[%s291 + $0x12a0] sm:$0xff]
        %v1048 = vld [vmem:[%s291 + $0x12a8] sm:$0xff]
        %v1049 = vld [vmem:[%s291 + $0x12b0] sm:$0xf]
        %v1050 = vld [vmem:[%s291 + $0x12b4] sm:$0xff]
        %v1051 = vld [vmem:[%s291 + $0x12bc] sm:$0xff]
        %v1052 = vld [vmem:[%s291 + $0x12c4] sm:$0xff]
        %v1053 = vld [vmem:[%s291 + $0x12cc] sm:$0xf]
        %v1054 = vld [vmem:[%s291 + $0x12d0] sm:$0xff]
        %v1055 = vld [vmem:[%s291 + $0x12d8] sm:$0xff]
        %v1056 = vld [vmem:[%s291 + $0x12e0] sm:$0xff]
        %v1057 = vld [vmem:[%s291 + $0x12e8] sm:$0xf]
        %v1058 = vld [vmem:[%s291 + $0x12ec] sm:$0xff]
        %v1059 = vld [vmem:[%s291 + $0x12f4] sm:$0xff]
        %v1060 = vld [vmem:[%s291 + $0x12fc] sm:$0xff]
        %v1061 = vld [vmem:[%s291 + $0x1304] sm:$0xf]
        %v1062 = vld [vmem:[%s291 + $0x1308] sm:$0xff]
        %v1063 = vld [vmem:[%s291 + $0x1310] sm:$0xff]
        %v1064 = vld [vmem:[%s291 + $0x1318] sm:$0xff]
        %v1065 = vld [vmem:[%s291 + $0x1320] sm:$0xf]
        %v1066 = vld [vmem:[%s291 + $0x1324] sm:$0xff]
        %v1067 = vld [vmem:[%s291 + $0x132c] sm:$0xff]
        %v1068 = vld [vmem:[%s291 + $0x1334] sm:$0xff]
        %v1069 = vld [vmem:[%s291 + $0x133c] sm:$0xf]
        %v1070 = vld [vmem:[%s291 + $0x1340] sm:$0xff]
        %v1071 = vld [vmem:[%s291 + $0x1348] sm:$0xff]
        %v1072 = vld [vmem:[%s291 + $0x1350] sm:$0xff]
        %v1073 = vld [vmem:[%s291 + $0x1358] sm:$0xf]
        %v1074 = vld [vmem:[%s291 + $0x135c] sm:$0xff]
        %v1075 = vld [vmem:[%s291 + $0x1364] sm:$0xff]
        %v1076 = vld [vmem:[%s291 + $0x136c] sm:$0xff]
        %v1077 = vld [vmem:[%s291 + $0x1374] sm:$0xf]
        %v1078 = vld [vmem:[%s291 + $0x1378] sm:$0xff]
        %v1079 = vld [vmem:[%s291 + $0x1380] sm:$0xff]
        %v1080 = vld [vmem:[%s291 + $0x1388] sm:$0xff]
        %v1081 = vld [vmem:[%s291 + $0x1390] sm:$0xf]
        %v1082 = vld [vmem:[%s291 + $0x1394] sm:$0xff]
        %v1083 = vld [vmem:[%s291 + $0x139c] sm:$0xff]
        %v1084 = vld [vmem:[%s291 + $0x13a4] sm:$0xff]
        %v1085 = vld [vmem:[%s291 + $0x13ac] sm:$0xf]
        %v1086 = vld [vmem:[%s291 + $0x13b0] sm:$0xff]
        %v1087 = vld [vmem:[%s291 + $0x13b8] sm:$0xff]
        %v1088 = vld [vmem:[%s291 + $0x13c0] sm:$0xff]
        %v1089 = vld [vmem:[%s291 + $0x13c8] sm:$0xf]
        %v1090 = vld [vmem:[%s291 + $0x13cc] sm:$0xff]
        %v1091 = vld [vmem:[%s291 + $0x13d4] sm:$0xff]
        %v1092 = vld [vmem:[%s291 + $0x13dc] sm:$0xff]
        %v1093 = vld [vmem:[%s291 + $0x13e4] sm:$0xf]
        %v1094 = vld [vmem:[%s291 + $0x13e8] sm:$0xff]
        %v1095 = vld [vmem:[%s291 + $0x13f0] sm:$0xff]
        %v1096 = vld [vmem:[%s291 + $0x13f8] sm:$0xff]
        %v1097 = vld [vmem:[%s291 + $0x1400] sm:$0xf]
        %v1098 = vld [vmem:[%s291 + $0x1404] sm:$0xff]
        %v1099 = vld [vmem:[%s291 + $0x140c] sm:$0xff]
        %v1100 = vld [vmem:[%s291 + $0x1414] sm:$0xff]
        %v1101 = vld [vmem:[%s291 + $0x141c] sm:$0xf]
        %v1102 = vld [vmem:[%s291 + $0x1420] sm:$0xff]
        %v1103 = vld [vmem:[%s291 + $0x1428] sm:$0xff]
        %v1104 = vld [vmem:[%s291 + $0x1430] sm:$0xff]
        %v1105 = vld [vmem:[%s291 + $0x1438] sm:$0xf]
        %v1106 = vld [vmem:[%s291 + $0x143c] sm:$0xff]
        %v1107 = vld [vmem:[%s291 + $0x1444] sm:$0xff]
        %v1108 = vld [vmem:[%s291 + $0x144c] sm:$0xff]
        %v1109 = vld [vmem:[%s291 + $0x1454] sm:$0xf]
        %v1110 = vld [vmem:[%s291 + $0x1458] sm:$0xff]
        %v1111 = vld [vmem:[%s291 + $0x1460] sm:$0xff]
        %v1112 = vld [vmem:[%s291 + $0x1468] sm:$0xff]
        %v1113 = vld [vmem:[%s291 + $0x1470] sm:$0xf]
        %v1114 = vld [vmem:[%s291 + $0x1474] sm:$0xff]
        %v1115 = vld [vmem:[%s291 + $0x147c] sm:$0xff]
        %v1116 = vld [vmem:[%s291 + $0x1484] sm:$0xff]
        %v1117 = vld [vmem:[%s291 + $0x148c] sm:$0xf]
        %v1118 = vld [vmem:[%s291 + $0x1490] sm:$0xff]
        %v1119 = vld [vmem:[%s291 + $0x1498] sm:$0xff]
        %v1120 = vld [vmem:[%s291 + $0x14a0] sm:$0xff]
        %v1121 = vld [vmem:[%s291 + $0x14a8] sm:$0xf]
        %v1122 = vld [vmem:[%s291 + $0x14ac] sm:$0xff]
        %v1123 = vld [vmem:[%s291 + $0x14b4] sm:$0xff]
        %v1124 = vld [vmem:[%s291 + $0x14bc] sm:$0xff]
        %v1125 = vld [vmem:[%s291 + $0x14c4] sm:$0xf]
        %v1126 = vld [vmem:[%s291 + $0x14c8] sm:$0xff]
        %v1127 = vld [vmem:[%s291 + $0x14d0] sm:$0xff]
        %v1128 = vld [vmem:[%s291 + $0x14d8] sm:$0xff]
        %v1129 = vld [vmem:[%s291 + $0x14e0] sm:$0xf]
        %v1130 = vld [vmem:[%s291 + $0x14e4] sm:$0xff]
        %v1131 = vld [vmem:[%s291 + $0x14ec] sm:$0xff]
        %v1132 = vld [vmem:[%s291 + $0x14f4] sm:$0xff]
        %v1133 = vld [vmem:[%s291 + $0x14fc] sm:$0xf]
        %v1134 = vld [vmem:[%s291 + $0x1500] sm:$0xff]
        %v1135 = vld [vmem:[%s291 + $0x1508] sm:$0xff]
        %v1136 = vld [vmem:[%s291 + $0x1510] sm:$0xff]
        %v1137 = vld [vmem:[%s291 + $0x1518] sm:$0xf]
        %v1138 = vld [vmem:[%s291 + $0x151c] sm:$0xff]
        %v1139 = vld [vmem:[%s291 + $0x1524] sm:$0xff]
        %v1140 = vld [vmem:[%s291 + $0x152c] sm:$0xff]
        %v1141 = vld [vmem:[%s291 + $0x1534] sm:$0xf]
        %v1142 = vld [vmem:[%s291 + $0x1538] sm:$0xff]
        %v1143 = vld [vmem:[%s291 + $0x1540] sm:$0xff]
        %v1144 = vld [vmem:[%s291 + $0x1548] sm:$0xff]
        %v1145 = vld [vmem:[%s291 + $0x1550] sm:$0xf]
        %v1146 = vld [vmem:[%s291 + $0x1554] sm:$0xff]
        %v1147 = vld [vmem:[%s291 + $0x155c] sm:$0xff]
        %v1148 = vld [vmem:[%s291 + $0x1564] sm:$0xff]
        %v1149 = vld [vmem:[%s291 + $0x156c] sm:$0xf]
        %v1150 = vld [vmem:[%s291 + $0x1570] sm:$0xff]
        %v1151 = vld [vmem:[%s291 + $0x1578] sm:$0xff]
        %v1152 = vld [vmem:[%s291 + $0x1580] sm:$0xff]
        %v1153 = vld [vmem:[%s291 + $0x1588] sm:$0xf]
        %v1154 = vld [vmem:[%s291 + $0x158c] sm:$0xff]
        %v1155 = vld [vmem:[%s291 + $0x1594] sm:$0xff]
        %v1156 = vld [vmem:[%s291 + $0x159c] sm:$0xff]
        %v1157 = vld [vmem:[%s291 + $0x15a4] sm:$0xf]
        %v1158 = vld [vmem:[%s291 + $0x15a8] sm:$0xff]
        %v1159 = vld [vmem:[%s291 + $0x15b0] sm:$0xff]
        %v1160 = vld [vmem:[%s291 + $0x15b8] sm:$0xff]
        %v1161 = vld [vmem:[%s291 + $0x15c0] sm:$0xf]
        %v1162 = vld [vmem:[%s291 + $0x15c4] sm:$0xff]
        %v1163 = vld [vmem:[%s291 + $0x15cc] sm:$0xff]
        %v1164 = vld [vmem:[%s291 + $0x15d4] sm:$0xff]
        %v1165 = vld [vmem:[%s291 + $0x15dc] sm:$0xf]
        %v1166 = vld [vmem:[%s291 + $0x15e0] sm:$0xff]
        %v1167 = vld [vmem:[%s291 + $0x15e8] sm:$0xff]
        %v1168 = vld [vmem:[%s291 + $0x15f0] sm:$0xff]
        %v1169 = vld [vmem:[%s291 + $0x15f8] sm:$0xf]
        %v1170 = vld [vmem:[%s291 + $0x15fc] sm:$0xff]
        %v1171 = vld [vmem:[%s291 + $0x1604] sm:$0xff]
        %v1172 = vld [vmem:[%s291 + $0x160c] sm:$0xff]
        %v1173 = vld [vmem:[%s291 + $0x1614] sm:$0xf]
        %v1174 = vld [vmem:[%s291 + $0x1618] sm:$0xff]
        %v1175 = vld [vmem:[%s291 + $0x1620] sm:$0xff]
        %v1176 = vld [vmem:[%s291 + $0x1628] sm:$0xff]
        %v1177 = vld [vmem:[%s291 + $0x1630] sm:$0xf]
        %v1178 = vld [vmem:[%s291 + $0x1634] sm:$0xff]
        %v1179 = vld [vmem:[%s291 + $0x163c] sm:$0xff]
        %v1180 = vld [vmem:[%s291 + $0x1644] sm:$0xff]
        %v1181 = vld [vmem:[%s291 + $0x164c] sm:$0xf]
        %v1182 = vld [vmem:[%s291 + $0x1650] sm:$0xff]
        %v1183 = vld [vmem:[%s291 + $0x1658] sm:$0xff]
        %v1184 = vld [vmem:[%s291 + $0x1660] sm:$0xff]
        %v1185 = vld [vmem:[%s291 + $0x1668] sm:$0xf]
        %v1186 = vld [vmem:[%s291 + $0x166c] sm:$0xff]
        %v1187 = vld [vmem:[%s291 + $0x1674] sm:$0xff]
        %v1188 = vld [vmem:[%s291 + $0x167c] sm:$0xff]
        %v1189 = vld [vmem:[%s291 + $0x1684] sm:$0xf]
        %v1190 = vld [vmem:[%s291 + $0x1688] sm:$0xff]
        %v1191 = vld [vmem:[%s291 + $0x1690] sm:$0xff]
        %v1192 = vld [vmem:[%s291 + $0x1698] sm:$0xff]
        %v1193 = vld [vmem:[%s291 + $0x16a0] sm:$0xf]
        %v1194 = vld [vmem:[%s291 + $0x16a4] sm:$0xff]
        %v1195 = vld [vmem:[%s291 + $0x16ac] sm:$0xff]
        %v1196 = vld [vmem:[%s291 + $0x16b4] sm:$0xff]
        %v1197 = vld [vmem:[%s291 + $0x16bc] sm:$0xf]
        %v1198 = vld [vmem:[%s291 + $0x16c0] sm:$0xff]
        %v1199 = vld [vmem:[%s291 + $0x16c8] sm:$0xff]
        %v1200 = vld [vmem:[%s291 + $0x16d0] sm:$0xff]
        %v1201 = vld [vmem:[%s291 + $0x16d8] sm:$0xf]
        %v1202 = vld [vmem:[%s291 + $0x16dc] sm:$0xff]
        %v1203 = vld [vmem:[%s291 + $0x16e4] sm:$0xff]
        %v1204 = vld [vmem:[%s291 + $0x16ec] sm:$0xff]
        %v1205 = vld [vmem:[%s291 + $0x16f4] sm:$0xf]
        %v1206 = vld [vmem:[%s291 + $0x16f8] sm:$0xff]
        %v1207 = vld [vmem:[%s291 + $0x1700] sm:$0xff]
        %v1208 = vld [vmem:[%s291 + $0x1708] sm:$0xff]
        %v1209 = vld [vmem:[%s291 + $0x1710] sm:$0xf]
        %v1210 = vld [vmem:[%s291 + $0x1714] sm:$0xff]
        %v1211 = vld [vmem:[%s291 + $0x171c] sm:$0xff]
        %v1212 = vld [vmem:[%s291 + $0x1724] sm:$0xff]
        %v1213 = vld [vmem:[%s291 + $0x172c] sm:$0xf]
        %v1214 = vld [vmem:[%s291 + $0x1730] sm:$0xff]
        %v1215 = vld [vmem:[%s291 + $0x1738] sm:$0xff]
        %v1216 = vld [vmem:[%s291 + $0x1740] sm:$0xff]
        %v1217 = vld [vmem:[%s291 + $0x1748] sm:$0xf]
        %v1218 = vld [vmem:[%s291 + $0x174c] sm:$0xff]
        %v1219 = vld [vmem:[%s291 + $0x1754] sm:$0xff]
        %v1220 = vld [vmem:[%s291 + $0x175c] sm:$0xff]
        %v1221 = vld [vmem:[%s291 + $0x1764] sm:$0xf]
        %v1222 = vld [vmem:[%s291 + $0x1768] sm:$0xff]
        %v1223 = vld [vmem:[%s291 + $0x1770] sm:$0xff]
        %v1224 = vld [vmem:[%s291 + $0x1778] sm:$0xff]
        %v1225 = vld [vmem:[%s291 + $0x1780] sm:$0xf]
        %v1226 = vld [vmem:[%s291 + $0x1784] sm:$0xff]
        %v1227 = vld [vmem:[%s291 + $0x178c] sm:$0xff]
        %v1228 = vld [vmem:[%s291 + $0x1794] sm:$0xff]
        %v1229 = vld [vmem:[%s291 + $0x179c] sm:$0xf]
        %v1230 = vld [vmem:[%s291 + $0x17a0] sm:$0xff]
        %v1231 = vld [vmem:[%s291 + $0x17a8] sm:$0xff]
        %v1232 = vld [vmem:[%s291 + $0x17b0] sm:$0xff]
        %v1233 = vld [vmem:[%s291 + $0x17b8] sm:$0xf]
        %v1234 = vld [vmem:[%s291 + $0x17bc] sm:$0xff]
        %v1235 = vld [vmem:[%s291 + $0x17c4] sm:$0xff]
        %v1236 = vld [vmem:[%s291 + $0x17cc] sm:$0xff]
        %v1237 = vld [vmem:[%s291 + $0x17d4] sm:$0xf]
        %v1238 = vld [vmem:[%s291 + $0x17d8] sm:$0xff]
        %v1239 = vld [vmem:[%s291 + $0x17e0] sm:$0xff]
        %v1240 = vld [vmem:[%s291 + $0x17e8] sm:$0xff]
        %v1241 = vld [vmem:[%s291 + $0x17f0] sm:$0xf]
        %v1242 = vld [vmem:[%s291 + $0x17f4] sm:$0xff]
        %v1243 = vld [vmem:[%s291 + $0x17fc] sm:$0xff]
        %v1244 = vld [vmem:[%s291 + $0x1804] sm:$0xff]
        %v1245 = vld [vmem:[%s291 + $0x180c] sm:$0xf]
        %v1246 = vld [vmem:[%s291 + $0x1810] sm:$0xff]
        %v1247 = vld [vmem:[%s291 + $0x1818] sm:$0xff]
        %v1248 = vld [vmem:[%s291 + $0x1820] sm:$0xff]
        %v1249 = vld [vmem:[%s291 + $0x1828] sm:$0xf]
        %v1250 = vld [vmem:[%s291 + $0x182c] sm:$0xff]
        %v1251 = vld [vmem:[%s291 + $0x1834] sm:$0xff]
        %v1252 = vld [vmem:[%s291 + $0x183c] sm:$0xff]
        %v1253 = vld [vmem:[%s291 + $0x1844] sm:$0xf]
        %v1254 = vld [vmem:[%s291 + $0x1848] sm:$0xff]
        %v1255 = vld [vmem:[%s291 + $0x1850] sm:$0xff]
        %v1256 = vld [vmem:[%s291 + $0x1858] sm:$0xff]
        %v1257 = vld [vmem:[%s291 + $0x1860] sm:$0xf]
        %v1258 = vld [vmem:[%s291 + $0x1864] sm:$0xff]
        %v1259 = vld [vmem:[%s291 + $0x186c] sm:$0xff]
        %v1260 = vld [vmem:[%s291 + $0x1874] sm:$0xff]
        %v1261 = vld [vmem:[%s291 + $0x187c] sm:$0xf]
        %v1262 = vld [vmem:[%s300] sm:$0xff]
        %v1264 = vlaneseq
        %v1265 = vshrl.u32 %v1264, 7
        %v1266 = vsub.s32 0, %v1265
        %v1267 = vrot.slane %v1262, %v1266
        %v1268 = vlaneseq
        %v1269 = vshrl.u32 %v1268, 7
        %v1270 = vsub.s32 1, %v1269
        %v1271 = vrot.slane %v1262, %v1270
        %v1272 = vlaneseq
        %v1273 = vshrl.u32 %v1272, 7
        %v1274 = vsub.s32 2, %v1273
        %v1275 = vrot.slane %v1262, %v1274
        %v1276 = vlaneseq
        %v1277 = vshrl.u32 %v1276, 7
        %v1278 = vsub.s32 3, %v1277
        %v1279 = vrot.slane %v1262, %v1278
        %v1280 = vlaneseq
        %v1281 = vshrl.u32 %v1280, 7
        %v1282 = vsub.s32 4, %v1281
        %v1283 = vrot.slane %v1262, %v1282
        %v1284 = vlaneseq
        %v1285 = vshrl.u32 %v1284, 7
        %v1286 = vsub.s32 5, %v1285
        %v1287 = vrot.slane %v1262, %v1286
        %v1288 = vlaneseq
        %v1289 = vshrl.u32 %v1288, 7
        %v1290 = vsub.s32 6, %v1289
        %v1291 = vrot.slane %v1262, %v1290
        %v1301 = vcombine.high %v364, %v364
        %v1303 = vunpack.c.l.s4 1966171168
        %v1304 = vunpack.c.0.s8 %v1303
        %v1305 = vlaneseq
        %v1306 = vshrl.u32 %v1305, 7
        %v1307 = vsub.s32 %v1304, %v1306
        %v1308 = vrot.slane %v364, %v1307
        %v1310 = vunpack.c.l.s4 1966171168
        %v1311 = vunpack.c.0.s8 %v1310
        %v1312 = vlaneseq
        %v1313 = vshrl.u32 %v1312, 7
        %v1314 = vsub.s32 %v1311, %v1313
        %v1315 = vrot.slane %v1301, %v1314
        %v1316 = vcombine.high %v1308, %v1308
        %v1317 = vcombine.high %v1315, %v1315
        %v1319 = vunpack.c.l.s4 1966171168
        %v1320 = vunpack.c.0.s8 %v1319
        %v1321 = vlaneseq
        %v1322 = vshrl.u32 %v1321, 7
        %v1323 = vsub.s32 %v1320, %v1322
        %v1324 = vrot.slane %v1308, %v1323
        %v1326 = vunpack.c.l.s4 1966171168
        %v1327 = vunpack.c.0.s8 %v1326
        %v1328 = vlaneseq
        %v1329 = vshrl.u32 %v1328, 7
        %v1330 = vsub.s32 %v1327, %v1329
        %v1331 = vrot.slane %v1315, %v1330
        %v1333 = vunpack.c.l.s4 1966171168
        %v1334 = vunpack.c.0.s8 %v1333
        %v1335 = vlaneseq
        %v1336 = vshrl.u32 %v1335, 7
        %v1337 = vsub.s32 %v1334, %v1336
        %v1338 = vrot.slane %v1316, %v1337
        %v1340 = vunpack.c.l.s4 1966171168
        %v1341 = vunpack.c.0.s8 %v1340
        %v1342 = vlaneseq
        %v1343 = vshrl.u32 %v1342, 7
        %v1344 = vsub.s32 %v1341, %v1343
        %v1345 = vrot.slane %v1317, %v1344
        %v1346 = vcombine.high %v1324, %v1324
        %v1347 = vcombine.high %v1331, %v1331
        %v1348 = vcombine.high %v1338, %v1338
        %v1349 = vcombine.high %v1345, %v1345
        %v1350 = vcombine.high %v365, %v365
        %v1352 = vunpack.c.l.s4 1966171168
        %v1353 = vunpack.c.0.s8 %v1352
        %v1354 = vlaneseq
        %v1355 = vshrl.u32 %v1354, 7
        %v1356 = vsub.s32 %v1353, %v1355
        %v1357 = vrot.slane %v365, %v1356
        %v1359 = vunpack.c.l.s4 1966171168
        %v1360 = vunpack.c.0.s8 %v1359
        %v1361 = vlaneseq
        %v1362 = vshrl.u32 %v1361, 7
        %v1363 = vsub.s32 %v1360, %v1362
        %v1364 = vrot.slane %v1350, %v1363
        %v1365 = vcombine.high %v1357, %v1357
        %v1366 = vcombine.high %v1364, %v1364
        %v1368 = vunpack.c.l.s4 1966171168
        %v1369 = vunpack.c.0.s8 %v1368
        %v1370 = vlaneseq
        %v1371 = vshrl.u32 %v1370, 7
        %v1372 = vsub.s32 %v1369, %v1371
        %v1373 = vrot.slane %v1357, %v1372
        %v1375 = vunpack.c.l.s4 1966171168
        %v1376 = vunpack.c.0.s8 %v1375
        %v1377 = vlaneseq
        %v1378 = vshrl.u32 %v1377, 7
        %v1379 = vsub.s32 %v1376, %v1378
        %v1380 = vrot.slane %v1364, %v1379
        %v1382 = vunpack.c.l.s4 1966171168
        %v1383 = vunpack.c.0.s8 %v1382
        %v1384 = vlaneseq
        %v1385 = vshrl.u32 %v1384, 7
        %v1386 = vsub.s32 %v1383, %v1385
        %v1387 = vrot.slane %v1365, %v1386
        %v1389 = vunpack.c.l.s4 1966171168
        %v1390 = vunpack.c.0.s8 %v1389
        %v1391 = vlaneseq
        %v1392 = vshrl.u32 %v1391, 7
        %v1393 = vsub.s32 %v1390, %v1392
        %v1394 = vrot.slane %v1366, %v1393
        %v1395 = vcombine.high %v1373, %v1373
        %v1396 = vcombine.high %v1387, %v1387
        %v2307 = vunpack.c.l.b16 %v366
        %v2308 = vunpack.c.h.b16 %v366
        %v2309 = vunpack.c.l.b16 %v367
        %v2310 = vunpack.c.h.b16 %v367
        %v2311 = vunpack.c.l.b16 %v368
        %v2312 = vunpack.c.h.b16 %v368
        %v2313 = vunpack.c.l.b16 %v369
        %v2314 = vunpack.c.l.b16 %v370
        %v2315 = vunpack.c.h.b16 %v370
        %v2316 = vunpack.c.l.b16 %v371
        %v2317 = vunpack.c.h.b16 %v371
        %v2318 = vunpack.c.l.b16 %v372
        %v2319 = vunpack.c.h.b16 %v372
        %v2320 = vunpack.c.l.b16 %v373
        %v2321 = vunpack.c.l.b16 %v374
        %v2322 = vunpack.c.h.b16 %v374
        %v2323 = vunpack.c.l.b16 %v375
        %v2324 = vunpack.c.h.b16 %v375
        %v2325 = vunpack.c.l.b16 %v376
        %v2326 = vunpack.c.h.b16 %v376
        %v2327 = vunpack.c.l.b16 %v377
        %v2328 = vunpack.c.l.b16 %v378
        %v2329 = vunpack.c.h.b16 %v378
        %v2330 = vunpack.c.l.b16 %v379
        %v2331 = vunpack.c.h.b16 %v379
        %v2332 = vunpack.c.l.b16 %v380
        %v2333 = vunpack.c.h.b16 %v380
        %v2334 = vunpack.c.l.b16 %v381
        %v2335 = vunpack.c.l.b16 %v382
        %v2336 = vunpack.c.h.b16 %v382
        %v2337 = vunpack.c.l.b16 %v383
        %v2338 = vunpack.c.h.b16 %v383
        %v2339 = vunpack.c.l.b16 %v384
        %v2340 = vunpack.c.h.b16 %v384
        %v2341 = vunpack.c.l.b16 %v385
        %v2342 = vunpack.c.l.b16 %v386
        %v2343 = vunpack.c.h.b16 %v386
        %v2344 = vunpack.c.l.b16 %v387
        %v2345 = vunpack.c.h.b16 %v387
        %v2346 = vunpack.c.l.b16 %v388
        %v2347 = vunpack.c.h.b16 %v388
        %v2348 = vunpack.c.l.b16 %v389
        %v2349 = vunpack.c.l.b16 %v390
        %v2350 = vunpack.c.h.b16 %v390
        %v2351 = vunpack.c.l.b16 %v391
        %v2352 = vunpack.c.h.b16 %v391
        %v2353 = vunpack.c.l.b16 %v392
        %v2354 = vunpack.c.h.b16 %v392
        %v2355 = vunpack.c.l.b16 %v393
        %v2356 = vunpack.c.l.b16 %v394
        %v2357 = vunpack.c.h.b16 %v394
        %v2358 = vunpack.c.l.b16 %v395
        %v2359 = vunpack.c.h.b16 %v395
        %v2360 = vunpack.c.l.b16 %v396
        %v2361 = vunpack.c.h.b16 %v396
        %v2362 = vunpack.c.l.b16 %v397
        %v2363 = vunpack.c.l.b16 %v398
        %v2364 = vunpack.c.h.b16 %v398
        %v2365 = vunpack.c.l.b16 %v399
        %v2366 = vunpack.c.h.b16 %v399
        %v2367 = vunpack.c.l.b16 %v400
        %v2368 = vunpack.c.h.b16 %v400
        %v2369 = vunpack.c.l.b16 %v401
        %v2370 = vunpack.c.l.b16 %v402
        %v2371 = vunpack.c.h.b16 %v402
        %v2372 = vunpack.c.l.b16 %v403
        %v2373 = vunpack.c.h.b16 %v403
        %v2374 = vunpack.c.l.b16 %v404
        %v2375 = vunpack.c.h.b16 %v404
        %v2376 = vunpack.c.l.b16 %v405
        %v2377 = vunpack.c.l.b16 %v406
        %v2378 = vunpack.c.h.b16 %v406
        %v2379 = vunpack.c.l.b16 %v407
        %v2380 = vunpack.c.h.b16 %v407
        %v2381 = vunpack.c.l.b16 %v408
        %v2382 = vunpack.c.h.b16 %v408
        %v2383 = vunpack.c.l.b16 %v409
        %v2384 = vunpack.c.l.b16 %v410
        %v2385 = vunpack.c.h.b16 %v410
        %v2386 = vunpack.c.l.b16 %v411
        %v2387 = vunpack.c.h.b16 %v411
        %v2388 = vunpack.c.l.b16 %v412
        %v2389 = vunpack.c.h.b16 %v412
        %v2390 = vunpack.c.l.b16 %v413
        %v2391 = vunpack.c.l.b16 %v414
        %v2392 = vunpack.c.h.b16 %v414
        %v2393 = vunpack.c.l.b16 %v415
        %v2394 = vunpack.c.h.b16 %v415
        %v2395 = vunpack.c.l.b16 %v416
        %v2396 = vunpack.c.h.b16 %v416
        %v2397 = vunpack.c.l.b16 %v417
        %v2398 = vunpack.c.l.b16 %v418
        %v2399 = vunpack.c.h.b16 %v418
        %v2400 = vunpack.c.l.b16 %v419
        %v2401 = vunpack.c.h.b16 %v419
        %v2402 = vunpack.c.l.b16 %v420
        %v2403 = vunpack.c.h.b16 %v420
        %v2404 = vunpack.c.l.b16 %v421
        %v2405 = vunpack.c.l.b16 %v422
        %v2406 = vunpack.c.h.b16 %v422
        %v2407 = vunpack.c.l.b16 %v423
        %v2408 = vunpack.c.h.b16 %v423
        %v2409 = vunpack.c.l.b16 %v424
        %v2410 = vunpack.c.h.b16 %v424
        %v2411 = vunpack.c.l.b16 %v425
        %v2412 = vunpack.c.l.b16 %v426
        %v2413 = vunpack.c.h.b16 %v426
        %v2414 = vunpack.c.l.b16 %v427
        %v2415 = vunpack.c.h.b16 %v427
        %v2416 = vunpack.c.l.b16 %v428
        %v2417 = vunpack.c.h.b16 %v428
        %v2418 = vunpack.c.l.b16 %v429
        %v2419 = vunpack.c.l.b16 %v430
        %v2420 = vunpack.c.h.b16 %v430
        %v2421 = vunpack.c.l.b16 %v431
        %v2422 = vunpack.c.h.b16 %v431
        %v2423 = vunpack.c.l.b16 %v432
        %v2424 = vunpack.c.h.b16 %v432
        %v2425 = vunpack.c.l.b16 %v433
        %v2426 = vunpack.c.l.b16 %v434
        %v2427 = vunpack.c.h.b16 %v434
        %v2428 = vunpack.c.l.b16 %v435
        %v2429 = vunpack.c.h.b16 %v435
        %v2430 = vunpack.c.l.b16 %v436
        %v2431 = vunpack.c.h.b16 %v436
        %v2432 = vunpack.c.l.b16 %v437
        %v2433 = vunpack.c.l.b16 %v438
        %v2434 = vunpack.c.h.b16 %v438
        %v2435 = vunpack.c.l.b16 %v439
        %v2436 = vunpack.c.h.b16 %v439
        %v2437 = vunpack.c.l.b16 %v440
        %v2438 = vunpack.c.h.b16 %v440
        %v2439 = vunpack.c.l.b16 %v441
        %v2440 = vunpack.c.l.b16 %v442
        %v2441 = vunpack.c.h.b16 %v442
        %v2442 = vunpack.c.l.b16 %v443
        %v2443 = vunpack.c.h.b16 %v443
        %v2444 = vunpack.c.l.b16 %v444
        %v2445 = vunpack.c.h.b16 %v444
        %v2446 = vunpack.c.l.b16 %v445
        %v2447 = vunpack.c.l.b16 %v446
        %v2448 = vunpack.c.h.b16 %v446
        %v2449 = vunpack.c.l.b16 %v447
        %v2450 = vunpack.c.h.b16 %v447
        %v2451 = vunpack.c.l.b16 %v448
        %v2452 = vunpack.c.h.b16 %v448
        %v2453 = vunpack.c.l.b16 %v449
        %v2454 = vunpack.c.l.b16 %v450
        %v2455 = vunpack.c.h.b16 %v450
        %v2456 = vunpack.c.l.b16 %v451
        %v2457 = vunpack.c.h.b16 %v451
        %v2458 = vunpack.c.l.b16 %v452
        %v2459 = vunpack.c.h.b16 %v452
        %v2460 = vunpack.c.l.b16 %v453
        %v2461 = vunpack.c.l.b16 %v454
        %v2462 = vunpack.c.h.b16 %v454
        %v2463 = vunpack.c.l.b16 %v455
        %v2464 = vunpack.c.h.b16 %v455
        %v2465 = vunpack.c.l.b16 %v456
        %v2466 = vunpack.c.h.b16 %v456
        %v2467 = vunpack.c.l.b16 %v457
        %v2468 = vunpack.c.l.b16 %v458
        %v2469 = vunpack.c.h.b16 %v458
        %v2470 = vunpack.c.l.b16 %v459
        %v2471 = vunpack.c.h.b16 %v459
        %v2472 = vunpack.c.l.b16 %v460
        %v2473 = vunpack.c.h.b16 %v460
        %v2474 = vunpack.c.l.b16 %v461
        %v2475 = vunpack.c.l.b16 %v462
        %v2476 = vunpack.c.h.b16 %v462
        %v2477 = vunpack.c.l.b16 %v463
        %v2478 = vunpack.c.h.b16 %v463
        %v2479 = vunpack.c.l.b16 %v464
        %v2480 = vunpack.c.h.b16 %v464
        %v2481 = vunpack.c.l.b16 %v465
        %v2482 = vunpack.c.l.b16 %v466
        %v2483 = vunpack.c.h.b16 %v466
        %v2484 = vunpack.c.l.b16 %v467
        %v2485 = vunpack.c.h.b16 %v467
        %v2486 = vunpack.c.l.b16 %v468
        %v2487 = vunpack.c.h.b16 %v468
        %v2488 = vunpack.c.l.b16 %v469
        %v2489 = vunpack.c.l.b16 %v470
        %v2490 = vunpack.c.h.b16 %v470
        %v2491 = vunpack.c.l.b16 %v471
        %v2492 = vunpack.c.h.b16 %v471
        %v2493 = vunpack.c.l.b16 %v472
        %v2494 = vunpack.c.h.b16 %v472
        %v2495 = vunpack.c.l.b16 %v473
        %v2496 = vunpack.c.l.b16 %v474
        %v2497 = vunpack.c.h.b16 %v474
        %v2498 = vunpack.c.l.b16 %v475
        %v2499 = vunpack.c.h.b16 %v475
        %v2500 = vunpack.c.l.b16 %v476
        %v2501 = vunpack.c.h.b16 %v476
        %v2502 = vunpack.c.l.b16 %v477
        %v2503 = vunpack.c.l.b16 %v478
        %v2504 = vunpack.c.h.b16 %v478
        %v2505 = vunpack.c.l.b16 %v479
        %v2506 = vunpack.c.h.b16 %v479
        %v2507 = vunpack.c.l.b16 %v480
        %v2508 = vunpack.c.h.b16 %v480
        %v2509 = vunpack.c.l.b16 %v481
        %v2510 = vunpack.c.l.b16 %v482
        %v2511 = vunpack.c.h.b16 %v482
        %v2512 = vunpack.c.l.b16 %v483
        %v2513 = vunpack.c.h.b16 %v483
        %v2514 = vunpack.c.l.b16 %v484
        %v2515 = vunpack.c.h.b16 %v484
        %v2516 = vunpack.c.l.b16 %v485
        %v2517 = vunpack.c.l.b16 %v486
        %v2518 = vunpack.c.h.b16 %v486
        %v2519 = vunpack.c.l.b16 %v487
        %v2520 = vunpack.c.h.b16 %v487
        %v2521 = vunpack.c.l.b16 %v488
        %v2522 = vunpack.c.h.b16 %v488
        %v2523 = vunpack.c.l.b16 %v489
        %v2524 = vunpack.c.l.b16 %v490
        %v2525 = vunpack.c.h.b16 %v490
        %v2526 = vunpack.c.l.b16 %v491
        %v2527 = vunpack.c.h.b16 %v491
        %v2528 = vunpack.c.l.b16 %v492
        %v2529 = vunpack.c.h.b16 %v492
        %v2530 = vunpack.c.l.b16 %v493
        %v2531 = vunpack.c.l.b16 %v494
        %v2532 = vunpack.c.h.b16 %v494
        %v2533 = vunpack.c.l.b16 %v495
        %v2534 = vunpack.c.h.b16 %v495
        %v2535 = vunpack.c.l.b16 %v496
        %v2536 = vunpack.c.h.b16 %v496
        %v2537 = vunpack.c.l.b16 %v497
        %v2538 = vunpack.c.l.b16 %v498
        %v2539 = vunpack.c.h.b16 %v498
        %v2540 = vunpack.c.l.b16 %v499
        %v2541 = vunpack.c.h.b16 %v499
        %v2542 = vunpack.c.l.b16 %v500
        %v2543 = vunpack.c.h.b16 %v500
        %v2544 = vunpack.c.l.b16 %v501
        %v2545 = vunpack.c.l.b16 %v502
        %v2546 = vunpack.c.h.b16 %v502
        %v2547 = vunpack.c.l.b16 %v503
        %v2548 = vunpack.c.h.b16 %v503
        %v2549 = vunpack.c.l.b16 %v504
        %v2550 = vunpack.c.h.b16 %v504
        %v2551 = vunpack.c.l.b16 %v505
        %v2552 = vunpack.c.l.b16 %v506
        %v2553 = vunpack.c.h.b16 %v506
        %v2554 = vunpack.c.l.b16 %v507
        %v2555 = vunpack.c.h.b16 %v507
        %v2556 = vunpack.c.l.b16 %v508
        %v2557 = vunpack.c.h.b16 %v508
        %v2558 = vunpack.c.l.b16 %v509
        %v2559 = vunpack.c.l.b16 %v510
        %v2560 = vunpack.c.h.b16 %v510
        %v2561 = vunpack.c.l.b16 %v511
        %v2562 = vunpack.c.h.b16 %v511
        %v2563 = vunpack.c.l.b16 %v512
        %v2564 = vunpack.c.h.b16 %v512
        %v2565 = vunpack.c.l.b16 %v513
        %v2566 = vunpack.c.l.b16 %v514
        %v2567 = vunpack.c.h.b16 %v514
        %v2568 = vunpack.c.l.b16 %v515
        %v2569 = vunpack.c.h.b16 %v515
        %v2570 = vunpack.c.l.b16 %v516
        %v2571 = vunpack.c.h.b16 %v516
        %v2572 = vunpack.c.l.b16 %v517
        %v2573 = vunpack.c.l.b16 %v518
        %v2574 = vunpack.c.h.b16 %v518
        %v2575 = vunpack.c.l.b16 %v519
        %v2576 = vunpack.c.h.b16 %v519
        %v2577 = vunpack.c.l.b16 %v520
        %v2578 = vunpack.c.h.b16 %v520
        %v2579 = vunpack.c.l.b16 %v521
        %v2580 = vunpack.c.l.b16 %v522
        %v2581 = vunpack.c.h.b16 %v522
        %v2582 = vunpack.c.l.b16 %v523
        %v2583 = vunpack.c.h.b16 %v523
        %v2584 = vunpack.c.l.b16 %v524
        %v2585 = vunpack.c.h.b16 %v524
        %v2586 = vunpack.c.l.b16 %v525
        %v2587 = vunpack.c.l.b16 %v526
        %v2588 = vunpack.c.h.b16 %v526
        %v2589 = vunpack.c.l.b16 %v527
        %v2590 = vunpack.c.h.b16 %v527
        %v2591 = vunpack.c.l.b16 %v528
        %v2592 = vunpack.c.h.b16 %v528
        %v2593 = vunpack.c.l.b16 %v529
        %v2594 = vunpack.c.l.b16 %v530
        %v2595 = vunpack.c.h.b16 %v530
        %v2596 = vunpack.c.l.b16 %v531
        %v2597 = vunpack.c.h.b16 %v531
        %v2598 = vunpack.c.l.b16 %v532
        %v2599 = vunpack.c.h.b16 %v532
        %v2600 = vunpack.c.l.b16 %v533
        %v2601 = vunpack.c.l.b16 %v534
        %v2602 = vunpack.c.h.b16 %v534
        %v2603 = vunpack.c.l.b16 %v535
        %v2604 = vunpack.c.h.b16 %v535
        %v2605 = vunpack.c.l.b16 %v536
        %v2606 = vunpack.c.h.b16 %v536
        %v2607 = vunpack.c.l.b16 %v537
        %v2608 = vunpack.c.l.b16 %v538
        %v2609 = vunpack.c.h.b16 %v538
        %v2610 = vunpack.c.l.b16 %v539
        %v2611 = vunpack.c.h.b16 %v539
        %v2612 = vunpack.c.l.b16 %v540
        %v2613 = vunpack.c.h.b16 %v540
        %v2614 = vunpack.c.l.b16 %v541
        %v2615 = vunpack.c.l.b16 %v542
        %v2616 = vunpack.c.h.b16 %v542
        %v2617 = vunpack.c.l.b16 %v543
        %v2618 = vunpack.c.h.b16 %v543
        %v2619 = vunpack.c.l.b16 %v544
        %v2620 = vunpack.c.h.b16 %v544
        %v2621 = vunpack.c.l.b16 %v545
        %v2622 = vunpack.c.l.b16 %v546
        %v2623 = vunpack.c.h.b16 %v546
        %v2624 = vunpack.c.l.b16 %v547
        %v2625 = vunpack.c.h.b16 %v547
        %v2626 = vunpack.c.l.b16 %v548
        %v2627 = vunpack.c.h.b16 %v548
        %v2628 = vunpack.c.l.b16 %v549
        %v2629 = vunpack.c.l.b16 %v550
        %v2630 = vunpack.c.h.b16 %v550
        %v2631 = vunpack.c.l.b16 %v551
        %v2632 = vunpack.c.h.b16 %v551
        %v2633 = vunpack.c.l.b16 %v552
        %v2634 = vunpack.c.h.b16 %v552
        %v2635 = vunpack.c.l.b16 %v553
        %v2636 = vunpack.c.l.b16 %v554
        %v2637 = vunpack.c.h.b16 %v554
        %v2638 = vunpack.c.l.b16 %v555
        %v2639 = vunpack.c.h.b16 %v555
        %v2640 = vunpack.c.l.b16 %v556
        %v2641 = vunpack.c.h.b16 %v556
        %v2642 = vunpack.c.l.b16 %v557
        %v2643 = vunpack.c.l.b16 %v558
        %v2644 = vunpack.c.h.b16 %v558
        %v2645 = vunpack.c.l.b16 %v559
        %v2646 = vunpack.c.h.b16 %v559
        %v2647 = vunpack.c.l.b16 %v560
        %v2648 = vunpack.c.h.b16 %v560
        %v2649 = vunpack.c.l.b16 %v561
        %v2650 = vunpack.c.l.b16 %v562
        %v2651 = vunpack.c.h.b16 %v562
        %v2652 = vunpack.c.l.b16 %v563
        %v2653 = vunpack.c.h.b16 %v563
        %v2654 = vunpack.c.l.b16 %v564
        %v2655 = vunpack.c.h.b16 %v564
        %v2656 = vunpack.c.l.b16 %v565
        %v2657 = vunpack.c.l.b16 %v566
        %v2658 = vunpack.c.h.b16 %v566
        %v2659 = vunpack.c.l.b16 %v567
        %v2660 = vunpack.c.h.b16 %v567
        %v2661 = vunpack.c.l.b16 %v568
        %v2662 = vunpack.c.h.b16 %v568
        %v2663 = vunpack.c.l.b16 %v569
        %v2664 = vunpack.c.l.b16 %v570
        %v2665 = vunpack.c.h.b16 %v570
        %v2666 = vunpack.c.l.b16 %v571
        %v2667 = vunpack.c.h.b16 %v571
        %v2668 = vunpack.c.l.b16 %v572
        %v2669 = vunpack.c.h.b16 %v572
        %v2670 = vunpack.c.l.b16 %v573
        %v2671 = vunpack.c.l.b16 %v574
        %v2672 = vunpack.c.h.b16 %v574
        %v2673 = vunpack.c.l.b16 %v575
        %v2674 = vunpack.c.h.b16 %v575
        %v2675 = vunpack.c.l.b16 %v576
        %v2676 = vunpack.c.h.b16 %v576
        %v2677 = vunpack.c.l.b16 %v577
        %v2678 = vunpack.c.l.b16 %v578
        %v2679 = vunpack.c.h.b16 %v578
        %v2680 = vunpack.c.l.b16 %v579
        %v2681 = vunpack.c.h.b16 %v579
        %v2682 = vunpack.c.l.b16 %v580
        %v2683 = vunpack.c.h.b16 %v580
        %v2684 = vunpack.c.l.b16 %v581
        %v2685 = vunpack.c.l.b16 %v582
        %v2686 = vunpack.c.h.b16 %v582
        %v2687 = vunpack.c.l.b16 %v583
        %v2688 = vunpack.c.h.b16 %v583
        %v2689 = vunpack.c.l.b16 %v584
        %v2690 = vunpack.c.h.b16 %v584
        %v2691 = vunpack.c.l.b16 %v585
        %v2692 = vunpack.c.l.b16 %v586
        %v2693 = vunpack.c.h.b16 %v586
        %v2694 = vunpack.c.l.b16 %v587
        %v2695 = vunpack.c.h.b16 %v587
        %v2696 = vunpack.c.l.b16 %v588
        %v2697 = vunpack.c.h.b16 %v588
        %v2698 = vunpack.c.l.b16 %v589
        %v2699 = vunpack.c.l.b16 %v590
        %v2700 = vunpack.c.h.b16 %v590
        %v2701 = vunpack.c.l.b16 %v591
        %v2702 = vunpack.c.h.b16 %v591
        %v2703 = vunpack.c.l.b16 %v592
        %v2704 = vunpack.c.h.b16 %v592
        %v2705 = vunpack.c.l.b16 %v593
        %v2706 = vunpack.c.l.b16 %v594
        %v2707 = vunpack.c.h.b16 %v594
        %v2708 = vunpack.c.l.b16 %v595
        %v2709 = vunpack.c.h.b16 %v595
        %v2710 = vunpack.c.l.b16 %v596
        %v2711 = vunpack.c.h.b16 %v596
        %v2712 = vunpack.c.l.b16 %v597
        %v2713 = vunpack.c.l.b16 %v598
        %v2714 = vunpack.c.h.b16 %v598
        %v2715 = vunpack.c.l.b16 %v599
        %v2716 = vunpack.c.h.b16 %v599
        %v2717 = vunpack.c.l.b16 %v600
        %v2718 = vunpack.c.h.b16 %v600
        %v2719 = vunpack.c.l.b16 %v601
        %v2720 = vunpack.c.l.b16 %v602
        %v2721 = vunpack.c.h.b16 %v602
        %v2722 = vunpack.c.l.b16 %v603
        %v2723 = vunpack.c.h.b16 %v603
        %v2724 = vunpack.c.l.b16 %v604
        %v2725 = vunpack.c.h.b16 %v604
        %v2726 = vunpack.c.l.b16 %v605
        %v2727 = vunpack.c.l.b16 %v606
        %v2728 = vunpack.c.h.b16 %v606
        %v2729 = vunpack.c.l.b16 %v607
        %v2730 = vunpack.c.h.b16 %v607
        %v2731 = vunpack.c.l.b16 %v608
        %v2732 = vunpack.c.h.b16 %v608
        %v2733 = vunpack.c.l.b16 %v609
        %v2734 = vunpack.c.l.b16 %v610
        %v2735 = vunpack.c.h.b16 %v610
        %v2736 = vunpack.c.l.b16 %v611
        %v2737 = vunpack.c.h.b16 %v611
        %v2738 = vunpack.c.l.b16 %v612
        %v2739 = vunpack.c.h.b16 %v612
        %v2740 = vunpack.c.l.b16 %v613
        %v2741 = vunpack.c.l.b16 %v614
        %v2742 = vunpack.c.h.b16 %v614
        %v2743 = vunpack.c.l.b16 %v615
        %v2744 = vunpack.c.h.b16 %v615
        %v2745 = vunpack.c.l.b16 %v616
        %v2746 = vunpack.c.h.b16 %v616
        %v2747 = vunpack.c.l.b16 %v617
        %v2748 = vunpack.c.l.b16 %v618
        %v2749 = vunpack.c.h.b16 %v618
        %v2750 = vunpack.c.l.b16 %v619
        %v2751 = vunpack.c.h.b16 %v619
        %v2752 = vunpack.c.l.b16 %v620
        %v2753 = vunpack.c.h.b16 %v620
        %v2754 = vunpack.c.l.b16 %v621
        %v2755 = vunpack.c.l.b16 %v622
        %v2756 = vunpack.c.h.b16 %v622
        %v2757 = vunpack.c.l.b16 %v623
        %v2758 = vunpack.c.h.b16 %v623
        %v2759 = vunpack.c.l.b16 %v624
        %v2760 = vunpack.c.h.b16 %v624
        %v2761 = vunpack.c.l.b16 %v625
        %v2762 = vunpack.c.l.b16 %v626
        %v2763 = vunpack.c.h.b16 %v626
        %v2764 = vunpack.c.l.b16 %v627
        %v2765 = vunpack.c.h.b16 %v627
        %v2766 = vunpack.c.l.b16 %v628
        %v2767 = vunpack.c.h.b16 %v628
        %v2768 = vunpack.c.l.b16 %v629
        %v2769 = vunpack.c.l.b16 %v630
        %v2770 = vunpack.c.h.b16 %v630
        %v2771 = vunpack.c.l.b16 %v631
        %v2772 = vunpack.c.h.b16 %v631
        %v2773 = vunpack.c.l.b16 %v632
        %v2774 = vunpack.c.h.b16 %v632
        %v2775 = vunpack.c.l.b16 %v633
        %v2776 = vunpack.c.l.b16 %v634
        %v2777 = vunpack.c.h.b16 %v634
        %v2778 = vunpack.c.l.b16 %v635
        %v2779 = vunpack.c.h.b16 %v635
        %v2780 = vunpack.c.l.b16 %v636
        %v2781 = vunpack.c.h.b16 %v636
        %v2782 = vunpack.c.l.b16 %v637
        %v2783 = vunpack.c.l.b16 %v638
        %v2784 = vunpack.c.h.b16 %v638
        %v2785 = vunpack.c.l.b16 %v639
        %v2786 = vunpack.c.h.b16 %v639
        %v2787 = vunpack.c.l.b16 %v640
        %v2788 = vunpack.c.h.b16 %v640
        %v2789 = vunpack.c.l.b16 %v641
        %v2790 = vunpack.c.l.b16 %v642
        %v2791 = vunpack.c.h.b16 %v642
        %v2792 = vunpack.c.l.b16 %v643
        %v2793 = vunpack.c.h.b16 %v643
        %v2794 = vunpack.c.l.b16 %v644
        %v2795 = vunpack.c.h.b16 %v644
        %v2796 = vunpack.c.l.b16 %v645
        %v2797 = vunpack.c.l.b16 %v646
        %v2798 = vunpack.c.h.b16 %v646
        %v2799 = vunpack.c.l.b16 %v647
        %v2800 = vunpack.c.h.b16 %v647
        %v2801 = vunpack.c.l.b16 %v648
        %v2802 = vunpack.c.h.b16 %v648
        %v2803 = vunpack.c.l.b16 %v649
        %v2804 = vunpack.c.l.b16 %v650
        %v2805 = vunpack.c.h.b16 %v650
        %v2806 = vunpack.c.l.b16 %v651
        %v2807 = vunpack.c.h.b16 %v651
        %v2808 = vunpack.c.l.b16 %v652
        %v2809 = vunpack.c.h.b16 %v652
        %v2810 = vunpack.c.l.b16 %v653
        %v2811 = vunpack.c.l.b16 %v654
        %v2812 = vunpack.c.h.b16 %v654
        %v2813 = vunpack.c.l.b16 %v655
        %v2814 = vunpack.c.h.b16 %v655
        %v2815 = vunpack.c.l.b16 %v656
        %v2816 = vunpack.c.h.b16 %v656
        %v2817 = vunpack.c.l.b16 %v657
        %v2818 = vunpack.c.l.b16 %v658
        %v2819 = vunpack.c.h.b16 %v658
        %v2820 = vunpack.c.l.b16 %v659
        %v2821 = vunpack.c.h.b16 %v659
        %v2822 = vunpack.c.l.b16 %v660
        %v2823 = vunpack.c.h.b16 %v660
        %v2824 = vunpack.c.l.b16 %v661
        %v2825 = vunpack.c.l.b16 %v662
        %v2826 = vunpack.c.h.b16 %v662
        %v2827 = vunpack.c.l.b16 %v663
        %v2828 = vunpack.c.h.b16 %v663
        %v2829 = vunpack.c.l.b16 %v664
        %v2830 = vunpack.c.h.b16 %v664
        %v2831 = vunpack.c.l.b16 %v665
        %v2832 = vunpack.c.l.b16 %v666
        %v2833 = vunpack.c.h.b16 %v666
        %v2834 = vunpack.c.l.b16 %v667
        %v2835 = vunpack.c.h.b16 %v667
        %v2836 = vunpack.c.l.b16 %v668
        %v2837 = vunpack.c.h.b16 %v668
        %v2838 = vunpack.c.l.b16 %v669
        %v2839 = vunpack.c.l.b16 %v670
        %v2840 = vunpack.c.h.b16 %v670
        %v2841 = vunpack.c.l.b16 %v671
        %v2842 = vunpack.c.h.b16 %v671
        %v2843 = vunpack.c.l.b16 %v672
        %v2844 = vunpack.c.h.b16 %v672
        %v2845 = vunpack.c.l.b16 %v673
        %v2846 = vunpack.c.l.b16 %v674
        %v2847 = vunpack.c.h.b16 %v674
        %v2848 = vunpack.c.l.b16 %v675
        %v2849 = vunpack.c.h.b16 %v675
        %v2850 = vunpack.c.l.b16 %v676
        %v2851 = vunpack.c.h.b16 %v676
        %v2852 = vunpack.c.l.b16 %v677
        %v2853 = vunpack.c.l.b16 %v678
        %v2854 = vunpack.c.h.b16 %v678
        %v2855 = vunpack.c.l.b16 %v679
        %v2856 = vunpack.c.h.b16 %v679
        %v2857 = vunpack.c.l.b16 %v680
        %v2858 = vunpack.c.h.b16 %v680
        %v2859 = vunpack.c.l.b16 %v681
        %v2860 = vunpack.c.l.b16 %v682
        %v2861 = vunpack.c.h.b16 %v682
        %v2862 = vunpack.c.l.b16 %v683
        %v2863 = vunpack.c.h.b16 %v683
        %v2864 = vunpack.c.l.b16 %v684
        %v2865 = vunpack.c.h.b16 %v684
        %v2866 = vunpack.c.l.b16 %v685
        %v2867 = vunpack.c.l.b16 %v686
        %v2868 = vunpack.c.h.b16 %v686
        %v2869 = vunpack.c.l.b16 %v687
        %v2870 = vunpack.c.h.b16 %v687
        %v2871 = vunpack.c.l.b16 %v688
        %v2872 = vunpack.c.h.b16 %v688
        %v2873 = vunpack.c.l.b16 %v689
        %v2874 = vunpack.c.l.b16 %v690
        %v2875 = vunpack.c.h.b16 %v690
        %v2876 = vunpack.c.l.b16 %v691
        %v2877 = vunpack.c.h.b16 %v691
        %v2878 = vunpack.c.l.b16 %v692
        %v2879 = vunpack.c.h.b16 %v692
        %v2880 = vunpack.c.l.b16 %v693
        %v2881 = vunpack.c.l.b16 %v694
        %v2882 = vunpack.c.h.b16 %v694
        %v2883 = vunpack.c.l.b16 %v695
        %v2884 = vunpack.c.h.b16 %v695
        %v2885 = vunpack.c.l.b16 %v696
        %v2886 = vunpack.c.h.b16 %v696
        %v2887 = vunpack.c.l.b16 %v697
        %v2888 = vunpack.c.l.b16 %v698
        %v2889 = vunpack.c.h.b16 %v698
        %v2890 = vunpack.c.l.b16 %v699
        %v2891 = vunpack.c.h.b16 %v699
        %v2892 = vunpack.c.l.b16 %v700
        %v2893 = vunpack.c.h.b16 %v700
        %v2894 = vunpack.c.l.b16 %v701
        %v2895 = vunpack.c.l.b16 %v702
        %v2896 = vunpack.c.h.b16 %v702
        %v2897 = vunpack.c.l.b16 %v703
        %v2898 = vunpack.c.h.b16 %v703
        %v2899 = vunpack.c.l.b16 %v704
        %v2900 = vunpack.c.h.b16 %v704
        %v2901 = vunpack.c.l.b16 %v705
        %v2902 = vunpack.c.l.b16 %v706
        %v2903 = vunpack.c.h.b16 %v706
        %v2904 = vunpack.c.l.b16 %v707
        %v2905 = vunpack.c.h.b16 %v707
        %v2906 = vunpack.c.l.b16 %v708
        %v2907 = vunpack.c.h.b16 %v708
        %v2908 = vunpack.c.l.b16 %v709
        %v2909 = vunpack.c.l.b16 %v710
        %v2910 = vunpack.c.h.b16 %v710
        %v2911 = vunpack.c.l.b16 %v711
        %v2912 = vunpack.c.h.b16 %v711
        %v2913 = vunpack.c.l.b16 %v712
        %v2914 = vunpack.c.h.b16 %v712
        %v2915 = vunpack.c.l.b16 %v713
        %v2916 = vunpack.c.l.b16 %v714
        %v2917 = vunpack.c.h.b16 %v714
        %v2918 = vunpack.c.l.b16 %v715
        %v2919 = vunpack.c.h.b16 %v715
        %v2920 = vunpack.c.l.b16 %v716
        %v2921 = vunpack.c.h.b16 %v716
        %v2922 = vunpack.c.l.b16 %v717
        %v2923 = vunpack.c.l.b16 %v718
        %v2924 = vunpack.c.h.b16 %v718
        %v2925 = vunpack.c.l.b16 %v719
        %v2926 = vunpack.c.h.b16 %v719
        %v2927 = vunpack.c.l.b16 %v720
        %v2928 = vunpack.c.h.b16 %v720
        %v2929 = vunpack.c.l.b16 %v721
        %v2930 = vunpack.c.l.b16 %v722
        %v2931 = vunpack.c.h.b16 %v722
        %v2932 = vunpack.c.l.b16 %v723
        %v2933 = vunpack.c.h.b16 %v723
        %v2934 = vunpack.c.l.b16 %v724
        %v2935 = vunpack.c.h.b16 %v724
        %v2936 = vunpack.c.l.b16 %v725
        %v2937 = vunpack.c.l.b16 %v726
        %v2938 = vunpack.c.h.b16 %v726
        %v2939 = vunpack.c.l.b16 %v727
        %v2940 = vunpack.c.h.b16 %v727
        %v2941 = vunpack.c.l.b16 %v728
        %v2942 = vunpack.c.h.b16 %v728
        %v2943 = vunpack.c.l.b16 %v729
        %v2944 = vunpack.c.l.b16 %v730
        %v2945 = vunpack.c.h.b16 %v730
        %v2946 = vunpack.c.l.b16 %v731
        %v2947 = vunpack.c.h.b16 %v731
        %v2948 = vunpack.c.l.b16 %v732
        %v2949 = vunpack.c.h.b16 %v732
        %v2950 = vunpack.c.l.b16 %v733
        %v2951 = vunpack.c.l.b16 %v734
        %v2952 = vunpack.c.h.b16 %v734
        %v2953 = vunpack.c.l.b16 %v735
        %v2954 = vunpack.c.h.b16 %v735
        %v2955 = vunpack.c.l.b16 %v736
        %v2956 = vunpack.c.h.b16 %v736
        %v2957 = vunpack.c.l.b16 %v737
        %v2958 = vunpack.c.l.b16 %v738
        %v2959 = vunpack.c.h.b16 %v738
        %v2960 = vunpack.c.l.b16 %v739
        %v2961 = vunpack.c.h.b16 %v739
        %v2962 = vunpack.c.l.b16 %v740
        %v2963 = vunpack.c.h.b16 %v740
        %v2964 = vunpack.c.l.b16 %v741
        %v2965 = vunpack.c.l.b16 %v742
        %v2966 = vunpack.c.h.b16 %v742
        %v2967 = vunpack.c.l.b16 %v743
        %v2968 = vunpack.c.h.b16 %v743
        %v2969 = vunpack.c.l.b16 %v744
        %v2970 = vunpack.c.h.b16 %v744
        %v2971 = vunpack.c.l.b16 %v745
        %v2972 = vunpack.c.l.b16 %v746
        %v2973 = vunpack.c.h.b16 %v746
        %v2974 = vunpack.c.l.b16 %v747
        %v2975 = vunpack.c.h.b16 %v747
        %v2976 = vunpack.c.l.b16 %v748
        %v2977 = vunpack.c.h.b16 %v748
        %v2978 = vunpack.c.l.b16 %v749
        %v2979 = vunpack.c.l.b16 %v750
        %v2980 = vunpack.c.h.b16 %v750
        %v2981 = vunpack.c.l.b16 %v751
        %v2982 = vunpack.c.h.b16 %v751
        %v2983 = vunpack.c.l.b16 %v752
        %v2984 = vunpack.c.h.b16 %v752
        %v2985 = vunpack.c.l.b16 %v753
        %v2986 = vunpack.c.l.b16 %v754
        %v2987 = vunpack.c.h.b16 %v754
        %v2988 = vunpack.c.l.b16 %v755
        %v2989 = vunpack.c.h.b16 %v755
        %v2990 = vunpack.c.l.b16 %v756
        %v2991 = vunpack.c.h.b16 %v756
        %v2992 = vunpack.c.l.b16 %v757
        %v2993 = vunpack.c.l.b16 %v758
        %v2994 = vunpack.c.h.b16 %v758
        %v2995 = vunpack.c.l.b16 %v759
        %v2996 = vunpack.c.h.b16 %v759
        %v2997 = vunpack.c.l.b16 %v760
        %v2998 = vunpack.c.h.b16 %v760
        %v2999 = vunpack.c.l.b16 %v761
        %v3000 = vunpack.c.l.b16 %v762
        %v3001 = vunpack.c.h.b16 %v762
        %v3002 = vunpack.c.l.b16 %v763
        %v3003 = vunpack.c.h.b16 %v763
        %v3004 = vunpack.c.l.b16 %v764
        %v3005 = vunpack.c.h.b16 %v764
        %v3006 = vunpack.c.l.b16 %v765
        %v3007 = vunpack.c.l.b16 %v766
        %v3008 = vunpack.c.h.b16 %v766
        %v3009 = vunpack.c.l.b16 %v767
        %v3010 = vunpack.c.h.b16 %v767
        %v3011 = vunpack.c.l.b16 %v768
        %v3012 = vunpack.c.h.b16 %v768
        %v3013 = vunpack.c.l.b16 %v769
        %v3014 = vunpack.c.l.b16 %v770
        %v3015 = vunpack.c.h.b16 %v770
        %v3016 = vunpack.c.l.b16 %v771
        %v3017 = vunpack.c.h.b16 %v771
        %v3018 = vunpack.c.l.b16 %v772
        %v3019 = vunpack.c.h.b16 %v772
        %v3020 = vunpack.c.l.b16 %v773
        %v3021 = vunpack.c.l.b16 %v774
        %v3022 = vunpack.c.h.b16 %v774
        %v3023 = vunpack.c.l.b16 %v775
        %v3024 = vunpack.c.h.b16 %v775
        %v3025 = vunpack.c.l.b16 %v776
        %v3026 = vunpack.c.h.b16 %v776
        %v3027 = vunpack.c.l.b16 %v777
        %v3028 = vunpack.c.l.b16 %v778
        %v3029 = vunpack.c.h.b16 %v778
        %v3030 = vunpack.c.l.b16 %v779
        %v3031 = vunpack.c.h.b16 %v779
        %v3032 = vunpack.c.l.b16 %v780
        %v3033 = vunpack.c.h.b16 %v780
        %v3034 = vunpack.c.l.b16 %v781
        %v3035 = vunpack.c.l.b16 %v782
        %v3036 = vunpack.c.h.b16 %v782
        %v3037 = vunpack.c.l.b16 %v783
        %v3038 = vunpack.c.h.b16 %v783
        %v3039 = vunpack.c.l.b16 %v784
        %v3040 = vunpack.c.h.b16 %v784
        %v3041 = vunpack.c.l.b16 %v785
        %v3042 = vunpack.c.l.b16 %v786
        %v3043 = vunpack.c.h.b16 %v786
        %v3044 = vunpack.c.l.b16 %v787
        %v3045 = vunpack.c.h.b16 %v787
        %v3046 = vunpack.c.l.b16 %v788
        %v3047 = vunpack.c.h.b16 %v788
        %v3048 = vunpack.c.l.b16 %v789
        %v3049 = vunpack.c.l.b16 %v790
        %v3050 = vunpack.c.h.b16 %v790
        %v3051 = vunpack.c.l.b16 %v791
        %v3052 = vunpack.c.h.b16 %v791
        %v3053 = vunpack.c.l.b16 %v792
        %v3054 = vunpack.c.h.b16 %v792
        %v3055 = vunpack.c.l.b16 %v793
        %v3056 = vunpack.c.l.b16 %v794
        %v3057 = vunpack.c.h.b16 %v794
        %v3058 = vunpack.c.l.b16 %v795
        %v3059 = vunpack.c.h.b16 %v795
        %v3060 = vunpack.c.l.b16 %v796
        %v3061 = vunpack.c.h.b16 %v796
        %v3062 = vunpack.c.l.b16 %v797
        %v3063 = vunpack.c.l.b16 %v798
        %v3064 = vunpack.c.h.b16 %v798
        %v3065 = vunpack.c.l.b16 %v799
        %v3066 = vunpack.c.h.b16 %v799
        %v3067 = vunpack.c.l.b16 %v800
        %v3068 = vunpack.c.h.b16 %v800
        %v3069 = vunpack.c.l.b16 %v801
        %v3070 = vunpack.c.l.b16 %v802
        %v3071 = vunpack.c.h.b16 %v802
        %v3072 = vunpack.c.l.b16 %v803
        %v3073 = vunpack.c.h.b16 %v803
        %v3074 = vunpack.c.l.b16 %v804
        %v3075 = vunpack.c.h.b16 %v804
        %v3076 = vunpack.c.l.b16 %v805
        %v3077 = vunpack.c.l.b16 %v806
        %v3078 = vunpack.c.h.b16 %v806
        %v3079 = vunpack.c.l.b16 %v807
        %v3080 = vunpack.c.h.b16 %v807
        %v3081 = vunpack.c.l.b16 %v808
        %v3082 = vunpack.c.h.b16 %v808
        %v3083 = vunpack.c.l.b16 %v809
        %v3084 = vunpack.c.l.b16 %v810
        %v3085 = vunpack.c.h.b16 %v810
        %v3086 = vunpack.c.l.b16 %v811
        %v3087 = vunpack.c.h.b16 %v811
        %v3088 = vunpack.c.l.b16 %v812
        %v3089 = vunpack.c.h.b16 %v812
        %v3090 = vunpack.c.l.b16 %v813
        %v3091 = vunpack.c.l.b16 %v814
        %v3092 = vunpack.c.h.b16 %v814
        %v3093 = vunpack.c.l.b16 %v815
        %v3094 = vunpack.c.h.b16 %v815
        %v3095 = vunpack.c.l.b16 %v816
        %v3096 = vunpack.c.h.b16 %v816
        %v3097 = vunpack.c.l.b16 %v817
        %v3098 = vunpack.c.l.b16 %v818
        %v3099 = vunpack.c.h.b16 %v818
        %v3100 = vunpack.c.l.b16 %v819
        %v3101 = vunpack.c.h.b16 %v819
        %v3102 = vunpack.c.l.b16 %v820
        %v3103 = vunpack.c.h.b16 %v820
        %v3104 = vunpack.c.l.b16 %v821
        %v3105 = vunpack.c.l.b16 %v822
        %v3106 = vunpack.c.h.b16 %v822
        %v3107 = vunpack.c.l.b16 %v823
        %v3108 = vunpack.c.h.b16 %v823
        %v3109 = vunpack.c.l.b16 %v824
        %v3110 = vunpack.c.h.b16 %v824
        %v3111 = vunpack.c.l.b16 %v825
        %v3112 = vunpack.c.l.b16 %v826
        %v3113 = vunpack.c.h.b16 %v826
        %v3114 = vunpack.c.l.b16 %v827
        %v3115 = vunpack.c.h.b16 %v827
        %v3116 = vunpack.c.l.b16 %v828
        %v3117 = vunpack.c.h.b16 %v828
        %v3118 = vunpack.c.l.b16 %v829
        %v3119 = vunpack.c.l.b16 %v830
        %v3120 = vunpack.c.h.b16 %v830
        %v3121 = vunpack.c.l.b16 %v831
        %v3122 = vunpack.c.h.b16 %v831
        %v3123 = vunpack.c.l.b16 %v832
        %v3124 = vunpack.c.h.b16 %v832
        %v3125 = vunpack.c.l.b16 %v833
        %v3126 = vunpack.c.l.b16 %v834
        %v3127 = vunpack.c.h.b16 %v834
        %v3128 = vunpack.c.l.b16 %v835
        %v3129 = vunpack.c.h.b16 %v835
        %v3130 = vunpack.c.l.b16 %v836
        %v3131 = vunpack.c.h.b16 %v836
        %v3132 = vunpack.c.l.b16 %v837
        %v3133 = vunpack.c.l.b16 %v838
        %v3134 = vunpack.c.h.b16 %v838
        %v3135 = vunpack.c.l.b16 %v839
        %v3136 = vunpack.c.h.b16 %v839
        %v3137 = vunpack.c.l.b16 %v840
        %v3138 = vunpack.c.h.b16 %v840
        %v3139 = vunpack.c.l.b16 %v841
        %v3140 = vunpack.c.l.b16 %v842
        %v3141 = vunpack.c.h.b16 %v842
        %v3142 = vunpack.c.l.b16 %v843
        %v3143 = vunpack.c.h.b16 %v843
        %v3144 = vunpack.c.l.b16 %v844
        %v3145 = vunpack.c.h.b16 %v844
        %v3146 = vunpack.c.l.b16 %v845
        %v3147 = vunpack.c.l.b16 %v846
        %v3148 = vunpack.c.h.b16 %v846
        %v3149 = vunpack.c.l.b16 %v847
        %v3150 = vunpack.c.h.b16 %v847
        %v3151 = vunpack.c.l.b16 %v848
        %v3152 = vunpack.c.h.b16 %v848
        %v3153 = vunpack.c.l.b16 %v849
        %v3154 = vunpack.c.l.b16 %v850
        %v3155 = vunpack.c.h.b16 %v850
        %v3156 = vunpack.c.l.b16 %v851
        %v3157 = vunpack.c.h.b16 %v851
        %v3158 = vunpack.c.l.b16 %v852
        %v3159 = vunpack.c.h.b16 %v852
        %v3160 = vunpack.c.l.b16 %v853
        %v3161 = vunpack.c.l.b16 %v854
        %v3162 = vunpack.c.h.b16 %v854
        %v3163 = vunpack.c.l.b16 %v855
        %v3164 = vunpack.c.h.b16 %v855
        %v3165 = vunpack.c.l.b16 %v856
        %v3166 = vunpack.c.h.b16 %v856
        %v3167 = vunpack.c.l.b16 %v857
        %v3168 = vunpack.c.l.b16 %v858
        %v3169 = vunpack.c.h.b16 %v858
        %v3170 = vunpack.c.l.b16 %v859
        %v3171 = vunpack.c.h.b16 %v859
        %v3172 = vunpack.c.l.b16 %v860
        %v3173 = vunpack.c.h.b16 %v860
        %v3174 = vunpack.c.l.b16 %v861
        %v3175 = vunpack.c.l.b16 %v862
        %v3176 = vunpack.c.h.b16 %v862
        %v3177 = vunpack.c.l.b16 %v863
        %v3178 = vunpack.c.h.b16 %v863
        %v3179 = vunpack.c.l.b16 %v864
        %v3180 = vunpack.c.h.b16 %v864
        %v3181 = vunpack.c.l.b16 %v865
        %v3182 = vunpack.c.l.b16 %v866
        %v3183 = vunpack.c.h.b16 %v866
        %v3184 = vunpack.c.l.b16 %v867
        %v3185 = vunpack.c.h.b16 %v867
        %v3186 = vunpack.c.l.b16 %v868
        %v3187 = vunpack.c.h.b16 %v868
        %v3188 = vunpack.c.l.b16 %v869
        %v3189 = vunpack.c.l.b16 %v870
        %v3190 = vunpack.c.h.b16 %v870
        %v3191 = vunpack.c.l.b16 %v871
        %v3192 = vunpack.c.h.b16 %v871
        %v3193 = vunpack.c.l.b16 %v872
        %v3194 = vunpack.c.h.b16 %v872
        %v3195 = vunpack.c.l.b16 %v873
        %v3196 = vunpack.c.l.b16 %v874
        %v3197 = vunpack.c.h.b16 %v874
        %v3198 = vunpack.c.l.b16 %v875
        %v3199 = vunpack.c.h.b16 %v875
        %v3200 = vunpack.c.l.b16 %v876
        %v3201 = vunpack.c.h.b16 %v876
        %v3202 = vunpack.c.l.b16 %v877
        %v3203 = vunpack.c.l.b16 %v878
        %v3204 = vunpack.c.h.b16 %v878
        %v3205 = vunpack.c.l.b16 %v879
        %v3206 = vunpack.c.h.b16 %v879
        %v3207 = vunpack.c.l.b16 %v880
        %v3208 = vunpack.c.h.b16 %v880
        %v3209 = vunpack.c.l.b16 %v881
        %v3210 = vunpack.c.l.b16 %v882
        %v3211 = vunpack.c.h.b16 %v882
        %v3212 = vunpack.c.l.b16 %v883
        %v3213 = vunpack.c.h.b16 %v883
        %v3214 = vunpack.c.l.b16 %v884
        %v3215 = vunpack.c.h.b16 %v884
        %v3216 = vunpack.c.l.b16 %v885
        %v3217 = vunpack.c.l.b16 %v886
        %v3218 = vunpack.c.h.b16 %v886
        %v3219 = vunpack.c.l.b16 %v887
        %v3220 = vunpack.c.h.b16 %v887
        %v3221 = vunpack.c.l.b16 %v888
        %v3222 = vunpack.c.h.b16 %v888
        %v3223 = vunpack.c.l.b16 %v889
        %v3224 = vunpack.c.l.b16 %v890
        %v3225 = vunpack.c.h.b16 %v890
        %v3226 = vunpack.c.l.b16 %v891
        %v3227 = vunpack.c.h.b16 %v891
        %v3228 = vunpack.c.l.b16 %v892
        %v3229 = vunpack.c.h.b16 %v892
        %v3230 = vunpack.c.l.b16 %v893
        %v3231 = vunpack.c.l.b16 %v894
        %v3232 = vunpack.c.h.b16 %v894
        %v3233 = vunpack.c.l.b16 %v895
        %v3234 = vunpack.c.h.b16 %v895
        %v3235 = vunpack.c.l.b16 %v896
        %v3236 = vunpack.c.h.b16 %v896
        %v3237 = vunpack.c.l.b16 %v897
        %v3238 = vunpack.c.l.b16 %v898
        %v3239 = vunpack.c.h.b16 %v898
        %v3240 = vunpack.c.l.b16 %v899
        %v3241 = vunpack.c.h.b16 %v899
        %v3242 = vunpack.c.l.b16 %v900
        %v3243 = vunpack.c.h.b16 %v900
        %v3244 = vunpack.c.l.b16 %v901
        %v3245 = vunpack.c.l.b16 %v902
        %v3246 = vunpack.c.h.b16 %v902
        %v3247 = vunpack.c.l.b16 %v903
        %v3248 = vunpack.c.h.b16 %v903
        %v3249 = vunpack.c.l.b16 %v904
        %v3250 = vunpack.c.h.b16 %v904
        %v3251 = vunpack.c.l.b16 %v905
        %v3252 = vunpack.c.l.b16 %v906
        %v3253 = vunpack.c.h.b16 %v906
        %v3254 = vunpack.c.l.b16 %v907
        %v3255 = vunpack.c.h.b16 %v907
        %v3256 = vunpack.c.l.b16 %v908
        %v3257 = vunpack.c.h.b16 %v908
        %v3258 = vunpack.c.l.b16 %v909
        %v3259 = vunpack.c.l.b16 %v910
        %v3260 = vunpack.c.h.b16 %v910
        %v3261 = vunpack.c.l.b16 %v911
        %v3262 = vunpack.c.h.b16 %v911
        %v3263 = vunpack.c.l.b16 %v912
        %v3264 = vunpack.c.h.b16 %v912
        %v3265 = vunpack.c.l.b16 %v913
        %v3266 = vunpack.c.l.b16 %v914
        %v3267 = vunpack.c.h.b16 %v914
        %v3268 = vunpack.c.l.b16 %v915
        %v3269 = vunpack.c.h.b16 %v915
        %v3270 = vunpack.c.l.b16 %v916
        %v3271 = vunpack.c.h.b16 %v916
        %v3272 = vunpack.c.l.b16 %v917
        %v3273 = vunpack.c.l.b16 %v918
        %v3274 = vunpack.c.h.b16 %v918
        %v3275 = vunpack.c.l.b16 %v919
        %v3276 = vunpack.c.h.b16 %v919
        %v3277 = vunpack.c.l.b16 %v920
        %v3278 = vunpack.c.h.b16 %v920
        %v3279 = vunpack.c.l.b16 %v921
        %v3280 = vunpack.c.l.b16 %v922
        %v3281 = vunpack.c.h.b16 %v922
        %v3282 = vunpack.c.l.b16 %v923
        %v3283 = vunpack.c.h.b16 %v923
        %v3284 = vunpack.c.l.b16 %v924
        %v3285 = vunpack.c.h.b16 %v924
        %v3286 = vunpack.c.l.b16 %v925
        %v3287 = vunpack.c.l.b16 %v926
        %v3288 = vunpack.c.h.b16 %v926
        %v3289 = vunpack.c.l.b16 %v927
        %v3290 = vunpack.c.h.b16 %v927
        %v3291 = vunpack.c.l.b16 %v928
        %v3292 = vunpack.c.h.b16 %v928
        %v3293 = vunpack.c.l.b16 %v929
        %v3294 = vunpack.c.l.b16 %v930
        %v3295 = vunpack.c.h.b16 %v930
        %v3296 = vunpack.c.l.b16 %v931
        %v3297 = vunpack.c.h.b16 %v931
        %v3298 = vunpack.c.l.b16 %v932
        %v3299 = vunpack.c.h.b16 %v932
        %v3300 = vunpack.c.l.b16 %v933
        %v3301 = vunpack.c.l.b16 %v934
        %v3302 = vunpack.c.h.b16 %v934
        %v3303 = vunpack.c.l.b16 %v935
        %v3304 = vunpack.c.h.b16 %v935
        %v3305 = vunpack.c.l.b16 %v936
        %v3306 = vunpack.c.h.b16 %v936
        %v3307 = vunpack.c.l.b16 %v937
        %v3308 = vunpack.c.l.b16 %v938
        %v3309 = vunpack.c.h.b16 %v938
        %v3310 = vunpack.c.l.b16 %v939
        %v3311 = vunpack.c.h.b16 %v939
        %v3312 = vunpack.c.l.b16 %v940
        %v3313 = vunpack.c.h.b16 %v940
        %v3314 = vunpack.c.l.b16 %v941
        %v3315 = vunpack.c.l.b16 %v942
        %v3316 = vunpack.c.h.b16 %v942
        %v3317 = vunpack.c.l.b16 %v943
        %v3318 = vunpack.c.h.b16 %v943
        %v3319 = vunpack.c.l.b16 %v944
        %v3320 = vunpack.c.h.b16 %v944
        %v3321 = vunpack.c.l.b16 %v945
        %v3322 = vunpack.c.l.b16 %v946
        %v3323 = vunpack.c.h.b16 %v946
        %v3324 = vunpack.c.l.b16 %v947
        %v3325 = vunpack.c.h.b16 %v947
        %v3326 = vunpack.c.l.b16 %v948
        %v3327 = vunpack.c.h.b16 %v948
        %v3328 = vunpack.c.l.b16 %v949
        %v3329 = vunpack.c.l.b16 %v950
        %v3330 = vunpack.c.h.b16 %v950
        %v3331 = vunpack.c.l.b16 %v951
        %v3332 = vunpack.c.h.b16 %v951
        %v3333 = vunpack.c.l.b16 %v952
        %v3334 = vunpack.c.h.b16 %v952
        %v3335 = vunpack.c.l.b16 %v953
        %v3336 = vunpack.c.l.b16 %v954
        %v3337 = vunpack.c.h.b16 %v954
        %v3338 = vunpack.c.l.b16 %v955
        %v3339 = vunpack.c.h.b16 %v955
        %v3340 = vunpack.c.l.b16 %v956
        %v3341 = vunpack.c.h.b16 %v956
        %v3342 = vunpack.c.l.b16 %v957
        %v3343 = vunpack.c.l.b16 %v958
        %v3344 = vunpack.c.h.b16 %v958
        %v3345 = vunpack.c.l.b16 %v959
        %v3346 = vunpack.c.h.b16 %v959
        %v3347 = vunpack.c.l.b16 %v960
        %v3348 = vunpack.c.h.b16 %v960
        %v3349 = vunpack.c.l.b16 %v961
        %v3350 = vunpack.c.l.b16 %v962
        %v3351 = vunpack.c.h.b16 %v962
        %v3352 = vunpack.c.l.b16 %v963
        %v3353 = vunpack.c.h.b16 %v963
        %v3354 = vunpack.c.l.b16 %v964
        %v3355 = vunpack.c.h.b16 %v964
        %v3356 = vunpack.c.l.b16 %v965
        %v3357 = vunpack.c.l.b16 %v966
        %v3358 = vunpack.c.h.b16 %v966
        %v3359 = vunpack.c.l.b16 %v967
        %v3360 = vunpack.c.h.b16 %v967
        %v3361 = vunpack.c.l.b16 %v968
        %v3362 = vunpack.c.h.b16 %v968
        %v3363 = vunpack.c.l.b16 %v969
        %v3364 = vunpack.c.l.b16 %v970
        %v3365 = vunpack.c.h.b16 %v970
        %v3366 = vunpack.c.l.b16 %v971
        %v3367 = vunpack.c.h.b16 %v971
        %v3368 = vunpack.c.l.b16 %v972
        %v3369 = vunpack.c.h.b16 %v972
        %v3370 = vunpack.c.l.b16 %v973
        %v3371 = vunpack.c.l.b16 %v974
        %v3372 = vunpack.c.h.b16 %v974
        %v3373 = vunpack.c.l.b16 %v975
        %v3374 = vunpack.c.h.b16 %v975
        %v3375 = vunpack.c.l.b16 %v976
        %v3376 = vunpack.c.h.b16 %v976
        %v3377 = vunpack.c.l.b16 %v977
        %v3378 = vunpack.c.l.b16 %v978
        %v3379 = vunpack.c.h.b16 %v978
        %v3380 = vunpack.c.l.b16 %v979
        %v3381 = vunpack.c.h.b16 %v979
        %v3382 = vunpack.c.l.b16 %v980
        %v3383 = vunpack.c.h.b16 %v980
        %v3384 = vunpack.c.l.b16 %v981
        %v3385 = vunpack.c.l.b16 %v982
        %v3386 = vunpack.c.h.b16 %v982
        %v3387 = vunpack.c.l.b16 %v983
        %v3388 = vunpack.c.h.b16 %v983
        %v3389 = vunpack.c.l.b16 %v984
        %v3390 = vunpack.c.h.b16 %v984
        %v3391 = vunpack.c.l.b16 %v985
        %v3392 = vunpack.c.l.b16 %v986
        %v3393 = vunpack.c.h.b16 %v986
        %v3394 = vunpack.c.l.b16 %v987
        %v3395 = vunpack.c.h.b16 %v987
        %v3396 = vunpack.c.l.b16 %v988
        %v3397 = vunpack.c.h.b16 %v988
        %v3398 = vunpack.c.l.b16 %v989
        %v3399 = vunpack.c.l.b16 %v990
        %v3400 = vunpack.c.h.b16 %v990
        %v3401 = vunpack.c.l.b16 %v991
        %v3402 = vunpack.c.h.b16 %v991
        %v3403 = vunpack.c.l.b16 %v992
        %v3404 = vunpack.c.h.b16 %v992
        %v3405 = vunpack.c.l.b16 %v993
        %v3406 = vunpack.c.l.b16 %v994
        %v3407 = vunpack.c.h.b16 %v994
        %v3408 = vunpack.c.l.b16 %v995
        %v3409 = vunpack.c.h.b16 %v995
        %v3410 = vunpack.c.l.b16 %v996
        %v3411 = vunpack.c.h.b16 %v996
        %v3412 = vunpack.c.l.b16 %v997
        %v3413 = vunpack.c.l.b16 %v998
        %v3414 = vunpack.c.h.b16 %v998
        %v3415 = vunpack.c.l.b16 %v999
        %v3416 = vunpack.c.h.b16 %v999
        %v3417 = vunpack.c.l.b16 %v1000
        %v3418 = vunpack.c.h.b16 %v1000
        %v3419 = vunpack.c.l.b16 %v1001
        %v3420 = vunpack.c.l.b16 %v1002
        %v3421 = vunpack.c.h.b16 %v1002
        %v3422 = vunpack.c.l.b16 %v1003
        %v3423 = vunpack.c.h.b16 %v1003
        %v3424 = vunpack.c.l.b16 %v1004
        %v3425 = vunpack.c.h.b16 %v1004
        %v3426 = vunpack.c.l.b16 %v1005
        %v3427 = vunpack.c.l.b16 %v1006
        %v3428 = vunpack.c.h.b16 %v1006
        %v3429 = vunpack.c.l.b16 %v1007
        %v3430 = vunpack.c.h.b16 %v1007
        %v3431 = vunpack.c.l.b16 %v1008
        %v3432 = vunpack.c.h.b16 %v1008
        %v3433 = vunpack.c.l.b16 %v1009
        %v3434 = vunpack.c.l.b16 %v1010
        %v3435 = vunpack.c.h.b16 %v1010
        %v3436 = vunpack.c.l.b16 %v1011
        %v3437 = vunpack.c.h.b16 %v1011
        %v3438 = vunpack.c.l.b16 %v1012
        %v3439 = vunpack.c.h.b16 %v1012
        %v3440 = vunpack.c.l.b16 %v1013
        %v3441 = vunpack.c.l.b16 %v1014
        %v3442 = vunpack.c.h.b16 %v1014
        %v3443 = vunpack.c.l.b16 %v1015
        %v3444 = vunpack.c.h.b16 %v1015
        %v3445 = vunpack.c.l.b16 %v1016
        %v3446 = vunpack.c.h.b16 %v1016
        %v3447 = vunpack.c.l.b16 %v1017
        %v3448 = vunpack.c.l.b16 %v1018
        %v3449 = vunpack.c.h.b16 %v1018
        %v3450 = vunpack.c.l.b16 %v1019
        %v3451 = vunpack.c.h.b16 %v1019
        %v3452 = vunpack.c.l.b16 %v1020
        %v3453 = vunpack.c.h.b16 %v1020
        %v3454 = vunpack.c.l.b16 %v1021
        %v3455 = vunpack.c.l.b16 %v1022
        %v3456 = vunpack.c.h.b16 %v1022
        %v3457 = vunpack.c.l.b16 %v1023
        %v3458 = vunpack.c.h.b16 %v1023
        %v3459 = vunpack.c.l.b16 %v1024
        %v3460 = vunpack.c.h.b16 %v1024
        %v3461 = vunpack.c.l.b16 %v1025
        %v3462 = vunpack.c.l.b16 %v1026
        %v3463 = vunpack.c.h.b16 %v1026
        %v3464 = vunpack.c.l.b16 %v1027
        %v3465 = vunpack.c.h.b16 %v1027
        %v3466 = vunpack.c.l.b16 %v1028
        %v3467 = vunpack.c.h.b16 %v1028
        %v3468 = vunpack.c.l.b16 %v1029
        %v3469 = vunpack.c.l.b16 %v1030
        %v3470 = vunpack.c.h.b16 %v1030
        %v3471 = vunpack.c.l.b16 %v1031
        %v3472 = vunpack.c.h.b16 %v1031
        %v3473 = vunpack.c.l.b16 %v1032
        %v3474 = vunpack.c.h.b16 %v1032
        %v3475 = vunpack.c.l.b16 %v1033
        %v3476 = vunpack.c.l.b16 %v1034
        %v3477 = vunpack.c.h.b16 %v1034
        %v3478 = vunpack.c.l.b16 %v1035
        %v3479 = vunpack.c.h.b16 %v1035
        %v3480 = vunpack.c.l.b16 %v1036
        %v3481 = vunpack.c.h.b16 %v1036
        %v3482 = vunpack.c.l.b16 %v1037
        %v3483 = vunpack.c.l.b16 %v1038
        %v3484 = vunpack.c.h.b16 %v1038
        %v3485 = vunpack.c.l.b16 %v1039
        %v3486 = vunpack.c.h.b16 %v1039
        %v3487 = vunpack.c.l.b16 %v1040
        %v3488 = vunpack.c.h.b16 %v1040
        %v3489 = vunpack.c.l.b16 %v1041
        %v3490 = vunpack.c.l.b16 %v1042
        %v3491 = vunpack.c.h.b16 %v1042
        %v3492 = vunpack.c.l.b16 %v1043
        %v3493 = vunpack.c.h.b16 %v1043
        %v3494 = vunpack.c.l.b16 %v1044
        %v3495 = vunpack.c.h.b16 %v1044
        %v3496 = vunpack.c.l.b16 %v1045
        %v3497 = vunpack.c.l.b16 %v1046
        %v3498 = vunpack.c.h.b16 %v1046
        %v3499 = vunpack.c.l.b16 %v1047
        %v3500 = vunpack.c.h.b16 %v1047
        %v3501 = vunpack.c.l.b16 %v1048
        %v3502 = vunpack.c.h.b16 %v1048
        %v3503 = vunpack.c.l.b16 %v1049
        %v3504 = vunpack.c.l.b16 %v1050
        %v3505 = vunpack.c.h.b16 %v1050
        %v3506 = vunpack.c.l.b16 %v1051
        %v3507 = vunpack.c.h.b16 %v1051
        %v3508 = vunpack.c.l.b16 %v1052
        %v3509 = vunpack.c.h.b16 %v1052
        %v3510 = vunpack.c.l.b16 %v1053
        %v3511 = vunpack.c.l.b16 %v1054
        %v3512 = vunpack.c.h.b16 %v1054
        %v3513 = vunpack.c.l.b16 %v1055
        %v3514 = vunpack.c.h.b16 %v1055
        %v3515 = vunpack.c.l.b16 %v1056
        %v3516 = vunpack.c.h.b16 %v1056
        %v3517 = vunpack.c.l.b16 %v1057
        %v3518 = vunpack.c.l.b16 %v1058
        %v3519 = vunpack.c.h.b16 %v1058
        %v3520 = vunpack.c.l.b16 %v1059
        %v3521 = vunpack.c.h.b16 %v1059
        %v3522 = vunpack.c.l.b16 %v1060
        %v3523 = vunpack.c.h.b16 %v1060
        %v3524 = vunpack.c.l.b16 %v1061
        %v3525 = vunpack.c.l.b16 %v1062
        %v3526 = vunpack.c.h.b16 %v1062
        %v3527 = vunpack.c.l.b16 %v1063
        %v3528 = vunpack.c.h.b16 %v1063
        %v3529 = vunpack.c.l.b16 %v1064
        %v3530 = vunpack.c.h.b16 %v1064
        %v3531 = vunpack.c.l.b16 %v1065
        %v3532 = vunpack.c.l.b16 %v1066
        %v3533 = vunpack.c.h.b16 %v1066
        %v3534 = vunpack.c.l.b16 %v1067
        %v3535 = vunpack.c.h.b16 %v1067
        %v3536 = vunpack.c.l.b16 %v1068
        %v3537 = vunpack.c.h.b16 %v1068
        %v3538 = vunpack.c.l.b16 %v1069
        %v3539 = vunpack.c.l.b16 %v1070
        %v3540 = vunpack.c.h.b16 %v1070
        %v3541 = vunpack.c.l.b16 %v1071
        %v3542 = vunpack.c.h.b16 %v1071
        %v3543 = vunpack.c.l.b16 %v1072
        %v3544 = vunpack.c.h.b16 %v1072
        %v3545 = vunpack.c.l.b16 %v1073
        %v3546 = vunpack.c.l.b16 %v1074
        %v3547 = vunpack.c.h.b16 %v1074
        %v3548 = vunpack.c.l.b16 %v1075
        %v3549 = vunpack.c.h.b16 %v1075
        %v3550 = vunpack.c.l.b16 %v1076
        %v3551 = vunpack.c.h.b16 %v1076
        %v3552 = vunpack.c.l.b16 %v1077
        %v3553 = vunpack.c.l.b16 %v1078
        %v3554 = vunpack.c.h.b16 %v1078
        %v3555 = vunpack.c.l.b16 %v1079
        %v3556 = vunpack.c.h.b16 %v1079
        %v3557 = vunpack.c.l.b16 %v1080
        %v3558 = vunpack.c.h.b16 %v1080
        %v3559 = vunpack.c.l.b16 %v1081
        %v3560 = vunpack.c.l.b16 %v1082
        %v3561 = vunpack.c.h.b16 %v1082
        %v3562 = vunpack.c.l.b16 %v1083
        %v3563 = vunpack.c.h.b16 %v1083
        %v3564 = vunpack.c.l.b16 %v1084
        %v3565 = vunpack.c.h.b16 %v1084
        %v3566 = vunpack.c.l.b16 %v1085
        %v3567 = vunpack.c.l.b16 %v1086
        %v3568 = vunpack.c.h.b16 %v1086
        %v3569 = vunpack.c.l.b16 %v1087
        %v3570 = vunpack.c.h.b16 %v1087
        %v3571 = vunpack.c.l.b16 %v1088
        %v3572 = vunpack.c.h.b16 %v1088
        %v3573 = vunpack.c.l.b16 %v1089
        %v3574 = vunpack.c.l.b16 %v1090
        %v3575 = vunpack.c.h.b16 %v1090
        %v3576 = vunpack.c.l.b16 %v1091
        %v3577 = vunpack.c.h.b16 %v1091
        %v3578 = vunpack.c.l.b16 %v1092
        %v3579 = vunpack.c.h.b16 %v1092
        %v3580 = vunpack.c.l.b16 %v1093
        %v3581 = vunpack.c.l.b16 %v1094
        %v3582 = vunpack.c.h.b16 %v1094
        %v3583 = vunpack.c.l.b16 %v1095
        %v3584 = vunpack.c.h.b16 %v1095
        %v3585 = vunpack.c.l.b16 %v1096
        %v3586 = vunpack.c.h.b16 %v1096
        %v3587 = vunpack.c.l.b16 %v1097
        %v3588 = vunpack.c.l.b16 %v1098
        %v3589 = vunpack.c.h.b16 %v1098
        %v3590 = vunpack.c.l.b16 %v1099
        %v3591 = vunpack.c.h.b16 %v1099
        %v3592 = vunpack.c.l.b16 %v1100
        %v3593 = vunpack.c.h.b16 %v1100
        %v3594 = vunpack.c.l.b16 %v1101
        %v3595 = vunpack.c.l.b16 %v1102
        %v3596 = vunpack.c.h.b16 %v1102
        %v3597 = vunpack.c.l.b16 %v1103
        %v3598 = vunpack.c.h.b16 %v1103
        %v3599 = vunpack.c.l.b16 %v1104
        %v3600 = vunpack.c.h.b16 %v1104
        %v3601 = vunpack.c.l.b16 %v1105
        %v3602 = vunpack.c.l.b16 %v1106
        %v3603 = vunpack.c.h.b16 %v1106
        %v3604 = vunpack.c.l.b16 %v1107
        %v3605 = vunpack.c.h.b16 %v1107
        %v3606 = vunpack.c.l.b16 %v1108
        %v3607 = vunpack.c.h.b16 %v1108
        %v3608 = vunpack.c.l.b16 %v1109
        %v3609 = vunpack.c.l.b16 %v1110
        %v3610 = vunpack.c.h.b16 %v1110
        %v3611 = vunpack.c.l.b16 %v1111
        %v3612 = vunpack.c.h.b16 %v1111
        %v3613 = vunpack.c.l.b16 %v1112
        %v3614 = vunpack.c.h.b16 %v1112
        %v3615 = vunpack.c.l.b16 %v1113
        %v3616 = vunpack.c.l.b16 %v1114
        %v3617 = vunpack.c.h.b16 %v1114
        %v3618 = vunpack.c.l.b16 %v1115
        %v3619 = vunpack.c.h.b16 %v1115
        %v3620 = vunpack.c.l.b16 %v1116
        %v3621 = vunpack.c.h.b16 %v1116
        %v3622 = vunpack.c.l.b16 %v1117
        %v3623 = vunpack.c.l.b16 %v1118
        %v3624 = vunpack.c.h.b16 %v1118
        %v3625 = vunpack.c.l.b16 %v1119
        %v3626 = vunpack.c.h.b16 %v1119
        %v3627 = vunpack.c.l.b16 %v1120
        %v3628 = vunpack.c.h.b16 %v1120
        %v3629 = vunpack.c.l.b16 %v1121
        %v3630 = vunpack.c.l.b16 %v1122
        %v3631 = vunpack.c.h.b16 %v1122
        %v3632 = vunpack.c.l.b16 %v1123
        %v3633 = vunpack.c.h.b16 %v1123
        %v3634 = vunpack.c.l.b16 %v1124
        %v3635 = vunpack.c.h.b16 %v1124
        %v3636 = vunpack.c.l.b16 %v1125
        %v3637 = vunpack.c.l.b16 %v1126
        %v3638 = vunpack.c.h.b16 %v1126
        %v3639 = vunpack.c.l.b16 %v1127
        %v3640 = vunpack.c.h.b16 %v1127
        %v3641 = vunpack.c.l.b16 %v1128
        %v3642 = vunpack.c.h.b16 %v1128
        %v3643 = vunpack.c.l.b16 %v1129
        %v3644 = vunpack.c.l.b16 %v1130
        %v3645 = vunpack.c.h.b16 %v1130
        %v3646 = vunpack.c.l.b16 %v1131
        %v3647 = vunpack.c.h.b16 %v1131
        %v3648 = vunpack.c.l.b16 %v1132
        %v3649 = vunpack.c.h.b16 %v1132
        %v3650 = vunpack.c.l.b16 %v1133
        %v3651 = vunpack.c.l.b16 %v1134
        %v3652 = vunpack.c.h.b16 %v1134
        %v3653 = vunpack.c.l.b16 %v1135
        %v3654 = vunpack.c.h.b16 %v1135
        %v3655 = vunpack.c.l.b16 %v1136
        %v3656 = vunpack.c.h.b16 %v1136
        %v3657 = vunpack.c.l.b16 %v1137
        %v3658 = vunpack.c.l.b16 %v1138
        %v3659 = vunpack.c.h.b16 %v1138
        %v3660 = vunpack.c.l.b16 %v1139
        %v3661 = vunpack.c.h.b16 %v1139
        %v3662 = vunpack.c.l.b16 %v1140
        %v3663 = vunpack.c.h.b16 %v1140
        %v3664 = vunpack.c.l.b16 %v1141
        %v3665 = vunpack.c.l.b16 %v1142
        %v3666 = vunpack.c.h.b16 %v1142
        %v3667 = vunpack.c.l.b16 %v1143
        %v3668 = vunpack.c.h.b16 %v1143
        %v3669 = vunpack.c.l.b16 %v1144
        %v3670 = vunpack.c.h.b16 %v1144
        %v3671 = vunpack.c.l.b16 %v1145
        %v3672 = vunpack.c.l.b16 %v1146
        %v3673 = vunpack.c.h.b16 %v1146
        %v3674 = vunpack.c.l.b16 %v1147
        %v3675 = vunpack.c.h.b16 %v1147
        %v3676 = vunpack.c.l.b16 %v1148
        %v3677 = vunpack.c.h.b16 %v1148
        %v3678 = vunpack.c.l.b16 %v1149
        %v3679 = vunpack.c.l.b16 %v1150
        %v3680 = vunpack.c.h.b16 %v1150
        %v3681 = vunpack.c.l.b16 %v1151
        %v3682 = vunpack.c.h.b16 %v1151
        %v3683 = vunpack.c.l.b16 %v1152
        %v3684 = vunpack.c.h.b16 %v1152
        %v3685 = vunpack.c.l.b16 %v1153
        %v3686 = vunpack.c.l.b16 %v1154
        %v3687 = vunpack.c.h.b16 %v1154
        %v3688 = vunpack.c.l.b16 %v1155
        %v3689 = vunpack.c.h.b16 %v1155
        %v3690 = vunpack.c.l.b16 %v1156
        %v3691 = vunpack.c.h.b16 %v1156
        %v3692 = vunpack.c.l.b16 %v1157
        %v3693 = vunpack.c.l.b16 %v1158
        %v3694 = vunpack.c.h.b16 %v1158
        %v3695 = vunpack.c.l.b16 %v1159
        %v3696 = vunpack.c.h.b16 %v1159
        %v3697 = vunpack.c.l.b16 %v1160
        %v3698 = vunpack.c.h.b16 %v1160
        %v3699 = vunpack.c.l.b16 %v1161
        %v3700 = vunpack.c.l.b16 %v1162
        %v3701 = vunpack.c.h.b16 %v1162
        %v3702 = vunpack.c.l.b16 %v1163
        %v3703 = vunpack.c.h.b16 %v1163
        %v3704 = vunpack.c.l.b16 %v1164
        %v3705 = vunpack.c.h.b16 %v1164
        %v3706 = vunpack.c.l.b16 %v1165
        %v3707 = vunpack.c.l.b16 %v1166
        %v3708 = vunpack.c.h.b16 %v1166
        %v3709 = vunpack.c.l.b16 %v1167
        %v3710 = vunpack.c.h.b16 %v1167
        %v3711 = vunpack.c.l.b16 %v1168
        %v3712 = vunpack.c.h.b16 %v1168
        %v3713 = vunpack.c.l.b16 %v1169
        %v3714 = vunpack.c.l.b16 %v1170
        %v3715 = vunpack.c.h.b16 %v1170
        %v3716 = vunpack.c.l.b16 %v1171
        %v3717 = vunpack.c.h.b16 %v1171
        %v3718 = vunpack.c.l.b16 %v1172
        %v3719 = vunpack.c.h.b16 %v1172
        %v3720 = vunpack.c.l.b16 %v1173
        %v3721 = vunpack.c.l.b16 %v1174
        %v3722 = vunpack.c.h.b16 %v1174
        %v3723 = vunpack.c.l.b16 %v1175
        %v3724 = vunpack.c.h.b16 %v1175
        %v3725 = vunpack.c.l.b16 %v1176
        %v3726 = vunpack.c.h.b16 %v1176
        %v3727 = vunpack.c.l.b16 %v1177
        %v3728 = vunpack.c.l.b16 %v1178
        %v3729 = vunpack.c.h.b16 %v1178
        %v3730 = vunpack.c.l.b16 %v1179
        %v3731 = vunpack.c.h.b16 %v1179
        %v3732 = vunpack.c.l.b16 %v1180
        %v3733 = vunpack.c.h.b16 %v1180
        %v3734 = vunpack.c.l.b16 %v1181
        %v3735 = vunpack.c.l.b16 %v1182
        %v3736 = vunpack.c.h.b16 %v1182
        %v3737 = vunpack.c.l.b16 %v1183
        %v3738 = vunpack.c.h.b16 %v1183
        %v3739 = vunpack.c.l.b16 %v1184
        %v3740 = vunpack.c.h.b16 %v1184
        %v3741 = vunpack.c.l.b16 %v1185
        %v3742 = vunpack.c.l.b16 %v1186
        %v3743 = vunpack.c.h.b16 %v1186
        %v3744 = vunpack.c.l.b16 %v1187
        %v3745 = vunpack.c.h.b16 %v1187
        %v3746 = vunpack.c.l.b16 %v1188
        %v3747 = vunpack.c.h.b16 %v1188
        %v3748 = vunpack.c.l.b16 %v1189
        %v3749 = vunpack.c.l.b16 %v1190
        %v3750 = vunpack.c.h.b16 %v1190
        %v3751 = vunpack.c.l.b16 %v1191
        %v3752 = vunpack.c.h.b16 %v1191
        %v3753 = vunpack.c.l.b16 %v1192
        %v3754 = vunpack.c.h.b16 %v1192
        %v3755 = vunpack.c.l.b16 %v1193
        %v3756 = vunpack.c.l.b16 %v1194
        %v3757 = vunpack.c.h.b16 %v1194
        %v3758 = vunpack.c.l.b16 %v1195
        %v3759 = vunpack.c.h.b16 %v1195
        %v3760 = vunpack.c.l.b16 %v1196
        %v3761 = vunpack.c.h.b16 %v1196
        %v3762 = vunpack.c.l.b16 %v1197
        %v3763 = vunpack.c.l.b16 %v1198
        %v3764 = vunpack.c.h.b16 %v1198
        %v3765 = vunpack.c.l.b16 %v1199
        %v3766 = vunpack.c.h.b16 %v1199
        %v3767 = vunpack.c.l.b16 %v1200
        %v3768 = vunpack.c.h.b16 %v1200
        %v3769 = vunpack.c.l.b16 %v1201
        %v3770 = vunpack.c.l.b16 %v1202
        %v3771 = vunpack.c.h.b16 %v1202
        %v3772 = vunpack.c.l.b16 %v1203
        %v3773 = vunpack.c.h.b16 %v1203
        %v3774 = vunpack.c.l.b16 %v1204
        %v3775 = vunpack.c.h.b16 %v1204
        %v3776 = vunpack.c.l.b16 %v1205
        %v3777 = vunpack.c.l.b16 %v1206
        %v3778 = vunpack.c.h.b16 %v1206
        %v3779 = vunpack.c.l.b16 %v1207
        %v3780 = vunpack.c.h.b16 %v1207
        %v3781 = vunpack.c.l.b16 %v1208
        %v3782 = vunpack.c.h.b16 %v1208
        %v3783 = vunpack.c.l.b16 %v1209
        %v3784 = vunpack.c.l.b16 %v1210
        %v3785 = vunpack.c.h.b16 %v1210
        %v3786 = vunpack.c.l.b16 %v1211
        %v3787 = vunpack.c.h.b16 %v1211
        %v3788 = vunpack.c.l.b16 %v1212
        %v3789 = vunpack.c.h.b16 %v1212
        %v3790 = vunpack.c.l.b16 %v1213
        %v3791 = vunpack.c.l.b16 %v1214
        %v3792 = vunpack.c.h.b16 %v1214
        %v3793 = vunpack.c.l.b16 %v1215
        %v3794 = vunpack.c.h.b16 %v1215
        %v3795 = vunpack.c.l.b16 %v1216
        %v3796 = vunpack.c.h.b16 %v1216
        %v3797 = vunpack.c.l.b16 %v1217
        %v3798 = vunpack.c.l.b16 %v1218
        %v3799 = vunpack.c.h.b16 %v1218
        %v3800 = vunpack.c.l.b16 %v1219
        %v3801 = vunpack.c.h.b16 %v1219
        %v3802 = vunpack.c.l.b16 %v1220
        %v3803 = vunpack.c.h.b16 %v1220
        %v3804 = vunpack.c.l.b16 %v1221
        %v3805 = vunpack.c.l.b16 %v1222
        %v3806 = vunpack.c.h.b16 %v1222
        %v3807 = vunpack.c.l.b16 %v1223
        %v3808 = vunpack.c.h.b16 %v1223
        %v3809 = vunpack.c.l.b16 %v1224
        %v3810 = vunpack.c.h.b16 %v1224
        %v3811 = vunpack.c.l.b16 %v1225
        %v3812 = vunpack.c.l.b16 %v1226
        %v3813 = vunpack.c.h.b16 %v1226
        %v3814 = vunpack.c.l.b16 %v1227
        %v3815 = vunpack.c.h.b16 %v1227
        %v3816 = vunpack.c.l.b16 %v1228
        %v3817 = vunpack.c.h.b16 %v1228
        %v3818 = vunpack.c.l.b16 %v1229
        %v3819 = vunpack.c.l.b16 %v1230
        %v3820 = vunpack.c.h.b16 %v1230
        %v3821 = vunpack.c.l.b16 %v1231
        %v3822 = vunpack.c.h.b16 %v1231
        %v3823 = vunpack.c.l.b16 %v1232
        %v3824 = vunpack.c.h.b16 %v1232
        %v3825 = vunpack.c.l.b16 %v1233
        %v3826 = vunpack.c.l.b16 %v1234
        %v3827 = vunpack.c.h.b16 %v1234
        %v3828 = vunpack.c.l.b16 %v1235
        %v3829 = vunpack.c.h.b16 %v1235
        %v3830 = vunpack.c.l.b16 %v1236
        %v3831 = vunpack.c.h.b16 %v1236
        %v3832 = vunpack.c.l.b16 %v1237
        %v3833 = vunpack.c.l.b16 %v1238
        %v3834 = vunpack.c.h.b16 %v1238
        %v3835 = vunpack.c.l.b16 %v1239
        %v3836 = vunpack.c.h.b16 %v1239
        %v3837 = vunpack.c.l.b16 %v1240
        %v3838 = vunpack.c.h.b16 %v1240
        %v3839 = vunpack.c.l.b16 %v1241
        %v3840 = vunpack.c.l.b16 %v1242
        %v3841 = vunpack.c.h.b16 %v1242
        %v3842 = vunpack.c.l.b16 %v1243
        %v3843 = vunpack.c.h.b16 %v1243
        %v3844 = vunpack.c.l.b16 %v1244
        %v3845 = vunpack.c.h.b16 %v1244
        %v3846 = vunpack.c.l.b16 %v1245
        %v3847 = vunpack.c.l.b16 %v1246
        %v3848 = vunpack.c.h.b16 %v1246
        %v3849 = vunpack.c.l.b16 %v1247
        %v3850 = vunpack.c.h.b16 %v1247
        %v3851 = vunpack.c.l.b16 %v1248
        %v3852 = vunpack.c.h.b16 %v1248
        %v3853 = vunpack.c.l.b16 %v1249
        %v3854 = vunpack.c.l.b16 %v1250
        %v3855 = vunpack.c.h.b16 %v1250
        %v3856 = vunpack.c.l.b16 %v1251
        %v3857 = vunpack.c.h.b16 %v1251
        %v3858 = vunpack.c.l.b16 %v1252
        %v3859 = vunpack.c.h.b16 %v1252
        %v3860 = vunpack.c.l.b16 %v1253
        %v3861 = vunpack.c.l.b16 %v1254
        %v3862 = vunpack.c.h.b16 %v1254
        %v3863 = vunpack.c.l.b16 %v1255
        %v3864 = vunpack.c.h.b16 %v1255
        %v3865 = vunpack.c.l.b16 %v1256
        %v3866 = vunpack.c.h.b16 %v1256
        %v3867 = vunpack.c.l.b16 %v1257
        %v3868 = vunpack.c.l.b16 %v1258
        %v3869 = vunpack.c.h.b16 %v1258
        %v3870 = vunpack.c.l.b16 %v1259
        %v3871 = vunpack.c.h.b16 %v1259
        %v3872 = vunpack.c.l.b16 %v1260
        %v3873 = vunpack.c.h.b16 %v1260
        %v3874 = vunpack.c.l.b16 %v1261
        %v3875 = vpack.c.b16 %v2314, %v2307
        %v3876 = vpack.c.b16 %v2315, %v2308
        %v3877 = vpack.c.b16 %v2316, %v2309
        %v3878 = vpack.c.b16 %v2317, %v2310
        %v3879 = vpack.c.b16 %v2318, %v2311
        %v3880 = vpack.c.b16 %v2319, %v2312
        %v3881 = vpack.c.b16 %v2320, %v2313
        %v3882 = vpack.c.b16 %v2328, %v2321
        %v3883 = vpack.c.b16 %v2329, %v2322
        %v3884 = vpack.c.b16 %v2330, %v2323
        %v3885 = vpack.c.b16 %v2331, %v2324
        %v3886 = vpack.c.b16 %v2332, %v2325
        %v3887 = vpack.c.b16 %v2333, %v2326
        %v3888 = vpack.c.b16 %v2334, %v2327
        %v3889 = vpack.c.b16 %v2342, %v2335
        %v3890 = vpack.c.b16 %v2343, %v2336
        %v3891 = vpack.c.b16 %v2344, %v2337
        %v3892 = vpack.c.b16 %v2345, %v2338
        %v3893 = vpack.c.b16 %v2346, %v2339
        %v3894 = vpack.c.b16 %v2347, %v2340
        %v3895 = vpack.c.b16 %v2348, %v2341
        %v3896 = vpack.c.b16 %v2356, %v2349
        %v3897 = vpack.c.b16 %v2357, %v2350
        %v3898 = vpack.c.b16 %v2358, %v2351
        %v3899 = vpack.c.b16 %v2359, %v2352
        %v3900 = vpack.c.b16 %v2360, %v2353
        %v3901 = vpack.c.b16 %v2361, %v2354
        %v3902 = vpack.c.b16 %v2362, %v2355
        %v3903 = vpack.c.b16 %v2370, %v2363
        %v3904 = vpack.c.b16 %v2371, %v2364
        %v3905 = vpack.c.b16 %v2372, %v2365
        %v3906 = vpack.c.b16 %v2373, %v2366
        %v3907 = vpack.c.b16 %v2374, %v2367
        %v3908 = vpack.c.b16 %v2375, %v2368
        %v3909 = vpack.c.b16 %v2376, %v2369
        %v3910 = vpack.c.b16 %v2384, %v2377
        %v3911 = vpack.c.b16 %v2385, %v2378
        %v3912 = vpack.c.b16 %v2386, %v2379
        %v3913 = vpack.c.b16 %v2387, %v2380
        %v3914 = vpack.c.b16 %v2388, %v2381
        %v3915 = vpack.c.b16 %v2389, %v2382
        %v3916 = vpack.c.b16 %v2390, %v2383
        %v3917 = vpack.c.b16 %v2398, %v2391
        %v3918 = vpack.c.b16 %v2399, %v2392
        %v3919 = vpack.c.b16 %v2400, %v2393
        %v3920 = vpack.c.b16 %v2401, %v2394
        %v3921 = vpack.c.b16 %v2402, %v2395
        %v3922 = vpack.c.b16 %v2403, %v2396
        %v3923 = vpack.c.b16 %v2404, %v2397
        %v3924 = vpack.c.b16 %v2412, %v2405
        %v3925 = vpack.c.b16 %v2413, %v2406
        %v3926 = vpack.c.b16 %v2414, %v2407
        %v3927 = vpack.c.b16 %v2415, %v2408
        %v3928 = vpack.c.b16 %v2416, %v2409
        %v3929 = vpack.c.b16 %v2417, %v2410
        %v3930 = vpack.c.b16 %v2418, %v2411
        %v3931 = vpack.c.b16 %v2426, %v2419
        %v3932 = vpack.c.b16 %v2427, %v2420
        %v3933 = vpack.c.b16 %v2428, %v2421
        %v3934 = vpack.c.b16 %v2429, %v2422
        %v3935 = vpack.c.b16 %v2430, %v2423
        %v3936 = vpack.c.b16 %v2431, %v2424
        %v3937 = vpack.c.b16 %v2432, %v2425
        %v3938 = vpack.c.b16 %v2440, %v2433
        %v3939 = vpack.c.b16 %v2441, %v2434
        %v3940 = vpack.c.b16 %v2442, %v2435
        %v3941 = vpack.c.b16 %v2443, %v2436
        %v3942 = vpack.c.b16 %v2444, %v2437
        %v3943 = vpack.c.b16 %v2445, %v2438
        %v3944 = vpack.c.b16 %v2446, %v2439
        %v3945 = vpack.c.b16 %v2454, %v2447
        %v3946 = vpack.c.b16 %v2455, %v2448
        %v3947 = vpack.c.b16 %v2456, %v2449
        %v3948 = vpack.c.b16 %v2457, %v2450
        %v3949 = vpack.c.b16 %v2458, %v2451
        %v3950 = vpack.c.b16 %v2459, %v2452
        %v3951 = vpack.c.b16 %v2460, %v2453
        %v3952 = vpack.c.b16 %v2468, %v2461
        %v3953 = vpack.c.b16 %v2469, %v2462
        %v3954 = vpack.c.b16 %v2470, %v2463
        %v3955 = vpack.c.b16 %v2471, %v2464
        %v3956 = vpack.c.b16 %v2472, %v2465
        %v3957 = vpack.c.b16 %v2473, %v2466
        %v3958 = vpack.c.b16 %v2474, %v2467
        %v3959 = vpack.c.b16 %v2482, %v2475
        %v3960 = vpack.c.b16 %v2483, %v2476
        %v3961 = vpack.c.b16 %v2484, %v2477
        %v3962 = vpack.c.b16 %v2485, %v2478
        %v3963 = vpack.c.b16 %v2486, %v2479
        %v3964 = vpack.c.b16 %v2487, %v2480
        %v3965 = vpack.c.b16 %v2488, %v2481
        %v3966 = vpack.c.b16 %v2496, %v2489
        %v3967 = vpack.c.b16 %v2497, %v2490
        %v3968 = vpack.c.b16 %v2498, %v2491
        %v3969 = vpack.c.b16 %v2499, %v2492
        %v3970 = vpack.c.b16 %v2500, %v2493
        %v3971 = vpack.c.b16 %v2501, %v2494
        %v3972 = vpack.c.b16 %v2502, %v2495
        %v3973 = vpack.c.b16 %v2510, %v2503
        %v3974 = vpack.c.b16 %v2511, %v2504
        %v3975 = vpack.c.b16 %v2512, %v2505
        %v3976 = vpack.c.b16 %v2513, %v2506
        %v3977 = vpack.c.b16 %v2514, %v2507
        %v3978 = vpack.c.b16 %v2515, %v2508
        %v3979 = vpack.c.b16 %v2516, %v2509
        %v3980 = vpack.c.b16 %v2524, %v2517
        %v3981 = vpack.c.b16 %v2525, %v2518
        %v3982 = vpack.c.b16 %v2526, %v2519
        %v3983 = vpack.c.b16 %v2527, %v2520
        %v3984 = vpack.c.b16 %v2528, %v2521
        %v3985 = vpack.c.b16 %v2529, %v2522
        %v3986 = vpack.c.b16 %v2530, %v2523
        %v3987 = vpack.c.b16 %v2538, %v2531
        %v3988 = vpack.c.b16 %v2539, %v2532
        %v3989 = vpack.c.b16 %v2540, %v2533
        %v3990 = vpack.c.b16 %v2541, %v2534
        %v3991 = vpack.c.b16 %v2542, %v2535
        %v3992 = vpack.c.b16 %v2543, %v2536
        %v3993 = vpack.c.b16 %v2544, %v2537
        %v3994 = vpack.c.b16 %v2552, %v2545
        %v3995 = vpack.c.b16 %v2553, %v2546
        %v3996 = vpack.c.b16 %v2554, %v2547
        %v3997 = vpack.c.b16 %v2555, %v2548
        %v3998 = vpack.c.b16 %v2556, %v2549
        %v3999 = vpack.c.b16 %v2557, %v2550
        %v4000 = vpack.c.b16 %v2558, %v2551
        %v4001 = vpack.c.b16 %v2566, %v2559
        %v4002 = vpack.c.b16 %v2567, %v2560
        %v4003 = vpack.c.b16 %v2568, %v2561
        %v4004 = vpack.c.b16 %v2569, %v2562
        %v4005 = vpack.c.b16 %v2570, %v2563
        %v4006 = vpack.c.b16 %v2571, %v2564
        %v4007 = vpack.c.b16 %v2572, %v2565
        %v4008 = vpack.c.b16 %v2580, %v2573
        %v4009 = vpack.c.b16 %v2581, %v2574
        %v4010 = vpack.c.b16 %v2582, %v2575
        %v4011 = vpack.c.b16 %v2583, %v2576
        %v4012 = vpack.c.b16 %v2584, %v2577
        %v4013 = vpack.c.b16 %v2585, %v2578
        %v4014 = vpack.c.b16 %v2586, %v2579
        %v4015 = vpack.c.b16 %v2594, %v2587
        %v4016 = vpack.c.b16 %v2595, %v2588
        %v4017 = vpack.c.b16 %v2596, %v2589
        %v4018 = vpack.c.b16 %v2597, %v2590
        %v4019 = vpack.c.b16 %v2598, %v2591
        %v4020 = vpack.c.b16 %v2599, %v2592
        %v4021 = vpack.c.b16 %v2600, %v2593
        %v4022 = vpack.c.b16 %v2608, %v2601
        %v4023 = vpack.c.b16 %v2609, %v2602
        %v4024 = vpack.c.b16 %v2610, %v2603
        %v4025 = vpack.c.b16 %v2611, %v2604
        %v4026 = vpack.c.b16 %v2612, %v2605
        %v4027 = vpack.c.b16 %v2613, %v2606
        %v4028 = vpack.c.b16 %v2614, %v2607
        %v4029 = vpack.c.b16 %v2622, %v2615
        %v4030 = vpack.c.b16 %v2623, %v2616
        %v4031 = vpack.c.b16 %v2624, %v2617
        %v4032 = vpack.c.b16 %v2625, %v2618
        %v4033 = vpack.c.b16 %v2626, %v2619
        %v4034 = vpack.c.b16 %v2627, %v2620
        %v4035 = vpack.c.b16 %v2628, %v2621
        %v4036 = vpack.c.b16 %v2636, %v2629
        %v4037 = vpack.c.b16 %v2637, %v2630
        %v4038 = vpack.c.b16 %v2638, %v2631
        %v4039 = vpack.c.b16 %v2639, %v2632
        %v4040 = vpack.c.b16 %v2640, %v2633
        %v4041 = vpack.c.b16 %v2641, %v2634
        %v4042 = vpack.c.b16 %v2642, %v2635
        %v4043 = vpack.c.b16 %v2650, %v2643
        %v4044 = vpack.c.b16 %v2651, %v2644
        %v4045 = vpack.c.b16 %v2652, %v2645
        %v4046 = vpack.c.b16 %v2653, %v2646
        %v4047 = vpack.c.b16 %v2654, %v2647
        %v4048 = vpack.c.b16 %v2655, %v2648
        %v4049 = vpack.c.b16 %v2656, %v2649
        %v4050 = vpack.c.b16 %v2664, %v2657
        %v4051 = vpack.c.b16 %v2665, %v2658
        %v4052 = vpack.c.b16 %v2666, %v2659
        %v4053 = vpack.c.b16 %v2667, %v2660
        %v4054 = vpack.c.b16 %v2668, %v2661
        %v4055 = vpack.c.b16 %v2669, %v2662
        %v4056 = vpack.c.b16 %v2670, %v2663
        %v4057 = vpack.c.b16 %v2678, %v2671
        %v4058 = vpack.c.b16 %v2679, %v2672
        %v4059 = vpack.c.b16 %v2680, %v2673
        %v4060 = vpack.c.b16 %v2681, %v2674
        %v4061 = vpack.c.b16 %v2682, %v2675
        %v4062 = vpack.c.b16 %v2683, %v2676
        %v4063 = vpack.c.b16 %v2684, %v2677
        %v4064 = vpack.c.b16 %v2692, %v2685
        %v4065 = vpack.c.b16 %v2693, %v2686
        %v4066 = vpack.c.b16 %v2694, %v2687
        %v4067 = vpack.c.b16 %v2695, %v2688
        %v4068 = vpack.c.b16 %v2696, %v2689
        %v4069 = vpack.c.b16 %v2697, %v2690
        %v4070 = vpack.c.b16 %v2698, %v2691
        %v4071 = vpack.c.b16 %v2706, %v2699
        %v4072 = vpack.c.b16 %v2707, %v2700
        %v4073 = vpack.c.b16 %v2708, %v2701
        %v4074 = vpack.c.b16 %v2709, %v2702
        %v4075 = vpack.c.b16 %v2710, %v2703
        %v4076 = vpack.c.b16 %v2711, %v2704
        %v4077 = vpack.c.b16 %v2712, %v2705
        %v4078 = vpack.c.b16 %v2720, %v2713
        %v4079 = vpack.c.b16 %v2721, %v2714
        %v4080 = vpack.c.b16 %v2722, %v2715
        %v4081 = vpack.c.b16 %v2723, %v2716
        %v4082 = vpack.c.b16 %v2724, %v2717
        %v4083 = vpack.c.b16 %v2725, %v2718
        %v4084 = vpack.c.b16 %v2726, %v2719
        %v4085 = vpack.c.b16 %v2734, %v2727
        %v4086 = vpack.c.b16 %v2735, %v2728
        %v4087 = vpack.c.b16 %v2736, %v2729
        %v4088 = vpack.c.b16 %v2737, %v2730
        %v4089 = vpack.c.b16 %v2738, %v2731
        %v4090 = vpack.c.b16 %v2739, %v2732
        %v4091 = vpack.c.b16 %v2740, %v2733
        %v4092 = vpack.c.b16 %v2748, %v2741
        %v4093 = vpack.c.b16 %v2749, %v2742
        %v4094 = vpack.c.b16 %v2750, %v2743
        %v4095 = vpack.c.b16 %v2751, %v2744
        %v4096 = vpack.c.b16 %v2752, %v2745
        %v4097 = vpack.c.b16 %v2753, %v2746
        %v4098 = vpack.c.b16 %v2754, %v2747
        %v4099 = vpack.c.b16 %v2762, %v2755
        %v4100 = vpack.c.b16 %v2763, %v2756
        %v4101 = vpack.c.b16 %v2764, %v2757
        %v4102 = vpack.c.b16 %v2765, %v2758
        %v4103 = vpack.c.b16 %v2766, %v2759
        %v4104 = vpack.c.b16 %v2767, %v2760
        %v4105 = vpack.c.b16 %v2768, %v2761
        %v4106 = vpack.c.b16 %v2776, %v2769
        %v4107 = vpack.c.b16 %v2777, %v2770
        %v4108 = vpack.c.b16 %v2778, %v2771
        %v4109 = vpack.c.b16 %v2779, %v2772
        %v4110 = vpack.c.b16 %v2780, %v2773
        %v4111 = vpack.c.b16 %v2781, %v2774
        %v4112 = vpack.c.b16 %v2782, %v2775
        %v4113 = vpack.c.b16 %v2790, %v2783
        %v4114 = vpack.c.b16 %v2791, %v2784
        %v4115 = vpack.c.b16 %v2792, %v2785
        %v4116 = vpack.c.b16 %v2793, %v2786
        %v4117 = vpack.c.b16 %v2794, %v2787
        %v4118 = vpack.c.b16 %v2795, %v2788
        %v4119 = vpack.c.b16 %v2796, %v2789
        %v4120 = vpack.c.b16 %v2804, %v2797
        %v4121 = vpack.c.b16 %v2805, %v2798
        %v4122 = vpack.c.b16 %v2806, %v2799
        %v4123 = vpack.c.b16 %v2807, %v2800
        %v4124 = vpack.c.b16 %v2808, %v2801
        %v4125 = vpack.c.b16 %v2809, %v2802
        %v4126 = vpack.c.b16 %v2810, %v2803
        %v4127 = vpack.c.b16 %v2818, %v2811
        %v4128 = vpack.c.b16 %v2819, %v2812
        %v4129 = vpack.c.b16 %v2820, %v2813
        %v4130 = vpack.c.b16 %v2821, %v2814
        %v4131 = vpack.c.b16 %v2822, %v2815
        %v4132 = vpack.c.b16 %v2823, %v2816
        %v4133 = vpack.c.b16 %v2824, %v2817
        %v4134 = vpack.c.b16 %v2832, %v2825
        %v4135 = vpack.c.b16 %v2833, %v2826
        %v4136 = vpack.c.b16 %v2834, %v2827
        %v4137 = vpack.c.b16 %v2835, %v2828
        %v4138 = vpack.c.b16 %v2836, %v2829
        %v4139 = vpack.c.b16 %v2837, %v2830
        %v4140 = vpack.c.b16 %v2838, %v2831
        %v4141 = vpack.c.b16 %v2846, %v2839
        %v4142 = vpack.c.b16 %v2847, %v2840
        %v4143 = vpack.c.b16 %v2848, %v2841
        %v4144 = vpack.c.b16 %v2849, %v2842
        %v4145 = vpack.c.b16 %v2850, %v2843
        %v4146 = vpack.c.b16 %v2851, %v2844
        %v4147 = vpack.c.b16 %v2852, %v2845
        %v4148 = vpack.c.b16 %v2860, %v2853
        %v4149 = vpack.c.b16 %v2861, %v2854
        %v4150 = vpack.c.b16 %v2862, %v2855
        %v4151 = vpack.c.b16 %v2863, %v2856
        %v4152 = vpack.c.b16 %v2864, %v2857
        %v4153 = vpack.c.b16 %v2865, %v2858
        %v4154 = vpack.c.b16 %v2866, %v2859
        %v4155 = vpack.c.b16 %v2874, %v2867
        %v4156 = vpack.c.b16 %v2875, %v2868
        %v4157 = vpack.c.b16 %v2876, %v2869
        %v4158 = vpack.c.b16 %v2877, %v2870
        %v4159 = vpack.c.b16 %v2878, %v2871
        %v4160 = vpack.c.b16 %v2879, %v2872
        %v4161 = vpack.c.b16 %v2880, %v2873
        %v4162 = vpack.c.b16 %v2888, %v2881
        %v4163 = vpack.c.b16 %v2889, %v2882
        %v4164 = vpack.c.b16 %v2890, %v2883
        %v4165 = vpack.c.b16 %v2891, %v2884
        %v4166 = vpack.c.b16 %v2892, %v2885
        %v4167 = vpack.c.b16 %v2893, %v2886
        %v4168 = vpack.c.b16 %v2894, %v2887
        %v4169 = vpack.c.b16 %v2902, %v2895
        %v4170 = vpack.c.b16 %v2903, %v2896
        %v4171 = vpack.c.b16 %v2904, %v2897
        %v4172 = vpack.c.b16 %v2905, %v2898
        %v4173 = vpack.c.b16 %v2906, %v2899
        %v4174 = vpack.c.b16 %v2907, %v2900
        %v4175 = vpack.c.b16 %v2908, %v2901
        %v4176 = vpack.c.b16 %v2916, %v2909
        %v4177 = vpack.c.b16 %v2917, %v2910
        %v4178 = vpack.c.b16 %v2918, %v2911
        %v4179 = vpack.c.b16 %v2919, %v2912
        %v4180 = vpack.c.b16 %v2920, %v2913
        %v4181 = vpack.c.b16 %v2921, %v2914
        %v4182 = vpack.c.b16 %v2922, %v2915
        %v4183 = vpack.c.b16 %v2930, %v2923
        %v4184 = vpack.c.b16 %v2931, %v2924
        %v4185 = vpack.c.b16 %v2932, %v2925
        %v4186 = vpack.c.b16 %v2933, %v2926
        %v4187 = vpack.c.b16 %v2934, %v2927
        %v4188 = vpack.c.b16 %v2935, %v2928
        %v4189 = vpack.c.b16 %v2936, %v2929
        %v4190 = vpack.c.b16 %v2944, %v2937
        %v4191 = vpack.c.b16 %v2945, %v2938
        %v4192 = vpack.c.b16 %v2946, %v2939
        %v4193 = vpack.c.b16 %v2947, %v2940
        %v4194 = vpack.c.b16 %v2948, %v2941
        %v4195 = vpack.c.b16 %v2949, %v2942
        %v4196 = vpack.c.b16 %v2950, %v2943
        %v4197 = vpack.c.b16 %v2958, %v2951
        %v4198 = vpack.c.b16 %v2959, %v2952
        %v4199 = vpack.c.b16 %v2960, %v2953
        %v4200 = vpack.c.b16 %v2961, %v2954
        %v4201 = vpack.c.b16 %v2962, %v2955
        %v4202 = vpack.c.b16 %v2963, %v2956
        %v4203 = vpack.c.b16 %v2964, %v2957
        %v4204 = vpack.c.b16 %v2972, %v2965
        %v4205 = vpack.c.b16 %v2973, %v2966
        %v4206 = vpack.c.b16 %v2974, %v2967
        %v4207 = vpack.c.b16 %v2975, %v2968
        %v4208 = vpack.c.b16 %v2976, %v2969
        %v4209 = vpack.c.b16 %v2977, %v2970
        %v4210 = vpack.c.b16 %v2978, %v2971
        %v4211 = vpack.c.b16 %v2986, %v2979
        %v4212 = vpack.c.b16 %v2987, %v2980
        %v4213 = vpack.c.b16 %v2988, %v2981
        %v4214 = vpack.c.b16 %v2989, %v2982
        %v4215 = vpack.c.b16 %v2990, %v2983
        %v4216 = vpack.c.b16 %v2991, %v2984
        %v4217 = vpack.c.b16 %v2992, %v2985
        %v4218 = vpack.c.b16 %v3000, %v2993
        %v4219 = vpack.c.b16 %v3001, %v2994
        %v4220 = vpack.c.b16 %v3002, %v2995
        %v4221 = vpack.c.b16 %v3003, %v2996
        %v4222 = vpack.c.b16 %v3004, %v2997
        %v4223 = vpack.c.b16 %v3005, %v2998
        %v4224 = vpack.c.b16 %v3006, %v2999
        %v4225 = vpack.c.b16 %v3014, %v3007
        %v4226 = vpack.c.b16 %v3015, %v3008
        %v4227 = vpack.c.b16 %v3016, %v3009
        %v4228 = vpack.c.b16 %v3017, %v3010
        %v4229 = vpack.c.b16 %v3018, %v3011
        %v4230 = vpack.c.b16 %v3019, %v3012
        %v4231 = vpack.c.b16 %v3020, %v3013
        %v4232 = vpack.c.b16 %v3028, %v3021
        %v4233 = vpack.c.b16 %v3029, %v3022
        %v4234 = vpack.c.b16 %v3030, %v3023
        %v4235 = vpack.c.b16 %v3031, %v3024
        %v4236 = vpack.c.b16 %v3032, %v3025
        %v4237 = vpack.c.b16 %v3033, %v3026
        %v4238 = vpack.c.b16 %v3034, %v3027
        %v4239 = vpack.c.b16 %v3042, %v3035
        %v4240 = vpack.c.b16 %v3043, %v3036
        %v4241 = vpack.c.b16 %v3044, %v3037
        %v4242 = vpack.c.b16 %v3045, %v3038
        %v4243 = vpack.c.b16 %v3046, %v3039
        %v4244 = vpack.c.b16 %v3047, %v3040
        %v4245 = vpack.c.b16 %v3048, %v3041
        %v4246 = vpack.c.b16 %v3056, %v3049
        %v4247 = vpack.c.b16 %v3057, %v3050
        %v4248 = vpack.c.b16 %v3058, %v3051
        %v4249 = vpack.c.b16 %v3059, %v3052
        %v4250 = vpack.c.b16 %v3060, %v3053
        %v4251 = vpack.c.b16 %v3061, %v3054
        %v4252 = vpack.c.b16 %v3062, %v3055
        %v4253 = vpack.c.b16 %v3070, %v3063
        %v4254 = vpack.c.b16 %v3071, %v3064
        %v4255 = vpack.c.b16 %v3072, %v3065
        %v4256 = vpack.c.b16 %v3073, %v3066
        %v4257 = vpack.c.b16 %v3074, %v3067
        %v4258 = vpack.c.b16 %v3075, %v3068
        %v4259 = vpack.c.b16 %v3076, %v3069
        %v4260 = vpack.c.b16 %v3084, %v3077
        %v4261 = vpack.c.b16 %v3085, %v3078
        %v4262 = vpack.c.b16 %v3086, %v3079
        %v4263 = vpack.c.b16 %v3087, %v3080
        %v4264 = vpack.c.b16 %v3088, %v3081
        %v4265 = vpack.c.b16 %v3089, %v3082
        %v4266 = vpack.c.b16 %v3090, %v3083
        %v4267 = vpack.c.b16 %v3098, %v3091
        %v4268 = vpack.c.b16 %v3099, %v3092
        %v4269 = vpack.c.b16 %v3100, %v3093
        %v4270 = vpack.c.b16 %v3101, %v3094
        %v4271 = vpack.c.b16 %v3102, %v3095
        %v4272 = vpack.c.b16 %v3103, %v3096
        %v4273 = vpack.c.b16 %v3104, %v3097
        %v4274 = vpack.c.b16 %v3112, %v3105
        %v4275 = vpack.c.b16 %v3113, %v3106
        %v4276 = vpack.c.b16 %v3114, %v3107
        %v4277 = vpack.c.b16 %v3115, %v3108
        %v4278 = vpack.c.b16 %v3116, %v3109
        %v4279 = vpack.c.b16 %v3117, %v3110
        %v4280 = vpack.c.b16 %v3118, %v3111
        %v4281 = vpack.c.b16 %v3126, %v3119
        %v4282 = vpack.c.b16 %v3127, %v3120
        %v4283 = vpack.c.b16 %v3128, %v3121
        %v4284 = vpack.c.b16 %v3129, %v3122
        %v4285 = vpack.c.b16 %v3130, %v3123
        %v4286 = vpack.c.b16 %v3131, %v3124
        %v4287 = vpack.c.b16 %v3132, %v3125
        %v4288 = vpack.c.b16 %v3140, %v3133
        %v4289 = vpack.c.b16 %v3141, %v3134
        %v4290 = vpack.c.b16 %v3142, %v3135
        %v4291 = vpack.c.b16 %v3143, %v3136
        %v4292 = vpack.c.b16 %v3144, %v3137
        %v4293 = vpack.c.b16 %v3145, %v3138
        %v4294 = vpack.c.b16 %v3146, %v3139
        %v4295 = vpack.c.b16 %v3154, %v3147
        %v4296 = vpack.c.b16 %v3155, %v3148
        %v4297 = vpack.c.b16 %v3156, %v3149
        %v4298 = vpack.c.b16 %v3157, %v3150
        %v4299 = vpack.c.b16 %v3158, %v3151
        %v4300 = vpack.c.b16 %v3159, %v3152
        %v4301 = vpack.c.b16 %v3160, %v3153
        %v4302 = vpack.c.b16 %v3168, %v3161
        %v4303 = vpack.c.b16 %v3169, %v3162
        %v4304 = vpack.c.b16 %v3170, %v3163
        %v4305 = vpack.c.b16 %v3171, %v3164
        %v4306 = vpack.c.b16 %v3172, %v3165
        %v4307 = vpack.c.b16 %v3173, %v3166
        %v4308 = vpack.c.b16 %v3174, %v3167
        %v4309 = vpack.c.b16 %v3182, %v3175
        %v4310 = vpack.c.b16 %v3183, %v3176
        %v4311 = vpack.c.b16 %v3184, %v3177
        %v4312 = vpack.c.b16 %v3185, %v3178
        %v4313 = vpack.c.b16 %v3186, %v3179
        %v4314 = vpack.c.b16 %v3187, %v3180
        %v4315 = vpack.c.b16 %v3188, %v3181
        %v4316 = vpack.c.b16 %v3196, %v3189
        %v4317 = vpack.c.b16 %v3197, %v3190
        %v4318 = vpack.c.b16 %v3198, %v3191
        %v4319 = vpack.c.b16 %v3199, %v3192
        %v4320 = vpack.c.b16 %v3200, %v3193
        %v4321 = vpack.c.b16 %v3201, %v3194
        %v4322 = vpack.c.b16 %v3202, %v3195
        %v4323 = vpack.c.b16 %v3210, %v3203
        %v4324 = vpack.c.b16 %v3211, %v3204
        %v4325 = vpack.c.b16 %v3212, %v3205
        %v4326 = vpack.c.b16 %v3213, %v3206
        %v4327 = vpack.c.b16 %v3214, %v3207
        %v4328 = vpack.c.b16 %v3215, %v3208
        %v4329 = vpack.c.b16 %v3216, %v3209
        %v4330 = vpack.c.b16 %v3224, %v3217
        %v4331 = vpack.c.b16 %v3225, %v3218
        %v4332 = vpack.c.b16 %v3226, %v3219
        %v4333 = vpack.c.b16 %v3227, %v3220
        %v4334 = vpack.c.b16 %v3228, %v3221
        %v4335 = vpack.c.b16 %v3229, %v3222
        %v4336 = vpack.c.b16 %v3230, %v3223
        %v4337 = vpack.c.b16 %v3238, %v3231
        %v4338 = vpack.c.b16 %v3239, %v3232
        %v4339 = vpack.c.b16 %v3240, %v3233
        %v4340 = vpack.c.b16 %v3241, %v3234
        %v4341 = vpack.c.b16 %v3242, %v3235
        %v4342 = vpack.c.b16 %v3243, %v3236
        %v4343 = vpack.c.b16 %v3244, %v3237
        %v4344 = vpack.c.b16 %v3252, %v3245
        %v4345 = vpack.c.b16 %v3253, %v3246
        %v4346 = vpack.c.b16 %v3254, %v3247
        %v4347 = vpack.c.b16 %v3255, %v3248
        %v4348 = vpack.c.b16 %v3256, %v3249
        %v4349 = vpack.c.b16 %v3257, %v3250
        %v4350 = vpack.c.b16 %v3258, %v3251
        %v4351 = vpack.c.b16 %v3266, %v3259
        %v4352 = vpack.c.b16 %v3267, %v3260
        %v4353 = vpack.c.b16 %v3268, %v3261
        %v4354 = vpack.c.b16 %v3269, %v3262
        %v4355 = vpack.c.b16 %v3270, %v3263
        %v4356 = vpack.c.b16 %v3271, %v3264
        %v4357 = vpack.c.b16 %v3272, %v3265
        %v4358 = vpack.c.b16 %v3280, %v3273
        %v4359 = vpack.c.b16 %v3281, %v3274
        %v4360 = vpack.c.b16 %v3282, %v3275
        %v4361 = vpack.c.b16 %v3283, %v3276
        %v4362 = vpack.c.b16 %v3284, %v3277
        %v4363 = vpack.c.b16 %v3285, %v3278
        %v4364 = vpack.c.b16 %v3286, %v3279
        %v4365 = vpack.c.b16 %v3294, %v3287
        %v4366 = vpack.c.b16 %v3295, %v3288
        %v4367 = vpack.c.b16 %v3296, %v3289
        %v4368 = vpack.c.b16 %v3297, %v3290
        %v4369 = vpack.c.b16 %v3298, %v3291
        %v4370 = vpack.c.b16 %v3299, %v3292
        %v4371 = vpack.c.b16 %v3300, %v3293
        %v4372 = vpack.c.b16 %v3308, %v3301
        %v4373 = vpack.c.b16 %v3309, %v3302
        %v4374 = vpack.c.b16 %v3310, %v3303
        %v4375 = vpack.c.b16 %v3311, %v3304
        %v4376 = vpack.c.b16 %v3312, %v3305
        %v4377 = vpack.c.b16 %v3313, %v3306
        %v4378 = vpack.c.b16 %v3314, %v3307
        %v4379 = vpack.c.b16 %v3322, %v3315
        %v4380 = vpack.c.b16 %v3323, %v3316
        %v4381 = vpack.c.b16 %v3324, %v3317
        %v4382 = vpack.c.b16 %v3325, %v3318
        %v4383 = vpack.c.b16 %v3326, %v3319
        %v4384 = vpack.c.b16 %v3327, %v3320
        %v4385 = vpack.c.b16 %v3328, %v3321
        %v4386 = vpack.c.b16 %v3336, %v3329
        %v4387 = vpack.c.b16 %v3337, %v3330
        %v4388 = vpack.c.b16 %v3338, %v3331
        %v4389 = vpack.c.b16 %v3339, %v3332
        %v4390 = vpack.c.b16 %v3340, %v3333
        %v4391 = vpack.c.b16 %v3341, %v3334
        %v4392 = vpack.c.b16 %v3342, %v3335
        %v4393 = vpack.c.b16 %v3350, %v3343
        %v4394 = vpack.c.b16 %v3351, %v3344
        %v4395 = vpack.c.b16 %v3352, %v3345
        %v4396 = vpack.c.b16 %v3353, %v3346
        %v4397 = vpack.c.b16 %v3354, %v3347
        %v4398 = vpack.c.b16 %v3355, %v3348
        %v4399 = vpack.c.b16 %v3356, %v3349
        %v4400 = vpack.c.b16 %v3364, %v3357
        %v4401 = vpack.c.b16 %v3365, %v3358
        %v4402 = vpack.c.b16 %v3366, %v3359
        %v4403 = vpack.c.b16 %v3367, %v3360
        %v4404 = vpack.c.b16 %v3368, %v3361
        %v4405 = vpack.c.b16 %v3369, %v3362
        %v4406 = vpack.c.b16 %v3370, %v3363
        %v4407 = vpack.c.b16 %v3378, %v3371
        %v4408 = vpack.c.b16 %v3379, %v3372
        %v4409 = vpack.c.b16 %v3380, %v3373
        %v4410 = vpack.c.b16 %v3381, %v3374
        %v4411 = vpack.c.b16 %v3382, %v3375
        %v4412 = vpack.c.b16 %v3383, %v3376
        %v4413 = vpack.c.b16 %v3384, %v3377
        %v4414 = vpack.c.b16 %v3392, %v3385
        %v4415 = vpack.c.b16 %v3393, %v3386
        %v4416 = vpack.c.b16 %v3394, %v3387
        %v4417 = vpack.c.b16 %v3395, %v3388
        %v4418 = vpack.c.b16 %v3396, %v3389
        %v4419 = vpack.c.b16 %v3397, %v3390
        %v4420 = vpack.c.b16 %v3398, %v3391
        %v4421 = vpack.c.b16 %v3406, %v3399
        %v4422 = vpack.c.b16 %v3407, %v3400
        %v4423 = vpack.c.b16 %v3408, %v3401
        %v4424 = vpack.c.b16 %v3409, %v3402
        %v4425 = vpack.c.b16 %v3410, %v3403
        %v4426 = vpack.c.b16 %v3411, %v3404
        %v4427 = vpack.c.b16 %v3412, %v3405
        %v4428 = vpack.c.b16 %v3420, %v3413
        %v4429 = vpack.c.b16 %v3421, %v3414
        %v4430 = vpack.c.b16 %v3422, %v3415
        %v4431 = vpack.c.b16 %v3423, %v3416
        %v4432 = vpack.c.b16 %v3424, %v3417
        %v4433 = vpack.c.b16 %v3425, %v3418
        %v4434 = vpack.c.b16 %v3426, %v3419
        %v4435 = vpack.c.b16 %v3434, %v3427
        %v4436 = vpack.c.b16 %v3435, %v3428
        %v4437 = vpack.c.b16 %v3436, %v3429
        %v4438 = vpack.c.b16 %v3437, %v3430
        %v4439 = vpack.c.b16 %v3438, %v3431
        %v4440 = vpack.c.b16 %v3439, %v3432
        %v4441 = vpack.c.b16 %v3440, %v3433
        %v4442 = vpack.c.b16 %v3448, %v3441
        %v4443 = vpack.c.b16 %v3449, %v3442
        %v4444 = vpack.c.b16 %v3450, %v3443
        %v4445 = vpack.c.b16 %v3451, %v3444
        %v4446 = vpack.c.b16 %v3452, %v3445
        %v4447 = vpack.c.b16 %v3453, %v3446
        %v4448 = vpack.c.b16 %v3454, %v3447
        %v4449 = vpack.c.b16 %v3462, %v3455
        %v4450 = vpack.c.b16 %v3463, %v3456
        %v4451 = vpack.c.b16 %v3464, %v3457
        %v4452 = vpack.c.b16 %v3465, %v3458
        %v4453 = vpack.c.b16 %v3466, %v3459
        %v4454 = vpack.c.b16 %v3467, %v3460
        %v4455 = vpack.c.b16 %v3468, %v3461
        %v4456 = vpack.c.b16 %v3476, %v3469
        %v4457 = vpack.c.b16 %v3477, %v3470
        %v4458 = vpack.c.b16 %v3478, %v3471
        %v4459 = vpack.c.b16 %v3479, %v3472
        %v4460 = vpack.c.b16 %v3480, %v3473
        %v4461 = vpack.c.b16 %v3481, %v3474
        %v4462 = vpack.c.b16 %v3482, %v3475
        %v4463 = vpack.c.b16 %v3490, %v3483
        %v4464 = vpack.c.b16 %v3491, %v3484
        %v4465 = vpack.c.b16 %v3492, %v3485
        %v4466 = vpack.c.b16 %v3493, %v3486
        %v4467 = vpack.c.b16 %v3494, %v3487
        %v4468 = vpack.c.b16 %v3495, %v3488
        %v4469 = vpack.c.b16 %v3496, %v3489
        %v4470 = vpack.c.b16 %v3504, %v3497
        %v4471 = vpack.c.b16 %v3505, %v3498
        %v4472 = vpack.c.b16 %v3506, %v3499
        %v4473 = vpack.c.b16 %v3507, %v3500
        %v4474 = vpack.c.b16 %v3508, %v3501
        %v4475 = vpack.c.b16 %v3509, %v3502
        %v4476 = vpack.c.b16 %v3510, %v3503
        %v4477 = vpack.c.b16 %v3518, %v3511
        %v4478 = vpack.c.b16 %v3519, %v3512
        %v4479 = vpack.c.b16 %v3520, %v3513
        %v4480 = vpack.c.b16 %v3521, %v3514
        %v4481 = vpack.c.b16 %v3522, %v3515
        %v4482 = vpack.c.b16 %v3523, %v3516
        %v4483 = vpack.c.b16 %v3524, %v3517
        %v4484 = vpack.c.b16 %v3532, %v3525
        %v4485 = vpack.c.b16 %v3533, %v3526
        %v4486 = vpack.c.b16 %v3534, %v3527
        %v4487 = vpack.c.b16 %v3535, %v3528
        %v4488 = vpack.c.b16 %v3536, %v3529
        %v4489 = vpack.c.b16 %v3537, %v3530
        %v4490 = vpack.c.b16 %v3538, %v3531
        %v4491 = vpack.c.b16 %v3546, %v3539
        %v4492 = vpack.c.b16 %v3547, %v3540
        %v4493 = vpack.c.b16 %v3548, %v3541
        %v4494 = vpack.c.b16 %v3549, %v3542
        %v4495 = vpack.c.b16 %v3550, %v3543
        %v4496 = vpack.c.b16 %v3551, %v3544
        %v4497 = vpack.c.b16 %v3552, %v3545
        %v4498 = vpack.c.b16 %v3560, %v3553
        %v4499 = vpack.c.b16 %v3561, %v3554
        %v4500 = vpack.c.b16 %v3562, %v3555
        %v4501 = vpack.c.b16 %v3563, %v3556
        %v4502 = vpack.c.b16 %v3564, %v3557
        %v4503 = vpack.c.b16 %v3565, %v3558
        %v4504 = vpack.c.b16 %v3566, %v3559
        %v4505 = vpack.c.b16 %v3574, %v3567
        %v4506 = vpack.c.b16 %v3575, %v3568
        %v4507 = vpack.c.b16 %v3576, %v3569
        %v4508 = vpack.c.b16 %v3577, %v3570
        %v4509 = vpack.c.b16 %v3578, %v3571
        %v4510 = vpack.c.b16 %v3579, %v3572
        %v4511 = vpack.c.b16 %v3580, %v3573
        %v4512 = vpack.c.b16 %v3588, %v3581
        %v4513 = vpack.c.b16 %v3589, %v3582
        %v4514 = vpack.c.b16 %v3590, %v3583
        %v4515 = vpack.c.b16 %v3591, %v3584
        %v4516 = vpack.c.b16 %v3592, %v3585
        %v4517 = vpack.c.b16 %v3593, %v3586
        %v4518 = vpack.c.b16 %v3594, %v3587
        %v4519 = vpack.c.b16 %v3602, %v3595
        %v4520 = vpack.c.b16 %v3603, %v3596
        %v4521 = vpack.c.b16 %v3604, %v3597
        %v4522 = vpack.c.b16 %v3605, %v3598
        %v4523 = vpack.c.b16 %v3606, %v3599
        %v4524 = vpack.c.b16 %v3607, %v3600
        %v4525 = vpack.c.b16 %v3608, %v3601
        %v4526 = vpack.c.b16 %v3616, %v3609
        %v4527 = vpack.c.b16 %v3617, %v3610
        %v4528 = vpack.c.b16 %v3618, %v3611
        %v4529 = vpack.c.b16 %v3619, %v3612
        %v4530 = vpack.c.b16 %v3620, %v3613
        %v4531 = vpack.c.b16 %v3621, %v3614
        %v4532 = vpack.c.b16 %v3622, %v3615
        %v4533 = vpack.c.b16 %v3630, %v3623
        %v4534 = vpack.c.b16 %v3631, %v3624
        %v4535 = vpack.c.b16 %v3632, %v3625
        %v4536 = vpack.c.b16 %v3633, %v3626
        %v4537 = vpack.c.b16 %v3634, %v3627
        %v4538 = vpack.c.b16 %v3635, %v3628
        %v4539 = vpack.c.b16 %v3636, %v3629
        %v4540 = vpack.c.b16 %v3644, %v3637
        %v4541 = vpack.c.b16 %v3645, %v3638
        %v4542 = vpack.c.b16 %v3646, %v3639
        %v4543 = vpack.c.b16 %v3647, %v3640
        %v4544 = vpack.c.b16 %v3648, %v3641
        %v4545 = vpack.c.b16 %v3649, %v3642
        %v4546 = vpack.c.b16 %v3650, %v3643
        %v4547 = vpack.c.b16 %v3658, %v3651
        %v4548 = vpack.c.b16 %v3659, %v3652
        %v4549 = vpack.c.b16 %v3660, %v3653
        %v4550 = vpack.c.b16 %v3661, %v3654
        %v4551 = vpack.c.b16 %v3662, %v3655
        %v4552 = vpack.c.b16 %v3663, %v3656
        %v4553 = vpack.c.b16 %v3664, %v3657
        %v4554 = vpack.c.b16 %v3672, %v3665
        %v4555 = vpack.c.b16 %v3673, %v3666
        %v4556 = vpack.c.b16 %v3674, %v3667
        %v4557 = vpack.c.b16 %v3675, %v3668
        %v4558 = vpack.c.b16 %v3676, %v3669
        %v4559 = vpack.c.b16 %v3677, %v3670
        %v4560 = vpack.c.b16 %v3678, %v3671
        %v4561 = vpack.c.b16 %v3686, %v3679
        %v4562 = vpack.c.b16 %v3687, %v3680
        %v4563 = vpack.c.b16 %v3688, %v3681
        %v4564 = vpack.c.b16 %v3689, %v3682
        %v4565 = vpack.c.b16 %v3690, %v3683
        %v4566 = vpack.c.b16 %v3691, %v3684
        %v4567 = vpack.c.b16 %v3692, %v3685
        %v4568 = vpack.c.b16 %v3700, %v3693
        %v4569 = vpack.c.b16 %v3701, %v3694
        %v4570 = vpack.c.b16 %v3702, %v3695
        %v4571 = vpack.c.b16 %v3703, %v3696
        %v4572 = vpack.c.b16 %v3704, %v3697
        %v4573 = vpack.c.b16 %v3705, %v3698
        %v4574 = vpack.c.b16 %v3706, %v3699
        %v4575 = vpack.c.b16 %v3714, %v3707
        %v4576 = vpack.c.b16 %v3715, %v3708
        %v4577 = vpack.c.b16 %v3716, %v3709
        %v4578 = vpack.c.b16 %v3717, %v3710
        %v4579 = vpack.c.b16 %v3718, %v3711
        %v4580 = vpack.c.b16 %v3719, %v3712
        %v4581 = vpack.c.b16 %v3720, %v3713
        %v4582 = vpack.c.b16 %v3728, %v3721
        %v4583 = vpack.c.b16 %v3729, %v3722
        %v4584 = vpack.c.b16 %v3730, %v3723
        %v4585 = vpack.c.b16 %v3731, %v3724
        %v4586 = vpack.c.b16 %v3732, %v3725
        %v4587 = vpack.c.b16 %v3733, %v3726
        %v4588 = vpack.c.b16 %v3734, %v3727
        %v4589 = vpack.c.b16 %v3742, %v3735
        %v4590 = vpack.c.b16 %v3743, %v3736
        %v4591 = vpack.c.b16 %v3744, %v3737
        %v4592 = vpack.c.b16 %v3745, %v3738
        %v4593 = vpack.c.b16 %v3746, %v3739
        %v4594 = vpack.c.b16 %v3747, %v3740
        %v4595 = vpack.c.b16 %v3748, %v3741
        %v4596 = vpack.c.b16 %v3756, %v3749
        %v4597 = vpack.c.b16 %v3757, %v3750
        %v4598 = vpack.c.b16 %v3758, %v3751
        %v4599 = vpack.c.b16 %v3759, %v3752
        %v4600 = vpack.c.b16 %v3760, %v3753
        %v4601 = vpack.c.b16 %v3761, %v3754
        %v4602 = vpack.c.b16 %v3762, %v3755
        %v4603 = vpack.c.b16 %v3770, %v3763
        %v4604 = vpack.c.b16 %v3771, %v3764
        %v4605 = vpack.c.b16 %v3772, %v3765
        %v4606 = vpack.c.b16 %v3773, %v3766
        %v4607 = vpack.c.b16 %v3774, %v3767
        %v4608 = vpack.c.b16 %v3775, %v3768
        %v4609 = vpack.c.b16 %v3776, %v3769
        %v4610 = vpack.c.b16 %v3784, %v3777
        %v4611 = vpack.c.b16 %v3785, %v3778
        %v4612 = vpack.c.b16 %v3786, %v3779
        %v4613 = vpack.c.b16 %v3787, %v3780
        %v4614 = vpack.c.b16 %v3788, %v3781
        %v4615 = vpack.c.b16 %v3789, %v3782
        %v4616 = vpack.c.b16 %v3790, %v3783
        %v4617 = vpack.c.b16 %v3798, %v3791
        %v4618 = vpack.c.b16 %v3799, %v3792
        %v4619 = vpack.c.b16 %v3800, %v3793
        %v4620 = vpack.c.b16 %v3801, %v3794
        %v4621 = vpack.c.b16 %v3802, %v3795
        %v4622 = vpack.c.b16 %v3803, %v3796
        %v4623 = vpack.c.b16 %v3804, %v3797
        %v4624 = vpack.c.b16 %v3812, %v3805
        %v4625 = vpack.c.b16 %v3813, %v3806
        %v4626 = vpack.c.b16 %v3814, %v3807
        %v4627 = vpack.c.b16 %v3815, %v3808
        %v4628 = vpack.c.b16 %v3816, %v3809
        %v4629 = vpack.c.b16 %v3817, %v3810
        %v4630 = vpack.c.b16 %v3818, %v3811
        %v4631 = vpack.c.b16 %v3826, %v3819
        %v4632 = vpack.c.b16 %v3827, %v3820
        %v4633 = vpack.c.b16 %v3828, %v3821
        %v4634 = vpack.c.b16 %v3829, %v3822
        %v4635 = vpack.c.b16 %v3830, %v3823
        %v4636 = vpack.c.b16 %v3831, %v3824
        %v4637 = vpack.c.b16 %v3832, %v3825
        %v4638 = vpack.c.b16 %v3840, %v3833
        %v4639 = vpack.c.b16 %v3841, %v3834
        %v4640 = vpack.c.b16 %v3842, %v3835
        %v4641 = vpack.c.b16 %v3843, %v3836
        %v4642 = vpack.c.b16 %v3844, %v3837
        %v4643 = vpack.c.b16 %v3845, %v3838
        %v4644 = vpack.c.b16 %v3846, %v3839
        %v4645 = vpack.c.b16 %v3854, %v3847
        %v4646 = vpack.c.b16 %v3855, %v3848
        %v4647 = vpack.c.b16 %v3856, %v3849
        %v4648 = vpack.c.b16 %v3857, %v3850
        %v4649 = vpack.c.b16 %v3858, %v3851
        %v4650 = vpack.c.b16 %v3859, %v3852
        %v4651 = vpack.c.b16 %v3860, %v3853
        %v4652 = vpack.c.b16 %v3868, %v3861
        %v4653 = vpack.c.b16 %v3869, %v3862
        %v4654 = vpack.c.b16 %v3870, %v3863
        %v4655 = vpack.c.b16 %v3871, %v3864
        %v4656 = vpack.c.b16 %v3872, %v3865
        %v4657 = vpack.c.b16 %v3873, %v3866
        %v4658 = vpack.c.b16 %v3874, %v3867
        %5443 = vmatprep.subr.bf16.mxu0 %v3876
        %5444 = vmatpush1.bf16.msra.mxu0 %v3875
        %5445 = vmatprep.subr.bf16.mxu0 %v3883
        %5446 = vmatpush1.bf16.msra.mxu0 %v3882
        %5447 = vmatprep.subr.bf16.mxu0 %v3890
        %5448 = vmatpush1.bf16.msra.mxu0 %v3889
        %5449 = vmatprep.subr.bf16.mxu0 %v3897
        %5450 = vmatpush1.bf16.msra.mxu0 %v3896
        %5451 = vmatprep.subr.bf16.mxu0 %v3904
        %5452 = vmatpush1.bf16.msra.mxu0 %v3903
        %5453 = vmatprep.subr.bf16.mxu0 %v3911
        %5454 = vmatpush1.bf16.msra.mxu0 %v3910
        %5455 = vmatprep.subr.bf16.mxu0 %v3918
        %5456 = vmatpush1.bf16.msra.mxu0 %v3917
        %5457 = vmatprep.subr.bf16.mxu0 %v3925
        %5458 = vmatpush1.bf16.msra.mxu0 %v3924
        %5459 = vmatprep.subr.bf16.mxu0 %v3932
        %5460 = vmatpush1.bf16.msra.mxu0 %v3931
        %5461 = vmatprep.subr.bf16.mxu0 %v3939
        %5462 = vmatpush1.bf16.msra.mxu0 %v3938
        %5463 = vmatprep.subr.bf16.mxu0 %v3946
        %5464 = vmatpush1.bf16.msra.mxu0 %v3945
        %5465 = vmatprep.subr.bf16.mxu0 %v3953
        %5466 = vmatpush1.bf16.msra.mxu0 %v3952
        %5467 = vmatprep.subr.bf16.mxu0 %v3960
        %5468 = vmatpush1.bf16.msra.mxu0 %v3959
        %5469 = vmatprep.subr.bf16.mxu0 %v3967
        %5470 = vmatpush1.bf16.msra.mxu0 %v3966
        %5471 = vmatprep.subr.bf16.mxu0 %v3974
        %5472 = vmatpush1.bf16.msra.mxu0 %v3973
        %5473 = vmatprep.subr.bf16.mxu0 %v3981
        %5474 = vmatpush1.bf16.msra.mxu0 %v3980
        %5475 = vmatprep.mubr.bf16.mxu0 %v1338
        %5476 = vmatmul.mubr.bf16.gmra.mrb[0].mxu0 %v1324
        %v5477 = vpop.f32.mrb[0].mxu0
        %v5478 = vadd.f32 %v1267, %v5477
        %v5479 = vpop.f32.mrb[0].mxu0
        %v5480 = vadd.f32 %v1271, %v5479
        %v5481 = vpop.f32.mrb[0].mxu0
        %v5482 = vpop.f32.mrb[0].mxu0
        %5483 = vdwg.mxu0
        %5484 = vmatprep.subr.bf16.mxu0 %v3988
        %5485 = vmatpush1.bf16.msra.mxu0 %v3987
        %5486 = vmatprep.subr.bf16.mxu0 %v3995
        %5487 = vmatpush1.bf16.msra.mxu0 %v3994
        %5488 = vmatprep.subr.bf16.mxu0 %v4002
        %5489 = vmatpush1.bf16.msra.mxu0 %v4001
        %5490 = vmatprep.subr.bf16.mxu0 %v4009
        %5491 = vmatpush1.bf16.msra.mxu0 %v4008
        %5492 = vmatprep.subr.bf16.mxu0 %v4016
        %5493 = vmatpush1.bf16.msra.mxu0 %v4015
        %5494 = vmatprep.subr.bf16.mxu0 %v4023
        %5495 = vmatpush1.bf16.msra.mxu0 %v4022
        %5496 = vmatprep.subr.bf16.mxu0 %v4030
        %5497 = vmatpush1.bf16.msra.mxu0 %v4029
        %5498 = vmatprep.subr.bf16.mxu0 %v4037
        %5499 = vmatpush1.bf16.msra.mxu0 %v4036
        %5500 = vmatprep.subr.bf16.mxu0 %v4044
        %5501 = vmatpush1.bf16.msra.mxu0 %v4043
        %5502 = vmatprep.subr.bf16.mxu0 %v4051
        %5503 = vmatpush1.bf16.msra.mxu0 %v4050
        %5504 = vmatprep.subr.bf16.mxu0 %v4058
        %5505 = vmatpush1.bf16.msra.mxu0 %v4057
        %5506 = vmatprep.subr.bf16.mxu0 %v4065
        %5507 = vmatpush1.bf16.msra.mxu0 %v4064
        %5508 = vmatprep.subr.bf16.mxu0 %v4072
        %5509 = vmatpush1.bf16.msra.mxu0 %v4071
        %5510 = vmatprep.subr.bf16.mxu0 %v4079
        %5511 = vmatpush1.bf16.msra.mxu0 %v4078
        %5512 = vmatprep.subr.bf16.mxu0 %v4086
        %5513 = vmatpush1.bf16.msra.mxu0 %v4085
        %5514 = vmatprep.subr.bf16.mxu0 %v4093
        %5515 = vmatpush1.bf16.msra.mxu0 %v4092
        %5516 = vmatprep.mubr.bf16.mxu0 %v1348
        %5517 = vmatmul.mubr.bf16.gmra.mrb[0].mxu0 %v1346
        %v5518 = vpop.f32.mrb[0].mxu0
        %v5519 = vadd.f32 %v5478, %v5518
        %v5520 = vpop.f32.mrb[0].mxu0
        %v5521 = vadd.f32 %v5480, %v5520
        %v5522 = vpop.f32.mrb[0].mxu0
        %v5523 = vpop.f32.mrb[0].mxu0
        %5524 = vdwg.mxu0
        %5525 = vmatprep.subr.bf16.mxu0 %v4100
        %5526 = vmatpush1.bf16.msra.mxu0 %v4099
        %5527 = vmatprep.subr.bf16.mxu0 %v4107
        %5528 = vmatpush1.bf16.msra.mxu0 %v4106
        %5529 = vmatprep.subr.bf16.mxu0 %v4114
        %5530 = vmatpush1.bf16.msra.mxu0 %v4113
        %5531 = vmatprep.subr.bf16.mxu0 %v4121
        %5532 = vmatpush1.bf16.msra.mxu0 %v4120
        %5533 = vmatprep.subr.bf16.mxu0 %v4128
        %5534 = vmatpush1.bf16.msra.mxu0 %v4127
        %5535 = vmatprep.subr.bf16.mxu0 %v4135
        %5536 = vmatpush1.bf16.msra.mxu0 %v4134
        %5537 = vmatprep.subr.bf16.mxu0 %v4142
        %5538 = vmatpush1.bf16.msra.mxu0 %v4141
        %5539 = vmatprep.subr.bf16.mxu0 %v4149
        %5540 = vmatpush1.bf16.msra.mxu0 %v4148
        %5541 = vmatprep.subr.bf16.mxu0 %v4156
        %5542 = vmatpush1.bf16.msra.mxu0 %v4155
        %5543 = vmatprep.subr.bf16.mxu0 %v4163
        %5544 = vmatpush1.bf16.msra.mxu0 %v4162
        %5545 = vmatprep.subr.bf16.mxu0 %v4170
        %5546 = vmatpush1.bf16.msra.mxu0 %v4169
        %5547 = vmatprep.subr.bf16.mxu0 %v4177
        %5548 = vmatpush1.bf16.msra.mxu0 %v4176
        %5549 = vmatprep.subr.bf16.mxu0 %v4184
        %5550 = vmatpush1.bf16.msra.mxu0 %v4183
        %5551 = vmatprep.subr.bf16.mxu0 %v4191
        %5552 = vmatpush1.bf16.msra.mxu0 %v4190
        %5553 = vmatprep.subr.bf16.mxu0 %v4198
        %5554 = vmatpush1.bf16.msra.mxu0 %v4197
        %5555 = vmatprep.subr.bf16.mxu0 %v4205
        %5556 = vmatpush1.bf16.msra.mxu0 %v4204
        %5557 = vmatprep.mubr.bf16.mxu0 %v1345
        %5558 = vmatmul.mubr.bf16.gmra.mrb[0].mxu0 %v1331
        %v5559 = vpop.f32.mrb[0].mxu0
        %v5560 = vadd.f32 %v5519, %v5559
        %v5561 = vpop.f32.mrb[0].mxu0
        %v5562 = vadd.f32 %v5521, %v5561
        %v5563 = vpop.f32.mrb[0].mxu0
        %v5564 = vpop.f32.mrb[0].mxu0
        %5565 = vdwg.mxu0
        %5566 = vmatprep.subr.bf16.mxu0 %v4212
        %5567 = vmatpush1.bf16.msra.mxu0 %v4211
        %5568 = vmatprep.subr.bf16.mxu0 %v4219
        %5569 = vmatpush1.bf16.msra.mxu0 %v4218
        %5570 = vmatprep.subr.bf16.mxu0 %v4226
        %5571 = vmatpush1.bf16.msra.mxu0 %v4225
        %5572 = vmatprep.subr.bf16.mxu0 %v4233
        %5573 = vmatpush1.bf16.msra.mxu0 %v4232
        %5574 = vmatprep.subr.bf16.mxu0 %v4240
        %5575 = vmatpush1.bf16.msra.mxu0 %v4239
        %5576 = vmatprep.subr.bf16.mxu0 %v4247
        %5577 = vmatpush1.bf16.msra.mxu0 %v4246
        %5578 = vmatprep.subr.bf16.mxu0 %v4254
        %5579 = vmatpush1.bf16.msra.mxu0 %v4253
        %5580 = vmatprep.subr.bf16.mxu0 %v4261
        %5581 = vmatpush1.bf16.msra.mxu0 %v4260
        %5582 = vmatprep.subr.bf16.mxu0 %v4268
        %5583 = vmatpush1.bf16.msra.mxu0 %v4267
        %5584 = vmatprep.subr.bf16.mxu0 %v4275
        %5585 = vmatpush1.bf16.msra.mxu0 %v4274
        %5586 = vmatprep.subr.bf16.mxu0 %v4282
        %5587 = vmatpush1.bf16.msra.mxu0 %v4281
        %5588 = vmatprep.subr.bf16.mxu0 %v4289
        %5589 = vmatpush1.bf16.msra.mxu0 %v4288
        %5590 = vmatprep.subr.bf16.mxu0 %v4296
        %5591 = vmatpush1.bf16.msra.mxu0 %v4295
        %5592 = vmatprep.subr.bf16.mxu0 %v4303
        %5593 = vmatpush1.bf16.msra.mxu0 %v4302
        %5594 = vmatprep.subr.bf16.mxu0 %v4310
        %5595 = vmatpush1.bf16.msra.mxu0 %v4309
        %5596 = vmatprep.subr.bf16.mxu0 %v4317
        %5597 = vmatpush1.bf16.msra.mxu0 %v4316
        %5598 = vmatprep.mubr.bf16.mxu0 %v1349
        %5599 = vmatmul.mubr.bf16.gmra.mrb[0].mxu0 %v1347
        %v5600 = vpop.f32.mrb[0].mxu0
        %v5601 = vadd.f32 %v5560, %v5600
        %v5602 = vpop.f32.mrb[0].mxu0
        %v5603 = vadd.f32 %v5562, %v5602
        %v5604 = vpop.f32.mrb[0].mxu0
        %v5605 = vpop.f32.mrb[0].mxu0
        %5606 = vdwg.mxu0
        %5607 = vmatprep.subr.bf16.mxu0 %v4324
        %5608 = vmatpush1.bf16.msra.mxu0 %v4323
        %5609 = vmatprep.subr.bf16.mxu0 %v4331
        %5610 = vmatpush1.bf16.msra.mxu0 %v4330
        %5611 = vmatprep.subr.bf16.mxu0 %v4338
        %5612 = vmatpush1.bf16.msra.mxu0 %v4337
        %5613 = vmatprep.subr.bf16.mxu0 %v4345
        %5614 = vmatpush1.bf16.msra.mxu0 %v4344
        %5615 = vmatprep.subr.bf16.mxu0 %v4352
        %5616 = vmatpush1.bf16.msra.mxu0 %v4351
        %5617 = vmatprep.subr.bf16.mxu0 %v4359
        %5618 = vmatpush1.bf16.msra.mxu0 %v4358
        %5619 = vmatprep.subr.bf16.mxu0 %v4366
        %5620 = vmatpush1.bf16.msra.mxu0 %v4365
        %5621 = vmatprep.subr.bf16.mxu0 %v4373
        %5622 = vmatpush1.bf16.msra.mxu0 %v4372
        %5623 = vmatprep.subr.bf16.mxu0 %v4380
        %5624 = vmatpush1.bf16.msra.mxu0 %v4379
        %5625 = vmatprep.subr.bf16.mxu0 %v4387
        %5626 = vmatpush1.bf16.msra.mxu0 %v4386
        %5627 = vmatprep.subr.bf16.mxu0 %v4394
        %5628 = vmatpush1.bf16.msra.mxu0 %v4393
        %5629 = vmatprep.subr.bf16.mxu0 %v4401
        %5630 = vmatpush1.bf16.msra.mxu0 %v4400
        %5631 = vmatprep.subr.bf16.mxu0 %v4408
        %5632 = vmatpush1.bf16.msra.mxu0 %v4407
        %5633 = vmatprep.subr.bf16.mxu0 %v4415
        %5634 = vmatpush1.bf16.msra.mxu0 %v4414
        %5635 = vmatprep.subr.bf16.mxu0 %v4422
        %5636 = vmatpush1.bf16.msra.mxu0 %v4421
        %5637 = vmatprep.subr.bf16.mxu0 %v4429
        %5638 = vmatpush1.bf16.msra.mxu0 %v4428
        %5639 = vmatprep.mubr.bf16.mxu0 %v1387
        %5640 = vmatmul.mubr.bf16.gmra.mrb[0].mxu0 %v1373
        %v5641 = vpop.f32.mrb[0].mxu0
        %v5642 = vadd.f32 %v5601, %v5641
        %v5643 = vpop.f32.mrb[0].mxu0
        %v5644 = vadd.f32 %v5603, %v5643
        %v5645 = vpop.f32.mrb[0].mxu0
        %v5646 = vpop.f32.mrb[0].mxu0
        %5647 = vdwg.mxu0
        %5648 = vmatprep.subr.bf16.mxu0 %v4436
        %5649 = vmatpush1.bf16.msra.mxu0 %v4435
        %5650 = vmatprep.subr.bf16.mxu0 %v4443
        %5651 = vmatpush1.bf16.msra.mxu0 %v4442
        %5652 = vmatprep.subr.bf16.mxu0 %v4450
        %5653 = vmatpush1.bf16.msra.mxu0 %v4449
        %5654 = vmatprep.subr.bf16.mxu0 %v4457
        %5655 = vmatpush1.bf16.msra.mxu0 %v4456
        %5656 = vmatprep.subr.bf16.mxu0 %v4464
        %5657 = vmatpush1.bf16.msra.mxu0 %v4463
        %5658 = vmatprep.subr.bf16.mxu0 %v4471
        %5659 = vmatpush1.bf16.msra.mxu0 %v4470
        %5660 = vmatprep.subr.bf16.mxu0 %v4478
        %5661 = vmatpush1.bf16.msra.mxu0 %v4477
        %5662 = vmatprep.subr.bf16.mxu0 %v4485
        %5663 = vmatpush1.bf16.msra.mxu0 %v4484
        %5664 = vmatprep.subr.bf16.mxu0 %v4492
        %5665 = vmatpush1.bf16.msra.mxu0 %v4491
        %5666 = vmatprep.subr.bf16.mxu0 %v4499
        %5667 = vmatpush1.bf16.msra.mxu0 %v4498
        %5668 = vmatprep.subr.bf16.mxu0 %v4506
        %5669 = vmatpush1.bf16.msra.mxu0 %v4505
        %5670 = vmatprep.subr.bf16.mxu0 %v4513
        %5671 = vmatpush1.bf16.msra.mxu0 %v4512
        %5672 = vmatprep.subr.bf16.mxu0 %v4520
        %5673 = vmatpush1.bf16.msra.mxu0 %v4519
        %5674 = vmatprep.subr.bf16.mxu0 %v4527
        %5675 = vmatpush1.bf16.msra.mxu0 %v4526
        %5676 = vmatprep.subr.bf16.mxu0 %v4534
        %5677 = vmatpush1.bf16.msra.mxu0 %v4533
        %5678 = vmatprep.subr.bf16.mxu0 %v4541
        %5679 = vmatpush1.bf16.msra.mxu0 %v4540
        %5680 = vmatprep.mubr.bf16.mxu0 %v1396
        %5681 = vmatmul.mubr.bf16.gmra.mrb[0].mxu0 %v1395
        %v5682 = vpop.f32.mrb[0].mxu0
        %v5683 = vadd.f32 %v5642, %v5682
        %v5684 = vpop.f32.mrb[0].mxu0
        %v5685 = vadd.f32 %v5644, %v5684
        %v5686 = vpop.f32.mrb[0].mxu0
        %v5687 = vpop.f32.mrb[0].mxu0
        %5688 = vdwg.mxu0
        %5689 = vmatprep.subr.bf16.mxu0 %v4548
        %5690 = vmatpush1.bf16.msra.mxu0 %v4547
        %5691 = vmatprep.subr.bf16.mxu0 %v4555
        %5692 = vmatpush1.bf16.msra.mxu0 %v4554
        %5693 = vmatprep.subr.bf16.mxu0 %v4562
        %5694 = vmatpush1.bf16.msra.mxu0 %v4561
        %5695 = vmatprep.subr.bf16.mxu0 %v4569
        %5696 = vmatpush1.bf16.msra.mxu0 %v4568
        %5697 = vmatprep.subr.bf16.mxu0 %v4576
        %5698 = vmatpush1.bf16.msra.mxu0 %v4575
        %5699 = vmatprep.subr.bf16.mxu0 %v4583
        %5700 = vmatpush1.bf16.msra.mxu0 %v4582
        %5701 = vmatprep.subr.bf16.mxu0 %v4590
        %5702 = vmatpush1.bf16.msra.mxu0 %v4589
        %5703 = vmatprep.subr.bf16.mxu0 %v4597
        %5704 = vmatpush1.bf16.msra.mxu0 %v4596
        %5705 = vmatprep.subr.bf16.mxu0 %v4604
        %5706 = vmatpush1.bf16.msra.mxu0 %v4603
        %5707 = vmatprep.subr.bf16.mxu0 %v4611
        %5708 = vmatpush1.bf16.msra.mxu0 %v4610
        %5709 = vmatprep.subr.bf16.mxu0 %v4618
        %5710 = vmatpush1.bf16.msra.mxu0 %v4617
        %5711 = vmatprep.subr.bf16.mxu0 %v4625
        %5712 = vmatpush1.bf16.msra.mxu0 %v4624
        %5713 = vmatprep.subr.bf16.mxu0 %v4632
        %5714 = vmatpush1.bf16.msra.mxu0 %v4631
        %5715 = vmatprep.subr.bf16.mxu0 %v4639
        %5716 = vmatpush1.bf16.msra.mxu0 %v4638
        %5717 = vmatprep.subr.bf16.mxu0 %v4646
        %5718 = vmatpush1.bf16.msra.mxu0 %v4645
        %5719 = vmatprep.subr.bf16.mxu0 %v4653
        %5720 = vmatpush1.bf16.msra.mxu0 %v4652
        %5721 = vmatprep.mubr.bf16.mxu0 %v1394
        %5722 = vmatmul.mubr.bf16.gmra.mrb[0].mxu0 %v1380
        %v5723 = vpop.f32.mrb[0].mxu0
        %v5724 = vadd.f32 %v5683, %v5723
        %v5725 = vpop.f32.mrb[0].mxu0
        %v5726 = vadd.f32 %v5685, %v5725
        %v5727 = vpop.f32.mrb[0].mxu0
        %v5728 = vpop.f32.mrb[0].mxu0
        %5729 = vdwg.mxu0
        %5730 = vmatprep.subr.bf16.mxu0 %v3878
        %5731 = vmatpush1.bf16.msra.mxu0 %v3877
        %5732 = vmatprep.subr.bf16.mxu0 %v3885
        %5733 = vmatpush1.bf16.msra.mxu0 %v3884
        %5734 = vmatprep.subr.bf16.mxu0 %v3892
        %5735 = vmatpush1.bf16.msra.mxu0 %v3891
        %5736 = vmatprep.subr.bf16.mxu0 %v3899
        %5737 = vmatpush1.bf16.msra.mxu0 %v3898
        %5738 = vmatprep.subr.bf16.mxu0 %v3906
        %5739 = vmatpush1.bf16.msra.mxu0 %v3905
        %5740 = vmatprep.subr.bf16.mxu0 %v3913
        %5741 = vmatpush1.bf16.msra.mxu0 %v3912
        %5742 = vmatprep.subr.bf16.mxu0 %v3920
        %5743 = vmatpush1.bf16.msra.mxu0 %v3919
        %5744 = vmatprep.subr.bf16.mxu0 %v3927
        %5745 = vmatpush1.bf16.msra.mxu0 %v3926
        %5746 = vmatprep.subr.bf16.mxu0 %v3934
        %5747 = vmatpush1.bf16.msra.mxu0 %v3933
        %5748 = vmatprep.subr.bf16.mxu0 %v3941
        %5749 = vmatpush1.bf16.msra.mxu0 %v3940
        %5750 = vmatprep.subr.bf16.mxu0 %v3948
        %5751 = vmatpush1.bf16.msra.mxu0 %v3947
        %5752 = vmatprep.subr.bf16.mxu0 %v3955
        %5753 = vmatpush1.bf16.msra.mxu0 %v3954
        %5754 = vmatprep.subr.bf16.mxu0 %v3962
        %5755 = vmatpush1.bf16.msra.mxu0 %v3961
        %5756 = vmatprep.subr.bf16.mxu0 %v3969
        %5757 = vmatpush1.bf16.msra.mxu0 %v3968
        %5758 = vmatprep.subr.bf16.mxu0 %v3976
        %5759 = vmatpush1.bf16.msra.mxu0 %v3975
        %5760 = vmatprep.subr.bf16.mxu0 %v3983
        %5761 = vmatpush1.bf16.msra.mxu0 %v3982
        %5762 = vmatprep.mubr.bf16.mxu0 %v1338
        %5763 = vmatmul.mubr.bf16.gmra.mrb[0].mxu0 %v1324
        %v5764 = vpop.f32.mrb[0].mxu0
        %v5765 = vadd.f32 %v1275, %v5764
        %v5766 = vpop.f32.mrb[0].mxu0
        %v5767 = vadd.f32 %v1279, %v5766
        %v5768 = vpop.f32.mrb[0].mxu0
        %v5769 = vpop.f32.mrb[0].mxu0
        %5770 = vdwg.mxu0
        %5771 = vmatprep.subr.bf16.mxu0 %v3990
        %5772 = vmatpush1.bf16.msra.mxu0 %v3989
        %5773 = vmatprep.subr.bf16.mxu0 %v3997
        %5774 = vmatpush1.bf16.msra.mxu0 %v3996
        %5775 = vmatprep.subr.bf16.mxu0 %v4004
        %5776 = vmatpush1.bf16.msra.mxu0 %v4003
        %5777 = vmatprep.subr.bf16.mxu0 %v4011
        %5778 = vmatpush1.bf16.msra.mxu0 %v4010
        %5779 = vmatprep.subr.bf16.mxu0 %v4018
        %5780 = vmatpush1.bf16.msra.mxu0 %v4017
        %5781 = vmatprep.subr.bf16.mxu0 %v4025
        %5782 = vmatpush1.bf16.msra.mxu0 %v4024
        %5783 = vmatprep.subr.bf16.mxu0 %v4032
        %5784 = vmatpush1.bf16.msra.mxu0 %v4031
        %5785 = vmatprep.subr.bf16.mxu0 %v4039
        %5786 = vmatpush1.bf16.msra.mxu0 %v4038
        %5787 = vmatprep.subr.bf16.mxu0 %v4046
        %5788 = vmatpush1.bf16.msra.mxu0 %v4045
        %5789 = vmatprep.subr.bf16.mxu0 %v4053
        %5790 = vmatpush1.bf16.msra.mxu0 %v4052
        %5791 = vmatprep.subr.bf16.mxu0 %v4060
        %5792 = vmatpush1.bf16.msra.mxu0 %v4059
        %5793 = vmatprep.subr.bf16.mxu0 %v4067
        %5794 = vmatpush1.bf16.msra.mxu0 %v4066
        %5795 = vmatprep.subr.bf16.mxu0 %v4074
        %5796 = vmatpush1.bf16.msra.mxu0 %v4073
        %5797 = vmatprep.subr.bf16.mxu0 %v4081
        %5798 = vmatpush1.bf16.msra.mxu0 %v4080
        %5799 = vmatprep.subr.bf16.mxu0 %v4088
        %5800 = vmatpush1.bf16.msra.mxu0 %v4087
        %5801 = vmatprep.subr.bf16.mxu0 %v4095
        %5802 = vmatpush1.bf16.msra.mxu0 %v4094
        %5803 = vmatprep.mubr.bf16.mxu0 %v1348
        %5804 = vmatmul.mubr.bf16.gmra.mrb[0].mxu0 %v1346
        %v5805 = vpop.f32.mrb[0].mxu0
        %v5806 = vadd.f32 %v5765, %v5805
        %v5807 = vpop.f32.mrb[0].mxu0
        %v5808 = vadd.f32 %v5767, %v5807
        %v5809 = vpop.f32.mrb[0].mxu0
        %v5810 = vpop.f32.mrb[0].mxu0
        %5811 = vdwg.mxu0
        %5812 = vmatprep.subr.bf16.mxu0 %v4102
        %5813 = vmatpush1.bf16.msra.mxu0 %v4101
        %5814 = vmatprep.subr.bf16.mxu0 %v4109
        %5815 = vmatpush1.bf16.msra.mxu0 %v4108
        %5816 = vmatprep.subr.bf16.mxu0 %v4116
        %5817 = vmatpush1.bf16.msra.mxu0 %v4115
        %5818 = vmatprep.subr.bf16.mxu0 %v4123
        %5819 = vmatpush1.bf16.msra.mxu0 %v4122
        %5820 = vmatprep.subr.bf16.mxu0 %v4130
        %5821 = vmatpush1.bf16.msra.mxu0 %v4129
        %5822 = vmatprep.subr.bf16.mxu0 %v4137
        %5823 = vmatpush1.bf16.msra.mxu0 %v4136
        %5824 = vmatprep.subr.bf16.mxu0 %v4144
        %5825 = vmatpush1.bf16.msra.mxu0 %v4143
        %5826 = vmatprep.subr.bf16.mxu0 %v4151
        %5827 = vmatpush1.bf16.msra.mxu0 %v4150
        %5828 = vmatprep.subr.bf16.mxu0 %v4158
        %5829 = vmatpush1.bf16.msra.mxu0 %v4157
        %5830 = vmatprep.subr.bf16.mxu0 %v4165
        %5831 = vmatpush1.bf16.msra.mxu0 %v4164
        %5832 = vmatprep.subr.bf16.mxu0 %v4172
        %5833 = vmatpush1.bf16.msra.mxu0 %v4171
        %5834 = vmatprep.subr.bf16.mxu0 %v4179
        %5835 = vmatpush1.bf16.msra.mxu0 %v4178
        %5836 = vmatprep.subr.bf16.mxu0 %v4186
        %5837 = vmatpush1.bf16.msra.mxu0 %v4185
        %5838 = vmatprep.subr.bf16.mxu0 %v4193
        %5839 = vmatpush1.bf16.msra.mxu0 %v4192
        %5840 = vmatprep.subr.bf16.mxu0 %v4200
        %5841 = vmatpush1.bf16.msra.mxu0 %v4199
        %5842 = vmatprep.subr.bf16.mxu0 %v4207
        %5843 = vmatpush1.bf16.msra.mxu0 %v4206
        %5844 = vmatprep.mubr.bf16.mxu0 %v1345
        %5845 = vmatmul.mubr.bf16.gmra.mrb[0].mxu0 %v1331
        %v5846 = vpop.f32.mrb[0].mxu0
        %v5847 = vadd.f32 %v5806, %v5846
        %v5848 = vpop.f32.mrb[0].mxu0
        %v5849 = vadd.f32 %v5808, %v5848
        %v5850 = vpop.f32.mrb[0].mxu0
        %v5851 = vpop.f32.mrb[0].mxu0
        %5852 = vdwg.mxu0
        %5853 = vmatprep.subr.bf16.mxu0 %v4214
        %5854 = vmatpush1.bf16.msra.mxu0 %v4213
        %5855 = vmatprep.subr.bf16.mxu0 %v4221
        %5856 = vmatpush1.bf16.msra.mxu0 %v4220
        %5857 = vmatprep.subr.bf16.mxu0 %v4228
        %5858 = vmatpush1.bf16.msra.mxu0 %v4227
        %5859 = vmatprep.subr.bf16.mxu0 %v4235
        %5860 = vmatpush1.bf16.msra.mxu0 %v4234
        %5861 = vmatprep.subr.bf16.mxu0 %v4242
        %5862 = vmatpush1.bf16.msra.mxu0 %v4241
        %5863 = vmatprep.subr.bf16.mxu0 %v4249
        %5864 = vmatpush1.bf16.msra.mxu0 %v4248
        %5865 = vmatprep.subr.bf16.mxu0 %v4256
        %5866 = vmatpush1.bf16.msra.mxu0 %v4255
        %5867 = vmatprep.subr.bf16.mxu0 %v4263
        %5868 = vmatpush1.bf16.msra.mxu0 %v4262
        %5869 = vmatprep.subr.bf16.mxu0 %v4270
        %5870 = vmatpush1.bf16.msra.mxu0 %v4269
        %5871 = vmatprep.subr.bf16.mxu0 %v4277
        %5872 = vmatpush1.bf16.msra.mxu0 %v4276
        %5873 = vmatprep.subr.bf16.mxu0 %v4284
        %5874 = vmatpush1.bf16.msra.mxu0 %v4283
        %5875 = vmatprep.subr.bf16.mxu0 %v4291
        %5876 = vmatpush1.bf16.msra.mxu0 %v4290
        %5877 = vmatprep.subr.bf16.mxu0 %v4298
        %5878 = vmatpush1.bf16.msra.mxu0 %v4297
        %5879 = vmatprep.subr.bf16.mxu0 %v4305
        %5880 = vmatpush1.bf16.msra.mxu0 %v4304
        %5881 = vmatprep.subr.bf16.mxu0 %v4312
        %5882 = vmatpush1.bf16.msra.mxu0 %v4311
        %5883 = vmatprep.subr.bf16.mxu0 %v4319
        %5884 = vmatpush1.bf16.msra.mxu0 %v4318
        %5885 = vmatprep.mubr.bf16.mxu0 %v1349
        %5886 = vmatmul.mubr.bf16.gmra.mrb[0].mxu0 %v1347
        %v5887 = vpop.f32.mrb[0].mxu0
        %v5888 = vadd.f32 %v5847, %v5887
        %v5889 = vpop.f32.mrb[0].mxu0
        %v5890 = vadd.f32 %v5849, %v5889
        %v5891 = vpop.f32.mrb[0].mxu0
        %v5892 = vpop.f32.mrb[0].mxu0
        %5893 = vdwg.mxu0
        %5894 = vmatprep.subr.bf16.mxu0 %v4326
        %5895 = vmatpush1.bf16.msra.mxu0 %v4325
        %5896 = vmatprep.subr.bf16.mxu0 %v4333
        %5897 = vmatpush1.bf16.msra.mxu0 %v4332
        %5898 = vmatprep.subr.bf16.mxu0 %v4340
        %5899 = vmatpush1.bf16.msra.mxu0 %v4339
        %5900 = vmatprep.subr.bf16.mxu0 %v4347
        %5901 = vmatpush1.bf16.msra.mxu0 %v4346
        %5902 = vmatprep.subr.bf16.mxu0 %v4354
        %5903 = vmatpush1.bf16.msra.mxu0 %v4353
        %5904 = vmatprep.subr.bf16.mxu0 %v4361
        %5905 = vmatpush1.bf16.msra.mxu0 %v4360
        %5906 = vmatprep.subr.bf16.mxu0 %v4368
        %5907 = vmatpush1.bf16.msra.mxu0 %v4367
        %5908 = vmatprep.subr.bf16.mxu0 %v4375
        %5909 = vmatpush1.bf16.msra.mxu0 %v4374
        %5910 = vmatprep.subr.bf16.mxu0 %v4382
        %5911 = vmatpush1.bf16.msra.mxu0 %v4381
        %5912 = vmatprep.subr.bf16.mxu0 %v4389
        %5913 = vmatpush1.bf16.msra.mxu0 %v4388
        %5914 = vmatprep.subr.bf16.mxu0 %v4396
        %5915 = vmatpush1.bf16.msra.mxu0 %v4395
        %5916 = vmatprep.subr.bf16.mxu0 %v4403
        %5917 = vmatpush1.bf16.msra.mxu0 %v4402
        %5918 = vmatprep.subr.bf16.mxu0 %v4410
        %5919 = vmatpush1.bf16.msra.mxu0 %v4409
        %5920 = vmatprep.subr.bf16.mxu0 %v4417
        %5921 = vmatpush1.bf16.msra.mxu0 %v4416
        %5922 = vmatprep.subr.bf16.mxu0 %v4424
        %5923 = vmatpush1.bf16.msra.mxu0 %v4423
        %5924 = vmatprep.subr.bf16.mxu0 %v4431
        %5925 = vmatpush1.bf16.msra.mxu0 %v4430
        %5926 = vmatprep.mubr.bf16.mxu0 %v1387
        %5927 = vmatmul.mubr.bf16.gmra.mrb[0].mxu0 %v1373
        %v5928 = vpop.f32.mrb[0].mxu0
        %v5929 = vadd.f32 %v5888, %v5928
        %v5930 = vpop.f32.mrb[0].mxu0
        %v5931 = vadd.f32 %v5890, %v5930
        %v5932 = vpop.f32.mrb[0].mxu0
        %v5933 = vpop.f32.mrb[0].mxu0
        %5934 = vdwg.mxu0
        %5935 = vmatprep.subr.bf16.mxu0 %v4438
        %5936 = vmatpush1.bf16.msra.mxu0 %v4437
        %5937 = vmatprep.subr.bf16.mxu0 %v4445
        %5938 = vmatpush1.bf16.msra.mxu0 %v4444
        %5939 = vmatprep.subr.bf16.mxu0 %v4452
        %5940 = vmatpush1.bf16.msra.mxu0 %v4451
        %5941 = vmatprep.subr.bf16.mxu0 %v4459
        %5942 = vmatpush1.bf16.msra.mxu0 %v4458
        %5943 = vmatprep.subr.bf16.mxu0 %v4466
        %5944 = vmatpush1.bf16.msra.mxu0 %v4465
        %5945 = vmatprep.subr.bf16.mxu0 %v4473
        %5946 = vmatpush1.bf16.msra.mxu0 %v4472
        %5947 = vmatprep.subr.bf16.mxu0 %v4480
        %5948 = vmatpush1.bf16.msra.mxu0 %v4479
        %5949 = vmatprep.subr.bf16.mxu0 %v4487
        %5950 = vmatpush1.bf16.msra.mxu0 %v4486
        %5951 = vmatprep.subr.bf16.mxu0 %v4494
        %5952 = vmatpush1.bf16.msra.mxu0 %v4493
        %5953 = vmatprep.subr.bf16.mxu0 %v4501
        %5954 = vmatpush1.bf16.msra.mxu0 %v4500
        %5955 = vmatprep.subr.bf16.mxu0 %v4508
        %5956 = vmatpush1.bf16.msra.mxu0 %v4507
        %5957 = vmatprep.subr.bf16.mxu0 %v4515
        %5958 = vmatpush1.bf16.msra.mxu0 %v4514
        %5959 = vmatprep.subr.bf16.mxu0 %v4522
        %5960 = vmatpush1.bf16.msra.mxu0 %v4521
        %5961 = vmatprep.subr.bf16.mxu0 %v4529
        %5962 = vmatpush1.bf16.msra.mxu0 %v4528
        %5963 = vmatprep.subr.bf16.mxu0 %v4536
        %5964 = vmatpush1.bf16.msra.mxu0 %v4535
        %5965 = vmatprep.subr.bf16.mxu0 %v4543
        %5966 = vmatpush1.bf16.msra.mxu0 %v4542
        %5967 = vmatprep.mubr.bf16.mxu0 %v1396
        %5968 = vmatmul.mubr.bf16.gmra.mrb[0].mxu0 %v1395
        %v5969 = vpop.f32.mrb[0].mxu0
        %v5970 = vadd.f32 %v5929, %v5969
        %v5971 = vpop.f32.mrb[0].mxu0
        %v5972 = vadd.f32 %v5931, %v5971
        %v5973 = vpop.f32.mrb[0].mxu0
        %v5974 = vpop.f32.mrb[0].mxu0
        %5975 = vdwg.mxu0
        %5976 = vmatprep.subr.bf16.mxu0 %v4550
        %5977 = vmatpush1.bf16.msra.mxu0 %v4549
        %5978 = vmatprep.subr.bf16.mxu0 %v4557
        %5979 = vmatpush1.bf16.msra.mxu0 %v4556
        %5980 = vmatprep.subr.bf16.mxu0 %v4564
        %5981 = vmatpush1.bf16.msra.mxu0 %v4563
        %5982 = vmatprep.subr.bf16.mxu0 %v4571
        %5983 = vmatpush1.bf16.msra.mxu0 %v4570
        %5984 = vmatprep.subr.bf16.mxu0 %v4578
        %5985 = vmatpush1.bf16.msra.mxu0 %v4577
        %5986 = vmatprep.subr.bf16.mxu0 %v4585
        %5987 = vmatpush1.bf16.msra.mxu0 %v4584
        %5988 = vmatprep.subr.bf16.mxu0 %v4592
        %5989 = vmatpush1.bf16.msra.mxu0 %v4591
        %5990 = vmatprep.subr.bf16.mxu0 %v4599
        %5991 = vmatpush1.bf16.msra.mxu0 %v4598
        %5992 = vmatprep.subr.bf16.mxu0 %v4606
        %5993 = vmatpush1.bf16.msra.mxu0 %v4605
        %5994 = vmatprep.subr.bf16.mxu0 %v4613
        %5995 = vmatpush1.bf16.msra.mxu0 %v4612
        %5996 = vmatprep.subr.bf16.mxu0 %v4620
        %5997 = vmatpush1.bf16.msra.mxu0 %v4619
        %5998 = vmatprep.subr.bf16.mxu0 %v4627
        %5999 = vmatpush1.bf16.msra.mxu0 %v4626
        %6000 = vmatprep.subr.bf16.mxu0 %v4634
        %6001 = vmatpush1.bf16.msra.mxu0 %v4633
        %6002 = vmatprep.subr.bf16.mxu0 %v4641
        %6003 = vmatpush1.bf16.msra.mxu0 %v4640
        %6004 = vmatprep.subr.bf16.mxu0 %v4648
        %6005 = vmatpush1.bf16.msra.mxu0 %v4647
        %6006 = vmatprep.subr.bf16.mxu0 %v4655
        %6007 = vmatpush1.bf16.msra.mxu0 %v4654
        %6008 = vmatprep.mubr.bf16.mxu0 %v1394
        %6009 = vmatmul.mubr.bf16.gmra.mrb[0].mxu0 %v1380
        %v6010 = vpop.f32.mrb[0].mxu0
        %v6011 = vadd.f32 %v5970, %v6010
        %v6012 = vpop.f32.mrb[0].mxu0
        %v6013 = vadd.f32 %v5972, %v6012
        %v6014 = vpop.f32.mrb[0].mxu0
        %v6015 = vpop.f32.mrb[0].mxu0
        %6016 = vdwg.mxu0
        %6017 = vmatprep.subr.bf16.mxu0 %v3880
        %6018 = vmatpush1.bf16.msra.mxu0 %v3879
        %6019 = vmatprep.subr.bf16.mxu0 %v3887
        %6020 = vmatpush1.bf16.msra.mxu0 %v3886
        %6021 = vmatprep.subr.bf16.mxu0 %v3894
        %6022 = vmatpush1.bf16.msra.mxu0 %v3893
        %6023 = vmatprep.subr.bf16.mxu0 %v3901
        %6024 = vmatpush1.bf16.msra.mxu0 %v3900
        %6025 = vmatprep.subr.bf16.mxu0 %v3908
        %6026 = vmatpush1.bf16.msra.mxu0 %v3907
        %6027 = vmatprep.subr.bf16.mxu0 %v3915
        %6028 = vmatpush1.bf16.msra.mxu0 %v3914
        %6029 = vmatprep.subr.bf16.mxu0 %v3922
        %6030 = vmatpush1.bf16.msra.mxu0 %v3921
        %6031 = vmatprep.subr.bf16.mxu0 %v3929
        %6032 = vmatpush1.bf16.msra.mxu0 %v3928
        %6033 = vmatprep.subr.bf16.mxu0 %v3936
        %6034 = vmatpush1.bf16.msra.mxu0 %v3935
        %6035 = vmatprep.subr.bf16.mxu0 %v3943
        %6036 = vmatpush1.bf16.msra.mxu0 %v3942
        %6037 = vmatprep.subr.bf16.mxu0 %v3950
        %6038 = vmatpush1.bf16.msra.mxu0 %v3949
        %6039 = vmatprep.subr.bf16.mxu0 %v3957
        %6040 = vmatpush1.bf16.msra.mxu0 %v3956
        %6041 = vmatprep.subr.bf16.mxu0 %v3964
        %6042 = vmatpush1.bf16.msra.mxu0 %v3963
        %6043 = vmatprep.subr.bf16.mxu0 %v3971
        %6044 = vmatpush1.bf16.msra.mxu0 %v3970
        %6045 = vmatprep.subr.bf16.mxu0 %v3978
        %6046 = vmatpush1.bf16.msra.mxu0 %v3977
        %6047 = vmatprep.subr.bf16.mxu0 %v3985
        %6048 = vmatpush1.bf16.msra.mxu0 %v3984
        %6049 = vmatprep.mubr.bf16.mxu0 %v1338
        %6050 = vmatmul.mubr.bf16.gmra.mrb[0].mxu0 %v1324
        %v6051 = vpop.f32.mrb[0].mxu0
        %v6052 = vadd.f32 %v1283, %v6051
        %v6053 = vpop.f32.mrb[0].mxu0
        %v6054 = vadd.f32 %v1287, %v6053
        %v6055 = vpop.f32.mrb[0].mxu0
        %v6056 = vpop.f32.mrb[0].mxu0
        %6057 = vdwg.mxu0
        %6058 = vmatprep.subr.bf16.mxu0 %v3992
        %6059 = vmatpush1.bf16.msra.mxu0 %v3991
        %6060 = vmatprep.subr.bf16.mxu0 %v3999
        %6061 = vmatpush1.bf16.msra.mxu0 %v3998
        %6062 = vmatprep.subr.bf16.mxu0 %v4006
        %6063 = vmatpush1.bf16.msra.mxu0 %v4005
        %6064 = vmatprep.subr.bf16.mxu0 %v4013
        %6065 = vmatpush1.bf16.msra.mxu0 %v4012
        %6066 = vmatprep.subr.bf16.mxu0 %v4020
        %6067 = vmatpush1.bf16.msra.mxu0 %v4019
        %6068 = vmatprep.subr.bf16.mxu0 %v4027
        %6069 = vmatpush1.bf16.msra.mxu0 %v4026
        %6070 = vmatprep.subr.bf16.mxu0 %v4034
        %6071 = vmatpush1.bf16.msra.mxu0 %v4033
        %6072 = vmatprep.subr.bf16.mxu0 %v4041
        %6073 = vmatpush1.bf16.msra.mxu0 %v4040
        %6074 = vmatprep.subr.bf16.mxu0 %v4048
        %6075 = vmatpush1.bf16.msra.mxu0 %v4047
        %6076 = vmatprep.subr.bf16.mxu0 %v4055
        %6077 = vmatpush1.bf16.msra.mxu0 %v4054
        %6078 = vmatprep.subr.bf16.mxu0 %v4062
        %6079 = vmatpush1.bf16.msra.mxu0 %v4061
        %6080 = vmatprep.subr.bf16.mxu0 %v4069
        %6081 = vmatpush1.bf16.msra.mxu0 %v4068
        %6082 = vmatprep.subr.bf16.mxu0 %v4076
        %6083 = vmatpush1.bf16.msra.mxu0 %v4075
        %6084 = vmatprep.subr.bf16.mxu0 %v4083
        %6085 = vmatpush1.bf16.msra.mxu0 %v4082
        %6086 = vmatprep.subr.bf16.mxu0 %v4090
        %6087 = vmatpush1.bf16.msra.mxu0 %v4089
        %6088 = vmatprep.subr.bf16.mxu0 %v4097
        %6089 = vmatpush1.bf16.msra.mxu0 %v4096
        %6090 = vmatprep.mubr.bf16.mxu0 %v1348
        %6091 = vmatmul.mubr.bf16.gmra.mrb[0].mxu0 %v1346
        %v6092 = vpop.f32.mrb[0].mxu0
        %v6093 = vadd.f32 %v6052, %v6092
        %v6094 = vpop.f32.mrb[0].mxu0
        %v6095 = vadd.f32 %v6054, %v6094
        %v6096 = vpop.f32.mrb[0].mxu0
        %v6097 = vpop.f32.mrb[0].mxu0
        %6098 = vdwg.mxu0
        %6099 = vmatprep.subr.bf16.mxu0 %v4104
        %6100 = vmatpush1.bf16.msra.mxu0 %v4103
        %6101 = vmatprep.subr.bf16.mxu0 %v4111
        %6102 = vmatpush1.bf16.msra.mxu0 %v4110
        %6103 = vmatprep.subr.bf16.mxu0 %v4118
        %6104 = vmatpush1.bf16.msra.mxu0 %v4117
        %6105 = vmatprep.subr.bf16.mxu0 %v4125
        %6106 = vmatpush1.bf16.msra.mxu0 %v4124
        %6107 = vmatprep.subr.bf16.mxu0 %v4132
        %6108 = vmatpush1.bf16.msra.mxu0 %v4131
        %6109 = vmatprep.subr.bf16.mxu0 %v4139
        %6110 = vmatpush1.bf16.msra.mxu0 %v4138
        %6111 = vmatprep.subr.bf16.mxu0 %v4146
        %6112 = vmatpush1.bf16.msra.mxu0 %v4145
        %6113 = vmatprep.subr.bf16.mxu0 %v4153
        %6114 = vmatpush1.bf16.msra.mxu0 %v4152
        %6115 = vmatprep.subr.bf16.mxu0 %v4160
        %6116 = vmatpush1.bf16.msra.mxu0 %v4159
        %6117 = vmatprep.subr.bf16.mxu0 %v4167
        %6118 = vmatpush1.bf16.msra.mxu0 %v4166
        %6119 = vmatprep.subr.bf16.mxu0 %v4174
        %6120 = vmatpush1.bf16.msra.mxu0 %v4173
        %6121 = vmatprep.subr.bf16.mxu0 %v4181
        %6122 = vmatpush1.bf16.msra.mxu0 %v4180
        %6123 = vmatprep.subr.bf16.mxu0 %v4188
        %6124 = vmatpush1.bf16.msra.mxu0 %v4187
        %6125 = vmatprep.subr.bf16.mxu0 %v4195
        %6126 = vmatpush1.bf16.msra.mxu0 %v4194
        %6127 = vmatprep.subr.bf16.mxu0 %v4202
        %6128 = vmatpush1.bf16.msra.mxu0 %v4201
        %6129 = vmatprep.subr.bf16.mxu0 %v4209
        %6130 = vmatpush1.bf16.msra.mxu0 %v4208
        %6131 = vmatprep.mubr.bf16.mxu0 %v1345
        %6132 = vmatmul.mubr.bf16.gmra.mrb[0].mxu0 %v1331
        %v6133 = vpop.f32.mrb[0].mxu0
        %v6134 = vadd.f32 %v6093, %v6133
        %v6135 = vpop.f32.mrb[0].mxu0
        %v6136 = vadd.f32 %v6095, %v6135
        %v6137 = vpop.f32.mrb[0].mxu0
        %v6138 = vpop.f32.mrb[0].mxu0
        %6139 = vdwg.mxu0
        %6140 = vmatprep.subr.bf16.mxu0 %v4216
        %6141 = vmatpush1.bf16.msra.mxu0 %v4215
        %6142 = vmatprep.subr.bf16.mxu0 %v4223
        %6143 = vmatpush1.bf16.msra.mxu0 %v4222
        %6144 = vmatprep.subr.bf16.mxu0 %v4230
        %6145 = vmatpush1.bf16.msra.mxu0 %v4229
        %6146 = vmatprep.subr.bf16.mxu0 %v4237
        %6147 = vmatpush1.bf16.msra.mxu0 %v4236
        %6148 = vmatprep.subr.bf16.mxu0 %v4244
        %6149 = vmatpush1.bf16.msra.mxu0 %v4243
        %6150 = vmatprep.subr.bf16.mxu0 %v4251
        %6151 = vmatpush1.bf16.msra.mxu0 %v4250
        %6152 = vmatprep.subr.bf16.mxu0 %v4258
        %6153 = vmatpush1.bf16.msra.mxu0 %v4257
        %6154 = vmatprep.subr.bf16.mxu0 %v4265
        %6155 = vmatpush1.bf16.msra.mxu0 %v4264
        %6156 = vmatprep.subr.bf16.mxu0 %v4272
        %6157 = vmatpush1.bf16.msra.mxu0 %v4271
        %6158 = vmatprep.subr.bf16.mxu0 %v4279
        %6159 = vmatpush1.bf16.msra.mxu0 %v4278
        %6160 = vmatprep.subr.bf16.mxu0 %v4286
        %6161 = vmatpush1.bf16.msra.mxu0 %v4285
        %6162 = vmatprep.subr.bf16.mxu0 %v4293
        %6163 = vmatpush1.bf16.msra.mxu0 %v4292
        %6164 = vmatprep.subr.bf16.mxu0 %v4300
        %6165 = vmatpush1.bf16.msra.mxu0 %v4299
        %6166 = vmatprep.subr.bf16.mxu0 %v4307
        %6167 = vmatpush1.bf16.msra.mxu0 %v4306
        %6168 = vmatprep.subr.bf16.mxu0 %v4314
        %6169 = vmatpush1.bf16.msra.mxu0 %v4313
        %6170 = vmatprep.subr.bf16.mxu0 %v4321
        %6171 = vmatpush1.bf16.msra.mxu0 %v4320
        %6172 = vmatprep.mubr.bf16.mxu0 %v1349
        %6173 = vmatmul.mubr.bf16.gmra.mrb[0].mxu0 %v1347
        %v6174 = vpop.f32.mrb[0].mxu0
        %v6175 = vadd.f32 %v6134, %v6174
        %v6176 = vpop.f32.mrb[0].mxu0
        %v6177 = vadd.f32 %v6136, %v6176
        %v6178 = vpop.f32.mrb[0].mxu0
        %v6179 = vpop.f32.mrb[0].mxu0
        %6180 = vdwg.mxu0
        %6181 = vmatprep.subr.bf16.mxu0 %v4328
        %6182 = vmatpush1.bf16.msra.mxu0 %v4327
        %6183 = vmatprep.subr.bf16.mxu0 %v4335
        %6184 = vmatpush1.bf16.msra.mxu0 %v4334
        %6185 = vmatprep.subr.bf16.mxu0 %v4342
        %6186 = vmatpush1.bf16.msra.mxu0 %v4341
        %6187 = vmatprep.subr.bf16.mxu0 %v4349
        %6188 = vmatpush1.bf16.msra.mxu0 %v4348
        %6189 = vmatprep.subr.bf16.mxu0 %v4356
        %6190 = vmatpush1.bf16.msra.mxu0 %v4355
        %6191 = vmatprep.subr.bf16.mxu0 %v4363
        %6192 = vmatpush1.bf16.msra.mxu0 %v4362
        %6193 = vmatprep.subr.bf16.mxu0 %v4370
        %6194 = vmatpush1.bf16.msra.mxu0 %v4369
        %6195 = vmatprep.subr.bf16.mxu0 %v4377
        %6196 = vmatpush1.bf16.msra.mxu0 %v4376
        %6197 = vmatprep.subr.bf16.mxu0 %v4384
        %6198 = vmatpush1.bf16.msra.mxu0 %v4383
        %6199 = vmatprep.subr.bf16.mxu0 %v4391
        %6200 = vmatpush1.bf16.msra.mxu0 %v4390
        %6201 = vmatprep.subr.bf16.mxu0 %v4398
        %6202 = vmatpush1.bf16.msra.mxu0 %v4397
        %6203 = vmatprep.subr.bf16.mxu0 %v4405
        %6204 = vmatpush1.bf16.msra.mxu0 %v4404
        %6205 = vmatprep.subr.bf16.mxu0 %v4412
        %6206 = vmatpush1.bf16.msra.mxu0 %v4411
        %6207 = vmatprep.subr.bf16.mxu0 %v4419
        %6208 = vmatpush1.bf16.msra.mxu0 %v4418
        %6209 = vmatprep.subr.bf16.mxu0 %v4426
        %6210 = vmatpush1.bf16.msra.mxu0 %v4425
        %6211 = vmatprep.subr.bf16.mxu0 %v4433
        %6212 = vmatpush1.bf16.msra.mxu0 %v4432
        %6213 = vmatprep.mubr.bf16.mxu0 %v1387
        %6214 = vmatmul.mubr.bf16.gmra.mrb[0].mxu0 %v1373
        %v6215 = vpop.f32.mrb[0].mxu0
        %v6216 = vadd.f32 %v6175, %v6215
        %v6217 = vpop.f32.mrb[0].mxu0
        %v6218 = vadd.f32 %v6177, %v6217
        %v6219 = vpop.f32.mrb[0].mxu0
        %v6220 = vpop.f32.mrb[0].mxu0
        %6221 = vdwg.mxu0
        %6222 = vmatprep.subr.bf16.mxu0 %v4440
        %6223 = vmatpush1.bf16.msra.mxu0 %v4439
        %6224 = vmatprep.subr.bf16.mxu0 %v4447
        %6225 = vmatpush1.bf16.msra.mxu0 %v4446
        %6226 = vmatprep.subr.bf16.mxu0 %v4454
        %6227 = vmatpush1.bf16.msra.mxu0 %v4453
        %6228 = vmatprep.subr.bf16.mxu0 %v4461
        %6229 = vmatpush1.bf16.msra.mxu0 %v4460
        %6230 = vmatprep.subr.bf16.mxu0 %v4468
        %6231 = vmatpush1.bf16.msra.mxu0 %v4467
        %6232 = vmatprep.subr.bf16.mxu0 %v4475
        %6233 = vmatpush1.bf16.msra.mxu0 %v4474
        %6234 = vmatprep.subr.bf16.mxu0 %v4482
        %6235 = vmatpush1.bf16.msra.mxu0 %v4481
        %6236 = vmatprep.subr.bf16.mxu0 %v4489
        %6237 = vmatpush1.bf16.msra.mxu0 %v4488
        %6238 = vmatprep.subr.bf16.mxu0 %v4496
        %6239 = vmatpush1.bf16.msra.mxu0 %v4495
        %6240 = vmatprep.subr.bf16.mxu0 %v4503
        %6241 = vmatpush1.bf16.msra.mxu0 %v4502
        %6242 = vmatprep.subr.bf16.mxu0 %v4510
        %6243 = vmatpush1.bf16.msra.mxu0 %v4509
        %6244 = vmatprep.subr.bf16.mxu0 %v4517
        %6245 = vmatpush1.bf16.msra.mxu0 %v4516
        %6246 = vmatprep.subr.bf16.mxu0 %v4524
        %6247 = vmatpush1.bf16.msra.mxu0 %v4523
        %6248 = vmatprep.subr.bf16.mxu0 %v4531
        %6249 = vmatpush1.bf16.msra.mxu0 %v4530
        %6250 = vmatprep.subr.bf16.mxu0 %v4538
        %6251 = vmatpush1.bf16.msra.mxu0 %v4537
        %6252 = vmatprep.subr.bf16.mxu0 %v4545
        %6253 = vmatpush1.bf16.msra.mxu0 %v4544
        %6254 = vmatprep.mubr.bf16.mxu0 %v1396
        %6255 = vmatmul.mubr.bf16.gmra.mrb[0].mxu0 %v1395
        %v6256 = vpop.f32.mrb[0].mxu0
        %v6257 = vadd.f32 %v6216, %v6256
        %v6258 = vpop.f32.mrb[0].mxu0
        %v6259 = vadd.f32 %v6218, %v6258
        %v6260 = vpop.f32.mrb[0].mxu0
        %v6261 = vpop.f32.mrb[0].mxu0
        %6262 = vdwg.mxu0
        %6263 = vmatprep.subr.bf16.mxu0 %v4552
        %6264 = vmatpush1.bf16.msra.mxu0 %v4551
        %6265 = vmatprep.subr.bf16.mxu0 %v4559
        %6266 = vmatpush1.bf16.msra.mxu0 %v4558
        %6267 = vmatprep.subr.bf16.mxu0 %v4566
        %6268 = vmatpush1.bf16.msra.mxu0 %v4565
        %6269 = vmatprep.subr.bf16.mxu0 %v4573
        %6270 = vmatpush1.bf16.msra.mxu0 %v4572
        %6271 = vmatprep.subr.bf16.mxu0 %v4580
        %6272 = vmatpush1.bf16.msra.mxu0 %v4579
        %6273 = vmatprep.subr.bf16.mxu0 %v4587
        %6274 = vmatpush1.bf16.msra.mxu0 %v4586
        %6275 = vmatprep.subr.bf16.mxu0 %v4594
        %6276 = vmatpush1.bf16.msra.mxu0 %v4593
        %6277 = vmatprep.subr.bf16.mxu0 %v4601
        %6278 = vmatpush1.bf16.msra.mxu0 %v4600
        %6279 = vmatprep.subr.bf16.mxu0 %v4608
        %6280 = vmatpush1.bf16.msra.mxu0 %v4607
        %6281 = vmatprep.subr.bf16.mxu0 %v4615
        %6282 = vmatpush1.bf16.msra.mxu0 %v4614
        %6283 = vmatprep.subr.bf16.mxu0 %v4622
        %6284 = vmatpush1.bf16.msra.mxu0 %v4621
        %6285 = vmatprep.subr.bf16.mxu0 %v4629
        %6286 = vmatpush1.bf16.msra.mxu0 %v4628
        %6287 = vmatprep.subr.bf16.mxu0 %v4636
        %6288 = vmatpush1.bf16.msra.mxu0 %v4635
        %6289 = vmatprep.subr.bf16.mxu0 %v4643
        %6290 = vmatpush1.bf16.msra.mxu0 %v4642
        %6291 = vmatprep.subr.bf16.mxu0 %v4650
        %6292 = vmatpush1.bf16.msra.mxu0 %v4649
        %6293 = vmatprep.subr.bf16.mxu0 %v4657
        %6294 = vmatpush1.bf16.msra.mxu0 %v4656
        %6295 = vmatprep.mubr.bf16.mxu0 %v1394
        %6296 = vmatmul.mubr.bf16.gmra.mrb[0].mxu0 %v1380
        %v6297 = vpop.f32.mrb[0].mxu0
        %v6298 = vadd.f32 %v6257, %v6297
        %v6299 = vpop.f32.mrb[0].mxu0
        %v6300 = vadd.f32 %v6259, %v6299
        %v6301 = vpop.f32.mrb[0].mxu0
        %v6302 = vpop.f32.mrb[0].mxu0
        %6303 = vdwg.mxu0
        %6304 = vmatprep.subr.bf16.mxu0 0
        %6305 = vmatpush1.bf16.msra.mxu0 %v3881
        %6306 = vmatprep.subr.bf16.mxu0 0
        %6307 = vmatpush1.bf16.msra.mxu0 %v3888
        %6308 = vmatprep.subr.bf16.mxu0 0
        %6309 = vmatpush1.bf16.msra.mxu0 %v3895
        %6310 = vmatprep.subr.bf16.mxu0 0
        %6311 = vmatpush1.bf16.msra.mxu0 %v3902
        %6312 = vmatprep.subr.bf16.mxu0 0
        %6313 = vmatpush1.bf16.msra.mxu0 %v3909
        %6314 = vmatprep.subr.bf16.mxu0 0
        %6315 = vmatpush1.bf16.msra.mxu0 %v3916
        %6316 = vmatprep.subr.bf16.mxu0 0
        %6317 = vmatpush1.bf16.msra.mxu0 %v3923
        %6318 = vmatprep.subr.bf16.mxu0 0
        %6319 = vmatpush1.bf16.msra.mxu0 %v3930
        %6320 = vmatprep.subr.bf16.mxu0 0
        %6321 = vmatpush1.bf16.msra.mxu0 %v3937
        %6322 = vmatprep.subr.bf16.mxu0 0
        %6323 = vmatpush1.bf16.msra.mxu0 %v3944
        %6324 = vmatprep.subr.bf16.mxu0 0
        %6325 = vmatpush1.bf16.msra.mxu0 %v3951
        %6326 = vmatprep.subr.bf16.mxu0 0
        %6327 = vmatpush1.bf16.msra.mxu0 %v3958
        %6328 = vmatprep.subr.bf16.mxu0 0
        %6329 = vmatpush1.bf16.msra.mxu0 %v3965
        %6330 = vmatprep.subr.bf16.mxu0 0
        %6331 = vmatpush1.bf16.msra.mxu0 %v3972
        %6332 = vmatprep.subr.bf16.mxu0 0
        %6333 = vmatpush1.bf16.msra.mxu0 %v3979
        %6334 = vmatprep.subr.bf16.mxu0 0
        %6335 = vmatpush1.bf16.msra.mxu0 %v3986
        %6336 = vmatprep.mubr.bf16.mxu0 %v1338
        %6337 = vmatmul.mubr.bf16.gmra.mrb[0].mxu0 %v1324
        %v6338 = vpop.f32.mrb[0].mxu0
        %v6339 = vadd.f32 %v1291, %v6338
        %v6340 = vpop.f32.mrb[0].mxu0
        %v6341 = vpop.f32.mrb[0].mxu0
        %v6342 = vpop.f32.mrb[0].mxu0
        %6343 = vdwg.mxu0
        %6344 = vmatprep.subr.bf16.mxu0 0
        %6345 = vmatpush1.bf16.msra.mxu0 %v3993
        %6346 = vmatprep.subr.bf16.mxu0 0
        %6347 = vmatpush1.bf16.msra.mxu0 %v4000
        %6348 = vmatprep.subr.bf16.mxu0 0
        %6349 = vmatpush1.bf16.msra.mxu0 %v4007
        %6350 = vmatprep.subr.bf16.mxu0 0
        %6351 = vmatpush1.bf16.msra.mxu0 %v4014
        %6352 = vmatprep.subr.bf16.mxu0 0
        %6353 = vmatpush1.bf16.msra.mxu0 %v4021
        %6354 = vmatprep.subr.bf16.mxu0 0
        %6355 = vmatpush1.bf16.msra.mxu0 %v4028
        %6356 = vmatprep.subr.bf16.mxu0 0
        %6357 = vmatpush1.bf16.msra.mxu0 %v4035
        %6358 = vmatprep.subr.bf16.mxu0 0
        %6359 = vmatpush1.bf16.msra.mxu0 %v4042
        %6360 = vmatprep.subr.bf16.mxu0 0
        %6361 = vmatpush1.bf16.msra.mxu0 %v4049
        %6362 = vmatprep.subr.bf16.mxu0 0
        %6363 = vmatpush1.bf16.msra.mxu0 %v4056
        %6364 = vmatprep.subr.bf16.mxu0 0
        %6365 = vmatpush1.bf16.msra.mxu0 %v4063
        %6366 = vmatprep.subr.bf16.mxu0 0
        %6367 = vmatpush1.bf16.msra.mxu0 %v4070
        %6368 = vmatprep.subr.bf16.mxu0 0
        %6369 = vmatpush1.bf16.msra.mxu0 %v4077
        %6370 = vmatprep.subr.bf16.mxu0 0
        %6371 = vmatpush1.bf16.msra.mxu0 %v4084
        %6372 = vmatprep.subr.bf16.mxu0 0
        %6373 = vmatpush1.bf16.msra.mxu0 %v4091
        %6374 = vmatprep.subr.bf16.mxu0 0
        %6375 = vmatpush1.bf16.msra.mxu0 %v4098
        %6376 = vmatprep.mubr.bf16.mxu0 %v1348
        %6377 = vmatmul.mubr.bf16.gmra.mrb[0].mxu0 %v1346
        %v6378 = vpop.f32.mrb[0].mxu0
        %v6379 = vadd.f32 %v6339, %v6378
        %v6380 = vpop.f32.mrb[0].mxu0
        %v6381 = vpop.f32.mrb[0].mxu0
        %v6382 = vpop.f32.mrb[0].mxu0
        %6383 = vdwg.mxu0
        %6384 = vmatprep.subr.bf16.mxu0 0
        %6385 = vmatpush1.bf16.msra.mxu0 %v4105
        %6386 = vmatprep.subr.bf16.mxu0 0
        %6387 = vmatpush1.bf16.msra.mxu0 %v4112
        %6388 = vmatprep.subr.bf16.mxu0 0
        %6389 = vmatpush1.bf16.msra.mxu0 %v4119
        %6390 = vmatprep.subr.bf16.mxu0 0
        %6391 = vmatpush1.bf16.msra.mxu0 %v4126
        %6392 = vmatprep.subr.bf16.mxu0 0
        %6393 = vmatpush1.bf16.msra.mxu0 %v4133
        %6394 = vmatprep.subr.bf16.mxu0 0
        %6395 = vmatpush1.bf16.msra.mxu0 %v4140
        %6396 = vmatprep.subr.bf16.mxu0 0
        %6397 = vmatpush1.bf16.msra.mxu0 %v4147
        %6398 = vmatprep.subr.bf16.mxu0 0
        %6399 = vmatpush1.bf16.msra.mxu0 %v4154
        %6400 = vmatprep.subr.bf16.mxu0 0
        %6401 = vmatpush1.bf16.msra.mxu0 %v4161
        %6402 = vmatprep.subr.bf16.mxu0 0
        %6403 = vmatpush1.bf16.msra.mxu0 %v4168
        %6404 = vmatprep.subr.bf16.mxu0 0
        %6405 = vmatpush1.bf16.msra.mxu0 %v4175
        %6406 = vmatprep.subr.bf16.mxu0 0
        %6407 = vmatpush1.bf16.msra.mxu0 %v4182
        %6408 = vmatprep.subr.bf16.mxu0 0
        %6409 = vmatpush1.bf16.msra.mxu0 %v4189
        %6410 = vmatprep.subr.bf16.mxu0 0
        %6411 = vmatpush1.bf16.msra.mxu0 %v4196
        %6412 = vmatprep.subr.bf16.mxu0 0
        %6413 = vmatpush1.bf16.msra.mxu0 %v4203
        %6414 = vmatprep.subr.bf16.mxu0 0
        %6415 = vmatpush1.bf16.msra.mxu0 %v4210
        %6416 = vmatprep.mubr.bf16.mxu0 %v1345
        %6417 = vmatmul.mubr.bf16.gmra.mrb[0].mxu0 %v1331
        %v6418 = vpop.f32.mrb[0].mxu0
        %v6419 = vadd.f32 %v6379, %v6418
        %v6420 = vpop.f32.mrb[0].mxu0
        %v6421 = vpop.f32.mrb[0].mxu0
        %v6422 = vpop.f32.mrb[0].mxu0
        %6423 = vdwg.mxu0
        %6424 = vmatprep.subr.bf16.mxu0 0
        %6425 = vmatpush1.bf16.msra.mxu0 %v4217
        %6426 = vmatprep.subr.bf16.mxu0 0
        %6427 = vmatpush1.bf16.msra.mxu0 %v4224
        %6428 = vmatprep.subr.bf16.mxu0 0
        %6429 = vmatpush1.bf16.msra.mxu0 %v4231
        %6430 = vmatprep.subr.bf16.mxu0 0
        %6431 = vmatpush1.bf16.msra.mxu0 %v4238
        %6432 = vmatprep.subr.bf16.mxu0 0
        %6433 = vmatpush1.bf16.msra.mxu0 %v4245
        %6434 = vmatprep.subr.bf16.mxu0 0
        %6435 = vmatpush1.bf16.msra.mxu0 %v4252
        %6436 = vmatprep.subr.bf16.mxu0 0
        %6437 = vmatpush1.bf16.msra.mxu0 %v4259
        %6438 = vmatprep.subr.bf16.mxu0 0
        %6439 = vmatpush1.bf16.msra.mxu0 %v4266
        %6440 = vmatprep.subr.bf16.mxu0 0
        %6441 = vmatpush1.bf16.msra.mxu0 %v4273
        %6442 = vmatprep.subr.bf16.mxu0 0
        %6443 = vmatpush1.bf16.msra.mxu0 %v4280
        %6444 = vmatprep.subr.bf16.mxu0 0
        %6445 = vmatpush1.bf16.msra.mxu0 %v4287
        %6446 = vmatprep.subr.bf16.mxu0 0
        %6447 = vmatpush1.bf16.msra.mxu0 %v4294
        %6448 = vmatprep.subr.bf16.mxu0 0
        %6449 = vmatpush1.bf16.msra.mxu0 %v4301
        %6450 = vmatprep.subr.bf16.mxu0 0
        %6451 = vmatpush1.bf16.msra.mxu0 %v4308
        %6452 = vmatprep.subr.bf16.mxu0 0
        %6453 = vmatpush1.bf16.msra.mxu0 %v4315
        %6454 = vmatprep.subr.bf16.mxu0 0
        %6455 = vmatpush1.bf16.msra.mxu0 %v4322
        %6456 = vmatprep.mubr.bf16.mxu0 %v1349
        %6457 = vmatmul.mubr.bf16.gmra.mrb[0].mxu0 %v1347
        %v6458 = vpop.f32.mrb[0].mxu0
        %v6459 = vadd.f32 %v6419, %v6458
        %v6460 = vpop.f32.mrb[0].mxu0
        %v6461 = vpop.f32.mrb[0].mxu0
        %v6462 = vpop.f32.mrb[0].mxu0
        %6463 = vdwg.mxu0
        %6464 = vmatprep.subr.bf16.mxu0 0
        %6465 = vmatpush1.bf16.msra.mxu0 %v4329
        %6466 = vmatprep.subr.bf16.mxu0 0
        %6467 = vmatpush1.bf16.msra.mxu0 %v4336
        %6468 = vmatprep.subr.bf16.mxu0 0
        %6469 = vmatpush1.bf16.msra.mxu0 %v4343
        %6470 = vmatprep.subr.bf16.mxu0 0
        %6471 = vmatpush1.bf16.msra.mxu0 %v4350
        %6472 = vmatprep.subr.bf16.mxu0 0
        %6473 = vmatpush1.bf16.msra.mxu0 %v4357
        %6474 = vmatprep.subr.bf16.mxu0 0
        %6475 = vmatpush1.bf16.msra.mxu0 %v4364
        %6476 = vmatprep.subr.bf16.mxu0 0
        %6477 = vmatpush1.bf16.msra.mxu0 %v4371
        %6478 = vmatprep.subr.bf16.mxu0 0
        %6479 = vmatpush1.bf16.msra.mxu0 %v4378
        %6480 = vmatprep.subr.bf16.mxu0 0
        %6481 = vmatpush1.bf16.msra.mxu0 %v4385
        %6482 = vmatprep.subr.bf16.mxu0 0
        %6483 = vmatpush1.bf16.msra.mxu0 %v4392
        %6484 = vmatprep.subr.bf16.mxu0 0
        %6485 = vmatpush1.bf16.msra.mxu0 %v4399
        %6486 = vmatprep.subr.bf16.mxu0 0
        %6487 = vmatpush1.bf16.msra.mxu0 %v4406
        %6488 = vmatprep.subr.bf16.mxu0 0
        %6489 = vmatpush1.bf16.msra.mxu0 %v4413
        %6490 = vmatprep.subr.bf16.mxu0 0
        %6491 = vmatpush1.bf16.msra.mxu0 %v4420
        %6492 = vmatprep.subr.bf16.mxu0 0
        %6493 = vmatpush1.bf16.msra.mxu0 %v4427
        %6494 = vmatprep.subr.bf16.mxu0 0
        %6495 = vmatpush1.bf16.msra.mxu0 %v4434
        %6496 = vmatprep.mubr.bf16.mxu0 %v1387
        %6497 = vmatmul.mubr.bf16.gmra.mrb[0].mxu0 %v1373
        %v6498 = vpop.f32.mrb[0].mxu0
        %v6499 = vadd.f32 %v6459, %v6498
        %v6500 = vpop.f32.mrb[0].mxu0
        %v6501 = vpop.f32.mrb[0].mxu0
        %v6502 = vpop.f32.mrb[0].mxu0
        %6503 = vdwg.mxu0
        %6504 = vmatprep.subr.bf16.mxu0 0
        %6505 = vmatpush1.bf16.msra.mxu0 %v4441
        %6506 = vmatprep.subr.bf16.mxu0 0
        %6507 = vmatpush1.bf16.msra.mxu0 %v4448
        %6508 = vmatprep.subr.bf16.mxu0 0
        %6509 = vmatpush1.bf16.msra.mxu0 %v4455
        %6510 = vmatprep.subr.bf16.mxu0 0
        %6511 = vmatpush1.bf16.msra.mxu0 %v4462
        %6512 = vmatprep.subr.bf16.mxu0 0
        %6513 = vmatpush1.bf16.msra.mxu0 %v4469
        %6514 = vmatprep.subr.bf16.mxu0 0
        %6515 = vmatpush1.bf16.msra.mxu0 %v4476
        %6516 = vmatprep.subr.bf16.mxu0 0
        %6517 = vmatpush1.bf16.msra.mxu0 %v4483
        %6518 = vmatprep.subr.bf16.mxu0 0
        %6519 = vmatpush1.bf16.msra.mxu0 %v4490
        %6520 = vmatprep.subr.bf16.mxu0 0
        %6521 = vmatpush1.bf16.msra.mxu0 %v4497
        %6522 = vmatprep.subr.bf16.mxu0 0
        %6523 = vmatpush1.bf16.msra.mxu0 %v4504
        %6524 = vmatprep.subr.bf16.mxu0 0
        %6525 = vmatpush1.bf16.msra.mxu0 %v4511
        %6526 = vmatprep.subr.bf16.mxu0 0
        %6527 = vmatpush1.bf16.msra.mxu0 %v4518
        %6528 = vmatprep.subr.bf16.mxu0 0
        %6529 = vmatpush1.bf16.msra.mxu0 %v4525
        %6530 = vmatprep.subr.bf16.mxu0 0
        %6531 = vmatpush1.bf16.msra.mxu0 %v4532
        %6532 = vmatprep.subr.bf16.mxu0 0
        %6533 = vmatpush1.bf16.msra.mxu0 %v4539
        %6534 = vmatprep.subr.bf16.mxu0 0
        %6535 = vmatpush1.bf16.msra.mxu0 %v4546
        %6536 = vmatprep.mubr.bf16.mxu0 %v1396
        %6537 = vmatmul.mubr.bf16.gmra.mrb[0].mxu0 %v1395
        %v6538 = vpop.f32.mrb[0].mxu0
        %v6539 = vadd.f32 %v6499, %v6538
        %v6540 = vpop.f32.mrb[0].mxu0
        %v6541 = vpop.f32.mrb[0].mxu0
        %v6542 = vpop.f32.mrb[0].mxu0
        %6543 = vdwg.mxu0
        %6544 = vmatprep.subr.bf16.mxu0 0
        %6545 = vmatpush1.bf16.msra.mxu0 %v4553
        %6546 = vmatprep.subr.bf16.mxu0 0
        %6547 = vmatpush1.bf16.msra.mxu0 %v4560
        %6548 = vmatprep.subr.bf16.mxu0 0
        %6549 = vmatpush1.bf16.msra.mxu0 %v4567
        %6550 = vmatprep.subr.bf16.mxu0 0
        %6551 = vmatpush1.bf16.msra.mxu0 %v4574
        %6552 = vmatprep.subr.bf16.mxu0 0
        %6553 = vmatpush1.bf16.msra.mxu0 %v4581
        %6554 = vmatprep.subr.bf16.mxu0 0
        %6555 = vmatpush1.bf16.msra.mxu0 %v4588
        %6556 = vmatprep.subr.bf16.mxu0 0
        %6557 = vmatpush1.bf16.msra.mxu0 %v4595
        %6558 = vmatprep.subr.bf16.mxu0 0
        %6559 = vmatpush1.bf16.msra.mxu0 %v4602
        %6560 = vmatprep.subr.bf16.mxu0 0
        %6561 = vmatpush1.bf16.msra.mxu0 %v4609
        %6562 = vmatprep.subr.bf16.mxu0 0
        %6563 = vmatpush1.bf16.msra.mxu0 %v4616
        %6564 = vmatprep.subr.bf16.mxu0 0
        %6565 = vmatpush1.bf16.msra.mxu0 %v4623
        %6566 = vmatprep.subr.bf16.mxu0 0
        %6567 = vmatpush1.bf16.msra.mxu0 %v4630
        %6568 = vmatprep.subr.bf16.mxu0 0
        %6569 = vmatpush1.bf16.msra.mxu0 %v4637
        %6570 = vmatprep.subr.bf16.mxu0 0
        %6571 = vmatpush1.bf16.msra.mxu0 %v4644
        %6572 = vmatprep.subr.bf16.mxu0 0
        %6573 = vmatpush1.bf16.msra.mxu0 %v4651
        %6574 = vmatprep.subr.bf16.mxu0 0
        %6575 = vmatpush1.bf16.msra.mxu0 %v4658
        %6576 = vmatprep.mubr.bf16.mxu0 %v1394
        %6577 = vmatmul.mubr.bf16.gmra.mrb[0].mxu0 %v1380
        %v6578 = vpop.f32.mrb[0].mxu0
        %v6579 = vadd.f32 %v6539, %v6578
        %v6580 = vpop.f32.mrb[0].mxu0
        %v6581 = vpop.f32.mrb[0].mxu0
        %v6582 = vpop.f32.mrb[0].mxu0
        %6583 = vdwg.mxu0
        %v6584 = vxor.u32 %v5724, 2147483648
        %v6585 = vxor.u32 %v5726, 2147483648
        %v6586 = vxor.u32 %v6011, 2147483648
        %v6587 = vxor.u32 %v6013, 2147483648
        %v6588 = vxor.u32 %v6298, 2147483648
        %v6589 = vxor.u32 %v6300, 2147483648
        %v6590 = vxor.u32 %v6579, 2147483648
        %v6591 = vmul.f32 %v6584, 1.442695
        %v6592 = vpow.pop %v6591
        %v6593 = vmul.f32 %v6585, 1.442695
        %v6594 = vpow.pop %v6593
        %v6595 = vmul.f32 %v6586, 1.442695
        %v6596 = vpow.pop %v6595
        %v6597 = vmul.f32 %v6587, 1.442695
        %v6598 = vpow.pop %v6597
        %v6599 = vmul.f32 %v6588, 1.442695
        %v6600 = vpow.pop %v6599
        %v6601 = vmul.f32 %v6589, 1.442695
        %v6602 = vpow.pop %v6601
        %v6603 = vmul.f32 %v6590, 1.442695
        %v6604 = vpow.pop %v6603
        %v6605 = vadd.f32 %v6592, 1.0
        %v6606 = vadd.f32 %v6594, 1.0
        %v6607 = vadd.f32 %v6596, 1.0
        %v6608 = vadd.f32 %v6598, 1.0
        %v6609 = vadd.f32 %v6600, 1.0
        %v6610 = vadd.f32 %v6602, 1.0
        %v6611 = vadd.f32 %v6604, 1.0
        %v6612 = vrcp.pop %v6605
        %v6613 = vmul.f32 1.0, %v6612
        %v6614 = vrcp.pop %v6606
        %v6615 = vmul.f32 1.0, %v6614
        %v6616 = vrcp.pop %v6607
        %v6617 = vmul.f32 1.0, %v6616
        %v6618 = vrcp.pop %v6608
        %v6619 = vmul.f32 1.0, %v6618
        %v6620 = vrcp.pop %v6609
        %v6621 = vmul.f32 1.0, %v6620
        %v6622 = vrcp.pop %v6610
        %v6623 = vmul.f32 1.0, %v6622
        %v6624 = vrcp.pop %v6611
        %v6625 = vmul.f32 1.0, %v6624
        %v6626 = vmax.f32 %v5724, 0.0
        %v6627 = vmax.f32 %v5726, 0.0
        %v6628 = vmax.f32 %v6011, 0.0
        %v6629 = vmax.f32 %v6013, 0.0
        %v6630 = vmax.f32 %v6298, 0.0
        %v6631 = vmax.f32 %v6300, 0.0
        %v6632 = vmax.f32 %v6579, 0.0
        %v6633 = vmul.f32 %v6613, %v6626
        %v6634 = vmul.f32 %v6615, %v6627
        %v6635 = vmul.f32 %v6617, %v6628
        %v6636 = vmul.f32 %v6619, %v6629
        %v6637 = vmul.f32 %v6621, %v6630
        %v6638 = vmul.f32 %v6623, %v6631
        %v6639 = vmul.f32 %v6625, %v6632
        %v6640 = vsub.f32 1.0, %v6613
        %v6641 = vsub.f32 1.0, %v6615
        %v6642 = vsub.f32 1.0, %v6617
        %v6643 = vsub.f32 1.0, %v6619
        %v6644 = vsub.f32 1.0, %v6621
        %v6645 = vsub.f32 1.0, %v6623
        %v6646 = vsub.f32 1.0, %v6625
        %v6647 = vld [vmem:[%s352] sm:$0xff]
        %v6648 = vld [vmem:[%s352 + $0x8] sm:$0x3f]
        %v6651 = vcombine.high %v6647, %v6647
        %v6653 = vunpack.c.l.s4 1983009808
        %v6654 = vunpack.c.0.s8 %v6653
        %v6655 = vlaneseq
        %v6656 = vshrl.u32 %v6655, 7
        %v6657 = vsub.s32 %v6654, %v6656
        %v6658 = vrot.slane %v6647, %v6657
        %v6660 = vunpack.c.l.s4 1983009808
        %v6661 = vunpack.c.0.s8 %v6660
        %v6662 = vlaneseq
        %v6663 = vshrl.u32 %v6662, 7
        %v6664 = vsub.s32 %v6661, %v6663
        %v6665 = vrot.slane %v6651, %v6664
        %v6666 = vcombine.high %v6658, %v6658
        %v6667 = vcombine.high %v6665, %v6665
        %v6668 = vcombine.high %v6648, %v6648
        %v6670 = vunpack.c.l.s4 1983009808
        %v6671 = vunpack.c.0.s8 %v6670
        %v6672 = vlaneseq
        %v6673 = vshrl.u32 %v6672, 7
        %v6674 = vsub.s32 %v6671, %v6673
        %v6675 = vrot.slane %v6648, %v6674
        %v6677 = vunpack.c.l.s4 1983009808
        %v6678 = vunpack.c.0.s8 %v6677
        %v6679 = vlaneseq
        %v6680 = vshrl.u32 %v6679, 7
        %v6681 = vsub.s32 %v6678, %v6680
        %v6682 = vrot.slane %v6668, %v6681
        %v6683 = vcombine.high %v6675, %v6675
        %v6691 = vmul.f32 %v6640, %v6658
        %v6692 = vmul.f32 %v6641, %v6666
        %v6693 = vmul.f32 %v6642, %v6665
        %v6694 = vmul.f32 %v6643, %v6667
        %v6695 = vmul.f32 %v6644, %v6675
        %v6696 = vmul.f32 %v6645, %v6683
        %v6697 = vmul.f32 %v6646, %v6682
        %v6698 = vadd.f32 %v6633, %v6691
        %v6699 = vadd.f32 %v6634, %v6692
        %v6700 = vadd.f32 %v6635, %v6693
        %v6701 = vadd.f32 %v6636, %v6694
        %v6702 = vadd.f32 %v6637, %v6695
        %v6703 = vadd.f32 %v6638, %v6696
        %v6704 = vadd.f32 %v6639, %v6697
        %v6705 = vld [vmem:[#allocation2] sm:$0x3]
        %v6706 = vld [vmem:[%s309] sm:$0xff]
        %v6708 = vlaneseq
        %v6709 = vshrl.u32 %v6708, 7
        %v6710 = vsub.s32 0, %v6709
        %v6711 = vrot.slane %v6706, %v6710
        %v6712 = vlaneseq
        %v6713 = vshrl.u32 %v6712, 7
        %v6714 = vsub.s32 1, %v6713
        %v6715 = vrot.slane %v6706, %v6714
        %v6716 = vlaneseq
        %v6717 = vshrl.u32 %v6716, 7
        %v6718 = vsub.s32 2, %v6717
        %v6719 = vrot.slane %v6706, %v6718
        %v6720 = vlaneseq
        %v6721 = vshrl.u32 %v6720, 7
        %v6722 = vsub.s32 3, %v6721
        %v6723 = vrot.slane %v6706, %v6722
        %v6724 = vlaneseq
        %v6725 = vshrl.u32 %v6724, 7
        %v6726 = vsub.s32 4, %v6725
        %v6727 = vrot.slane %v6706, %v6726
        %v6728 = vlaneseq
        %v6729 = vshrl.u32 %v6728, 7
        %v6730 = vsub.s32 5, %v6729
        %v6731 = vrot.slane %v6706, %v6730
        %v6732 = vlaneseq
        %v6733 = vshrl.u32 %v6732, 7
        %v6734 = vsub.s32 6, %v6733
        %v6735 = vrot.slane %v6706, %v6734
        %v6743 = vmul.f32 %v6698, %v6711
        %v6744 = vmul.f32 %v6699, %v6715
        %v6745 = vmul.f32 %v6700, %v6719
        %v6746 = vmul.f32 %v6701, %v6723
        %v6747 = vmul.f32 %v6702, %v6727
        %v6748 = vmul.f32 %v6703, %v6731
        %v6749 = vmul.f32 %v6704, %v6735
        %vm6750 = vcmask 1041408
        %v6751 = vsel %vm6750, %v6743, 0.0
        %v6752 = vsel %vm6750, %v6744, 0.0
        %v6753 = vadd.f32 %v6751, %v6752
        %v6754 = vsel %vm6750, %v6745, 0.0
        %v6755 = vadd.f32 %v6753, %v6754
        %v6756 = vsel %vm6750, %v6746, 0.0
        %v6757 = vadd.f32 %v6755, %v6756
        %v6758 = vsel %vm6750, %v6747, 0.0
        %v6759 = vadd.f32 %v6757, %v6758
        %v6760 = vsel %vm6750, %v6748, 0.0
        %v6761 = vadd.f32 %v6759, %v6760
        %v6762 = vsel %vm6750, %v6749, 0.0
        %v6763 = vadd.f32 %v6761, %v6762
        %6764 = vadd.xlane.f32.xlu0 %v6763
        %v6765 = vpop.xlane.xlu0 %6764
        %v6766 = vadd.f32 %v6705, %v6765
        %vm6767 = vcmask 1024
        %6768 = vst.msk [vmem:[#allocation2] sm:$0x3] %vm6767, %v6766
        %p6769 = scmp.eq.s32.totalorder %s25, 1
        // Predicated region
        $region61: #{cnn_discriminator_forward.3} parent=43 // pred_check
          %p6770 = pneg %p6769
        $region62: #{cnn_discriminator_forward.3} parent=43 // pred_check_branch
          %6772 = sbr.rel (%p6770) target = $region64
        $region63: #{cnn_discriminator_forward.3} parent=43 // pred_region
          %v6773 = vld [vmem:[#allocation2] sm:$0x3]
          %v6774 = vld [vmem:[#allocation3] sm:$0x1]
          %v6776 = vlaneseq
          %v6777 = vshrl.u32 %v6776, 7
          %v6778 = vsub.s32 0, %v6777
          %v6779 = vrot.slane %v6774, %v6778
          %v6781 = vadd.f32 %v6773, %v6779
          %v6782 = vxor.u32 %v6781, 2147483648
          %v6783 = vmul.f32 %v6782, 1.442695
          %v6784 = vpow.pop %v6783
          %v6785 = vadd.f32 %v6784, 1.0
          %v6786 = vrcp.pop %v6785
          %v6787 = vmul.f32 1.0, %v6786
          %6788 = vst.msk [vmem:[%s6] sm:$0x3] %vm6767, %v6787
        $region64: #{cnn_discriminator_forward.3} parent=43 // pred_fallthru
          _
        // Predicated region
        $region65: #{cnn_discriminator_forward.3} parent=43 // pred_check
          %p6789 = pneg %p184
        $region66: #{cnn_discriminator_forward.3} parent=43 // pred_check_branch
          %6791 = sbr.rel (%p6789) target = $region68
        $region67: #{cnn_discriminator_forward.3} parent=43 // pred_region
          _
        $region68: #{cnn_discriminator_forward.3} parent=43 // pred_fallthru
          _
        // Predicated region
        $region69: #{cnn_discriminator_forward.3} parent=43 // pred_check
          %p6792 = pneg %p184
        $region70: #{cnn_discriminator_forward.3} parent=43 // pred_check_branch
          %6794 = sbr.rel (%p6792) target = $region72
        $region71: #{cnn_discriminator_forward.3} parent=43 // pred_region
          _
        $region72: #{cnn_discriminator_forward.3} parent=43 // pred_fallthru
          _
      $region44: #{cnn_discriminator_forward.3} parent=5 // pred_fallthru
        _
      %p6795 = scmp.le.s32.totalorder 2, %s20
      // Predicated region
      $region73: #{cnn_discriminator_forward.3} parent=5 // pred_check
        %p6796 = pneg %p6795
      $region74: #{cnn_discriminator_forward.3} parent=5 // pred_check_branch
        %6798 = sbr.rel (%p6796) target = $region76
      $region75: #{cnn_discriminator_forward.3} parent=5 // pred_region
        %s6799 = ssub.s32 %s20, 2
      $region76: #{cnn_discriminator_forward.3} parent=5 // pred_fallthru
        _
    $region6: #{cnn_discriminator_forward.3} parent=1 // loop_footer
      %s24 = sadd.s32 1, %s20
    $region7: #{cnn_discriminator_forward.3} parent=1 // loop_footer_branch
      %19 = sbr.rel target = $region3
    $region8: #{cnn_discriminator_forward.3} parent=1 // loop_exit
      _
    %6800 = vsyncpa [#allocation5], 1
    %s6801 = scalar_lea.sflag [#allocation5], 1
    %6802 = vsyncpa %s6801, 1
    %6803 = vsyncpa [#allocation7], 1
    %s6804 = scalar_lea.sflag [#allocation7], 1
    %6805 = vsyncpa %s6804, 1

</llo_original>
